<compile_context>
chip_gen: v6e
topology: v6e:2x2x1
jax: 0.10.0
libtpu: 0.0.40
codegen_flags: <defaults>
</compile_context>

<pallas_src>
import functools

import jax
import jax.numpy as jnp
from jax.experimental import pallas as pl
from jax.experimental.pallas import tpu as pltpu


_CDT = jnp.bfloat16  # matmul operand dtype (accumulation stays f32)

# Per-layer parameter ordering as passed to the kernel (each stacked (L, ...)).
_BLOCK_PARAM_ORDER = (
    "ln1_g", "ln1_b", "w_qkv1", "wo1",
    "ln2_g", "ln2_b", "wq2", "w_kv2", "wo2",
    "ln3_g", "ln3_b", "w_ff1", "b_ff1", "w_ff2", "b_ff2",
)


# ----------------------------------------------------------------------------
# Kernel math
# ----------------------------------------------------------------------------

def _layernorm(x, g, b, eps=1e-5):
    mu = jnp.mean(x, axis=-1, keepdims=True)
    var = jnp.mean((x - mu) ** 2, axis=-1, keepdims=True)
    return (x - mu) * jax.lax.rsqrt(var + eps) * g + b


def _attn_heads(q, k, v, wo, num_heads, mask_bias, ctx_ref):
    """q:(B,T,D) f32, k/v:(B,S,D) f32, wo:(D,D) bf16.

    The 1/sqrt(dh) scale is pre-folded into the Q projection weights.
    Per-head contexts land in ctx_ref (B*T, D) at static lane offsets; the
    output projection is a single full-contraction matmul afterwards.
    """
    B, T, D = q.shape
    dh = D // num_heads
    for h in range(num_heads):  # static unroll over heads
        lo, hi = h * dh, (h + 1) * dh
        qh = q[:, :, lo:hi].astype(_CDT)
        kh = k[:, :, lo:hi].astype(_CDT)
        vh = v[:, :, lo:hi].astype(_CDT)
        a = jnp.einsum('btd,bsd->bts', qh, kh,
                       preferred_element_type=jnp.float32)
        if mask_bias is not None:
            a = a + mask_bias           # hoisted additive bias (one VALU add)
        a = a - jnp.max(a, axis=-1, keepdims=True)
        e = jnp.exp(a)
        inv = pl.reciprocal(jnp.sum(e, axis=-1, keepdims=True), approx=True)
        p = (e * inv).astype(_CDT)
        ctx = jnp.einsum('bts,bsd->btd', p, vh,
                         preferred_element_type=jnp.float32)
        ctx_ref[:, lo:hi] = ctx.reshape(B * T, dh)
    out = jnp.dot(ctx_ref[...].astype(_CDT), wo,
                  preferred_element_type=jnp.float32)
    return out.reshape(B, T, D)


def _block_fused(x, enc_bf, S, w, n_self, n_cross, is_first, mask_bias,
                 ctx_ref):
    """One decoder block.  x:(B,T,D) f32, enc_bf:(B*S,D) bf16."""
    (ln1_g, ln1_b, w_qkv1, wo1,
     ln2_g, ln2_b, wq2, w_kv2, wo2,
     ln3_g, ln3_b, w_ff1, b_ff1, w_ff2, b_ff2) = w
    B, T, D = x.shape

    # --- (masked) self attention: fused QKV projection ---
    xn = _layernorm(x, ln1_g, ln1_b)
    qkv = jnp.dot(xn.reshape(B * T, D).astype(_CDT), w_qkv1,
                  preferred_element_type=jnp.float32).reshape(B, T, 3 * D)
    sa = _attn_heads(qkv[..., :D], qkv[..., D:2 * D], qkv[..., 2 * D:],
                     wo1, n_self, mask_bias, ctx_ref)
    # torch: first block's residual base is the *normalized* input.
    x = (xn + sa) if is_first else (x + sa)

    # --- encoder-decoder attention: fused KV projection ---
    xn = _layernorm(x, ln2_g, ln2_b)
    q = jnp.dot(xn.reshape(B * T, D).astype(_CDT), wq2,
                preferred_element_type=jnp.float32).reshape(B, T, D)
    kv = jnp.dot(enc_bf, w_kv2,
                 preferred_element_type=jnp.float32).reshape(B, S, 2 * D)
    ca = _attn_heads(q, kv[..., :D], kv[..., D:], wo2, n_cross, None, ctx_ref)
    x = x + ca

    # --- feed-forward ---
    xn = _layernorm(x, ln3_g, ln3_b)
    h = jnp.maximum(
        jnp.dot(xn.reshape(B * T, D).astype(_CDT), w_ff1,
                preferred_element_type=jnp.float32) + b_ff1, 0.0)
    f = jnp.dot(h.astype(_CDT), w_ff2,
                preferred_element_type=jnp.float32) + b_ff2
    return x + f.reshape(B, T, D)


def _fused_decoder_kernel(x_ref, enc_ref, *refs,
                          num_layers, num_heads, cross_heads, causal):
    nb = len(_BLOCK_PARAM_ORDER)
    block_refs = refs[:nb]                               # each stacked (L,...)
    hln_g_ref, hln_b_ref, w_proj_ref, b_proj_ref = refs[nb:nb + 4]
    out_ref = refs[nb + 4]
    ctx_ref = refs[nb + 5]                               # (B*T, D) f32 scratch

    x = x_ref[...]                                       # (B, T, D) f32
    enc = enc_ref[...]                                   # (B, S, D) f32
    B, T, D = x.shape
    S = enc.shape[1]

    # Hoisted out of all layer/head loops.
    mask_bias = None
    if causal:
        ti = jax.lax.broadcasted_iota(jnp.int32, (T, T), 0)
        si = jax.lax.broadcasted_iota(jnp.int32, (T, T), 1)
        bias2d = jnp.where(si > ti, jnp.float32(-1e30), jnp.float32(0.0))
        mask_bias = jnp.broadcast_to(bias2d[None, :, :], (B, T, T))
    enc_bf = enc.reshape(B * S, D).astype(_CDT)          # shared by all layers

    for l in range(num_layers):                          # static unroll
        w = [r[l] for r in block_refs]
        x = _block_fused(x, enc_bf, S, w, num_heads, cross_heads[l],
                         is_first=(l == 0), mask_bias=mask_bias,
                         ctx_ref=ctx_ref)

    # Final LayerNorm + fused (recon|mask) projection.
    # NOTE: output last dim (2*P2) < 128 lanes -> masked stores; fine at this
    # head width, revisit if patch_size grows.
    xn = _layernorm(x, hln_g_ref[...], hln_b_ref[...])
    out_ref[...] = (jnp.dot(xn.reshape(B * T, D).astype(_CDT), w_proj_ref[...],
                            preferred_element_type=jnp.float32)
                    + b_proj_ref[...])


# ----------------------------------------------------------------------------
# Wrapper
# ----------------------------------------------------------------------------

def transformer_decoder_image_pallas(x, enc, params, num_heads,
                                     num_cross_heads=None, causal_mask=False):
    B, T, D = x.shape
    S = enc.shape[1]
    blocks = params["blocks"]
    L = len(blocks)
    head = params["head"]
    P2 = head["w_recon"].shape[1]

    # torch: first block always uses num_heads for cross attention.
    ch = num_cross_heads if num_cross_heads is not None else num_heads
    cross = [num_heads] + [ch] * (L - 1)

    def row(v):   # 1-D param -> (1, N) f32
        return v.reshape(1, -1).astype(jnp.float32)

    def bf(v):    # matmul weight -> bf16 (cast once, outside the kernel)
        return v.astype(_CDT)

    self_scale = float((D // num_heads) ** -0.5)
    per_layer = {k: [] for k in _BLOCK_PARAM_ORDER}
    for l, bp in enumerate(blocks):
        cross_scale = float((D // cross[l]) ** -0.5)
        per_layer["ln1_g"].append(row(bp["ln1_g"]))
        per_layer["ln1_b"].append(row(bp["ln1_b"]))
        # Fused QKV for self-attn; 1/sqrt(dh) folded into wq.
        per_layer["w_qkv1"].append(bf(jnp.concatenate(
            [bp["wq1"] * self_scale, bp["wk1"], bp["wv1"]], axis=1)))
        per_layer["wo1"].append(bf(bp["wo1"]))
        per_layer["ln2_g"].append(row(bp["ln2_g"]))
        per_layer["ln2_b"].append(row(bp["ln2_b"]))
        per_layer["wq2"].append(bf(bp["wq2"] * cross_scale))
        # Fused KV for cross-attn.
        per_layer["w_kv2"].append(bf(jnp.concatenate(
            [bp["wk2"], bp["wv2"]], axis=1)))
        per_layer["wo2"].append(bf(bp["wo2"]))
        per_layer["ln3_g"].append(row(bp["ln3_g"]))
        per_layer["ln3_b"].append(row(bp["ln3_b"]))
        per_layer["w_ff1"].append(bf(bp["w_ff1"]))
        per_layer["b_ff1"].append(row(bp["b_ff1"]))
        per_layer["w_ff2"].append(bf(bp["w_ff2"]))
        per_layer["b_ff2"].append(row(bp["b_ff2"]))
    stacked = [jnp.stack(per_layer[k], axis=0) for k in _BLOCK_PARAM_ORDER]

    hln_g = row(head["ln_g"])
    hln_b = row(head["ln_b"])
    # Fused recon + mask projection: one (D, 2*P2) matmul, split outside.
    w_proj = bf(jnp.concatenate([head["w_recon"], head["w_mask"]], axis=1))
    b_proj = jnp.concatenate([head["b_recon"], head["b_mask"]]).reshape(1, -1)

    inputs = [x, enc] + stacked + [hln_g, hln_b, w_proj, b_proj]

    # Explicit scoped-VMEM sizing (inputs + output + scratch, with headroom).
    in_bytes = sum(int(a.size) * a.dtype.itemsize for a in inputs)
    need = in_bytes + B * T * 2 * P2 * 4 + B * T * D * 4
    vmem_limit = int(min(max(4 * need, 32 << 20), 64 << 20))

    kernel = functools.partial(
        _fused_decoder_kernel, num_layers=L, num_heads=num_heads,
        cross_heads=tuple(cross), causal=causal_mask)

    vmem = pl.BlockSpec(memory_space=pltpu.MemorySpace.VMEM)
    out = pl.pallas_call(
        kernel,
        out_shape=jax.ShapeDtypeStruct((B * T, 2 * P2), jnp.float32),
        in_specs=[vmem] * len(inputs),
        out_specs=vmem,
        scratch_shapes=[pltpu.VMEM((B * T, D), jnp.float32)],
        compiler_params=pltpu.CompilerParams(vmem_limit_bytes=vmem_limit),
    )(*inputs)

    out = out.reshape(B, T, 2 * P2)
    # out_chans == 1 (non-autoregressive): stack along dim=1.
    recons = out[..., :P2][:, None, :, :]
    masks = out[..., P2:][:, None, :, :]
    return recons, masks


# ----------------------------------------------------------------------------
# Independent plain-JAX reference mirroring the PyTorch module (f32, exact
# reciprocal, unfused projections, explicit q scaling) — used to validate the
# kernel's fusion / scale-folding / mask-bias / bf16 path.
# ----------------------------------------------------------------------------

def _ref_layernorm(x, g, b, eps=1e-5):
    mu = jnp.mean(x, axis=-1, keepdims=True)
    var = jnp.mean((x - mu) ** 2, axis=-1, keepdims=True)
    return (x - mu) / jnp.sqrt(var + eps) * g + b


def _ref_mha(q_in, k_in, v_in, wq, wk, wv, wo, num_heads, attn_mask):
    B, T, D = q_in.shape
    S = k_in.shape[1]
    dh = D // num_heads
    q = (q_in @ wq).reshape(B, T, num_heads, dh)
    k = (k_in @ wk).reshape(B, S, num_heads, dh)
    v = (v_in @ wv).reshape(B, S, num_heads, dh)
    q = q * dh ** (-0.5)
    a = jnp.einsum('bthd,bshd->bhts', q, k)
    if attn_mask is not None:
        a = jnp.where(attn_mask[None, None], -jnp.inf, a)
    p = jax.nn.softmax(a, axis=-1)
    ctx = jnp.einsum('bhts,bshd->bthd', p, v).reshape(B, T, D)
    return ctx @ wo


def _ref_block(x, enc, bp, n_self, n_cross, is_first, attn_mask):
    if is_first:
        x = _ref_layernorm(x, bp["ln1_g"], bp["ln1_b"])
        sa = _ref_mha(x, x, x, bp["wq1"], bp["wk1"], bp["wv1"], bp["wo1"],
                      n_self, attn_mask)
        x = x + sa
    else:
        xn = _ref_layernorm(x, bp["ln1_g"], bp["ln1_b"])
        sa = _ref_mha(xn, xn, xn, bp["wq1"], bp["wk1"], bp["wv1"], bp["wo1"],
                      n_self, attn_mask)
        x = x + sa
    xn = _ref_layernorm(x, bp["ln2_g"], bp["ln2_b"])
    ca = _ref_mha(xn, enc, enc, bp["wq2"], bp["wk2"], bp["wv2"], bp["wo2"],
                  n_cross, None)
    x = x + ca
    xn = _ref_layernorm(x, bp["ln3_g"], bp["ln3_b"])
    h = jax.nn.relu(xn @ bp["w_ff1"] + bp["b_ff1"])
    f = h @ bp["w_ff2"] + bp["b_ff2"]
    return x + f


def transformer_decoder_image_ref(x, enc, params, num_heads,
                                  num_cross_heads=None, causal_mask=False):
    B, T, D = x.shape
    head = params["head"]
    blocks = params["blocks"]
    ch = num_cross_heads if num_cross_heads is not None else num_heads
    cross = [num_heads] + [ch] * (len(blocks) - 1)
    mask = jnp.triu(jnp.ones((T, T), dtype=bool), k=1) if causal_mask else None
    h = x
    for i, bp in enumerate(blocks):
        h = _ref_block(h, enc, bp, num_heads, cross[i], i == 0, mask)
    h = _ref_layernorm(h, head["ln_g"], head["ln_b"])
    recon = h @ head["w_recon"] + head["b_recon"]
    msk = h @ head["w_mask"] + head["b_mask"]
    return recon[:, None], msk[:, None]


# ----------------------------------------------------------------------------
# Deterministic parameter init (xavier-uniform weights, zero biases,
# LayerNorm weight=1 / bias=0), stored as (in, out) matrices.
# ----------------------------------------------------------------------------

def _xavier(key, fan_in, fan_out):
    limit = (6.0 / (fan_in + fan_out)) ** 0.5
    return jax.random.uniform(key, (fan_in, fan_out), jnp.float32,
                              -limit, limit)


def init_params(key, num_blocks, d_model, patch_size):
    blocks = []
    keys = jax.random.split(key, num_blocks + 1)
    for bi in range(num_blocks):
        bk = jax.random.split(keys[bi], 10)
        blocks.append({
            "ln1_g": jnp.ones((d_model,), jnp.float32),
            "ln1_b": jnp.zeros((d_model,), jnp.float32),
            "wq1": _xavier(bk[0], d_model, d_model),
            "wk1": _xavier(bk[1], d_model, d_model),
            "wv1": _xavier(bk[2], d_model, d_model),
            "wo1": _xavier(bk[3], d_model, d_model),
            "ln2_g": jnp.ones((d_model,), jnp.float32),
            "ln2_b": jnp.zeros((d_model,), jnp.float32),
            "wq2": _xavier(bk[4], d_model, d_model),
            "wk2": _xavier(bk[5], d_model, d_model),
            "wv2": _xavier(bk[6], d_model, d_model),
            "wo2": _xavier(bk[7], d_model, d_model),
            "ln3_g": jnp.ones((d_model,), jnp.float32),
            "ln3_b": jnp.zeros((d_model,), jnp.float32),
            "w_ff1": _xavier(bk[8], d_model, 4 * d_model),
            "b_ff1": jnp.zeros((4 * d_model,), jnp.float32),
            "w_ff2": _xavier(bk[9], 4 * d_model, d_model),
            "b_ff2": jnp.zeros((d_model,), jnp.float32),
        })
    hk = jax.random.split(keys[-1], 2)
    p2 = patch_size ** 2
    head = {
        "ln_g": jnp.ones((d_model,), jnp.float32),
        "ln_b": jnp.zeros((d_model,), jnp.float32),
        "w_recon": _xavier(hk[0], d_model, p2),
        "b_recon": jnp.zeros((p2,), jnp.float32),
        "w_mask": _xavier(hk[1], d_model, p2),
        "b_mask": jnp.zeros((p2,), jnp.float32),
    }
    return {"blocks": blocks, "head": head}


# ----------------------------------------------------------------------------
# Main
# ----------------------------------------------------------------------------

if __name__ == "__main__":
    B, T, S, D = 2, 8, 10, 32
    num_heads = 4
    num_cross_heads = 2      # exercise the differing cross-head count path
    num_blocks = 2
    patch_size = 4           # -> patch_size**2 = 16 output features per token

    key = jax.random.PRNGKey(0)
    k_in, k_enc, k_par = jax.random.split(key, 3)
    x = jax.random.normal(k_in, (B, T, D), jnp.float32)
    enc = jax.random.normal(k_enc, (B, S, D), jnp.float32)
    params = init_params(k_par, num_blocks, D, patch_size)

    recons, masks = transformer_decoder_image_pallas(
        x, enc, params, num_heads, num_cross_heads, causal_mask=False)
    jax.block_until_ready((recons, masks))

    # Correctness vs an independent f32 plain-JAX reference of the PyTorch
    # math.  Tolerance covers bf16 matmul operands + approx EUP reciprocal.
    r_ref, m_ref = transformer_decoder_image_ref(
        x, enc, params, num_heads, num_cross_heads, causal_mask=False)
    assert recons.shape == (B, 1, T, patch_size ** 2)
    assert masks.shape == (B, 1, T, patch_size ** 2)
    assert jnp.allclose(recons, r_ref, atol=5e-2, rtol=5e-2)
    assert jnp.allclose(masks, m_ref, atol=5e-2, rtol=5e-2)

    # Also exercise the causal-mask (additive-bias) path.
    rc, mc = transformer_decoder_image_pallas(
        x, enc, params, num_heads, num_cross_heads, causal_mask=True)
    jax.block_until_ready((rc, mc))
    rc_ref, mc_ref = transformer_decoder_image_ref(
        x, enc, params, num_heads, num_cross_heads, causal_mask=True)
    assert jnp.allclose(rc, rc_ref, atol=5e-2, rtol=5e-2)
    assert jnp.allclose(mc, mc_ref, atol=5e-2, rtol=5e-2)

    print("KERNEL_OK")
</pallas_src>

<mosaic_0001>
module attributes {stable_mosaic.version = 11 : i64} {
  func.func @_fused_decoder_kernel(%arg0: memref<2x8x32xf32, #tpu.memory_space<vmem>>, %arg1: memref<2x10x32xf32, #tpu.memory_space<vmem>>, %arg2: memref<2x1x32xf32, #tpu.memory_space<vmem>>, %arg3: memref<2x1x32xf32, #tpu.memory_space<vmem>>, %arg4: memref<2x32x96xbf16, #tpu.memory_space<vmem>>, %arg5: memref<2x32x32xbf16, #tpu.memory_space<vmem>>, %arg6: memref<2x1x32xf32, #tpu.memory_space<vmem>>, %arg7: memref<2x1x32xf32, #tpu.memory_space<vmem>>, %arg8: memref<2x32x32xbf16, #tpu.memory_space<vmem>>, %arg9: memref<2x32x64xbf16, #tpu.memory_space<vmem>>, %arg10: memref<2x32x32xbf16, #tpu.memory_space<vmem>>, %arg11: memref<2x1x32xf32, #tpu.memory_space<vmem>>, %arg12: memref<2x1x32xf32, #tpu.memory_space<vmem>>, %arg13: memref<2x32x128xbf16, #tpu.memory_space<vmem>>, %arg14: memref<2x1x128xf32, #tpu.memory_space<vmem>>, %arg15: memref<2x128x32xbf16, #tpu.memory_space<vmem>>, %arg16: memref<2x1x32xf32, #tpu.memory_space<vmem>>, %arg17: memref<1x32xf32, #tpu.memory_space<vmem>>, %arg18: memref<1x32xf32, #tpu.memory_space<vmem>>, %arg19: memref<32x32xbf16, #tpu.memory_space<vmem>>, %arg20: memref<1x32xf32, #tpu.memory_space<vmem>>, %arg21: memref<16x32xf32, #tpu.memory_space<vmem>>, %arg22: memref<16x32xf32, #tpu.memory_space<vmem>>) attributes {dimension_semantics = [], scalar_prefetch = 0 : i64, scratch_operands = 1 : i64, tpu.core_type = #tpu.core_type<tc>} {
    %c0 = arith.constant 0 : index
    %c0_0 = arith.constant 0 : index
    %c0_1 = arith.constant 0 : index
    %0 = vector.load %arg0[%c0, %c0_0, %c0_1] : memref<2x8x32xf32, #tpu.memory_space<vmem>>, vector<2x8x32xf32>
    %c0_2 = arith.constant 0 : index
    %c0_3 = arith.constant 0 : index
    %c0_4 = arith.constant 0 : index
    %1 = vector.load %arg1[%c0_2, %c0_3, %c0_4] : memref<2x10x32xf32, #tpu.memory_space<vmem>>, vector<2x10x32xf32>
    %2 = vector.shape_cast %1 : vector<2x10x32xf32> to vector<20x32xf32>
    %3 = arith.truncf %2 : vector<20x32xf32> to vector<20x32xbf16>
    %c0_5 = arith.constant 0 : index
    %c0_6 = arith.constant 0 : index
    %c0_7 = arith.constant 0 : index
    %4 = vector.load %arg2[%c0_5, %c0_6, %c0_7] : memref<2x1x32xf32, #tpu.memory_space<vmem>>, vector<1x1x32xf32>
    %5 = vector.shape_cast %4 : vector<1x1x32xf32> to vector<1x32xf32>
    %c0_8 = arith.constant 0 : index
    %c0_9 = arith.constant 0 : index
    %c0_10 = arith.constant 0 : index
    %6 = vector.load %arg3[%c0_8, %c0_9, %c0_10] : memref<2x1x32xf32, #tpu.memory_space<vmem>>, vector<1x1x32xf32>
    %7 = vector.shape_cast %6 : vector<1x1x32xf32> to vector<1x32xf32>
    %c0_11 = arith.constant 0 : index
    %c0_12 = arith.constant 0 : index
    %c0_13 = arith.constant 0 : index
    %8 = vector.load %arg4[%c0_11, %c0_12, %c0_13] : memref<2x32x96xbf16, #tpu.memory_space<vmem>>, vector<1x32x96xbf16>
    %9 = vector.shape_cast %8 : vector<1x32x96xbf16> to vector<32x96xbf16>
    %c0_14 = arith.constant 0 : index
    %c0_15 = arith.constant 0 : index
    %c0_16 = arith.constant 0 : index
    %10 = vector.load %arg5[%c0_14, %c0_15, %c0_16] : memref<2x32x32xbf16, #tpu.memory_space<vmem>>, vector<1x32x32xbf16>
    %11 = vector.shape_cast %10 : vector<1x32x32xbf16> to vector<32x32xbf16>
    %c0_17 = arith.constant 0 : index
    %c0_18 = arith.constant 0 : index
    %c0_19 = arith.constant 0 : index
    %12 = vector.load %arg6[%c0_17, %c0_18, %c0_19] : memref<2x1x32xf32, #tpu.memory_space<vmem>>, vector<1x1x32xf32>
    %13 = vector.shape_cast %12 : vector<1x1x32xf32> to vector<1x32xf32>
    %c0_20 = arith.constant 0 : index
    %c0_21 = arith.constant 0 : index
    %c0_22 = arith.constant 0 : index
    %14 = vector.load %arg7[%c0_20, %c0_21, %c0_22] : memref<2x1x32xf32, #tpu.memory_space<vmem>>, vector<1x1x32xf32>
    %15 = vector.shape_cast %14 : vector<1x1x32xf32> to vector<1x32xf32>
    %c0_23 = arith.constant 0 : index
    %c0_24 = arith.constant 0 : index
    %c0_25 = arith.constant 0 : index
    %16 = vector.load %arg8[%c0_23, %c0_24, %c0_25] : memref<2x32x32xbf16, #tpu.memory_space<vmem>>, vector<1x32x32xbf16>
    %17 = vector.shape_cast %16 : vector<1x32x32xbf16> to vector<32x32xbf16>
    %c0_26 = arith.constant 0 : index
    %c0_27 = arith.constant 0 : index
    %c0_28 = arith.constant 0 : index
    %18 = vector.load %arg9[%c0_26, %c0_27, %c0_28] : memref<2x32x64xbf16, #tpu.memory_space<vmem>>, vector<1x32x64xbf16>
    %19 = vector.shape_cast %18 : vector<1x32x64xbf16> to vector<32x64xbf16>
    %c0_29 = arith.constant 0 : index
    %c0_30 = arith.constant 0 : index
    %c0_31 = arith.constant 0 : index
    %20 = vector.load %arg10[%c0_29, %c0_30, %c0_31] : memref<2x32x32xbf16, #tpu.memory_space<vmem>>, vector<1x32x32xbf16>
    %21 = vector.shape_cast %20 : vector<1x32x32xbf16> to vector<32x32xbf16>
    %c0_32 = arith.constant 0 : index
    %c0_33 = arith.constant 0 : index
    %c0_34 = arith.constant 0 : index
    %22 = vector.load %arg11[%c0_32, %c0_33, %c0_34] : memref<2x1x32xf32, #tpu.memory_space<vmem>>, vector<1x1x32xf32>
    %23 = vector.shape_cast %22 : vector<1x1x32xf32> to vector<1x32xf32>
    %c0_35 = arith.constant 0 : index
    %c0_36 = arith.constant 0 : index
    %c0_37 = arith.constant 0 : index
    %24 = vector.load %arg12[%c0_35, %c0_36, %c0_37] : memref<2x1x32xf32, #tpu.memory_space<vmem>>, vector<1x1x32xf32>
    %25 = vector.shape_cast %24 : vector<1x1x32xf32> to vector<1x32xf32>
    %c0_38 = arith.constant 0 : index
    %c0_39 = arith.constant 0 : index
    %c0_40 = arith.constant 0 : index
    %26 = vector.load %arg13[%c0_38, %c0_39, %c0_40] : memref<2x32x128xbf16, #tpu.memory_space<vmem>>, vector<1x32x128xbf16>
    %27 = vector.shape_cast %26 : vector<1x32x128xbf16> to vector<32x128xbf16>
    %c0_41 = arith.constant 0 : index
    %c0_42 = arith.constant 0 : index
    %c0_43 = arith.constant 0 : index
    %28 = vector.load %arg14[%c0_41, %c0_42, %c0_43] : memref<2x1x128xf32, #tpu.memory_space<vmem>>, vector<1x1x128xf32>
    %29 = vector.shape_cast %28 : vector<1x1x128xf32> to vector<1x128xf32>
    %c0_44 = arith.constant 0 : index
    %c0_45 = arith.constant 0 : index
    %c0_46 = arith.constant 0 : index
    %30 = vector.load %arg15[%c0_44, %c0_45, %c0_46] : memref<2x128x32xbf16, #tpu.memory_space<vmem>>, vector<1x128x32xbf16>
    %31 = vector.shape_cast %30 : vector<1x128x32xbf16> to vector<128x32xbf16>
    %c0_47 = arith.constant 0 : index
    %c0_48 = arith.constant 0 : index
    %c0_49 = arith.constant 0 : index
    %32 = vector.load %arg16[%c0_47, %c0_48, %c0_49] : memref<2x1x32xf32, #tpu.memory_space<vmem>>, vector<1x1x32xf32>
    %33 = vector.shape_cast %32 : vector<1x1x32xf32> to vector<1x32xf32>
    %cst = arith.constant dense<0.000000e+00> : vector<2x8xf32>
    %34 = vector.multi_reduction <add>, %0, %cst [2] : vector<2x8x32xf32> to vector<2x8xf32>
    %35 = vector.shape_cast %34 : vector<2x8xf32> to vector<2x8x1xf32>
    %cst_50 = arith.constant 3.200000e+01 : f32
    %36 = vector.broadcast %cst_50 : f32 to vector<2x8x1xf32>
    %37 = arith.divf %35, %36 : vector<2x8x1xf32>
    %38 = vector.broadcast %37 : vector<2x8x1xf32> to vector<2x8x32xf32>
    %39 = arith.subf %0, %38 : vector<2x8x32xf32>
    %40 = arith.mulf %39, %39 : vector<2x8x32xf32>
    %cst_51 = arith.constant dense<0.000000e+00> : vector<2x8xf32>
    %41 = vector.multi_reduction <add>, %40, %cst_51 [2] : vector<2x8x32xf32> to vector<2x8xf32>
    %42 = vector.shape_cast %41 : vector<2x8xf32> to vector<2x8x1xf32>
    %cst_52 = arith.constant 3.200000e+01 : f32
    %43 = vector.broadcast %cst_52 : f32 to vector<2x8x1xf32>
    %44 = arith.divf %42, %43 : vector<2x8x1xf32>
    %45 = vector.broadcast %37 : vector<2x8x1xf32> to vector<2x8x32xf32>
    %46 = arith.subf %0, %45 : vector<2x8x32xf32>
    %cst_53 = arith.constant 9.99999974E-6 : f32
    %47 = vector.broadcast %cst_53 : f32 to vector<2x8x1xf32>
    %48 = arith.addf %44, %47 : vector<2x8x1xf32>
    %49 = math.rsqrt %48 : vector<2x8x1xf32>
    %50 = vector.broadcast %49 : vector<2x8x1xf32> to vector<2x8x32xf32>
    %51 = arith.mulf %46, %50 : vector<2x8x32xf32>
    %52 = vector.shape_cast %5 : vector<1x32xf32> to vector<1x1x32xf32>
    %53 = vector.broadcast %52 : vector<1x1x32xf32> to vector<2x8x32xf32>
    %54 = arith.mulf %51, %53 : vector<2x8x32xf32>
    %55 = vector.shape_cast %7 : vector<1x32xf32> to vector<1x1x32xf32>
    %56 = vector.broadcast %55 : vector<1x1x32xf32> to vector<2x8x32xf32>
    %57 = arith.addf %54, %56 : vector<2x8x32xf32>
    %58 = vector.shape_cast %57 : vector<2x8x32xf32> to vector<16x32xf32>
    %59 = arith.truncf %58 : vector<16x32xf32> to vector<16x32xbf16>
    %cst_54 = arith.constant dense<0.000000e+00> : vector<16x96xf32>
    %60 = tpu.matmul %59, %9, %cst_54 {dimension_numbers = #tpu.dot_dimension_numbers<[1], [0], [0], [1], [0, 0, 1, 1], [], []>} : vector<16x32xbf16>, vector<32x96xbf16>, vector<16x96xf32> -> vector<16x96xf32>
    %61 = vector.shape_cast %60 : vector<16x96xf32> to vector<2x8x96xf32>
    %62 = vector.extract_strided_slice %61 {offsets = [0, 0, 0], sizes = [2, 8, 32], strides = [1, 1, 1]} : vector<2x8x96xf32> to vector<2x8x32xf32>
    %63 = vector.extract_strided_slice %61 {offsets = [0, 0, 32], sizes = [2, 8, 32], strides = [1, 1, 1]} : vector<2x8x96xf32> to vector<2x8x32xf32>
    %64 = vector.extract_strided_slice %61 {offsets = [0, 0, 64], sizes = [2, 8, 32], strides = [1, 1, 1]} : vector<2x8x96xf32> to vector<2x8x32xf32>
    %65 = vector.extract_strided_slice %62 {offsets = [0, 0, 0], sizes = [2, 8, 8], strides = [1, 1, 1]} : vector<2x8x32xf32> to vector<2x8x8xf32>
    %66 = arith.truncf %65 : vector<2x8x8xf32> to vector<2x8x8xbf16>
    %67 = vector.extract_strided_slice %63 {offsets = [0, 0, 0], sizes = [2, 8, 8], strides = [1, 1, 1]} : vector<2x8x32xf32> to vector<2x8x8xf32>
    %68 = arith.truncf %67 : vector<2x8x8xf32> to vector<2x8x8xbf16>
    %69 = vector.extract_strided_slice %64 {offsets = [0, 0, 0], sizes = [2, 8, 8], strides = [1, 1, 1]} : vector<2x8x32xf32> to vector<2x8x8xf32>
    %70 = arith.truncf %69 : vector<2x8x8xf32> to vector<2x8x8xbf16>
    "tpu.trace_start"() <{level = 10 : i32, message = "btd,bsd->bts"}> : () -> ()
    %cst_55 = arith.constant dense<0.000000e+00> : vector<2x8x8xf32>
    %71 = tpu.matmul %66, %68, %cst_55 {dimension_numbers = #tpu.dot_dimension_numbers<[2], [2], [1], [1], [0, 0, 0, 1, 1, 1], [0], [0]>} : vector<2x8x8xbf16>, vector<2x8x8xbf16>, vector<2x8x8xf32> -> vector<2x8x8xf32>
    "tpu.trace_stop"() : () -> ()
    %cst_56 = arith.constant dense<0xFF800000> : vector<2x8xf32>
    %72 = vector.multi_reduction <maximumf>, %71, %cst_56 [2] : vector<2x8x8xf32> to vector<2x8xf32>
    %73 = vector.shape_cast %72 : vector<2x8xf32> to vector<2x8x1xf32>
    %74 = vector.broadcast %73 : vector<2x8x1xf32> to vector<2x8x8xf32>
    %75 = arith.subf %71, %74 : vector<2x8x8xf32>
    %76 = math.exp %75 : vector<2x8x8xf32>
    %cst_57 = arith.constant dense<0.000000e+00> : vector<2x8xf32>
    %77 = vector.multi_reduction <add>, %76, %cst_57 [2] : vector<2x8x8xf32> to vector<2x8xf32>
    %78 = vector.shape_cast %77 : vector<2x8xf32> to vector<2x8x1xf32>
    %79 = tpu.reciprocal %78 {approx = true} : vector<2x8x1xf32> -> vector<2x8x1xf32>
    %80 = vector.broadcast %79 : vector<2x8x1xf32> to vector<2x8x8xf32>
    %81 = arith.mulf %76, %80 : vector<2x8x8xf32>
    %82 = arith.truncf %81 : vector<2x8x8xf32> to vector<2x8x8xbf16>
    "tpu.trace_start"() <{level = 10 : i32, message = "bts,bsd->btd"}> : () -> ()
    %cst_58 = arith.constant dense<0.000000e+00> : vector<2x8x8xf32>
    %83 = tpu.matmul %82, %70, %cst_58 {dimension_numbers = #tpu.dot_dimension_numbers<[2], [1], [1], [2], [0, 0, 0, 1, 1, 2], [0], [0]>} : vector<2x8x8xbf16>, vector<2x8x8xbf16>, vector<2x8x8xf32> -> vector<2x8x8xf32>
    "tpu.trace_stop"() : () -> ()
    %84 = vector.shape_cast %83 : vector<2x8x8xf32> to vector<16x8xf32>
    %c0_59 = arith.constant 0 : index
    %c0_60 = arith.constant 0 : index
    %85 = vector.load %arg22[%c0_59, %c0_60] : memref<16x32xf32, #tpu.memory_space<vmem>>, vector<16x8xf32>
    tpu.vector_store %arg22[%c0_59, %c0_60], %84 {strides = array<i32>} : memref<16x32xf32, #tpu.memory_space<vmem>>, vector<16x8xf32>,
    %86 = vector.extract_strided_slice %62 {offsets = [0, 0, 8], sizes = [2, 8, 8], strides = [1, 1, 1]} : vector<2x8x32xf32> to vector<2x8x8xf32>
    %87 = arith.truncf %86 : vector<2x8x8xf32> to vector<2x8x8xbf16>
    %88 = vector.extract_strided_slice %63 {offsets = [0, 0, 8], sizes = [2, 8, 8], strides = [1, 1, 1]} : vector<2x8x32xf32> to vector<2x8x8xf32>
    %89 = arith.truncf %88 : vector<2x8x8xf32> to vector<2x8x8xbf16>
    %90 = vector.extract_strided_slice %64 {offsets = [0, 0, 8], sizes = [2, 8, 8], strides = [1, 1, 1]} : vector<2x8x32xf32> to vector<2x8x8xf32>
    %91 = arith.truncf %90 : vector<2x8x8xf32> to vector<2x8x8xbf16>
    "tpu.trace_start"() <{level = 10 : i32, message = "btd,bsd->bts"}> : () -> ()
    %cst_61 = arith.constant dense<0.000000e+00> : vector<2x8x8xf32>
    %92 = tpu.matmul %87, %89, %cst_61 {dimension_numbers = #tpu.dot_dimension_numbers<[2], [2], [1], [1], [0, 0, 0, 1, 1, 1], [0], [0]>} : vector<2x8x8xbf16>, vector<2x8x8xbf16>, vector<2x8x8xf32> -> vector<2x8x8xf32>
    "tpu.trace_stop"() : () -> ()
    %cst_62 = arith.constant dense<0xFF800000> : vector<2x8xf32>
    %93 = vector.multi_reduction <maximumf>, %92, %cst_62 [2] : vector<2x8x8xf32> to vector<2x8xf32>
    %94 = vector.shape_cast %93 : vector<2x8xf32> to vector<2x8x1xf32>
    %95 = vector.broadcast %94 : vector<2x8x1xf32> to vector<2x8x8xf32>
    %96 = arith.subf %92, %95 : vector<2x8x8xf32>
    %97 = math.exp %96 : vector<2x8x8xf32>
    %cst_63 = arith.constant dense<0.000000e+00> : vector<2x8xf32>
    %98 = vector.multi_reduction <add>, %97, %cst_63 [2] : vector<2x8x8xf32> to vector<2x8xf32>
    %99 = vector.shape_cast %98 : vector<2x8xf32> to vector<2x8x1xf32>
    %100 = tpu.reciprocal %99 {approx = true} : vector<2x8x1xf32> -> vector<2x8x1xf32>
    %101 = vector.broadcast %100 : vector<2x8x1xf32> to vector<2x8x8xf32>
    %102 = arith.mulf %97, %101 : vector<2x8x8xf32>
    %103 = arith.truncf %102 : vector<2x8x8xf32> to vector<2x8x8xbf16>
    "tpu.trace_start"() <{level = 10 : i32, message = "bts,bsd->btd"}> : () -> ()
    %cst_64 = arith.constant dense<0.000000e+00> : vector<2x8x8xf32>
    %104 = tpu.matmul %103, %91, %cst_64 {dimension_numbers = #tpu.dot_dimension_numbers<[2], [1], [1], [2], [0, 0, 0, 1, 1, 2], [0], [0]>} : vector<2x8x8xbf16>, vector<2x8x8xbf16>, vector<2x8x8xf32> -> vector<2x8x8xf32>
    "tpu.trace_stop"() : () -> ()
    %105 = vector.shape_cast %104 : vector<2x8x8xf32> to vector<16x8xf32>
    %c0_65 = arith.constant 0 : index
    %c8 = arith.constant 8 : index
    %106 = vector.load %arg22[%c0_65, %c8] : memref<16x32xf32, #tpu.memory_space<vmem>>, vector<16x8xf32>
    tpu.vector_store %arg22[%c0_65, %c8], %105 {strides = array<i32>} : memref<16x32xf32, #tpu.memory_space<vmem>>, vector<16x8xf32>,
    %107 = vector.extract_strided_slice %62 {offsets = [0, 0, 16], sizes = [2, 8, 8], strides = [1, 1, 1]} : vector<2x8x32xf32> to vector<2x8x8xf32>
    %108 = arith.truncf %107 : vector<2x8x8xf32> to vector<2x8x8xbf16>
    %109 = vector.extract_strided_slice %63 {offsets = [0, 0, 16], sizes = [2, 8, 8], strides = [1, 1, 1]} : vector<2x8x32xf32> to vector<2x8x8xf32>
    %110 = arith.truncf %109 : vector<2x8x8xf32> to vector<2x8x8xbf16>
    %111 = vector.extract_strided_slice %64 {offsets = [0, 0, 16], sizes = [2, 8, 8], strides = [1, 1, 1]} : vector<2x8x32xf32> to vector<2x8x8xf32>
    %112 = arith.truncf %111 : vector<2x8x8xf32> to vector<2x8x8xbf16>
    "tpu.trace_start"() <{level = 10 : i32, message = "btd,bsd->bts"}> : () -> ()
    %cst_66 = arith.constant dense<0.000000e+00> : vector<2x8x8xf32>
    %113 = tpu.matmul %108, %110, %cst_66 {dimension_numbers = #tpu.dot_dimension_numbers<[2], [2], [1], [1], [0, 0, 0, 1, 1, 1], [0], [0]>} : vector<2x8x8xbf16>, vector<2x8x8xbf16>, vector<2x8x8xf32> -> vector<2x8x8xf32>
    "tpu.trace_stop"() : () -> ()
    %cst_67 = arith.constant dense<0xFF800000> : vector<2x8xf32>
    %114 = vector.multi_reduction <maximumf>, %113, %cst_67 [2] : vector<2x8x8xf32> to vector<2x8xf32>
    %115 = vector.shape_cast %114 : vector<2x8xf32> to vector<2x8x1xf32>
    %116 = vector.broadcast %115 : vector<2x8x1xf32> to vector<2x8x8xf32>
    %117 = arith.subf %113, %116 : vector<2x8x8xf32>
    %118 = math.exp %117 : vector<2x8x8xf32>
    %cst_68 = arith.constant dense<0.000000e+00> : vector<2x8xf32>
    %119 = vector.multi_reduction <add>, %118, %cst_68 [2] : vector<2x8x8xf32> to vector<2x8xf32>
    %120 = vector.shape_cast %119 : vector<2x8xf32> to vector<2x8x1xf32>
    %121 = tpu.reciprocal %120 {approx = true} : vector<2x8x1xf32> -> vector<2x8x1xf32>
    %122 = vector.broadcast %121 : vector<2x8x1xf32> to vector<2x8x8xf32>
    %123 = arith.mulf %118, %122 : vector<2x8x8xf32>
    %124 = arith.truncf %123 : vector<2x8x8xf32> to vector<2x8x8xbf16>
    "tpu.trace_start"() <{level = 10 : i32, message = "bts,bsd->btd"}> : () -> ()
    %cst_69 = arith.constant dense<0.000000e+00> : vector<2x8x8xf32>
    %125 = tpu.matmul %124, %112, %cst_69 {dimension_numbers = #tpu.dot_dimension_numbers<[2], [1], [1], [2], [0, 0, 0, 1, 1, 2], [0], [0]>} : vector<2x8x8xbf16>, vector<2x8x8xbf16>, vector<2x8x8xf32> -> vector<2x8x8xf32>
    "tpu.trace_stop"() : () -> ()
    %126 = vector.shape_cast %125 : vector<2x8x8xf32> to vector<16x8xf32>
    %c0_70 = arith.constant 0 : index
    %c16 = arith.constant 16 : index
    %127 = vector.load %arg22[%c0_70, %c16] : memref<16x32xf32, #tpu.memory_space<vmem>>, vector<16x8xf32>
    tpu.vector_store %arg22[%c0_70, %c16], %126 {strides = array<i32>} : memref<16x32xf32, #tpu.memory_space<vmem>>, vector<16x8xf32>,
    %128 = vector.extract_strided_slice %62 {offsets = [0, 0, 24], sizes = [2, 8, 8], strides = [1, 1, 1]} : vector<2x8x32xf32> to vector<2x8x8xf32>
    %129 = arith.truncf %128 : vector<2x8x8xf32> to vector<2x8x8xbf16>
    %130 = vector.extract_strided_slice %63 {offsets = [0, 0, 24], sizes = [2, 8, 8], strides = [1, 1, 1]} : vector<2x8x32xf32> to vector<2x8x8xf32>
    %131 = arith.truncf %130 : vector<2x8x8xf32> to vector<2x8x8xbf16>
    %132 = vector.extract_strided_slice %64 {offsets = [0, 0, 24], sizes = [2, 8, 8], strides = [1, 1, 1]} : vector<2x8x32xf32> to vector<2x8x8xf32>
    %133 = arith.truncf %132 : vector<2x8x8xf32> to vector<2x8x8xbf16>
    "tpu.trace_start"() <{level = 10 : i32, message = "btd,bsd->bts"}> : () -> ()
    %cst_71 = arith.constant dense<0.000000e+00> : vector<2x8x8xf32>
    %134 = tpu.matmul %129, %131, %cst_71 {dimension_numbers = #tpu.dot_dimension_numbers<[2], [2], [1], [1], [0, 0, 0, 1, 1, 1], [0], [0]>} : vector<2x8x8xbf16>, vector<2x8x8xbf16>, vector<2x8x8xf32> -> vector<2x8x8xf32>
    "tpu.trace_stop"() : () -> ()
    %cst_72 = arith.constant dense<0xFF800000> : vector<2x8xf32>
    %135 = vector.multi_reduction <maximumf>, %134, %cst_72 [2] : vector<2x8x8xf32> to vector<2x8xf32>
    %136 = vector.shape_cast %135 : vector<2x8xf32> to vector<2x8x1xf32>
    %137 = vector.broadcast %136 : vector<2x8x1xf32> to vector<2x8x8xf32>
    %138 = arith.subf %134, %137 : vector<2x8x8xf32>
    %139 = math.exp %138 : vector<2x8x8xf32>
    %cst_73 = arith.constant dense<0.000000e+00> : vector<2x8xf32>
    %140 = vector.multi_reduction <add>, %139, %cst_73 [2] : vector<2x8x8xf32> to vector<2x8xf32>
    %141 = vector.shape_cast %140 : vector<2x8xf32> to vector<2x8x1xf32>
    %142 = tpu.reciprocal %141 {approx = true} : vector<2x8x1xf32> -> vector<2x8x1xf32>
    %143 = vector.broadcast %142 : vector<2x8x1xf32> to vector<2x8x8xf32>
    %144 = arith.mulf %139, %143 : vector<2x8x8xf32>
    %145 = arith.truncf %144 : vector<2x8x8xf32> to vector<2x8x8xbf16>
    "tpu.trace_start"() <{level = 10 : i32, message = "bts,bsd->btd"}> : () -> ()
    %cst_74 = arith.constant dense<0.000000e+00> : vector<2x8x8xf32>
    %146 = tpu.matmul %145, %133, %cst_74 {dimension_numbers = #tpu.dot_dimension_numbers<[2], [1], [1], [2], [0, 0, 0, 1, 1, 2], [0], [0]>} : vector<2x8x8xbf16>, vector<2x8x8xbf16>, vector<2x8x8xf32> -> vector<2x8x8xf32>
    "tpu.trace_stop"() : () -> ()
    %147 = vector.shape_cast %146 : vector<2x8x8xf32> to vector<16x8xf32>
    %c0_75 = arith.constant 0 : index
    %c24 = arith.constant 24 : index
    %148 = vector.load %arg22[%c0_75, %c24] : memref<16x32xf32, #tpu.memory_space<vmem>>, vector<16x8xf32>
    tpu.vector_store %arg22[%c0_75, %c24], %147 {strides = array<i32>} : memref<16x32xf32, #tpu.memory_space<vmem>>, vector<16x8xf32>,
    %c0_76 = arith.constant 0 : index
    %c0_77 = arith.constant 0 : index
    %149 = vector.load %arg22[%c0_76, %c0_77] : memref<16x32xf32, #tpu.memory_space<vmem>>, vector<16x32xf32>
    %150 = arith.truncf %149 : vector<16x32xf32> to vector<16x32xbf16>
    %cst_78 = arith.constant dense<0.000000e+00> : vector<16x32xf32>
    %151 = tpu.matmul %150, %11, %cst_78 {dimension_numbers = #tpu.dot_dimension_numbers<[1], [0], [0], [1], [0, 0, 1, 1], [], []>} : vector<16x32xbf16>, vector<32x32xbf16>, vector<16x32xf32> -> vector<16x32xf32>
    %152 = vector.shape_cast %151 : vector<16x32xf32> to vector<2x8x32xf32>
    %153 = arith.addf %57, %152 : vector<2x8x32xf32>
    %cst_79 = arith.constant dense<0.000000e+00> : vector<2x8xf32>
    %154 = vector.multi_reduction <add>, %153, %cst_79 [2] : vector<2x8x32xf32> to vector<2x8xf32>
    %155 = vector.shape_cast %154 : vector<2x8xf32> to vector<2x8x1xf32>
    %cst_80 = arith.constant 3.200000e+01 : f32
    %156 = vector.broadcast %cst_80 : f32 to vector<2x8x1xf32>
    %157 = arith.divf %155, %156 : vector<2x8x1xf32>
    %158 = vector.broadcast %157 : vector<2x8x1xf32> to vector<2x8x32xf32>
    %159 = arith.subf %153, %158 : vector<2x8x32xf32>
    %160 = arith.mulf %159, %159 : vector<2x8x32xf32>
    %cst_81 = arith.constant dense<0.000000e+00> : vector<2x8xf32>
    %161 = vector.multi_reduction <add>, %160, %cst_81 [2] : vector<2x8x32xf32> to vector<2x8xf32>
    %162 = vector.shape_cast %161 : vector<2x8xf32> to vector<2x8x1xf32>
    %cst_82 = arith.constant 3.200000e+01 : f32
    %163 = vector.broadcast %cst_82 : f32 to vector<2x8x1xf32>
    %164 = arith.divf %162, %163 : vector<2x8x1xf32>
    %165 = vector.broadcast %157 : vector<2x8x1xf32> to vector<2x8x32xf32>
    %166 = arith.subf %153, %165 : vector<2x8x32xf32>
    %cst_83 = arith.constant 9.99999974E-6 : f32
    %167 = vector.broadcast %cst_83 : f32 to vector<2x8x1xf32>
    %168 = arith.addf %164, %167 : vector<2x8x1xf32>
    %169 = math.rsqrt %168 : vector<2x8x1xf32>
    %170 = vector.broadcast %169 : vector<2x8x1xf32> to vector<2x8x32xf32>
    %171 = arith.mulf %166, %170 : vector<2x8x32xf32>
    %172 = vector.shape_cast %13 : vector<1x32xf32> to vector<1x1x32xf32>
    %173 = vector.broadcast %172 : vector<1x1x32xf32> to vector<2x8x32xf32>
    %174 = arith.mulf %171, %173 : vector<2x8x32xf32>
    %175 = vector.shape_cast %15 : vector<1x32xf32> to vector<1x1x32xf32>
    %176 = vector.broadcast %175 : vector<1x1x32xf32> to vector<2x8x32xf32>
    %177 = arith.addf %174, %176 : vector<2x8x32xf32>
    %178 = vector.shape_cast %177 : vector<2x8x32xf32> to vector<16x32xf32>
    %179 = arith.truncf %178 : vector<16x32xf32> to vector<16x32xbf16>
    %cst_84 = arith.constant dense<0.000000e+00> : vector<16x32xf32>
    %180 = tpu.matmul %179, %17, %cst_84 {dimension_numbers = #tpu.dot_dimension_numbers<[1], [0], [0], [1], [0, 0, 1, 1], [], []>} : vector<16x32xbf16>, vector<32x32xbf16>, vector<16x32xf32> -> vector<16x32xf32>
    %181 = vector.shape_cast %180 : vector<16x32xf32> to vector<2x8x32xf32>
    %cst_85 = arith.constant dense<0.000000e+00> : vector<20x64xf32>
    %182 = tpu.matmul %3, %19, %cst_85 {dimension_numbers = #tpu.dot_dimension_numbers<[1], [0], [0], [1], [0, 0, 1, 1], [], []>} : vector<20x32xbf16>, vector<32x64xbf16>, vector<20x64xf32> -> vector<20x64xf32>
    %183 = vector.shape_cast %182 : vector<20x64xf32> to vector<2x10x64xf32>
    %184 = vector.extract_strided_slice %183 {offsets = [0, 0, 0], sizes = [2, 10, 32], strides = [1, 1, 1]} : vector<2x10x64xf32> to vector<2x10x32xf32>
    %185 = vector.extract_strided_slice %183 {offsets = [0, 0, 32], sizes = [2, 10, 32], strides = [1, 1, 1]} : vector<2x10x64xf32> to vector<2x10x32xf32>
    %186 = vector.extract_strided_slice %181 {offsets = [0, 0, 0], sizes = [2, 8, 8], strides = [1, 1, 1]} : vector<2x8x32xf32> to vector<2x8x8xf32>
    %187 = arith.truncf %186 : vector<2x8x8xf32> to vector<2x8x8xbf16>
    %188 = vector.extract_strided_slice %184 {offsets = [0, 0, 0], sizes = [2, 10, 8], strides = [1, 1, 1]} : vector<2x10x32xf32> to vector<2x10x8xf32>
    %189 = arith.truncf %188 : vector<2x10x8xf32> to vector<2x10x8xbf16>
    %190 = vector.extract_strided_slice %185 {offsets = [0, 0, 0], sizes = [2, 10, 8], strides = [1, 1, 1]} : vector<2x10x32xf32> to vector<2x10x8xf32>
    %191 = arith.truncf %190 : vector<2x10x8xf32> to vector<2x10x8xbf16>
    "tpu.trace_start"() <{level = 10 : i32, message = "btd,bsd->bts"}> : () -> ()
    %cst_86 = arith.constant dense<0.000000e+00> : vector<2x8x10xf32>
    %192 = tpu.matmul %187, %189, %cst_86 {dimension_numbers = #tpu.dot_dimension_numbers<[2], [2], [1], [1], [0, 0, 0, 1, 1, 1], [0], [0]>} : vector<2x8x8xbf16>, vector<2x10x8xbf16>, vector<2x8x10xf32> -> vector<2x8x10xf32>
    "tpu.trace_stop"() : () -> ()
    %cst_87 = arith.constant dense<0xFF800000> : vector<2x8xf32>
    %193 = vector.multi_reduction <maximumf>, %192, %cst_87 [2] : vector<2x8x10xf32> to vector<2x8xf32>
    %194 = vector.shape_cast %193 : vector<2x8xf32> to vector<2x8x1xf32>
    %195 = vector.broadcast %194 : vector<2x8x1xf32> to vector<2x8x10xf32>
    %196 = arith.subf %192, %195 : vector<2x8x10xf32>
    %197 = math.exp %196 : vector<2x8x10xf32>
    %cst_88 = arith.constant dense<0.000000e+00> : vector<2x8xf32>
    %198 = vector.multi_reduction <add>, %197, %cst_88 [2] : vector<2x8x10xf32> to vector<2x8xf32>
    %199 = vector.shape_cast %198 : vector<2x8xf32> to vector<2x8x1xf32>
    %200 = tpu.reciprocal %199 {approx = true} : vector<2x8x1xf32> -> vector<2x8x1xf32>
    %201 = vector.broadcast %200 : vector<2x8x1xf32> to vector<2x8x10xf32>
    %202 = arith.mulf %197, %201 : vector<2x8x10xf32>
    %203 = arith.truncf %202 : vector<2x8x10xf32> to vector<2x8x10xbf16>
    "tpu.trace_start"() <{level = 10 : i32, message = "bts,bsd->btd"}> : () -> ()
    %cst_89 = arith.constant dense<0.000000e+00> : vector<2x8x8xf32>
    %204 = tpu.matmul %203, %191, %cst_89 {dimension_numbers = #tpu.dot_dimension_numbers<[2], [1], [1], [2], [0, 0, 0, 1, 1, 2], [0], [0]>} : vector<2x8x10xbf16>, vector<2x10x8xbf16>, vector<2x8x8xf32> -> vector<2x8x8xf32>
    "tpu.trace_stop"() : () -> ()
    %205 = vector.shape_cast %204 : vector<2x8x8xf32> to vector<16x8xf32>
    %c0_90 = arith.constant 0 : index
    %c0_91 = arith.constant 0 : index
    %206 = vector.load %arg22[%c0_90, %c0_91] : memref<16x32xf32, #tpu.memory_space<vmem>>, vector<16x8xf32>
    tpu.vector_store %arg22[%c0_90, %c0_91], %205 {strides = array<i32>} : memref<16x32xf32, #tpu.memory_space<vmem>>, vector<16x8xf32>,
    %207 = vector.extract_strided_slice %181 {offsets = [0, 0, 8], sizes = [2, 8, 8], strides = [1, 1, 1]} : vector<2x8x32xf32> to vector<2x8x8xf32>
    %208 = arith.truncf %207 : vector<2x8x8xf32> to vector<2x8x8xbf16>
    %209 = vector.extract_strided_slice %184 {offsets = [0, 0, 8], sizes = [2, 10, 8], strides = [1, 1, 1]} : vector<2x10x32xf32> to vector<2x10x8xf32>
    %210 = arith.truncf %209 : vector<2x10x8xf32> to vector<2x10x8xbf16>
    %211 = vector.extract_strided_slice %185 {offsets = [0, 0, 8], sizes = [2, 10, 8], strides = [1, 1, 1]} : vector<2x10x32xf32> to vector<2x10x8xf32>
    %212 = arith.truncf %211 : vector<2x10x8xf32> to vector<2x10x8xbf16>
    "tpu.trace_start"() <{level = 10 : i32, message = "btd,bsd->bts"}> : () -> ()
    %cst_92 = arith.constant dense<0.000000e+00> : vector<2x8x10xf32>
    %213 = tpu.matmul %208, %210, %cst_92 {dimension_numbers = #tpu.dot_dimension_numbers<[2], [2], [1], [1], [0, 0, 0, 1, 1, 1], [0], [0]>} : vector<2x8x8xbf16>, vector<2x10x8xbf16>, vector<2x8x10xf32> -> vector<2x8x10xf32>
    "tpu.trace_stop"() : () -> ()
    %cst_93 = arith.constant dense<0xFF800000> : vector<2x8xf32>
    %214 = vector.multi_reduction <maximumf>, %213, %cst_93 [2] : vector<2x8x10xf32> to vector<2x8xf32>
    %215 = vector.shape_cast %214 : vector<2x8xf32> to vector<2x8x1xf32>
    %216 = vector.broadcast %215 : vector<2x8x1xf32> to vector<2x8x10xf32>
    %217 = arith.subf %213, %216 : vector<2x8x10xf32>
    %218 = math.exp %217 : vector<2x8x10xf32>
    %cst_94 = arith.constant dense<0.000000e+00> : vector<2x8xf32>
    %219 = vector.multi_reduction <add>, %218, %cst_94 [2] : vector<2x8x10xf32> to vector<2x8xf32>
    %220 = vector.shape_cast %219 : vector<2x8xf32> to vector<2x8x1xf32>
    %221 = tpu.reciprocal %220 {approx = true} : vector<2x8x1xf32> -> vector<2x8x1xf32>
    %222 = vector.broadcast %221 : vector<2x8x1xf32> to vector<2x8x10xf32>
    %223 = arith.mulf %218, %222 : vector<2x8x10xf32>
    %224 = arith.truncf %223 : vector<2x8x10xf32> to vector<2x8x10xbf16>
    "tpu.trace_start"() <{level = 10 : i32, message = "bts,bsd->btd"}> : () -> ()
    %cst_95 = arith.constant dense<0.000000e+00> : vector<2x8x8xf32>
    %225 = tpu.matmul %224, %212, %cst_95 {dimension_numbers = #tpu.dot_dimension_numbers<[2], [1], [1], [2], [0, 0, 0, 1, 1, 2], [0], [0]>} : vector<2x8x10xbf16>, vector<2x10x8xbf16>, vector<2x8x8xf32> -> vector<2x8x8xf32>
    "tpu.trace_stop"() : () -> ()
    %226 = vector.shape_cast %225 : vector<2x8x8xf32> to vector<16x8xf32>
    %c0_96 = arith.constant 0 : index
    %c8_97 = arith.constant 8 : index
    %227 = vector.load %arg22[%c0_96, %c8_97] : memref<16x32xf32, #tpu.memory_space<vmem>>, vector<16x8xf32>
    tpu.vector_store %arg22[%c0_96, %c8_97], %226 {strides = array<i32>} : memref<16x32xf32, #tpu.memory_space<vmem>>, vector<16x8xf32>,
    %228 = vector.extract_strided_slice %181 {offsets = [0, 0, 16], sizes = [2, 8, 8], strides = [1, 1, 1]} : vector<2x8x32xf32> to vector<2x8x8xf32>
    %229 = arith.truncf %228 : vector<2x8x8xf32> to vector<2x8x8xbf16>
    %230 = vector.extract_strided_slice %184 {offsets = [0, 0, 16], sizes = [2, 10, 8], strides = [1, 1, 1]} : vector<2x10x32xf32> to vector<2x10x8xf32>
    %231 = arith.truncf %230 : vector<2x10x8xf32> to vector<2x10x8xbf16>
    %232 = vector.extract_strided_slice %185 {offsets = [0, 0, 16], sizes = [2, 10, 8], strides = [1, 1, 1]} : vector<2x10x32xf32> to vector<2x10x8xf32>
    %233 = arith.truncf %232 : vector<2x10x8xf32> to vector<2x10x8xbf16>
    "tpu.trace_start"() <{level = 10 : i32, message = "btd,bsd->bts"}> : () -> ()
    %cst_98 = arith.constant dense<0.000000e+00> : vector<2x8x10xf32>
    %234 = tpu.matmul %229, %231, %cst_98 {dimension_numbers = #tpu.dot_dimension_numbers<[2], [2], [1], [1], [0, 0, 0, 1, 1, 1], [0], [0]>} : vector<2x8x8xbf16>, vector<2x10x8xbf16>, vector<2x8x10xf32> -> vector<2x8x10xf32>
    "tpu.trace_stop"() : () -> ()
    %cst_99 = arith.constant dense<0xFF800000> : vector<2x8xf32>
    %235 = vector.multi_reduction <maximumf>, %234, %cst_99 [2] : vector<2x8x10xf32> to vector<2x8xf32>
    %236 = vector.shape_cast %235 : vector<2x8xf32> to vector<2x8x1xf32>
    %237 = vector.broadcast %236 : vector<2x8x1xf32> to vector<2x8x10xf32>
    %238 = arith.subf %234, %237 : vector<2x8x10xf32>
    %239 = math.exp %238 : vector<2x8x10xf32>
    %cst_100 = arith.constant dense<0.000000e+00> : vector<2x8xf32>
    %240 = vector.multi_reduction <add>, %239, %cst_100 [2] : vector<2x8x10xf32> to vector<2x8xf32>
    %241 = vector.shape_cast %240 : vector<2x8xf32> to vector<2x8x1xf32>
    %242 = tpu.reciprocal %241 {approx = true} : vector<2x8x1xf32> -> vector<2x8x1xf32>
    %243 = vector.broadcast %242 : vector<2x8x1xf32> to vector<2x8x10xf32>
    %244 = arith.mulf %239, %243 : vector<2x8x10xf32>
    %245 = arith.truncf %244 : vector<2x8x10xf32> to vector<2x8x10xbf16>
    "tpu.trace_start"() <{level = 10 : i32, message = "bts,bsd->btd"}> : () -> ()
    %cst_101 = arith.constant dense<0.000000e+00> : vector<2x8x8xf32>
    %246 = tpu.matmul %245, %233, %cst_101 {dimension_numbers = #tpu.dot_dimension_numbers<[2], [1], [1], [2], [0, 0, 0, 1, 1, 2], [0], [0]>} : vector<2x8x10xbf16>, vector<2x10x8xbf16>, vector<2x8x8xf32> -> vector<2x8x8xf32>
    "tpu.trace_stop"() : () -> ()
    %247 = vector.shape_cast %246 : vector<2x8x8xf32> to vector<16x8xf32>
    %c0_102 = arith.constant 0 : index
    %c16_103 = arith.constant 16 : index
    %248 = vector.load %arg22[%c0_102, %c16_103] : memref<16x32xf32, #tpu.memory_space<vmem>>, vector<16x8xf32>
    tpu.vector_store %arg22[%c0_102, %c16_103], %247 {strides = array<i32>} : memref<16x32xf32, #tpu.memory_space<vmem>>, vector<16x8xf32>,
    %249 = vector.extract_strided_slice %181 {offsets = [0, 0, 24], sizes = [2, 8, 8], strides = [1, 1, 1]} : vector<2x8x32xf32> to vector<2x8x8xf32>
    %250 = arith.truncf %249 : vector<2x8x8xf32> to vector<2x8x8xbf16>
    %251 = vector.extract_strided_slice %184 {offsets = [0, 0, 24], sizes = [2, 10, 8], strides = [1, 1, 1]} : vector<2x10x32xf32> to vector<2x10x8xf32>
    %252 = arith.truncf %251 : vector<2x10x8xf32> to vector<2x10x8xbf16>
    %253 = vector.extract_strided_slice %185 {offsets = [0, 0, 24], sizes = [2, 10, 8], strides = [1, 1, 1]} : vector<2x10x32xf32> to vector<2x10x8xf32>
    %254 = arith.truncf %253 : vector<2x10x8xf32> to vector<2x10x8xbf16>
    "tpu.trace_start"() <{level = 10 : i32, message = "btd,bsd->bts"}> : () -> ()
    %cst_104 = arith.constant dense<0.000000e+00> : vector<2x8x10xf32>
    %255 = tpu.matmul %250, %252, %cst_104 {dimension_numbers = #tpu.dot_dimension_numbers<[2], [2], [1], [1], [0, 0, 0, 1, 1, 1], [0], [0]>} : vector<2x8x8xbf16>, vector<2x10x8xbf16>, vector<2x8x10xf32> -> vector<2x8x10xf32>
    "tpu.trace_stop"() : () -> ()
    %cst_105 = arith.constant dense<0xFF800000> : vector<2x8xf32>
    %256 = vector.multi_reduction <maximumf>, %255, %cst_105 [2] : vector<2x8x10xf32> to vector<2x8xf32>
    %257 = vector.shape_cast %256 : vector<2x8xf32> to vector<2x8x1xf32>
    %258 = vector.broadcast %257 : vector<2x8x1xf32> to vector<2x8x10xf32>
    %259 = arith.subf %255, %258 : vector<2x8x10xf32>
    %260 = math.exp %259 : vector<2x8x10xf32>
    %cst_106 = arith.constant dense<0.000000e+00> : vector<2x8xf32>
    %261 = vector.multi_reduction <add>, %260, %cst_106 [2] : vector<2x8x10xf32> to vector<2x8xf32>
    %262 = vector.shape_cast %261 : vector<2x8xf32> to vector<2x8x1xf32>
    %263 = tpu.reciprocal %262 {approx = true} : vector<2x8x1xf32> -> vector<2x8x1xf32>
    %264 = vector.broadcast %263 : vector<2x8x1xf32> to vector<2x8x10xf32>
    %265 = arith.mulf %260, %264 : vector<2x8x10xf32>
    %266 = arith.truncf %265 : vector<2x8x10xf32> to vector<2x8x10xbf16>
    "tpu.trace_start"() <{level = 10 : i32, message = "bts,bsd->btd"}> : () -> ()
    %cst_107 = arith.constant dense<0.000000e+00> : vector<2x8x8xf32>
    %267 = tpu.matmul %266, %254, %cst_107 {dimension_numbers = #tpu.dot_dimension_numbers<[2], [1], [1], [2], [0, 0, 0, 1, 1, 2], [0], [0]>} : vector<2x8x10xbf16>, vector<2x10x8xbf16>, vector<2x8x8xf32> -> vector<2x8x8xf32>
    "tpu.trace_stop"() : () -> ()
    %268 = vector.shape_cast %267 : vector<2x8x8xf32> to vector<16x8xf32>
    %c0_108 = arith.constant 0 : index
    %c24_109 = arith.constant 24 : index
    %269 = vector.load %arg22[%c0_108, %c24_109] : memref<16x32xf32, #tpu.memory_space<vmem>>, vector<16x8xf32>
    tpu.vector_store %arg22[%c0_108, %c24_109], %268 {strides = array<i32>} : memref<16x32xf32, #tpu.memory_space<vmem>>, vector<16x8xf32>,
    %c0_110 = arith.constant 0 : index
    %c0_111 = arith.constant 0 : index
    %270 = vector.load %arg22[%c0_110, %c0_111] : memref<16x32xf32, #tpu.memory_space<vmem>>, vector<16x32xf32>
    %271 = arith.truncf %270 : vector<16x32xf32> to vector<16x32xbf16>
    %cst_112 = arith.constant dense<0.000000e+00> : vector<16x32xf32>
    %272 = tpu.matmul %271, %21, %cst_112 {dimension_numbers = #tpu.dot_dimension_numbers<[1], [0], [0], [1], [0, 0, 1, 1], [], []>} : vector<16x32xbf16>, vector<32x32xbf16>, vector<16x32xf32> -> vector<16x32xf32>
    %273 = vector.shape_cast %272 : vector<16x32xf32> to vector<2x8x32xf32>
    %274 = arith.addf %153, %273 : vector<2x8x32xf32>
    %cst_113 = arith.constant dense<0.000000e+00> : vector<2x8xf32>
    %275 = vector.multi_reduction <add>, %274, %cst_113 [2] : vector<2x8x32xf32> to vector<2x8xf32>
    %276 = vector.shape_cast %275 : vector<2x8xf32> to vector<2x8x1xf32>
    %cst_114 = arith.constant 3.200000e+01 : f32
    %277 = vector.broadcast %cst_114 : f32 to vector<2x8x1xf32>
    %278 = arith.divf %276, %277 : vector<2x8x1xf32>
    %279 = vector.broadcast %278 : vector<2x8x1xf32> to vector<2x8x32xf32>
    %280 = arith.subf %274, %279 : vector<2x8x32xf32>
    %281 = arith.mulf %280, %280 : vector<2x8x32xf32>
    %cst_115 = arith.constant dense<0.000000e+00> : vector<2x8xf32>
    %282 = vector.multi_reduction <add>, %281, %cst_115 [2] : vector<2x8x32xf32> to vector<2x8xf32>
    %283 = vector.shape_cast %282 : vector<2x8xf32> to vector<2x8x1xf32>
    %cst_116 = arith.constant 3.200000e+01 : f32
    %284 = vector.broadcast %cst_116 : f32 to vector<2x8x1xf32>
    %285 = arith.divf %283, %284 : vector<2x8x1xf32>
    %286 = vector.broadcast %278 : vector<2x8x1xf32> to vector<2x8x32xf32>
    %287 = arith.subf %274, %286 : vector<2x8x32xf32>
    %cst_117 = arith.constant 9.99999974E-6 : f32
    %288 = vector.broadcast %cst_117 : f32 to vector<2x8x1xf32>
    %289 = arith.addf %285, %288 : vector<2x8x1xf32>
    %290 = math.rsqrt %289 : vector<2x8x1xf32>
    %291 = vector.broadcast %290 : vector<2x8x1xf32> to vector<2x8x32xf32>
    %292 = arith.mulf %287, %291 : vector<2x8x32xf32>
    %293 = vector.shape_cast %23 : vector<1x32xf32> to vector<1x1x32xf32>
    %294 = vector.broadcast %293 : vector<1x1x32xf32> to vector<2x8x32xf32>
    %295 = arith.mulf %292, %294 : vector<2x8x32xf32>
    %296 = vector.shape_cast %25 : vector<1x32xf32> to vector<1x1x32xf32>
    %297 = vector.broadcast %296 : vector<1x1x32xf32> to vector<2x8x32xf32>
    %298 = arith.addf %295, %297 : vector<2x8x32xf32>
    %299 = vector.shape_cast %298 : vector<2x8x32xf32> to vector<16x32xf32>
    %300 = arith.truncf %299 : vector<16x32xf32> to vector<16x32xbf16>
    %cst_118 = arith.constant dense<0.000000e+00> : vector<16x128xf32>
    %301 = tpu.matmul %300, %27, %cst_118 {dimension_numbers = #tpu.dot_dimension_numbers<[1], [0], [0], [1], [0, 0, 1, 1], [], []>} : vector<16x32xbf16>, vector<32x128xbf16>, vector<16x128xf32> -> vector<16x128xf32>
    %302 = vector.broadcast %29 : vector<1x128xf32> to vector<16x128xf32>
    %303 = arith.addf %301, %302 : vector<16x128xf32>
    %cst_119 = arith.constant 0.000000e+00 : f32
    %304 = vector.broadcast %cst_119 : f32 to vector<16x128xf32>
    %305 = arith.maximumf %303, %304 : vector<16x128xf32>
    %306 = arith.truncf %305 : vector<16x128xf32> to vector<16x128xbf16>
    %cst_120 = arith.constant dense<0.000000e+00> : vector<16x32xf32>
    %307 = tpu.matmul %306, %31, %cst_120 {dimension_numbers = #tpu.dot_dimension_numbers<[1], [0], [0], [1], [0, 0, 1, 1], [], []>} : vector<16x128xbf16>, vector<128x32xbf16>, vector<16x32xf32> -> vector<16x32xf32>
    %308 = vector.broadcast %33 : vector<1x32xf32> to vector<16x32xf32>
    %309 = arith.addf %307, %308 : vector<16x32xf32>
    %310 = vector.shape_cast %309 : vector<16x32xf32> to vector<2x8x32xf32>
    %311 = arith.addf %274, %310 : vector<2x8x32xf32>
    %c1 = arith.constant 1 : index
    %c0_121 = arith.constant 0 : index
    %c0_122 = arith.constant 0 : index
    %312 = vector.load %arg2[%c1, %c0_121, %c0_122] : memref<2x1x32xf32, #tpu.memory_space<vmem>>, vector<1x1x32xf32>
    %313 = vector.shape_cast %312 : vector<1x1x32xf32> to vector<1x32xf32>
    %c1_123 = arith.constant 1 : index
    %c0_124 = arith.constant 0 : index
    %c0_125 = arith.constant 0 : index
    %314 = vector.load %arg3[%c1_123, %c0_124, %c0_125] : memref<2x1x32xf32, #tpu.memory_space<vmem>>, vector<1x1x32xf32>
    %315 = vector.shape_cast %314 : vector<1x1x32xf32> to vector<1x32xf32>
    %c1_126 = arith.constant 1 : index
    %c0_127 = arith.constant 0 : index
    %c0_128 = arith.constant 0 : index
    %316 = vector.load %arg4[%c1_126, %c0_127, %c0_128] : memref<2x32x96xbf16, #tpu.memory_space<vmem>>, vector<1x32x96xbf16>
    %317 = vector.shape_cast %316 : vector<1x32x96xbf16> to vector<32x96xbf16>
    %c1_129 = arith.constant 1 : index
    %c0_130 = arith.constant 0 : index
    %c0_131 = arith.constant 0 : index
    %318 = vector.load %arg5[%c1_129, %c0_130, %c0_131] : memref<2x32x32xbf16, #tpu.memory_space<vmem>>, vector<1x32x32xbf16>
    %319 = vector.shape_cast %318 : vector<1x32x32xbf16> to vector<32x32xbf16>
    %c1_132 = arith.constant 1 : index
    %c0_133 = arith.constant 0 : index
    %c0_134 = arith.constant 0 : index
    %320 = vector.load %arg6[%c1_132, %c0_133, %c0_134] : memref<2x1x32xf32, #tpu.memory_space<vmem>>, vector<1x1x32xf32>
    %321 = vector.shape_cast %320 : vector<1x1x32xf32> to vector<1x32xf32>
    %c1_135 = arith.constant 1 : index
    %c0_136 = arith.constant 0 : index
    %c0_137 = arith.constant 0 : index
    %322 = vector.load %arg7[%c1_135, %c0_136, %c0_137] : memref<2x1x32xf32, #tpu.memory_space<vmem>>, vector<1x1x32xf32>
    %323 = vector.shape_cast %322 : vector<1x1x32xf32> to vector<1x32xf32>
    %c1_138 = arith.constant 1 : index
    %c0_139 = arith.constant 0 : index
    %c0_140 = arith.constant 0 : index
    %324 = vector.load %arg8[%c1_138, %c0_139, %c0_140] : memref<2x32x32xbf16, #tpu.memory_space<vmem>>, vector<1x32x32xbf16>
    %325 = vector.shape_cast %324 : vector<1x32x32xbf16> to vector<32x32xbf16>
    %c1_141 = arith.constant 1 : index
    %c0_142 = arith.constant 0 : index
    %c0_143 = arith.constant 0 : index
    %326 = vector.load %arg9[%c1_141, %c0_142, %c0_143] : memref<2x32x64xbf16, #tpu.memory_space<vmem>>, vector<1x32x64xbf16>
    %327 = vector.shape_cast %326 : vector<1x32x64xbf16> to vector<32x64xbf16>
    %c1_144 = arith.constant 1 : index
    %c0_145 = arith.constant 0 : index
    %c0_146 = arith.constant 0 : index
    %328 = vector.load %arg10[%c1_144, %c0_145, %c0_146] : memref<2x32x32xbf16, #tpu.memory_space<vmem>>, vector<1x32x32xbf16>
    %329 = vector.shape_cast %328 : vector<1x32x32xbf16> to vector<32x32xbf16>
    %c1_147 = arith.constant 1 : index
    %c0_148 = arith.constant 0 : index
    %c0_149 = arith.constant 0 : index
    %330 = vector.load %arg11[%c1_147, %c0_148, %c0_149] : memref<2x1x32xf32, #tpu.memory_space<vmem>>, vector<1x1x32xf32>
    %331 = vector.shape_cast %330 : vector<1x1x32xf32> to vector<1x32xf32>
    %c1_150 = arith.constant 1 : index
    %c0_151 = arith.constant 0 : index
    %c0_152 = arith.constant 0 : index
    %332 = vector.load %arg12[%c1_150, %c0_151, %c0_152] : memref<2x1x32xf32, #tpu.memory_space<vmem>>, vector<1x1x32xf32>
    %333 = vector.shape_cast %332 : vector<1x1x32xf32> to vector<1x32xf32>
    %c1_153 = arith.constant 1 : index
    %c0_154 = arith.constant 0 : index
    %c0_155 = arith.constant 0 : index
    %334 = vector.load %arg13[%c1_153, %c0_154, %c0_155] : memref<2x32x128xbf16, #tpu.memory_space<vmem>>, vector<1x32x128xbf16>
    %335 = vector.shape_cast %334 : vector<1x32x128xbf16> to vector<32x128xbf16>
    %c1_156 = arith.constant 1 : index
    %c0_157 = arith.constant 0 : index
    %c0_158 = arith.constant 0 : index
    %336 = vector.load %arg14[%c1_156, %c0_157, %c0_158] : memref<2x1x128xf32, #tpu.memory_space<vmem>>, vector<1x1x128xf32>
    %337 = vector.shape_cast %336 : vector<1x1x128xf32> to vector<1x128xf32>
    %c1_159 = arith.constant 1 : index
    %c0_160 = arith.constant 0 : index
    %c0_161 = arith.constant 0 : index
    %338 = vector.load %arg15[%c1_159, %c0_160, %c0_161] : memref<2x128x32xbf16, #tpu.memory_space<vmem>>, vector<1x128x32xbf16>
    %339 = vector.shape_cast %338 : vector<1x128x32xbf16> to vector<128x32xbf16>
    %c1_162 = arith.constant 1 : index
    %c0_163 = arith.constant 0 : index
    %c0_164 = arith.constant 0 : index
    %340 = vector.load %arg16[%c1_162, %c0_163, %c0_164] : memref<2x1x32xf32, #tpu.memory_space<vmem>>, vector<1x1x32xf32>
    %341 = vector.shape_cast %340 : vector<1x1x32xf32> to vector<1x32xf32>
    %cst_165 = arith.constant dense<0.000000e+00> : vector<2x8xf32>
    %342 = vector.multi_reduction <add>, %311, %cst_165 [2] : vector<2x8x32xf32> to vector<2x8xf32>
    %343 = vector.shape_cast %342 : vector<2x8xf32> to vector<2x8x1xf32>
    %cst_166 = arith.constant 3.200000e+01 : f32
    %344 = vector.broadcast %cst_166 : f32 to vector<2x8x1xf32>
    %345 = arith.divf %343, %344 : vector<2x8x1xf32>
    %346 = vector.broadcast %345 : vector<2x8x1xf32> to vector<2x8x32xf32>
    %347 = arith.subf %311, %346 : vector<2x8x32xf32>
    %348 = arith.mulf %347, %347 : vector<2x8x32xf32>
    %cst_167 = arith.constant dense<0.000000e+00> : vector<2x8xf32>
    %349 = vector.multi_reduction <add>, %348, %cst_167 [2] : vector<2x8x32xf32> to vector<2x8xf32>
    %350 = vector.shape_cast %349 : vector<2x8xf32> to vector<2x8x1xf32>
    %cst_168 = arith.constant 3.200000e+01 : f32
    %351 = vector.broadcast %cst_168 : f32 to vector<2x8x1xf32>
    %352 = arith.divf %350, %351 : vector<2x8x1xf32>
    %353 = vector.broadcast %345 : vector<2x8x1xf32> to vector<2x8x32xf32>
    %354 = arith.subf %311, %353 : vector<2x8x32xf32>
    %cst_169 = arith.constant 9.99999974E-6 : f32
    %355 = vector.broadcast %cst_169 : f32 to vector<2x8x1xf32>
    %356 = arith.addf %352, %355 : vector<2x8x1xf32>
    %357 = math.rsqrt %356 : vector<2x8x1xf32>
    %358 = vector.broadcast %357 : vector<2x8x1xf32> to vector<2x8x32xf32>
    %359 = arith.mulf %354, %358 : vector<2x8x32xf32>
    %360 = vector.shape_cast %313 : vector<1x32xf32> to vector<1x1x32xf32>
    %361 = vector.broadcast %360 : vector<1x1x32xf32> to vector<2x8x32xf32>
    %362 = arith.mulf %359, %361 : vector<2x8x32xf32>
    %363 = vector.shape_cast %315 : vector<1x32xf32> to vector<1x1x32xf32>
    %364 = vector.broadcast %363 : vector<1x1x32xf32> to vector<2x8x32xf32>
    %365 = arith.addf %362, %364 : vector<2x8x32xf32>
    %366 = vector.shape_cast %365 : vector<2x8x32xf32> to vector<16x32xf32>
    %367 = arith.truncf %366 : vector<16x32xf32> to vector<16x32xbf16>
    %cst_170 = arith.constant dense<0.000000e+00> : vector<16x96xf32>
    %368 = tpu.matmul %367, %317, %cst_170 {dimension_numbers = #tpu.dot_dimension_numbers<[1], [0], [0], [1], [0, 0, 1, 1], [], []>} : vector<16x32xbf16>, vector<32x96xbf16>, vector<16x96xf32> -> vector<16x96xf32>
    %369 = vector.shape_cast %368 : vector<16x96xf32> to vector<2x8x96xf32>
    %370 = vector.extract_strided_slice %369 {offsets = [0, 0, 0], sizes = [2, 8, 32], strides = [1, 1, 1]} : vector<2x8x96xf32> to vector<2x8x32xf32>
    %371 = vector.extract_strided_slice %369 {offsets = [0, 0, 32], sizes = [2, 8, 32], strides = [1, 1, 1]} : vector<2x8x96xf32> to vector<2x8x32xf32>
    %372 = vector.extract_strided_slice %369 {offsets = [0, 0, 64], sizes = [2, 8, 32], strides = [1, 1, 1]} : vector<2x8x96xf32> to vector<2x8x32xf32>
    %373 = vector.extract_strided_slice %370 {offsets = [0, 0, 0], sizes = [2, 8, 8], strides = [1, 1, 1]} : vector<2x8x32xf32> to vector<2x8x8xf32>
    %374 = arith.truncf %373 : vector<2x8x8xf32> to vector<2x8x8xbf16>
    %375 = vector.extract_strided_slice %371 {offsets = [0, 0, 0], sizes = [2, 8, 8], strides = [1, 1, 1]} : vector<2x8x32xf32> to vector<2x8x8xf32>
    %376 = arith.truncf %375 : vector<2x8x8xf32> to vector<2x8x8xbf16>
    %377 = vector.extract_strided_slice %372 {offsets = [0, 0, 0], sizes = [2, 8, 8], strides = [1, 1, 1]} : vector<2x8x32xf32> to vector<2x8x8xf32>
    %378 = arith.truncf %377 : vector<2x8x8xf32> to vector<2x8x8xbf16>
    "tpu.trace_start"() <{level = 10 : i32, message = "btd,bsd->bts"}> : () -> ()
    %cst_171 = arith.constant dense<0.000000e+00> : vector<2x8x8xf32>
    %379 = tpu.matmul %374, %376, %cst_171 {dimension_numbers = #tpu.dot_dimension_numbers<[2], [2], [1], [1], [0, 0, 0, 1, 1, 1], [0], [0]>} : vector<2x8x8xbf16>, vector<2x8x8xbf16>, vector<2x8x8xf32> -> vector<2x8x8xf32>
    "tpu.trace_stop"() : () -> ()
    %cst_172 = arith.constant dense<0xFF800000> : vector<2x8xf32>
    %380 = vector.multi_reduction <maximumf>, %379, %cst_172 [2] : vector<2x8x8xf32> to vector<2x8xf32>
    %381 = vector.shape_cast %380 : vector<2x8xf32> to vector<2x8x1xf32>
    %382 = vector.broadcast %381 : vector<2x8x1xf32> to vector<2x8x8xf32>
    %383 = arith.subf %379, %382 : vector<2x8x8xf32>
    %384 = math.exp %383 : vector<2x8x8xf32>
    %cst_173 = arith.constant dense<0.000000e+00> : vector<2x8xf32>
    %385 = vector.multi_reduction <add>, %384, %cst_173 [2] : vector<2x8x8xf32> to vector<2x8xf32>
    %386 = vector.shape_cast %385 : vector<2x8xf32> to vector<2x8x1xf32>
    %387 = tpu.reciprocal %386 {approx = true} : vector<2x8x1xf32> -> vector<2x8x1xf32>
    %388 = vector.broadcast %387 : vector<2x8x1xf32> to vector<2x8x8xf32>
    %389 = arith.mulf %384, %388 : vector<2x8x8xf32>
    %390 = arith.truncf %389 : vector<2x8x8xf32> to vector<2x8x8xbf16>
    "tpu.trace_start"() <{level = 10 : i32, message = "bts,bsd->btd"}> : () -> ()
    %cst_174 = arith.constant dense<0.000000e+00> : vector<2x8x8xf32>
    %391 = tpu.matmul %390, %378, %cst_174 {dimension_numbers = #tpu.dot_dimension_numbers<[2], [1], [1], [2], [0, 0, 0, 1, 1, 2], [0], [0]>} : vector<2x8x8xbf16>, vector<2x8x8xbf16>, vector<2x8x8xf32> -> vector<2x8x8xf32>
    "tpu.trace_stop"() : () -> ()
    %392 = vector.shape_cast %391 : vector<2x8x8xf32> to vector<16x8xf32>
    %c0_175 = arith.constant 0 : index
    %c0_176 = arith.constant 0 : index
    %393 = vector.load %arg22[%c0_175, %c0_176] : memref<16x32xf32, #tpu.memory_space<vmem>>, vector<16x8xf32>
    tpu.vector_store %arg22[%c0_175, %c0_176], %392 {strides = array<i32>} : memref<16x32xf32, #tpu.memory_space<vmem>>, vector<16x8xf32>,
    %394 = vector.extract_strided_slice %370 {offsets = [0, 0, 8], sizes = [2, 8, 8], strides = [1, 1, 1]} : vector<2x8x32xf32> to vector<2x8x8xf32>
    %395 = arith.truncf %394 : vector<2x8x8xf32> to vector<2x8x8xbf16>
    %396 = vector.extract_strided_slice %371 {offsets = [0, 0, 8], sizes = [2, 8, 8], strides = [1, 1, 1]} : vector<2x8x32xf32> to vector<2x8x8xf32>
    %397 = arith.truncf %396 : vector<2x8x8xf32> to vector<2x8x8xbf16>
    %398 = vector.extract_strided_slice %372 {offsets = [0, 0, 8], sizes = [2, 8, 8], strides = [1, 1, 1]} : vector<2x8x32xf32> to vector<2x8x8xf32>
    %399 = arith.truncf %398 : vector<2x8x8xf32> to vector<2x8x8xbf16>
    "tpu.trace_start"() <{level = 10 : i32, message = "btd,bsd->bts"}> : () -> ()
    %cst_177 = arith.constant dense<0.000000e+00> : vector<2x8x8xf32>
    %400 = tpu.matmul %395, %397, %cst_177 {dimension_numbers = #tpu.dot_dimension_numbers<[2], [2], [1], [1], [0, 0, 0, 1, 1, 1], [0], [0]>} : vector<2x8x8xbf16>, vector<2x8x8xbf16>, vector<2x8x8xf32> -> vector<2x8x8xf32>
    "tpu.trace_stop"() : () -> ()
    %cst_178 = arith.constant dense<0xFF800000> : vector<2x8xf32>
    %401 = vector.multi_reduction <maximumf>, %400, %cst_178 [2] : vector<2x8x8xf32> to vector<2x8xf32>
    %402 = vector.shape_cast %401 : vector<2x8xf32> to vector<2x8x1xf32>
    %403 = vector.broadcast %402 : vector<2x8x1xf32> to vector<2x8x8xf32>
    %404 = arith.subf %400, %403 : vector<2x8x8xf32>
    %405 = math.exp %404 : vector<2x8x8xf32>
    %cst_179 = arith.constant dense<0.000000e+00> : vector<2x8xf32>
    %406 = vector.multi_reduction <add>, %405, %cst_179 [2] : vector<2x8x8xf32> to vector<2x8xf32>
    %407 = vector.shape_cast %406 : vector<2x8xf32> to vector<2x8x1xf32>
    %408 = tpu.reciprocal %407 {approx = true} : vector<2x8x1xf32> -> vector<2x8x1xf32>
    %409 = vector.broadcast %408 : vector<2x8x1xf32> to vector<2x8x8xf32>
    %410 = arith.mulf %405, %409 : vector<2x8x8xf32>
    %411 = arith.truncf %410 : vector<2x8x8xf32> to vector<2x8x8xbf16>
    "tpu.trace_start"() <{level = 10 : i32, message = "bts,bsd->btd"}> : () -> ()
    %cst_180 = arith.constant dense<0.000000e+00> : vector<2x8x8xf32>
    %412 = tpu.matmul %411, %399, %cst_180 {dimension_numbers = #tpu.dot_dimension_numbers<[2], [1], [1], [2], [0, 0, 0, 1, 1, 2], [0], [0]>} : vector<2x8x8xbf16>, vector<2x8x8xbf16>, vector<2x8x8xf32> -> vector<2x8x8xf32>
    "tpu.trace_stop"() : () -> ()
    %413 = vector.shape_cast %412 : vector<2x8x8xf32> to vector<16x8xf32>
    %c0_181 = arith.constant 0 : index
    %c8_182 = arith.constant 8 : index
    %414 = vector.load %arg22[%c0_181, %c8_182] : memref<16x32xf32, #tpu.memory_space<vmem>>, vector<16x8xf32>
    tpu.vector_store %arg22[%c0_181, %c8_182], %413 {strides = array<i32>} : memref<16x32xf32, #tpu.memory_space<vmem>>, vector<16x8xf32>,
    %415 = vector.extract_strided_slice %370 {offsets = [0, 0, 16], sizes = [2, 8, 8], strides = [1, 1, 1]} : vector<2x8x32xf32> to vector<2x8x8xf32>
    %416 = arith.truncf %415 : vector<2x8x8xf32> to vector<2x8x8xbf16>
    %417 = vector.extract_strided_slice %371 {offsets = [0, 0, 16], sizes = [2, 8, 8], strides = [1, 1, 1]} : vector<2x8x32xf32> to vector<2x8x8xf32>
    %418 = arith.truncf %417 : vector<2x8x8xf32> to vector<2x8x8xbf16>
    %419 = vector.extract_strided_slice %372 {offsets = [0, 0, 16], sizes = [2, 8, 8], strides = [1, 1, 1]} : vector<2x8x32xf32> to vector<2x8x8xf32>
    %420 = arith.truncf %419 : vector<2x8x8xf32> to vector<2x8x8xbf16>
    "tpu.trace_start"() <{level = 10 : i32, message = "btd,bsd->bts"}> : () -> ()
    %cst_183 = arith.constant dense<0.000000e+00> : vector<2x8x8xf32>
    %421 = tpu.matmul %416, %418, %cst_183 {dimension_numbers = #tpu.dot_dimension_numbers<[2], [2], [1], [1], [0, 0, 0, 1, 1, 1], [0], [0]>} : vector<2x8x8xbf16>, vector<2x8x8xbf16>, vector<2x8x8xf32> -> vector<2x8x8xf32>
    "tpu.trace_stop"() : () -> ()
    %cst_184 = arith.constant dense<0xFF800000> : vector<2x8xf32>
    %422 = vector.multi_reduction <maximumf>, %421, %cst_184 [2] : vector<2x8x8xf32> to vector<2x8xf32>
    %423 = vector.shape_cast %422 : vector<2x8xf32> to vector<2x8x1xf32>
    %424 = vector.broadcast %423 : vector<2x8x1xf32> to vector<2x8x8xf32>
    %425 = arith.subf %421, %424 : vector<2x8x8xf32>
    %426 = math.exp %425 : vector<2x8x8xf32>
    %cst_185 = arith.constant dense<0.000000e+00> : vector<2x8xf32>
    %427 = vector.multi_reduction <add>, %426, %cst_185 [2] : vector<2x8x8xf32> to vector<2x8xf32>
    %428 = vector.shape_cast %427 : vector<2x8xf32> to vector<2x8x1xf32>
    %429 = tpu.reciprocal %428 {approx = true} : vector<2x8x1xf32> -> vector<2x8x1xf32>
    %430 = vector.broadcast %429 : vector<2x8x1xf32> to vector<2x8x8xf32>
    %431 = arith.mulf %426, %430 : vector<2x8x8xf32>
    %432 = arith.truncf %431 : vector<2x8x8xf32> to vector<2x8x8xbf16>
    "tpu.trace_start"() <{level = 10 : i32, message = "bts,bsd->btd"}> : () -> ()
    %cst_186 = arith.constant dense<0.000000e+00> : vector<2x8x8xf32>
    %433 = tpu.matmul %432, %420, %cst_186 {dimension_numbers = #tpu.dot_dimension_numbers<[2], [1], [1], [2], [0, 0, 0, 1, 1, 2], [0], [0]>} : vector<2x8x8xbf16>, vector<2x8x8xbf16>, vector<2x8x8xf32> -> vector<2x8x8xf32>
    "tpu.trace_stop"() : () -> ()
    %434 = vector.shape_cast %433 : vector<2x8x8xf32> to vector<16x8xf32>
    %c0_187 = arith.constant 0 : index
    %c16_188 = arith.constant 16 : index
    %435 = vector.load %arg22[%c0_187, %c16_188] : memref<16x32xf32, #tpu.memory_space<vmem>>, vector<16x8xf32>
    tpu.vector_store %arg22[%c0_187, %c16_188], %434 {strides = array<i32>} : memref<16x32xf32, #tpu.memory_space<vmem>>, vector<16x8xf32>,
    %436 = vector.extract_strided_slice %370 {offsets = [0, 0, 24], sizes = [2, 8, 8], strides = [1, 1, 1]} : vector<2x8x32xf32> to vector<2x8x8xf32>
    %437 = arith.truncf %436 : vector<2x8x8xf32> to vector<2x8x8xbf16>
    %438 = vector.extract_strided_slice %371 {offsets = [0, 0, 24], sizes = [2, 8, 8], strides = [1, 1, 1]} : vector<2x8x32xf32> to vector<2x8x8xf32>
    %439 = arith.truncf %438 : vector<2x8x8xf32> to vector<2x8x8xbf16>
    %440 = vector.extract_strided_slice %372 {offsets = [0, 0, 24], sizes = [2, 8, 8], strides = [1, 1, 1]} : vector<2x8x32xf32> to vector<2x8x8xf32>
    %441 = arith.truncf %440 : vector<2x8x8xf32> to vector<2x8x8xbf16>
    "tpu.trace_start"() <{level = 10 : i32, message = "btd,bsd->bts"}> : () -> ()
    %cst_189 = arith.constant dense<0.000000e+00> : vector<2x8x8xf32>
    %442 = tpu.matmul %437, %439, %cst_189 {dimension_numbers = #tpu.dot_dimension_numbers<[2], [2], [1], [1], [0, 0, 0, 1, 1, 1], [0], [0]>} : vector<2x8x8xbf16>, vector<2x8x8xbf16>, vector<2x8x8xf32> -> vector<2x8x8xf32>
    "tpu.trace_stop"() : () -> ()
    %cst_190 = arith.constant dense<0xFF800000> : vector<2x8xf32>
    %443 = vector.multi_reduction <maximumf>, %442, %cst_190 [2] : vector<2x8x8xf32> to vector<2x8xf32>
    %444 = vector.shape_cast %443 : vector<2x8xf32> to vector<2x8x1xf32>
    %445 = vector.broadcast %444 : vector<2x8x1xf32> to vector<2x8x8xf32>
    %446 = arith.subf %442, %445 : vector<2x8x8xf32>
    %447 = math.exp %446 : vector<2x8x8xf32>
    %cst_191 = arith.constant dense<0.000000e+00> : vector<2x8xf32>
    %448 = vector.multi_reduction <add>, %447, %cst_191 [2] : vector<2x8x8xf32> to vector<2x8xf32>
    %449 = vector.shape_cast %448 : vector<2x8xf32> to vector<2x8x1xf32>
    %450 = tpu.reciprocal %449 {approx = true} : vector<2x8x1xf32> -> vector<2x8x1xf32>
    %451 = vector.broadcast %450 : vector<2x8x1xf32> to vector<2x8x8xf32>
    %452 = arith.mulf %447, %451 : vector<2x8x8xf32>
    %453 = arith.truncf %452 : vector<2x8x8xf32> to vector<2x8x8xbf16>
    "tpu.trace_start"() <{level = 10 : i32, message = "bts,bsd->btd"}> : () -> ()
    %cst_192 = arith.constant dense<0.000000e+00> : vector<2x8x8xf32>
    %454 = tpu.matmul %453, %441, %cst_192 {dimension_numbers = #tpu.dot_dimension_numbers<[2], [1], [1], [2], [0, 0, 0, 1, 1, 2], [0], [0]>} : vector<2x8x8xbf16>, vector<2x8x8xbf16>, vector<2x8x8xf32> -> vector<2x8x8xf32>
    "tpu.trace_stop"() : () -> ()
    %455 = vector.shape_cast %454 : vector<2x8x8xf32> to vector<16x8xf32>
    %c0_193 = arith.constant 0 : index
    %c24_194 = arith.constant 24 : index
    %456 = vector.load %arg22[%c0_193, %c24_194] : memref<16x32xf32, #tpu.memory_space<vmem>>, vector<16x8xf32>
    tpu.vector_store %arg22[%c0_193, %c24_194], %455 {strides = array<i32>} : memref<16x32xf32, #tpu.memory_space<vmem>>, vector<16x8xf32>,
    %c0_195 = arith.constant 0 : index
    %c0_196 = arith.constant 0 : index
    %457 = vector.load %arg22[%c0_195, %c0_196] : memref<16x32xf32, #tpu.memory_space<vmem>>, vector<16x32xf32>
    %458 = arith.truncf %457 : vector<16x32xf32> to vector<16x32xbf16>
    %cst_197 = arith.constant dense<0.000000e+00> : vector<16x32xf32>
    %459 = tpu.matmul %458, %319, %cst_197 {dimension_numbers = #tpu.dot_dimension_numbers<[1], [0], [0], [1], [0, 0, 1, 1], [], []>} : vector<16x32xbf16>, vector<32x32xbf16>, vector<16x32xf32> -> vector<16x32xf32>
    %460 = vector.shape_cast %459 : vector<16x32xf32> to vector<2x8x32xf32>
    %461 = arith.addf %311, %460 : vector<2x8x32xf32>
    %cst_198 = arith.constant dense<0.000000e+00> : vector<2x8xf32>
    %462 = vector.multi_reduction <add>, %461, %cst_198 [2] : vector<2x8x32xf32> to vector<2x8xf32>
    %463 = vector.shape_cast %462 : vector<2x8xf32> to vector<2x8x1xf32>
    %cst_199 = arith.constant 3.200000e+01 : f32
    %464 = vector.broadcast %cst_199 : f32 to vector<2x8x1xf32>
    %465 = arith.divf %463, %464 : vector<2x8x1xf32>
    %466 = vector.broadcast %465 : vector<2x8x1xf32> to vector<2x8x32xf32>
    %467 = arith.subf %461, %466 : vector<2x8x32xf32>
    %468 = arith.mulf %467, %467 : vector<2x8x32xf32>
    %cst_200 = arith.constant dense<0.000000e+00> : vector<2x8xf32>
    %469 = vector.multi_reduction <add>, %468, %cst_200 [2] : vector<2x8x32xf32> to vector<2x8xf32>
    %470 = vector.shape_cast %469 : vector<2x8xf32> to vector<2x8x1xf32>
    %cst_201 = arith.constant 3.200000e+01 : f32
    %471 = vector.broadcast %cst_201 : f32 to vector<2x8x1xf32>
    %472 = arith.divf %470, %471 : vector<2x8x1xf32>
    %473 = vector.broadcast %465 : vector<2x8x1xf32> to vector<2x8x32xf32>
    %474 = arith.subf %461, %473 : vector<2x8x32xf32>
    %cst_202 = arith.constant 9.99999974E-6 : f32
    %475 = vector.broadcast %cst_202 : f32 to vector<2x8x1xf32>
    %476 = arith.addf %472, %475 : vector<2x8x1xf32>
    %477 = math.rsqrt %476 : vector<2x8x1xf32>
    %478 = vector.broadcast %477 : vector<2x8x1xf32> to vector<2x8x32xf32>
    %479 = arith.mulf %474, %478 : vector<2x8x32xf32>
    %480 = vector.shape_cast %321 : vector<1x32xf32> to vector<1x1x32xf32>
    %481 = vector.broadcast %480 : vector<1x1x32xf32> to vector<2x8x32xf32>
    %482 = arith.mulf %479, %481 : vector<2x8x32xf32>
    %483 = vector.shape_cast %323 : vector<1x32xf32> to vector<1x1x32xf32>
    %484 = vector.broadcast %483 : vector<1x1x32xf32> to vector<2x8x32xf32>
    %485 = arith.addf %482, %484 : vector<2x8x32xf32>
    %486 = vector.shape_cast %485 : vector<2x8x32xf32> to vector<16x32xf32>
    %487 = arith.truncf %486 : vector<16x32xf32> to vector<16x32xbf16>
    %cst_203 = arith.constant dense<0.000000e+00> : vector<16x32xf32>
    %488 = tpu.matmul %487, %325, %cst_203 {dimension_numbers = #tpu.dot_dimension_numbers<[1], [0], [0], [1], [0, 0, 1, 1], [], []>} : vector<16x32xbf16>, vector<32x32xbf16>, vector<16x32xf32> -> vector<16x32xf32>
    %489 = vector.shape_cast %488 : vector<16x32xf32> to vector<2x8x32xf32>
    %cst_204 = arith.constant dense<0.000000e+00> : vector<20x64xf32>
    %490 = tpu.matmul %3, %327, %cst_204 {dimension_numbers = #tpu.dot_dimension_numbers<[1], [0], [0], [1], [0, 0, 1, 1], [], []>} : vector<20x32xbf16>, vector<32x64xbf16>, vector<20x64xf32> -> vector<20x64xf32>
    %491 = vector.shape_cast %490 : vector<20x64xf32> to vector<2x10x64xf32>
    %492 = vector.extract_strided_slice %491 {offsets = [0, 0, 0], sizes = [2, 10, 32], strides = [1, 1, 1]} : vector<2x10x64xf32> to vector<2x10x32xf32>
    %493 = vector.extract_strided_slice %491 {offsets = [0, 0, 32], sizes = [2, 10, 32], strides = [1, 1, 1]} : vector<2x10x64xf32> to vector<2x10x32xf32>
    %494 = vector.extract_strided_slice %489 {offsets = [0, 0, 0], sizes = [2, 8, 16], strides = [1, 1, 1]} : vector<2x8x32xf32> to vector<2x8x16xf32>
    %495 = arith.truncf %494 : vector<2x8x16xf32> to vector<2x8x16xbf16>
    %496 = vector.extract_strided_slice %492 {offsets = [0, 0, 0], sizes = [2, 10, 16], strides = [1, 1, 1]} : vector<2x10x32xf32> to vector<2x10x16xf32>
    %497 = arith.truncf %496 : vector<2x10x16xf32> to vector<2x10x16xbf16>
    %498 = vector.extract_strided_slice %493 {offsets = [0, 0, 0], sizes = [2, 10, 16], strides = [1, 1, 1]} : vector<2x10x32xf32> to vector<2x10x16xf32>
    %499 = arith.truncf %498 : vector<2x10x16xf32> to vector<2x10x16xbf16>
    "tpu.trace_start"() <{level = 10 : i32, message = "btd,bsd->bts"}> : () -> ()
    %cst_205 = arith.constant dense<0.000000e+00> : vector<2x8x10xf32>
    %500 = tpu.matmul %495, %497, %cst_205 {dimension_numbers = #tpu.dot_dimension_numbers<[2], [2], [1], [1], [0, 0, 0, 1, 1, 1], [0], [0]>} : vector<2x8x16xbf16>, vector<2x10x16xbf16>, vector<2x8x10xf32> -> vector<2x8x10xf32>
    "tpu.trace_stop"() : () -> ()
    %cst_206 = arith.constant dense<0xFF800000> : vector<2x8xf32>
    %501 = vector.multi_reduction <maximumf>, %500, %cst_206 [2] : vector<2x8x10xf32> to vector<2x8xf32>
    %502 = vector.shape_cast %501 : vector<2x8xf32> to vector<2x8x1xf32>
    %503 = vector.broadcast %502 : vector<2x8x1xf32> to vector<2x8x10xf32>
    %504 = arith.subf %500, %503 : vector<2x8x10xf32>
    %505 = math.exp %504 : vector<2x8x10xf32>
    %cst_207 = arith.constant dense<0.000000e+00> : vector<2x8xf32>
    %506 = vector.multi_reduction <add>, %505, %cst_207 [2] : vector<2x8x10xf32> to vector<2x8xf32>
    %507 = vector.shape_cast %506 : vector<2x8xf32> to vector<2x8x1xf32>
    %508 = tpu.reciprocal %507 {approx = true} : vector<2x8x1xf32> -> vector<2x8x1xf32>
    %509 = vector.broadcast %508 : vector<2x8x1xf32> to vector<2x8x10xf32>
    %510 = arith.mulf %505, %509 : vector<2x8x10xf32>
    %511 = arith.truncf %510 : vector<2x8x10xf32> to vector<2x8x10xbf16>
    "tpu.trace_start"() <{level = 10 : i32, message = "bts,bsd->btd"}> : () -> ()
    %cst_208 = arith.constant dense<0.000000e+00> : vector<2x8x16xf32>
    %512 = tpu.matmul %511, %499, %cst_208 {dimension_numbers = #tpu.dot_dimension_numbers<[2], [1], [1], [2], [0, 0, 0, 1, 1, 2], [0], [0]>} : vector<2x8x10xbf16>, vector<2x10x16xbf16>, vector<2x8x16xf32> -> vector<2x8x16xf32>
    "tpu.trace_stop"() : () -> ()
    %513 = vector.shape_cast %512 : vector<2x8x16xf32> to vector<16x16xf32>
    %c0_209 = arith.constant 0 : index
    %c0_210 = arith.constant 0 : index
    %514 = vector.load %arg22[%c0_209, %c0_210] : memref<16x32xf32, #tpu.memory_space<vmem>>, vector<16x16xf32>
    tpu.vector_store %arg22[%c0_209, %c0_210], %513 {strides = array<i32>} : memref<16x32xf32, #tpu.memory_space<vmem>>, vector<16x16xf32>,
    %515 = vector.extract_strided_slice %489 {offsets = [0, 0, 16], sizes = [2, 8, 16], strides = [1, 1, 1]} : vector<2x8x32xf32> to vector<2x8x16xf32>
    %516 = arith.truncf %515 : vector<2x8x16xf32> to vector<2x8x16xbf16>
    %517 = vector.extract_strided_slice %492 {offsets = [0, 0, 16], sizes = [2, 10, 16], strides = [1, 1, 1]} : vector<2x10x32xf32> to vector<2x10x16xf32>
    %518 = arith.truncf %517 : vector<2x10x16xf32> to vector<2x10x16xbf16>
    %519 = vector.extract_strided_slice %493 {offsets = [0, 0, 16], sizes = [2, 10, 16], strides = [1, 1, 1]} : vector<2x10x32xf32> to vector<2x10x16xf32>
    %520 = arith.truncf %519 : vector<2x10x16xf32> to vector<2x10x16xbf16>
    "tpu.trace_start"() <{level = 10 : i32, message = "btd,bsd->bts"}> : () -> ()
    %cst_211 = arith.constant dense<0.000000e+00> : vector<2x8x10xf32>
    %521 = tpu.matmul %516, %518, %cst_211 {dimension_numbers = #tpu.dot_dimension_numbers<[2], [2], [1], [1], [0, 0, 0, 1, 1, 1], [0], [0]>} : vector<2x8x16xbf16>, vector<2x10x16xbf16>, vector<2x8x10xf32> -> vector<2x8x10xf32>
    "tpu.trace_stop"() : () -> ()
    %cst_212 = arith.constant dense<0xFF800000> : vector<2x8xf32>
    %522 = vector.multi_reduction <maximumf>, %521, %cst_212 [2] : vector<2x8x10xf32> to vector<2x8xf32>
    %523 = vector.shape_cast %522 : vector<2x8xf32> to vector<2x8x1xf32>
    %524 = vector.broadcast %523 : vector<2x8x1xf32> to vector<2x8x10xf32>
    %525 = arith.subf %521, %524 : vector<2x8x10xf32>
    %526 = math.exp %525 : vector<2x8x10xf32>
    %cst_213 = arith.constant dense<0.000000e+00> : vector<2x8xf32>
    %527 = vector.multi_reduction <add>, %526, %cst_213 [2] : vector<2x8x10xf32> to vector<2x8xf32>
    %528 = vector.shape_cast %527 : vector<2x8xf32> to vector<2x8x1xf32>
    %529 = tpu.reciprocal %528 {approx = true} : vector<2x8x1xf32> -> vector<2x8x1xf32>
    %530 = vector.broadcast %529 : vector<2x8x1xf32> to vector<2x8x10xf32>
    %531 = arith.mulf %526, %530 : vector<2x8x10xf32>
    %532 = arith.truncf %531 : vector<2x8x10xf32> to vector<2x8x10xbf16>
    "tpu.trace_start"() <{level = 10 : i32, message = "bts,bsd->btd"}> : () -> ()
    %cst_214 = arith.constant dense<0.000000e+00> : vector<2x8x16xf32>
    %533 = tpu.matmul %532, %520, %cst_214 {dimension_numbers = #tpu.dot_dimension_numbers<[2], [1], [1], [2], [0, 0, 0, 1, 1, 2], [0], [0]>} : vector<2x8x10xbf16>, vector<2x10x16xbf16>, vector<2x8x16xf32> -> vector<2x8x16xf32>
    "tpu.trace_stop"() : () -> ()
    %534 = vector.shape_cast %533 : vector<2x8x16xf32> to vector<16x16xf32>
    %c0_215 = arith.constant 0 : index
    %c16_216 = arith.constant 16 : index
    %535 = vector.load %arg22[%c0_215, %c16_216] : memref<16x32xf32, #tpu.memory_space<vmem>>, vector<16x16xf32>
    tpu.vector_store %arg22[%c0_215, %c16_216], %534 {strides = array<i32>} : memref<16x32xf32, #tpu.memory_space<vmem>>, vector<16x16xf32>,
    %c0_217 = arith.constant 0 : index
    %c0_218 = arith.constant 0 : index
    %536 = vector.load %arg22[%c0_217, %c0_218] : memref<16x32xf32, #tpu.memory_space<vmem>>, vector<16x32xf32>
    %537 = arith.truncf %536 : vector<16x32xf32> to vector<16x32xbf16>
    %cst_219 = arith.constant dense<0.000000e+00> : vector<16x32xf32>
    %538 = tpu.matmul %537, %329, %cst_219 {dimension_numbers = #tpu.dot_dimension_numbers<[1], [0], [0], [1], [0, 0, 1, 1], [], []>} : vector<16x32xbf16>, vector<32x32xbf16>, vector<16x32xf32> -> vector<16x32xf32>
    %539 = vector.shape_cast %538 : vector<16x32xf32> to vector<2x8x32xf32>
    %540 = arith.addf %461, %539 : vector<2x8x32xf32>
    %cst_220 = arith.constant dense<0.000000e+00> : vector<2x8xf32>
    %541 = vector.multi_reduction <add>, %540, %cst_220 [2] : vector<2x8x32xf32> to vector<2x8xf32>
    %542 = vector.shape_cast %541 : vector<2x8xf32> to vector<2x8x1xf32>
    %cst_221 = arith.constant 3.200000e+01 : f32
    %543 = vector.broadcast %cst_221 : f32 to vector<2x8x1xf32>
    %544 = arith.divf %542, %543 : vector<2x8x1xf32>
    %545 = vector.broadcast %544 : vector<2x8x1xf32> to vector<2x8x32xf32>
    %546 = arith.subf %540, %545 : vector<2x8x32xf32>
    %547 = arith.mulf %546, %546 : vector<2x8x32xf32>
    %cst_222 = arith.constant dense<0.000000e+00> : vector<2x8xf32>
    %548 = vector.multi_reduction <add>, %547, %cst_222 [2] : vector<2x8x32xf32> to vector<2x8xf32>
    %549 = vector.shape_cast %548 : vector<2x8xf32> to vector<2x8x1xf32>
    %cst_223 = arith.constant 3.200000e+01 : f32
    %550 = vector.broadcast %cst_223 : f32 to vector<2x8x1xf32>
    %551 = arith.divf %549, %550 : vector<2x8x1xf32>
    %552 = vector.broadcast %544 : vector<2x8x1xf32> to vector<2x8x32xf32>
    %553 = arith.subf %540, %552 : vector<2x8x32xf32>
    %cst_224 = arith.constant 9.99999974E-6 : f32
    %554 = vector.broadcast %cst_224 : f32 to vector<2x8x1xf32>
    %555 = arith.addf %551, %554 : vector<2x8x1xf32>
    %556 = math.rsqrt %555 : vector<2x8x1xf32>
    %557 = vector.broadcast %556 : vector<2x8x1xf32> to vector<2x8x32xf32>
    %558 = arith.mulf %553, %557 : vector<2x8x32xf32>
    %559 = vector.shape_cast %331 : vector<1x32xf32> to vector<1x1x32xf32>
    %560 = vector.broadcast %559 : vector<1x1x32xf32> to vector<2x8x32xf32>
    %561 = arith.mulf %558, %560 : vector<2x8x32xf32>
    %562 = vector.shape_cast %333 : vector<1x32xf32> to vector<1x1x32xf32>
    %563 = vector.broadcast %562 : vector<1x1x32xf32> to vector<2x8x32xf32>
    %564 = arith.addf %561, %563 : vector<2x8x32xf32>
    %565 = vector.shape_cast %564 : vector<2x8x32xf32> to vector<16x32xf32>
    %566 = arith.truncf %565 : vector<16x32xf32> to vector<16x32xbf16>
    %cst_225 = arith.constant dense<0.000000e+00> : vector<16x128xf32>
    %567 = tpu.matmul %566, %335, %cst_225 {dimension_numbers = #tpu.dot_dimension_numbers<[1], [0], [0], [1], [0, 0, 1, 1], [], []>} : vector<16x32xbf16>, vector<32x128xbf16>, vector<16x128xf32> -> vector<16x128xf32>
    %568 = vector.broadcast %337 : vector<1x128xf32> to vector<16x128xf32>
    %569 = arith.addf %567, %568 : vector<16x128xf32>
    %cst_226 = arith.constant 0.000000e+00 : f32
    %570 = vector.broadcast %cst_226 : f32 to vector<16x128xf32>
    %571 = arith.maximumf %569, %570 : vector<16x128xf32>
    %572 = arith.truncf %571 : vector<16x128xf32> to vector<16x128xbf16>
    %cst_227 = arith.constant dense<0.000000e+00> : vector<16x32xf32>
    %573 = tpu.matmul %572, %339, %cst_227 {dimension_numbers = #tpu.dot_dimension_numbers<[1], [0], [0], [1], [0, 0, 1, 1], [], []>} : vector<16x128xbf16>, vector<128x32xbf16>, vector<16x32xf32> -> vector<16x32xf32>
    %574 = vector.broadcast %341 : vector<1x32xf32> to vector<16x32xf32>
    %575 = arith.addf %573, %574 : vector<16x32xf32>
    %576 = vector.shape_cast %575 : vector<16x32xf32> to vector<2x8x32xf32>
    %577 = arith.addf %540, %576 : vector<2x8x32xf32>
    %c0_228 = arith.constant 0 : index
    %c0_229 = arith.constant 0 : index
    %578 = vector.load %arg17[%c0_228, %c0_229] : memref<1x32xf32, #tpu.memory_space<vmem>>, vector<1x32xf32>
    %c0_230 = arith.constant 0 : index
    %c0_231 = arith.constant 0 : index
    %579 = vector.load %arg18[%c0_230, %c0_231] : memref<1x32xf32, #tpu.memory_space<vmem>>, vector<1x32xf32>
    %cst_232 = arith.constant dense<0.000000e+00> : vector<2x8xf32>
    %580 = vector.multi_reduction <add>, %577, %cst_232 [2] : vector<2x8x32xf32> to vector<2x8xf32>
    %581 = vector.shape_cast %580 : vector<2x8xf32> to vector<2x8x1xf32>
    %cst_233 = arith.constant 3.200000e+01 : f32
    %582 = vector.broadcast %cst_233 : f32 to vector<2x8x1xf32>
    %583 = arith.divf %581, %582 : vector<2x8x1xf32>
    %584 = vector.broadcast %583 : vector<2x8x1xf32> to vector<2x8x32xf32>
    %585 = arith.subf %577, %584 : vector<2x8x32xf32>
    %586 = arith.mulf %585, %585 : vector<2x8x32xf32>
    %cst_234 = arith.constant dense<0.000000e+00> : vector<2x8xf32>
    %587 = vector.multi_reduction <add>, %586, %cst_234 [2] : vector<2x8x32xf32> to vector<2x8xf32>
    %588 = vector.shape_cast %587 : vector<2x8xf32> to vector<2x8x1xf32>
    %cst_235 = arith.constant 3.200000e+01 : f32
    %589 = vector.broadcast %cst_235 : f32 to vector<2x8x1xf32>
    %590 = arith.divf %588, %589 : vector<2x8x1xf32>
    %591 = vector.broadcast %583 : vector<2x8x1xf32> to vector<2x8x32xf32>
    %592 = arith.subf %577, %591 : vector<2x8x32xf32>
    %cst_236 = arith.constant 9.99999974E-6 : f32
    %593 = vector.broadcast %cst_236 : f32 to vector<2x8x1xf32>
    %594 = arith.addf %590, %593 : vector<2x8x1xf32>
    %595 = math.rsqrt %594 : vector<2x8x1xf32>
    %596 = vector.broadcast %595 : vector<2x8x1xf32> to vector<2x8x32xf32>
    %597 = arith.mulf %592, %596 : vector<2x8x32xf32>
    %598 = vector.shape_cast %578 : vector<1x32xf32> to vector<1x1x32xf32>
    %599 = vector.broadcast %598 : vector<1x1x32xf32> to vector<2x8x32xf32>
    %600 = arith.mulf %597, %599 : vector<2x8x32xf32>
    %601 = vector.shape_cast %579 : vector<1x32xf32> to vector<1x1x32xf32>
    %602 = vector.broadcast %601 : vector<1x1x32xf32> to vector<2x8x32xf32>
    %603 = arith.addf %600, %602 : vector<2x8x32xf32>
    %604 = vector.shape_cast %603 : vector<2x8x32xf32> to vector<16x32xf32>
    %605 = arith.truncf %604 : vector<16x32xf32> to vector<16x32xbf16>
    %c0_237 = arith.constant 0 : index
    %c0_238 = arith.constant 0 : index
    %606 = vector.load %arg19[%c0_237, %c0_238] : memref<32x32xbf16, #tpu.memory_space<vmem>>, vector<32x32xbf16>
    %cst_239 = arith.constant dense<0.000000e+00> : vector<16x32xf32>
    %607 = tpu.matmul %605, %606, %cst_239 {dimension_numbers = #tpu.dot_dimension_numbers<[1], [0], [0], [1], [0, 0, 1, 1], [], []>} : vector<16x32xbf16>, vector<32x32xbf16>, vector<16x32xf32> -> vector<16x32xf32>
    %c0_240 = arith.constant 0 : index
    %c0_241 = arith.constant 0 : index
    %608 = vector.load %arg20[%c0_240, %c0_241] : memref<1x32xf32, #tpu.memory_space<vmem>>, vector<1x32xf32>
    %609 = vector.broadcast %608 : vector<1x32xf32> to vector<16x32xf32>
    %610 = arith.addf %607, %609 : vector<16x32xf32>
    %c0_242 = arith.constant 0 : index
    %c0_243 = arith.constant 0 : index
    %611 = vector.load %arg21[%c0_242, %c0_243] : memref<16x32xf32, #tpu.memory_space<vmem>>, vector<16x32xf32>
    tpu.vector_store %arg21[%c0_242, %c0_243], %610 {strides = array<i32>} : memref<16x32xf32, #tpu.memory_space<vmem>>, vector<16x32xf32>,
    return
  }
}

</mosaic_0001>

<llo_original>
// kernel: tpu_custom_call.1
$region0: #{tpu_custom_call.1}
  #allocation0 [shape = 'u32[]', space=smem, size = 0x4, offset = 0x4, fixed_abs, tag = 'smem constant byte address 0x4 - core index']
  #allocation1 [shape = 'u32[144,128]{1,0:T(1,128)}', space=vmem, size = 0x12000, scoped, tag = 'internal scratch']
  #allocation2 [shape = 'f32[16,32]{1,0:T(8,128)}', space=vmem, size = 0x2000, scoped, tag = 'scratch operand']
  %s0 = inlined_call_operand.hbm [shape: f32[2,8,32], index: 0, kind: input, shape index: {}]
  %s1 = inlined_call_operand.vmem [shape: f32[2,10,32], index: 1, kind: input, shape index: {}]
  %s2 = inlined_call_operand.hbm [shape: f32[2,1,32], index: 2, kind: input, shape index: {}]
  %s3 = inlined_call_operand.hbm [shape: f32[2,1,32], index: 3, kind: input, shape index: {}]
  %s4 = inlined_call_operand.vmem [shape: bf16[2,32,96], index: 4, kind: input, shape index: {}]
  %s5 = inlined_call_operand.vmem [shape: bf16[2,32,32], index: 5, kind: input, shape index: {}]
  %s6 = inlined_call_operand.hbm [shape: f32[2,1,32], index: 6, kind: input, shape index: {}]
  %s7 = inlined_call_operand.hbm [shape: f32[2,1,32], index: 7, kind: input, shape index: {}]
  %s8 = inlined_call_operand.vmem [shape: bf16[2,32,32], index: 8, kind: input, shape index: {}]
  %s9 = inlined_call_operand.vmem [shape: bf16[2,32,64], index: 9, kind: input, shape index: {}]
  %s10 = inlined_call_operand.vmem [shape: bf16[2,32,32], index: 10, kind: input, shape index: {}]
  %s11 = inlined_call_operand.hbm [shape: f32[2,1,32], index: 11, kind: input, shape index: {}]
  %s12 = inlined_call_operand.hbm [shape: f32[2,1,32], index: 12, kind: input, shape index: {}]
  %s13 = inlined_call_operand.vmem [shape: bf16[2,32,128], index: 13, kind: input, shape index: {}]
  %s14 = inlined_call_operand.hbm [shape: f32[2,1,128], index: 14, kind: input, shape index: {}]
  %s15 = inlined_call_operand.vmem [shape: bf16[2,128,32], index: 15, kind: input, shape index: {}]
  %s16 = inlined_call_operand.hbm [shape: f32[2,1,32], index: 16, kind: input, shape index: {}]
  %s17 = inlined_call_operand.vmem [shape: f32[1,32], index: 17, kind: input, shape index: {}]
  %s18 = inlined_call_operand.vmem [shape: f32[1,32], index: 18, kind: input, shape index: {}]
  %s19 = inlined_call_operand.vmem [shape: bf16[32,32], index: 19, kind: input, shape index: {}]
  %s20 = inlined_call_operand.vmem [shape: f32[1,32], index: 20, kind: input, shape index: {}]
  %s21 = inlined_call_operand.hbm [shape: f32[16,32], index: 21, kind: output, shape index: {}]
  %s22 = sld [smem:[#allocation0]]
  $region130: #{tpu_custom_call.1} parent=0
    _
  %s24 = ssub.s32 1, %s22
  %s25 = scalar_select 0, %s24, %s22
  $region1: #{tpu_custom_call.1} parent=0
    #allocation3 [shape = 'u8[8192]{0}', space=vmem, size = 0x2000, scoped, tag = 'input window, operand 0, single buffered']
    #allocation4 [shape = 's32[1]{0}', space=sflag, size = 0x4, scoped, tag = 'scoped memory for tpu_custom_call.1']
    #allocation5 [shape = 's32[1]{0}', space=sflag, size = 0x4, scoped, tag = 'scoped memory for tpu_custom_call.1']
    #allocation6 [shape = 'u8[1024]{0}', space=vmem, size = 0x400, scoped, tag = 'input window, operand 2, single buffered']
    #allocation7 [shape = 's32[1]{0}', space=sflag, size = 0x4, scoped, tag = 'scoped memory for tpu_custom_call.1']
    #allocation8 [shape = 'u8[1024]{0}', space=vmem, size = 0x400, scoped, tag = 'input window, operand 3, single buffered']
    #allocation9 [shape = 'u8[1024]{0}', space=vmem, size = 0x400, scoped, tag = 'input window, operand 6, single buffered']
    #allocation10 [shape = 's32[1]{0}', space=sflag, size = 0x4, scoped, tag = 'scoped memory for tpu_custom_call.1']
    #allocation11 [shape = 'u8[1024]{0}', space=vmem, size = 0x400, scoped, tag = 'input window, operand 7, single buffered']
    #allocation12 [shape = 'u8[1024]{0}', space=vmem, size = 0x400, scoped, tag = 'input window, operand 11, single buffered']
    #allocation13 [shape = 's32[1]{0}', space=sflag, size = 0x4, scoped, tag = 'scoped memory for tpu_custom_call.1']
    #allocation14 [shape = 'u8[1024]{0}', space=vmem, size = 0x400, scoped, tag = 'input window, operand 12, single buffered']
    #allocation15 [shape = 'u8[1024]{0}', space=vmem, size = 0x400, scoped, tag = 'input window, operand 14, single buffered']
    #allocation16 [shape = 's32[1]{0}', space=sflag, size = 0x4, scoped, tag = 'scoped memory for tpu_custom_call.1']
    #allocation17 [shape = 'u8[1024]{0}', space=vmem, size = 0x400, scoped, tag = 'input window, operand 16, single buffered']
    #allocation18 [shape = 'u8[8192]{0}', space=vmem, size = 0x2000, scoped, tag = 'output window, operand 0, single buffered']
    %26 = vsyncpa [#allocation4], 0
    %27 = vsyncpa [#allocation7], 0
    %28 = vsyncpa [#allocation10], 0
    %29 = vsyncpa [#allocation13], 0
    %30 = vsyncpa [#allocation16], 0
    %31 = vsyncpa [#allocation5], 0
    // Predicated region
    $region2: #{tpu_custom_call.1} parent=1 // pred_check
      _
    $region3: #{tpu_custom_call.1} parent=1 // pred_check_branch
      %33 = sbr.rel (0) target = $region5
    $region4: #{tpu_custom_call.1} parent=1 // pred_region
      %s35 = ssub.s32 256, 256
      %36 = vsyncadd [#allocation4], %s35
      %s37 = sshll.u32 [#allocation3], 4
      %s38 = int_to_ptr.vmem [resolvable:$true] %s37
      %43 = dma.hbm_to_vmem [thread:$0]  %s0, 256, %s38, [#allocation4], 128, 128, 8
    $region5: #{tpu_custom_call.1} parent=1 // pred_fallthru
      _
    // Predicated region
    $region6: #{tpu_custom_call.1} parent=1 // pred_check
      _
    $region7: #{tpu_custom_call.1} parent=1 // pred_check_branch
      %45 = sbr.rel (0) target = $region9
    $region8: #{tpu_custom_call.1} parent=1 // pred_region
      _
    $region9: #{tpu_custom_call.1} parent=1 // pred_fallthru
      _
    // Predicated region
    $region10: #{tpu_custom_call.1} parent=1 // pred_check
      _
    $region11: #{tpu_custom_call.1} parent=1 // pred_check_branch
      %47 = sbr.rel (0) target = $region13
    $region12: #{tpu_custom_call.1} parent=1 // pred_region
      %s49 = ssub.s32 32, 32
      %50 = vsyncadd [#allocation7], %s49
      %s51 = sshll.u32 [#allocation6], 4
      %s52 = int_to_ptr.vmem [resolvable:$true] %s51
      %57 = dma.hbm_to_vmem [thread:$0]  %s2, 32, %s52, [#allocation7], 16, 16, 1
    $region13: #{tpu_custom_call.1} parent=1 // pred_fallthru
      _
    // Predicated region
    $region14: #{tpu_custom_call.1} parent=1 // pred_check
      _
    $region15: #{tpu_custom_call.1} parent=1 // pred_check_branch
      %59 = sbr.rel (0) target = $region17
    $region16: #{tpu_custom_call.1} parent=1 // pred_region
      %s61 = ssub.s32 32, 32
      %62 = vsyncadd [#allocation7], %s61
      %s63 = sshll.u32 [#allocation8], 4
      %s64 = int_to_ptr.vmem [resolvable:$true] %s63
      %69 = dma.hbm_to_vmem [thread:$0]  %s3, 32, %s64, [#allocation7], 16, 16, 1
    $region17: #{tpu_custom_call.1} parent=1 // pred_fallthru
      _
    // Predicated region
    $region18: #{tpu_custom_call.1} parent=1 // pred_check
      _
    $region19: #{tpu_custom_call.1} parent=1 // pred_check_branch
      %71 = sbr.rel (0) target = $region21
    $region20: #{tpu_custom_call.1} parent=1 // pred_region
      _
    $region21: #{tpu_custom_call.1} parent=1 // pred_fallthru
      _
    // Predicated region
    $region22: #{tpu_custom_call.1} parent=1 // pred_check
      _
    $region23: #{tpu_custom_call.1} parent=1 // pred_check_branch
      %73 = sbr.rel (0) target = $region25
    $region24: #{tpu_custom_call.1} parent=1 // pred_region
      _
    $region25: #{tpu_custom_call.1} parent=1 // pred_fallthru
      _
    // Predicated region
    $region26: #{tpu_custom_call.1} parent=1 // pred_check
      _
    $region27: #{tpu_custom_call.1} parent=1 // pred_check_branch
      %75 = sbr.rel (0) target = $region29
    $region28: #{tpu_custom_call.1} parent=1 // pred_region
      %s77 = ssub.s32 32, 32
      %78 = vsyncadd [#allocation10], %s77
      %s79 = sshll.u32 [#allocation9], 4
      %s80 = int_to_ptr.vmem [resolvable:$true] %s79
      %85 = dma.hbm_to_vmem [thread:$0]  %s6, 32, %s80, [#allocation10], 16, 16, 1
    $region29: #{tpu_custom_call.1} parent=1 // pred_fallthru
      _
    // Predicated region
    $region30: #{tpu_custom_call.1} parent=1 // pred_check
      _
    $region31: #{tpu_custom_call.1} parent=1 // pred_check_branch
      %87 = sbr.rel (0) target = $region33
    $region32: #{tpu_custom_call.1} parent=1 // pred_region
      %s89 = ssub.s32 32, 32
      %90 = vsyncadd [#allocation10], %s89
      %s91 = sshll.u32 [#allocation11], 4
      %s92 = int_to_ptr.vmem [resolvable:$true] %s91
      %97 = dma.hbm_to_vmem [thread:$0]  %s7, 32, %s92, [#allocation10], 16, 16, 1
    $region33: #{tpu_custom_call.1} parent=1 // pred_fallthru
      _
    // Predicated region
    $region34: #{tpu_custom_call.1} parent=1 // pred_check
      _
    $region35: #{tpu_custom_call.1} parent=1 // pred_check_branch
      %99 = sbr.rel (0) target = $region37
    $region36: #{tpu_custom_call.1} parent=1 // pred_region
      _
    $region37: #{tpu_custom_call.1} parent=1 // pred_fallthru
      _
    // Predicated region
    $region38: #{tpu_custom_call.1} parent=1 // pred_check
      _
    $region39: #{tpu_custom_call.1} parent=1 // pred_check_branch
      %101 = sbr.rel (0) target = $region41
    $region40: #{tpu_custom_call.1} parent=1 // pred_region
      _
    $region41: #{tpu_custom_call.1} parent=1 // pred_fallthru
      _
    // Predicated region
    $region42: #{tpu_custom_call.1} parent=1 // pred_check
      _
    $region43: #{tpu_custom_call.1} parent=1 // pred_check_branch
      %103 = sbr.rel (0) target = $region45
    $region44: #{tpu_custom_call.1} parent=1 // pred_region
      _
    $region45: #{tpu_custom_call.1} parent=1 // pred_fallthru
      _
    // Predicated region
    $region46: #{tpu_custom_call.1} parent=1 // pred_check
      _
    $region47: #{tpu_custom_call.1} parent=1 // pred_check_branch
      %105 = sbr.rel (0) target = $region49
    $region48: #{tpu_custom_call.1} parent=1 // pred_region
      %s107 = ssub.s32 32, 32
      %108 = vsyncadd [#allocation13], %s107
      %s109 = sshll.u32 [#allocation12], 4
      %s110 = int_to_ptr.vmem [resolvable:$true] %s109
      %115 = dma.hbm_to_vmem [thread:$0]  %s11, 32, %s110, [#allocation13], 16, 16, 1
    $region49: #{tpu_custom_call.1} parent=1 // pred_fallthru
      _
    // Predicated region
    $region50: #{tpu_custom_call.1} parent=1 // pred_check
      _
    $region51: #{tpu_custom_call.1} parent=1 // pred_check_branch
      %117 = sbr.rel (0) target = $region53
    $region52: #{tpu_custom_call.1} parent=1 // pred_region
      %s119 = ssub.s32 32, 32
      %120 = vsyncadd [#allocation13], %s119
      %s121 = sshll.u32 [#allocation14], 4
      %s122 = int_to_ptr.vmem [resolvable:$true] %s121
      %127 = dma.hbm_to_vmem [thread:$0]  %s12, 32, %s122, [#allocation13], 16, 16, 1
    $region53: #{tpu_custom_call.1} parent=1 // pred_fallthru
      _
    // Predicated region
    $region54: #{tpu_custom_call.1} parent=1 // pred_check
      _
    $region55: #{tpu_custom_call.1} parent=1 // pred_check_branch
      %129 = sbr.rel (0) target = $region57
    $region56: #{tpu_custom_call.1} parent=1 // pred_region
      _
    $region57: #{tpu_custom_call.1} parent=1 // pred_fallthru
      _
    // Predicated region
    $region58: #{tpu_custom_call.1} parent=1 // pred_check
      _
    $region59: #{tpu_custom_call.1} parent=1 // pred_check_branch
      %131 = sbr.rel (0) target = $region61
    $region60: #{tpu_custom_call.1} parent=1 // pred_region
      %s133 = ssub.s32 32, 32
      %134 = vsyncadd [#allocation16], %s133
      %s135 = sshll.u32 [#allocation15], 4
      %s136 = int_to_ptr.vmem [resolvable:$true] %s135
      %141 = dma.hbm_to_vmem [thread:$0]  %s14, 32, %s136, [#allocation16], 16, 16, 1
    $region61: #{tpu_custom_call.1} parent=1 // pred_fallthru
      _
    // Predicated region
    $region62: #{tpu_custom_call.1} parent=1 // pred_check
      _
    $region63: #{tpu_custom_call.1} parent=1 // pred_check_branch
      %143 = sbr.rel (0) target = $region65
    $region64: #{tpu_custom_call.1} parent=1 // pred_region
      _
    $region65: #{tpu_custom_call.1} parent=1 // pred_fallthru
      _
    // Predicated region
    $region66: #{tpu_custom_call.1} parent=1 // pred_check
      _
    $region67: #{tpu_custom_call.1} parent=1 // pred_check_branch
      %145 = sbr.rel (0) target = $region69
    $region68: #{tpu_custom_call.1} parent=1 // pred_region
      %s147 = ssub.s32 32, 32
      %148 = vsyncadd [#allocation16], %s147
      %s149 = sshll.u32 [#allocation17], 4
      %s150 = int_to_ptr.vmem [resolvable:$true] %s149
      %155 = dma.hbm_to_vmem [thread:$0]  %s16, 32, %s150, [#allocation16], 16, 16, 1
    $region69: #{tpu_custom_call.1} parent=1 // pred_fallthru
      _
    // Predicated region
    $region70: #{tpu_custom_call.1} parent=1 // pred_check
      _
    $region71: #{tpu_custom_call.1} parent=1 // pred_check_branch
      %157 = sbr.rel (0) target = $region73
    $region72: #{tpu_custom_call.1} parent=1 // pred_region
      _
    $region73: #{tpu_custom_call.1} parent=1 // pred_fallthru
      _
    // Predicated region
    $region74: #{tpu_custom_call.1} parent=1 // pred_check
      _
    $region75: #{tpu_custom_call.1} parent=1 // pred_check_branch
      %159 = sbr.rel (0) target = $region77
    $region76: #{tpu_custom_call.1} parent=1 // pred_region
      _
    $region77: #{tpu_custom_call.1} parent=1 // pred_fallthru
      _
    // Predicated region
    $region78: #{tpu_custom_call.1} parent=1 // pred_check
      _
    $region79: #{tpu_custom_call.1} parent=1 // pred_check_branch
      %161 = sbr.rel (0) target = $region81
    $region80: #{tpu_custom_call.1} parent=1 // pred_region
      _
    $region81: #{tpu_custom_call.1} parent=1 // pred_fallthru
      _
    // Predicated region
    $region82: #{tpu_custom_call.1} parent=1 // pred_check
      _
    $region83: #{tpu_custom_call.1} parent=1 // pred_check_branch
      %163 = sbr.rel (0) target = $region85
    $region84: #{tpu_custom_call.1} parent=1 // pred_region
      _
    $region85: #{tpu_custom_call.1} parent=1 // pred_fallthru
      _
    // Predicated region
    $region86: #{tpu_custom_call.1} parent=1 // pred_check
      _
    $region87: #{tpu_custom_call.1} parent=1 // pred_check_branch
      %165 = sbr.rel (0) target = $region89
    $region88: #{tpu_custom_call.1} parent=1 // pred_region
      %166 = dma.done [#allocation4], 256
    $region89: #{tpu_custom_call.1} parent=1 // pred_fallthru
      _
    // Predicated region
    $region90: #{tpu_custom_call.1} parent=1 // pred_check
      _
    $region91: #{tpu_custom_call.1} parent=1 // pred_check_branch
      %168 = sbr.rel (0) target = $region93
    $region92: #{tpu_custom_call.1} parent=1 // pred_region
      %169 = dma.done [#allocation7], 32
    $region93: #{tpu_custom_call.1} parent=1 // pred_fallthru
      _
    // Predicated region
    $region94: #{tpu_custom_call.1} parent=1 // pred_check
      _
    $region95: #{tpu_custom_call.1} parent=1 // pred_check_branch
      %171 = sbr.rel (0) target = $region97
    $region96: #{tpu_custom_call.1} parent=1 // pred_region
      %172 = dma.done [#allocation7], 32
    $region97: #{tpu_custom_call.1} parent=1 // pred_fallthru
      _
    // Predicated region
    $region98: #{tpu_custom_call.1} parent=1 // pred_check
      _
    $region99: #{tpu_custom_call.1} parent=1 // pred_check_branch
      %174 = sbr.rel (0) target = $region101
    $region100: #{tpu_custom_call.1} parent=1 // pred_region
      %175 = dma.done [#allocation10], 32
    $region101: #{tpu_custom_call.1} parent=1 // pred_fallthru
      _
    // Predicated region
    $region102: #{tpu_custom_call.1} parent=1 // pred_check
      _
    $region103: #{tpu_custom_call.1} parent=1 // pred_check_branch
      %177 = sbr.rel (0) target = $region105
    $region104: #{tpu_custom_call.1} parent=1 // pred_region
      %178 = dma.done [#allocation10], 32
    $region105: #{tpu_custom_call.1} parent=1 // pred_fallthru
      _
    // Predicated region
    $region106: #{tpu_custom_call.1} parent=1 // pred_check
      _
    $region107: #{tpu_custom_call.1} parent=1 // pred_check_branch
      %180 = sbr.rel (0) target = $region109
    $region108: #{tpu_custom_call.1} parent=1 // pred_region
      %181 = dma.done [#allocation13], 32
    $region109: #{tpu_custom_call.1} parent=1 // pred_fallthru
      _
    // Predicated region
    $region110: #{tpu_custom_call.1} parent=1 // pred_check
      _
    $region111: #{tpu_custom_call.1} parent=1 // pred_check_branch
      %183 = sbr.rel (0) target = $region113
    $region112: #{tpu_custom_call.1} parent=1 // pred_region
      %184 = dma.done [#allocation13], 32
    $region113: #{tpu_custom_call.1} parent=1 // pred_fallthru
      _
    // Predicated region
    $region114: #{tpu_custom_call.1} parent=1 // pred_check
      _
    $region115: #{tpu_custom_call.1} parent=1 // pred_check_branch
      %186 = sbr.rel (0) target = $region117
    $region116: #{tpu_custom_call.1} parent=1 // pred_region
      %187 = dma.done [#allocation16], 32
    $region117: #{tpu_custom_call.1} parent=1 // pred_fallthru
      _
    // Predicated region
    $region118: #{tpu_custom_call.1} parent=1 // pred_check
      _
    $region119: #{tpu_custom_call.1} parent=1 // pred_check_branch
      %189 = sbr.rel (0) target = $region121
    $region120: #{tpu_custom_call.1} parent=1 // pred_region
      %190 = dma.done [#allocation16], 32
    $region121: #{tpu_custom_call.1} parent=1 // pred_fallthru
      _
    %v192 = vld [vmem:[#allocation3] sm:$0xff]
    %v193 = vld [vmem:[#allocation3 + $0x8] sm:$0xff]
    %v194 = vld [vmem:[%s1] sm:$0xff]
    %v195 = vld [vmem:[%s1 + $0x8] sm:$0x3]
    %v196 = vld [vmem:[%s1 + $0x10] sm:$0xff]
    %v197 = vld [vmem:[%s1 + $0x18] sm:$0x3]
    %v202 = vcombine.high %v194, %v194
    %v204 = vunpack.c.l.s4 1983009808
    %v205 = vunpack.c.0.s8 %v204
    %v206 = vlaneseq
    %v207 = vshrl.u32 %v206, 7
    %v208 = vsub.s32 %v205, %v207
    %v209 = vrot.slane %v194, %v208
    %v211 = vunpack.c.l.s4 1983009808
    %v212 = vunpack.c.0.s8 %v211
    %v213 = vlaneseq
    %v214 = vshrl.u32 %v213, 7
    %v215 = vsub.s32 %v212, %v214
    %v216 = vrot.slane %v202, %v215
    %v217 = vcombine.high %v209, %v209
    %v218 = vcombine.high %v216, %v216
    %v220 = vunpack.c.l.s4 1983009808
    %v221 = vunpack.c.0.s8 %v220
    %v222 = vlaneseq
    %v223 = vshrl.u32 %v222, 7
    %v224 = vsub.s32 %v221, %v223
    %v225 = vrot.slane %v195, %v224
    %v226 = vcombine.high %v196, %v196
    %v228 = vunpack.c.l.s4 1983009808
    %v229 = vunpack.c.0.s8 %v228
    %v230 = vlaneseq
    %v231 = vshrl.u32 %v230, 7
    %v232 = vsub.s32 %v229, %v231
    %v233 = vrot.slane %v196, %v232
    %v235 = vunpack.c.l.s4 1983009808
    %v236 = vunpack.c.0.s8 %v235
    %v237 = vlaneseq
    %v238 = vshrl.u32 %v237, 7
    %v239 = vsub.s32 %v236, %v238
    %v240 = vrot.slane %v226, %v239
    %v241 = vcombine.high %v233, %v233
    %v242 = vcombine.high %v240, %v240
    %v244 = vunpack.c.l.s4 1983009808
    %v245 = vunpack.c.0.s8 %v244
    %v246 = vlaneseq
    %v247 = vshrl.u32 %v246, 7
    %v248 = vsub.s32 %v245, %v247
    %v249 = vrot.slane %v197, %v248
    %v250 = vcombine.low %v209, %v217
    %v251 = vcombine.low %v216, %v218
    %v253 = vunpack.c.l.s4 1983009808
    %v254 = vunpack.c.0.s8 %v253
    %v255 = vlaneseq
    %v256 = vshrl.u32 %v255, 7
    %v257 = vsub.s32 %v254, %v256
    %v258 = vrot.slane %v250, %v257
    %v260 = vunpack.c.l.s4 1983009808
    %v261 = vunpack.c.0.s8 %v260
    %v262 = vlaneseq
    %v263 = vshrl.u32 %v262, 7
    %v264 = vsub.s32 %v261, %v263
    %v265 = vrot.slane %v251, %v264
    %v266 = vcombine.low %v258, %v265
    %v267 = vcombine.low %v225, %v233
    %v268 = vcombine.low %v241, %v240
    %v270 = vunpack.c.l.s4 1983009808
    %v271 = vunpack.c.0.s8 %v270
    %v272 = vlaneseq
    %v273 = vshrl.u32 %v272, 7
    %v274 = vsub.s32 %v271, %v273
    %v275 = vrot.slane %v267, %v274
    %v277 = vunpack.c.l.s4 1983009808
    %v278 = vunpack.c.0.s8 %v277
    %v279 = vlaneseq
    %v280 = vshrl.u32 %v279, 7
    %v281 = vsub.s32 %v278, %v280
    %v282 = vrot.slane %v268, %v281
    %v283 = vcombine.low %v275, %v282
    %v284 = vcombine.low %v242, %v249
    %v286 = vunpack.c.l.s4 1983009808
    %v287 = vunpack.c.0.s8 %v286
    %v288 = vlaneseq
    %v289 = vshrl.u32 %v288, 7
    %v290 = vsub.s32 %v287, %v289
    %v291 = vrot.slane %v284, %v290
    %v295 = vpack.c.bf16 %v283, %v266
    %v296 = vpack.c.bf16 %v291, %v291
    %v297 = vld [vmem:[#allocation6] sm:$0x1]
    %v298 = vld [vmem:[#allocation8] sm:$0x1]
    %v299 = vld [vmem:[%s4] sm:$0xf]
    %v300 = vld [vmem:[%s4 + $0x4] sm:$0xf]
    %v301 = vld [vmem:[%s4 + $0x8] sm:$0xf]
    %v302 = vld [vmem:[%s4 + $0xc] sm:$0xf]
    %v303 = vld [vmem:[%s5] sm:$0xf]
    %v304 = vld [vmem:[%s5 + $0x4] sm:$0xf]
    %v305 = vld [vmem:[%s5 + $0x8] sm:$0xf]
    %v306 = vld [vmem:[%s5 + $0xc] sm:$0xf]
    %v307 = vld [vmem:[#allocation9] sm:$0x1]
    %v308 = vld [vmem:[#allocation11] sm:$0x1]
    %v309 = vld [vmem:[%s8] sm:$0xf]
    %v310 = vld [vmem:[%s8 + $0x4] sm:$0xf]
    %v311 = vld [vmem:[%s8 + $0x8] sm:$0xf]
    %v312 = vld [vmem:[%s8 + $0xc] sm:$0xf]
    %v313 = vld [vmem:[%s9] sm:$0xf]
    %v314 = vld [vmem:[%s9 + $0x4] sm:$0xf]
    %v315 = vld [vmem:[%s9 + $0x8] sm:$0xf]
    %v316 = vld [vmem:[%s9 + $0xc] sm:$0xf]
    %v317 = vld [vmem:[%s10] sm:$0xf]
    %v318 = vld [vmem:[%s10 + $0x4] sm:$0xf]
    %v319 = vld [vmem:[%s10 + $0x8] sm:$0xf]
    %v320 = vld [vmem:[%s10 + $0xc] sm:$0xf]
    %v321 = vld [vmem:[#allocation12] sm:$0x1]
    %v322 = vld [vmem:[#allocation14] sm:$0x1]
    %v323 = vld [vmem:[%s13] sm:$0xf]
    %v324 = vld [vmem:[%s13 + $0x4] sm:$0xf]
    %v325 = vld [vmem:[%s13 + $0x8] sm:$0xf]
    %v326 = vld [vmem:[%s13 + $0xc] sm:$0xf]
    %v327 = vld [vmem:[#allocation15] sm:$0x1]
    %v328 = vld [vmem:[%s15] sm:$0xf]
    %v329 = vld [vmem:[%s15 + $0x4] sm:$0xf]
    %v330 = vld [vmem:[%s15 + $0x8] sm:$0xf]
    %v331 = vld [vmem:[%s15 + $0xc] sm:$0xf]
    %v332 = vld [vmem:[%s15 + $0x10] sm:$0xf]
    %v333 = vld [vmem:[%s15 + $0x14] sm:$0xf]
    %v334 = vld [vmem:[%s15 + $0x18] sm:$0xf]
    %v335 = vld [vmem:[%s15 + $0x1c] sm:$0xf]
    %v336 = vld [vmem:[%s15 + $0x20] sm:$0xf]
    %v337 = vld [vmem:[%s15 + $0x24] sm:$0xf]
    %v338 = vld [vmem:[%s15 + $0x28] sm:$0xf]
    %v339 = vld [vmem:[%s15 + $0x2c] sm:$0xf]
    %v340 = vld [vmem:[%s15 + $0x30] sm:$0xf]
    %v341 = vld [vmem:[%s15 + $0x34] sm:$0xf]
    %v342 = vld [vmem:[%s15 + $0x38] sm:$0xf]
    %v343 = vld [vmem:[%s15 + $0x3c] sm:$0xf]
    %v344 = vld [vmem:[#allocation17] sm:$0x1]
    %vm345 = vcmask 261120
    %v346 = vsel %vm345, %v192, 0.0
    %347 = vadd.xlane.f32.xlu0 %v346
    %v348 = vpop.xlane.xlu0 %347
    %v349 = vsel %vm345, %v193, 0.0
    %350 = vadd.xlane.f32.xlu0 %v349
    %v351 = vpop.xlane.xlu0 %350
    %v352 = vrcp.pop 32.0
    %v353 = vmul.f32 %v348, %v352
    %v354 = vmul.f32 %v351, %v352
    %v355 = vsub.f32 %v192, %v353
    %v356 = vsub.f32 %v193, %v354
    %v357 = vmul.f32 %v355, %v355
    %v358 = vmul.f32 %v356, %v356
    %v359 = vsel %vm345, %v357, 0.0
    %360 = vadd.xlane.f32.xlu0 %v359
    %v361 = vpop.xlane.xlu0 %360
    %v362 = vsel %vm345, %v358, 0.0
    %363 = vadd.xlane.f32.xlu0 %v362
    %v364 = vpop.xlane.xlu0 %363
    %v365 = vmul.f32 %v361, %v352
    %v366 = vmul.f32 %v364, %v352
    %v367 = vadd.f32 %v365, 1e-05
    %v368 = vadd.f32 %v366, 1e-05
    %v369 = vrsqrt.pop %v367
    %v370 = vrsqrt.pop %v368
    %v371 = vmul.f32 %v355, %v369
    %v372 = vmul.f32 %v356, %v370
    %v374 = vlaneseq
    %v375 = vshrl.u32 %v374, 7
    %v376 = vsub.s32 0, %v375
    %v377 = vrot.slane %v297, %v376
    %v379 = vmul.f32 %v371, %v377
    %v380 = vmul.f32 %v372, %v377
    %v382 = vlaneseq
    %v383 = vshrl.u32 %v382, 7
    %v384 = vsub.s32 0, %v383
    %v385 = vrot.slane %v298, %v384
    %v387 = vadd.f32 %v379, %v385
    %v388 = vadd.f32 %v380, %v385
    %v389 = vpack.c.bf16 %v388, %v387
    %v394 = vunpack.c.l.b16 %v299
    %v395 = vunpack.c.l.b16 %v300
    %v396 = vunpack.c.l.b16 %v301
    %v397 = vunpack.c.l.b16 %v302
    %v398 = vpack.c.b16 %v395, %v394
    %v399 = vpack.c.b16 %v397, %v396
    %v403 = vsel %vm345, %v389, 0
    %405 = vmatprep.subr.bf16.mxu0 0
    %406 = vmatpush1.bf16.msra.mxu0 0
    %407 = vmatprep.subr.bf16.mxu0 0
    %408 = vmatpush1.bf16.msra.mxu0 0
    %409 = vmatprep.subr.bf16.mxu0 0
    %410 = vmatpush1.bf16.msra.mxu0 0
    %411 = vmatprep.subr.bf16.mxu0 0
    %412 = vmatpush1.bf16.msra.mxu0 0
    %413 = vmatprep.subr.bf16.mxu0 0
    %414 = vmatpush1.bf16.msra.mxu0 0
    %415 = vmatprep.subr.bf16.mxu0 0
    %416 = vmatpush1.bf16.msra.mxu0 0
    %417 = vmatprep.subr.bf16.mxu0 0
    %418 = vmatpush1.bf16.msra.mxu0 %v399
    %419 = vmatprep.subr.bf16.mxu0 0
    %420 = vmatpush1.bf16.msra.mxu0 %v398
    %421 = vmatprep.subr.bf16.mxu0 0
    %422 = vmatpush2.bf16.msra.mxu0 0
    %423 = vmatprep.subr.bf16.mxu0 0
    %424 = vmatpush2.bf16.msra.mxu0 0
    %425 = vmatprep.subr.bf16.mxu0 0
    %426 = vmatpush2.bf16.msra.mxu0 0
    %427 = vmatprep.subr.bf16.mxu0 0
    %428 = vmatpush2.bf16.msra.mxu0 0
    %429 = vmatprep.subr.bf16.mxu0 0
    %430 = vmatpush2.bf16.msra.mxu0 0
    %431 = vmatprep.subr.bf16.mxu0 0
    %432 = vmatpush2.bf16.msra.mxu0 0
    %433 = vmatprep.subr.bf16.mxu0 0
    %434 = vmatpush2.bf16.msra.mxu0 0
    %435 = vmatprep.subr.bf16.mxu0 0
    %436 = vmatpush2.bf16.msra.mxu0 0
    %437 = vmatprep.mubr.bf16.mxu0 0
    %438 = vmatmul.mubr.bf16.gmra.mxu0 %v403
    %v439 = vpop.f32.mrf.mxu0
    %v440 = vadd.f32 0.0, %v439
    %v441 = vpop.f32.mrf.mxu0
    %v442 = vpop.f32.mrf.mxu0
    %v443 = vadd.f32 0.0, %v442
    %v444 = vpop.f32.mrf.mxu0
    %445 = vdwg.mxu0
    %v446 = vpack.c.bf16 %v440, %v440
    %v447 = vpack.c.bf16 %v443, %v443
    %449 = vrot.lane.b32.xlu0 %v446, 96
    %v450 = vpop.permute.xlu0 %449
    %vm451 = vcmask 64512
    %v453 = vsel %vm451, %v446, 0
    %v456 = vsel %vm451, %v450, 0
    %458 = vmatprep.subr.bf16.mxu0 0
    %459 = vmatpush1.bf16.xpose.msra.mxu0 0
    %460 = vmatprep.subr.bf16.mxu0 0
    %461 = vmatpush1.bf16.xpose.msra.mxu0 0
    %462 = vmatprep.subr.bf16.mxu0 0
    %463 = vmatpush1.bf16.xpose.msra.mxu0 0
    %464 = vmatprep.subr.bf16.mxu0 0
    %465 = vmatpush1.bf16.xpose.msra.mxu0 0
    %466 = vmatprep.subr.bf16.mxu0 0
    %467 = vmatpush1.bf16.xpose.msra.mxu0 0
    %468 = vmatprep.subr.bf16.mxu0 0
    %469 = vmatpush1.bf16.xpose.msra.mxu0 0
    %470 = vmatprep.subr.bf16.mxu0 0
    %471 = vmatpush1.bf16.xpose.msra.mxu0 0
    %472 = vmatprep.subr.bf16.mxu0 0
    %473 = vmatpush1.bf16.xpose.msra.mxu0 %v456
    %474 = vmatprep.subr.bf16.mxu0 0
    %475 = vmatpush2.bf16.xpose.msra.mxu0 0
    %476 = vmatprep.subr.bf16.mxu0 0
    %477 = vmatpush2.bf16.xpose.msra.mxu0 0
    %478 = vmatprep.subr.bf16.mxu0 0
    %479 = vmatpush2.bf16.xpose.msra.mxu0 0
    %480 = vmatprep.subr.bf16.mxu0 0
    %481 = vmatpush2.bf16.xpose.msra.mxu0 0
    %482 = vmatprep.subr.bf16.mxu0 0
    %483 = vmatpush2.bf16.xpose.msra.mxu0 0
    %484 = vmatprep.subr.bf16.mxu0 0
    %485 = vmatpush2.bf16.xpose.msra.mxu0 0
    %486 = vmatprep.subr.bf16.mxu0 0
    %487 = vmatpush2.bf16.xpose.msra.mxu0 0
    %488 = vmatprep.subr.bf16.mxu0 0
    %489 = vmatpush2.bf16.xpose.msra.mxu0 0
    %490 = vmatprep.mubr.bf16.mxu0 0
    %491 = vmatmul.mubr.bf16.gmra.mxu0 %v453
    %v492 = vpop.f32.mrf.mxu0
    %v493 = vadd.f32 0.0, %v492
    %v494 = vpop.f32.mrf.mxu0
    %v495 = vpop.f32.mrf.mxu0
    %v496 = vpop.f32.mrf.mxu0
    %497 = vdwg.mxu0
    %499 = vrot.lane.b32.xlu0 %v447, 96
    %v500 = vpop.permute.xlu0 %499
    %v502 = vsel %vm451, %v447, 0
    %v505 = vsel %vm451, %v500, 0
    %507 = vmatprep.subr.bf16.mxu0 0
    %508 = vmatpush1.bf16.xpose.msra.mxu0 0
    %509 = vmatprep.subr.bf16.mxu0 0
    %510 = vmatpush1.bf16.xpose.msra.mxu0 0
    %511 = vmatprep.subr.bf16.mxu0 0
    %512 = vmatpush1.bf16.xpose.msra.mxu0 0
    %513 = vmatprep.subr.bf16.mxu0 0
    %514 = vmatpush1.bf16.xpose.msra.mxu0 0
    %515 = vmatprep.subr.bf16.mxu0 0
    %516 = vmatpush1.bf16.xpose.msra.mxu0 0
    %517 = vmatprep.subr.bf16.mxu0 0
    %518 = vmatpush1.bf16.xpose.msra.mxu0 0
    %519 = vmatprep.subr.bf16.mxu0 0
    %520 = vmatpush1.bf16.xpose.msra.mxu0 0
    %521 = vmatprep.subr.bf16.mxu0 0
    %522 = vmatpush1.bf16.xpose.msra.mxu0 %v505
    %523 = vmatprep.subr.bf16.mxu0 0
    %524 = vmatpush2.bf16.xpose.msra.mxu0 0
    %525 = vmatprep.subr.bf16.mxu0 0
    %526 = vmatpush2.bf16.xpose.msra.mxu0 0
    %527 = vmatprep.subr.bf16.mxu0 0
    %528 = vmatpush2.bf16.xpose.msra.mxu0 0
    %529 = vmatprep.subr.bf16.mxu0 0
    %530 = vmatpush2.bf16.xpose.msra.mxu0 0
    %531 = vmatprep.subr.bf16.mxu0 0
    %532 = vmatpush2.bf16.xpose.msra.mxu0 0
    %533 = vmatprep.subr.bf16.mxu0 0
    %534 = vmatpush2.bf16.xpose.msra.mxu0 0
    %535 = vmatprep.subr.bf16.mxu0 0
    %536 = vmatpush2.bf16.xpose.msra.mxu0 0
    %537 = vmatprep.subr.bf16.mxu0 0
    %538 = vmatpush2.bf16.xpose.msra.mxu0 0
    %539 = vmatprep.mubr.bf16.mxu0 0
    %540 = vmatmul.mubr.bf16.gmra.mxu0 %v502
    %v541 = vpop.f32.mrf.mxu0
    %v542 = vadd.f32 0.0, %v541
    %v543 = vpop.f32.mrf.mxu0
    %v544 = vpop.f32.mrf.mxu0
    %v545 = vpop.f32.mrf.mxu0
    %546 = vdwg.mxu0
    %v547 = vsel %vm451, %v493, -inf
    %548 = vmax.xlane.f32.xlu0 %v547
    %v549 = vpop.xlane.xlu0 %548
    %v550 = vsel %vm451, %v542, -inf
    %551 = vmax.xlane.f32.xlu0 %v550
    %v552 = vpop.xlane.xlu0 %551
    %v553 = vsub.f32 %v493, %v549
    %v554 = vsub.f32 %v542, %v552
    %v555 = vmul.f32 %v553, 1.442695
    %v556 = vpow.pop %v555
    %v557 = vmul.f32 %v554, 1.442695
    %v558 = vpow.pop %v557
    %v559 = vsel %vm451, %v556, 0.0
    %560 = vadd.xlane.f32.xlu0 %v559
    %v561 = vpop.xlane.xlu0 %560
    %v562 = vsel %vm451, %v558, 0.0
    %563 = vadd.xlane.f32.xlu0 %v562
    %v564 = vpop.xlane.xlu0 %563
    %v565 = vrcp.pop %v561
    %v566 = vrcp.pop %v564
    %v567 = vmul.f32 %v556, %v565
    %v568 = vmul.f32 %v558, %v566
    %v569 = vpack.c.bf16 %v567, %v567
    %v570 = vpack.c.bf16 %v568, %v568
    %571 = vrot.lane.b32.xlu0 %v446, 64
    %v572 = vpop.permute.xlu0 %571
    %v574 = vsel %vm451, %v569, 0
    %vm576 = vcmask 1043456
    %v578 = vsel %vm576, %v572, 0
    %580 = vmatprep.subr.bf16.mxu0 0
    %581 = vmatpush1.bf16.msra.mxu0 0
    %582 = vmatprep.subr.bf16.mxu0 0
    %583 = vmatpush1.bf16.msra.mxu0 0
    %584 = vmatprep.subr.bf16.mxu0 0
    %585 = vmatpush1.bf16.msra.mxu0 0
    %586 = vmatprep.subr.bf16.mxu0 0
    %587 = vmatpush1.bf16.msra.mxu0 0
    %588 = vmatprep.subr.bf16.mxu0 0
    %589 = vmatpush1.bf16.msra.mxu0 0
    %590 = vmatprep.subr.bf16.mxu0 0
    %591 = vmatpush1.bf16.msra.mxu0 0
    %592 = vmatprep.subr.bf16.mxu0 0
    %593 = vmatpush1.bf16.msra.mxu0 0
    %594 = vmatprep.subr.bf16.mxu0 0
    %595 = vmatpush1.bf16.msra.mxu0 %v578
    %596 = vmatprep.subr.bf16.mxu0 0
    %597 = vmatpush2.bf16.msra.mxu0 0
    %598 = vmatprep.subr.bf16.mxu0 0
    %599 = vmatpush2.bf16.msra.mxu0 0
    %600 = vmatprep.subr.bf16.mxu0 0
    %601 = vmatpush2.bf16.msra.mxu0 0
    %602 = vmatprep.subr.bf16.mxu0 0
    %603 = vmatpush2.bf16.msra.mxu0 0
    %604 = vmatprep.subr.bf16.mxu0 0
    %605 = vmatpush2.bf16.msra.mxu0 0
    %606 = vmatprep.subr.bf16.mxu0 0
    %607 = vmatpush2.bf16.msra.mxu0 0
    %608 = vmatprep.subr.bf16.mxu0 0
    %609 = vmatpush2.bf16.msra.mxu0 0
    %610 = vmatprep.subr.bf16.mxu0 0
    %611 = vmatpush2.bf16.msra.mxu0 0
    %612 = vmatprep.mubr.bf16.mxu0 0
    %613 = vmatmul.mubr.bf16.gmra.mxu0 %v574
    %v614 = vpop.f32.mrf.mxu0
    %v615 = vadd.f32 0.0, %v614
    %v616 = vpop.f32.mrf.mxu0
    %v617 = vpop.f32.mrf.mxu0
    %v618 = vpop.f32.mrf.mxu0
    %619 = vdwg.mxu0
    %620 = vrot.lane.b32.xlu0 %v447, 64
    %v621 = vpop.permute.xlu0 %620
    %v623 = vsel %vm451, %v570, 0
    %v626 = vsel %vm576, %v621, 0
    %628 = vmatprep.subr.bf16.mxu0 0
    %629 = vmatpush1.bf16.msra.mxu0 0
    %630 = vmatprep.subr.bf16.mxu0 0
    %631 = vmatpush1.bf16.msra.mxu0 0
    %632 = vmatprep.subr.bf16.mxu0 0
    %633 = vmatpush1.bf16.msra.mxu0 0
    %634 = vmatprep.subr.bf16.mxu0 0
    %635 = vmatpush1.bf16.msra.mxu0 0
    %636 = vmatprep.subr.bf16.mxu0 0
    %637 = vmatpush1.bf16.msra.mxu0 0
    %638 = vmatprep.subr.bf16.mxu0 0
    %639 = vmatpush1.bf16.msra.mxu0 0
    %640 = vmatprep.subr.bf16.mxu0 0
    %641 = vmatpush1.bf16.msra.mxu0 0
    %642 = vmatprep.subr.bf16.mxu0 0
    %643 = vmatpush1.bf16.msra.mxu0 %v626
    %644 = vmatprep.subr.bf16.mxu0 0
    %645 = vmatpush2.bf16.msra.mxu0 0
    %646 = vmatprep.subr.bf16.mxu0 0
    %647 = vmatpush2.bf16.msra.mxu0 0
    %648 = vmatprep.subr.bf16.mxu0 0
    %649 = vmatpush2.bf16.msra.mxu0 0
    %650 = vmatprep.subr.bf16.mxu0 0
    %651 = vmatpush2.bf16.msra.mxu0 0
    %652 = vmatprep.subr.bf16.mxu0 0
    %653 = vmatpush2.bf16.msra.mxu0 0
    %654 = vmatprep.subr.bf16.mxu0 0
    %655 = vmatpush2.bf16.msra.mxu0 0
    %656 = vmatprep.subr.bf16.mxu0 0
    %657 = vmatpush2.bf16.msra.mxu0 0
    %658 = vmatprep.subr.bf16.mxu0 0
    %659 = vmatpush2.bf16.msra.mxu0 0
    %660 = vmatprep.mubr.bf16.mxu0 0
    %661 = vmatmul.mubr.bf16.gmra.mxu0 %v623
    %v662 = vpop.f32.mrf.mxu0
    %v663 = vadd.f32 0.0, %v662
    %v664 = vpop.f32.mrf.mxu0
    %v665 = vpop.f32.mrf.mxu0
    %v666 = vpop.f32.mrf.mxu0
    %667 = vdwg.mxu0
    %668 = vst.msk [vmem:[#allocation2] sm:$0xff] %vm451, %v615
    %669 = vst.msk [vmem:[#allocation2 + $0x8] sm:$0xff] %vm451, %v663
    %670 = vrot.lane.b32.xlu0 %v446, 120
    %v671 = vpop.permute.xlu0 %670
    %672 = vrot.lane.b32.xlu0 %v446, 88
    %v673 = vpop.permute.xlu0 %672
    %v675 = vsel %vm451, %v671, 0
    %v678 = vsel %vm451, %v673, 0
    %680 = vmatprep.subr.bf16.mxu0 0
    %681 = vmatpush1.bf16.xpose.msra.mxu0 0
    %682 = vmatprep.subr.bf16.mxu0 0
    %683 = vmatpush1.bf16.xpose.msra.mxu0 0
    %684 = vmatprep.subr.bf16.mxu0 0
    %685 = vmatpush1.bf16.xpose.msra.mxu0 0
    %686 = vmatprep.subr.bf16.mxu0 0
    %687 = vmatpush1.bf16.xpose.msra.mxu0 0
    %688 = vmatprep.subr.bf16.mxu0 0
    %689 = vmatpush1.bf16.xpose.msra.mxu0 0
    %690 = vmatprep.subr.bf16.mxu0 0
    %691 = vmatpush1.bf16.xpose.msra.mxu0 0
    %692 = vmatprep.subr.bf16.mxu0 0
    %693 = vmatpush1.bf16.xpose.msra.mxu0 0
    %694 = vmatprep.subr.bf16.mxu0 0
    %695 = vmatpush1.bf16.xpose.msra.mxu0 %v678
    %696 = vmatprep.subr.bf16.mxu0 0
    %697 = vmatpush2.bf16.xpose.msra.mxu0 0
    %698 = vmatprep.subr.bf16.mxu0 0
    %699 = vmatpush2.bf16.xpose.msra.mxu0 0
    %700 = vmatprep.subr.bf16.mxu0 0
    %701 = vmatpush2.bf16.xpose.msra.mxu0 0
    %702 = vmatprep.subr.bf16.mxu0 0
    %703 = vmatpush2.bf16.xpose.msra.mxu0 0
    %704 = vmatprep.subr.bf16.mxu0 0
    %705 = vmatpush2.bf16.xpose.msra.mxu0 0
    %706 = vmatprep.subr.bf16.mxu0 0
    %707 = vmatpush2.bf16.xpose.msra.mxu0 0
    %708 = vmatprep.subr.bf16.mxu0 0
    %709 = vmatpush2.bf16.xpose.msra.mxu0 0
    %710 = vmatprep.subr.bf16.mxu0 0
    %711 = vmatpush2.bf16.xpose.msra.mxu0 0
    %712 = vmatprep.mubr.bf16.mxu0 0
    %713 = vmatmul.mubr.bf16.gmra.mxu0 %v675
    %v714 = vpop.f32.mrf.mxu0
    %v715 = vadd.f32 0.0, %v714
    %v716 = vpop.f32.mrf.mxu0
    %v717 = vpop.f32.mrf.mxu0
    %v718 = vpop.f32.mrf.mxu0
    %719 = vdwg.mxu0
    %720 = vrot.lane.b32.xlu0 %v447, 120
    %v721 = vpop.permute.xlu0 %720
    %722 = vrot.lane.b32.xlu0 %v447, 88
    %v723 = vpop.permute.xlu0 %722
    %v725 = vsel %vm451, %v721, 0
    %v728 = vsel %vm451, %v723, 0
    %730 = vmatprep.subr.bf16.mxu0 0
    %731 = vmatpush1.bf16.xpose.msra.mxu0 0
    %732 = vmatprep.subr.bf16.mxu0 0
    %733 = vmatpush1.bf16.xpose.msra.mxu0 0
    %734 = vmatprep.subr.bf16.mxu0 0
    %735 = vmatpush1.bf16.xpose.msra.mxu0 0
    %736 = vmatprep.subr.bf16.mxu0 0
    %737 = vmatpush1.bf16.xpose.msra.mxu0 0
    %738 = vmatprep.subr.bf16.mxu0 0
    %739 = vmatpush1.bf16.xpose.msra.mxu0 0
    %740 = vmatprep.subr.bf16.mxu0 0
    %741 = vmatpush1.bf16.xpose.msra.mxu0 0
    %742 = vmatprep.subr.bf16.mxu0 0
    %743 = vmatpush1.bf16.xpose.msra.mxu0 0
    %744 = vmatprep.subr.bf16.mxu0 0
    %745 = vmatpush1.bf16.xpose.msra.mxu0 %v728
    %746 = vmatprep.subr.bf16.mxu0 0
    %747 = vmatpush2.bf16.xpose.msra.mxu0 0
    %748 = vmatprep.subr.bf16.mxu0 0
    %749 = vmatpush2.bf16.xpose.msra.mxu0 0
    %750 = vmatprep.subr.bf16.mxu0 0
    %751 = vmatpush2.bf16.xpose.msra.mxu0 0
    %752 = vmatprep.subr.bf16.mxu0 0
    %753 = vmatpush2.bf16.xpose.msra.mxu0 0
    %754 = vmatprep.subr.bf16.mxu0 0
    %755 = vmatpush2.bf16.xpose.msra.mxu0 0
    %756 = vmatprep.subr.bf16.mxu0 0
    %757 = vmatpush2.bf16.xpose.msra.mxu0 0
    %758 = vmatprep.subr.bf16.mxu0 0
    %759 = vmatpush2.bf16.xpose.msra.mxu0 0
    %760 = vmatprep.subr.bf16.mxu0 0
    %761 = vmatpush2.bf16.xpose.msra.mxu0 0
    %762 = vmatprep.mubr.bf16.mxu0 0
    %763 = vmatmul.mubr.bf16.gmra.mxu0 %v725
    %v764 = vpop.f32.mrf.mxu0
    %v765 = vadd.f32 0.0, %v764
    %v766 = vpop.f32.mrf.mxu0
    %v767 = vpop.f32.mrf.mxu0
    %v768 = vpop.f32.mrf.mxu0
    %769 = vdwg.mxu0
    %v770 = vsel %vm451, %v715, -inf
    %771 = vmax.xlane.f32.xlu0 %v770
    %v772 = vpop.xlane.xlu0 %771
    %v773 = vsel %vm451, %v765, -inf
    %774 = vmax.xlane.f32.xlu0 %v773
    %v775 = vpop.xlane.xlu0 %774
    %v776 = vsub.f32 %v715, %v772
    %v777 = vsub.f32 %v765, %v775
    %v778 = vmul.f32 %v776, 1.442695
    %v779 = vpow.pop %v778
    %v780 = vmul.f32 %v777, 1.442695
    %v781 = vpow.pop %v780
    %v782 = vsel %vm451, %v779, 0.0
    %783 = vadd.xlane.f32.xlu0 %v782
    %v784 = vpop.xlane.xlu0 %783
    %v785 = vsel %vm451, %v781, 0.0
    %786 = vadd.xlane.f32.xlu0 %v785
    %v787 = vpop.xlane.xlu0 %786
    %v788 = vrcp.pop %v784
    %v789 = vrcp.pop %v787
    %v790 = vmul.f32 %v779, %v788
    %v791 = vmul.f32 %v781, %v789
    %v792 = vpack.c.bf16 %v790, %v790
    %v793 = vpack.c.bf16 %v791, %v791
    %794 = vrot.lane.b32.xlu0 %v446, 56
    %v795 = vpop.permute.xlu0 %794
    %v797 = vsel %vm451, %v792, 0
    %v800 = vsel %vm576, %v795, 0
    %802 = vmatprep.subr.bf16.mxu0 0
    %803 = vmatpush1.bf16.msra.mxu0 0
    %804 = vmatprep.subr.bf16.mxu0 0
    %805 = vmatpush1.bf16.msra.mxu0 0
    %806 = vmatprep.subr.bf16.mxu0 0
    %807 = vmatpush1.bf16.msra.mxu0 0
    %808 = vmatprep.subr.bf16.mxu0 0
    %809 = vmatpush1.bf16.msra.mxu0 0
    %810 = vmatprep.subr.bf16.mxu0 0
    %811 = vmatpush1.bf16.msra.mxu0 0
    %812 = vmatprep.subr.bf16.mxu0 0
    %813 = vmatpush1.bf16.msra.mxu0 0
    %814 = vmatprep.subr.bf16.mxu0 0
    %815 = vmatpush1.bf16.msra.mxu0 0
    %816 = vmatprep.subr.bf16.mxu0 0
    %817 = vmatpush1.bf16.msra.mxu0 %v800
    %818 = vmatprep.subr.bf16.mxu0 0
    %819 = vmatpush2.bf16.msra.mxu0 0
    %820 = vmatprep.subr.bf16.mxu0 0
    %821 = vmatpush2.bf16.msra.mxu0 0
    %822 = vmatprep.subr.bf16.mxu0 0
    %823 = vmatpush2.bf16.msra.mxu0 0
    %824 = vmatprep.subr.bf16.mxu0 0
    %825 = vmatpush2.bf16.msra.mxu0 0
    %826 = vmatprep.subr.bf16.mxu0 0
    %827 = vmatpush2.bf16.msra.mxu0 0
    %828 = vmatprep.subr.bf16.mxu0 0
    %829 = vmatpush2.bf16.msra.mxu0 0
    %830 = vmatprep.subr.bf16.mxu0 0
    %831 = vmatpush2.bf16.msra.mxu0 0
    %832 = vmatprep.subr.bf16.mxu0 0
    %833 = vmatpush2.bf16.msra.mxu0 0
    %834 = vmatprep.mubr.bf16.mxu0 0
    %835 = vmatmul.mubr.bf16.gmra.mxu0 %v797
    %v836 = vpop.f32.mrf.mxu0
    %v837 = vadd.f32 0.0, %v836
    %v838 = vpop.f32.mrf.mxu0
    %v839 = vpop.f32.mrf.mxu0
    %v840 = vpop.f32.mrf.mxu0
    %841 = vdwg.mxu0
    %842 = vrot.lane.b32.xlu0 %v447, 56
    %v843 = vpop.permute.xlu0 %842
    %v845 = vsel %vm451, %v793, 0
    %v848 = vsel %vm576, %v843, 0
    %850 = vmatprep.subr.bf16.mxu0 0
    %851 = vmatpush1.bf16.msra.mxu0 0
    %852 = vmatprep.subr.bf16.mxu0 0
    %853 = vmatpush1.bf16.msra.mxu0 0
    %854 = vmatprep.subr.bf16.mxu0 0
    %855 = vmatpush1.bf16.msra.mxu0 0
    %856 = vmatprep.subr.bf16.mxu0 0
    %857 = vmatpush1.bf16.msra.mxu0 0
    %858 = vmatprep.subr.bf16.mxu0 0
    %859 = vmatpush1.bf16.msra.mxu0 0
    %860 = vmatprep.subr.bf16.mxu0 0
    %861 = vmatpush1.bf16.msra.mxu0 0
    %862 = vmatprep.subr.bf16.mxu0 0
    %863 = vmatpush1.bf16.msra.mxu0 0
    %864 = vmatprep.subr.bf16.mxu0 0
    %865 = vmatpush1.bf16.msra.mxu0 %v848
    %866 = vmatprep.subr.bf16.mxu0 0
    %867 = vmatpush2.bf16.msra.mxu0 0
    %868 = vmatprep.subr.bf16.mxu0 0
    %869 = vmatpush2.bf16.msra.mxu0 0
    %870 = vmatprep.subr.bf16.mxu0 0
    %871 = vmatpush2.bf16.msra.mxu0 0
    %872 = vmatprep.subr.bf16.mxu0 0
    %873 = vmatpush2.bf16.msra.mxu0 0
    %874 = vmatprep.subr.bf16.mxu0 0
    %875 = vmatpush2.bf16.msra.mxu0 0
    %876 = vmatprep.subr.bf16.mxu0 0
    %877 = vmatpush2.bf16.msra.mxu0 0
    %878 = vmatprep.subr.bf16.mxu0 0
    %879 = vmatpush2.bf16.msra.mxu0 0
    %880 = vmatprep.subr.bf16.mxu0 0
    %881 = vmatpush2.bf16.msra.mxu0 0
    %882 = vmatprep.mubr.bf16.mxu0 0
    %883 = vmatmul.mubr.bf16.gmra.mxu0 %v845
    %v884 = vpop.f32.mrf.mxu0
    %v885 = vadd.f32 0.0, %v884
    %v886 = vpop.f32.mrf.mxu0
    %v887 = vpop.f32.mrf.mxu0
    %v888 = vpop.f32.mrf.mxu0
    %889 = vdwg.mxu0
    %892 = vrot.lane.b32.xlu0 %v837, 8
    %v893 = vpop.permute.xlu0 %892
    %894 = vrot.lane.b32.xlu0 %v885, 8
    %v895 = vpop.permute.xlu0 %894
    %vm898 = vcmask 130112
    %899 = vst.msk [vmem:[#allocation2] sm:$0xff] %vm898, %v893
    %900 = vst.msk [vmem:[#allocation2 + $0x8] sm:$0xff] %vm898, %v895
    %901 = vrot.lane.b32.xlu0 %v446, 112
    %v902 = vpop.permute.xlu0 %901
    %903 = vrot.lane.b32.xlu0 %v446, 80
    %v904 = vpop.permute.xlu0 %903
    %v906 = vsel %vm451, %v902, 0
    %v909 = vsel %vm451, %v904, 0
    %911 = vmatprep.subr.bf16.mxu0 0
    %912 = vmatpush1.bf16.xpose.msra.mxu0 0
    %913 = vmatprep.subr.bf16.mxu0 0
    %914 = vmatpush1.bf16.xpose.msra.mxu0 0
    %915 = vmatprep.subr.bf16.mxu0 0
    %916 = vmatpush1.bf16.xpose.msra.mxu0 0
    %917 = vmatprep.subr.bf16.mxu0 0
    %918 = vmatpush1.bf16.xpose.msra.mxu0 0
    %919 = vmatprep.subr.bf16.mxu0 0
    %920 = vmatpush1.bf16.xpose.msra.mxu0 0
    %921 = vmatprep.subr.bf16.mxu0 0
    %922 = vmatpush1.bf16.xpose.msra.mxu0 0
    %923 = vmatprep.subr.bf16.mxu0 0
    %924 = vmatpush1.bf16.xpose.msra.mxu0 0
    %925 = vmatprep.subr.bf16.mxu0 0
    %926 = vmatpush1.bf16.xpose.msra.mxu0 %v909
    %927 = vmatprep.subr.bf16.mxu0 0
    %928 = vmatpush2.bf16.xpose.msra.mxu0 0
    %929 = vmatprep.subr.bf16.mxu0 0
    %930 = vmatpush2.bf16.xpose.msra.mxu0 0
    %931 = vmatprep.subr.bf16.mxu0 0
    %932 = vmatpush2.bf16.xpose.msra.mxu0 0
    %933 = vmatprep.subr.bf16.mxu0 0
    %934 = vmatpush2.bf16.xpose.msra.mxu0 0
    %935 = vmatprep.subr.bf16.mxu0 0
    %936 = vmatpush2.bf16.xpose.msra.mxu0 0
    %937 = vmatprep.subr.bf16.mxu0 0
    %938 = vmatpush2.bf16.xpose.msra.mxu0 0
    %939 = vmatprep.subr.bf16.mxu0 0
    %940 = vmatpush2.bf16.xpose.msra.mxu0 0
    %941 = vmatprep.subr.bf16.mxu0 0
    %942 = vmatpush2.bf16.xpose.msra.mxu0 0
    %943 = vmatprep.mubr.bf16.mxu0 0
    %944 = vmatmul.mubr.bf16.gmra.mxu0 %v906
    %v945 = vpop.f32.mrf.mxu0
    %v946 = vadd.f32 0.0, %v945
    %v947 = vpop.f32.mrf.mxu0
    %v948 = vpop.f32.mrf.mxu0
    %v949 = vpop.f32.mrf.mxu0
    %950 = vdwg.mxu0
    %951 = vrot.lane.b32.xlu0 %v447, 112
    %v952 = vpop.permute.xlu0 %951
    %953 = vrot.lane.b32.xlu0 %v447, 80
    %v954 = vpop.permute.xlu0 %953
    %v956 = vsel %vm451, %v952, 0
    %v959 = vsel %vm451, %v954, 0
    %961 = vmatprep.subr.bf16.mxu0 0
    %962 = vmatpush1.bf16.xpose.msra.mxu0 0
    %963 = vmatprep.subr.bf16.mxu0 0
    %964 = vmatpush1.bf16.xpose.msra.mxu0 0
    %965 = vmatprep.subr.bf16.mxu0 0
    %966 = vmatpush1.bf16.xpose.msra.mxu0 0
    %967 = vmatprep.subr.bf16.mxu0 0
    %968 = vmatpush1.bf16.xpose.msra.mxu0 0
    %969 = vmatprep.subr.bf16.mxu0 0
    %970 = vmatpush1.bf16.xpose.msra.mxu0 0
    %971 = vmatprep.subr.bf16.mxu0 0
    %972 = vmatpush1.bf16.xpose.msra.mxu0 0
    %973 = vmatprep.subr.bf16.mxu0 0
    %974 = vmatpush1.bf16.xpose.msra.mxu0 0
    %975 = vmatprep.subr.bf16.mxu0 0
    %976 = vmatpush1.bf16.xpose.msra.mxu0 %v959
    %977 = vmatprep.subr.bf16.mxu0 0
    %978 = vmatpush2.bf16.xpose.msra.mxu0 0
    %979 = vmatprep.subr.bf16.mxu0 0
    %980 = vmatpush2.bf16.xpose.msra.mxu0 0
    %981 = vmatprep.subr.bf16.mxu0 0
    %982 = vmatpush2.bf16.xpose.msra.mxu0 0
    %983 = vmatprep.subr.bf16.mxu0 0
    %984 = vmatpush2.bf16.xpose.msra.mxu0 0
    %985 = vmatprep.subr.bf16.mxu0 0
    %986 = vmatpush2.bf16.xpose.msra.mxu0 0
    %987 = vmatprep.subr.bf16.mxu0 0
    %988 = vmatpush2.bf16.xpose.msra.mxu0 0
    %989 = vmatprep.subr.bf16.mxu0 0
    %990 = vmatpush2.bf16.xpose.msra.mxu0 0
    %991 = vmatprep.subr.bf16.mxu0 0
    %992 = vmatpush2.bf16.xpose.msra.mxu0 0
    %993 = vmatprep.mubr.bf16.mxu0 0
    %994 = vmatmul.mubr.bf16.gmra.mxu0 %v956
    %v995 = vpop.f32.mrf.mxu0
    %v996 = vadd.f32 0.0, %v995
    %v997 = vpop.f32.mrf.mxu0
    %v998 = vpop.f32.mrf.mxu0
    %v999 = vpop.f32.mrf.mxu0
    %1000 = vdwg.mxu0
    %v1001 = vsel %vm451, %v946, -inf
    %1002 = vmax.xlane.f32.xlu0 %v1001
    %v1003 = vpop.xlane.xlu0 %1002
    %v1004 = vsel %vm451, %v996, -inf
    %1005 = vmax.xlane.f32.xlu0 %v1004
    %v1006 = vpop.xlane.xlu0 %1005
    %v1007 = vsub.f32 %v946, %v1003
    %v1008 = vsub.f32 %v996, %v1006
    %v1009 = vmul.f32 %v1007, 1.442695
    %v1010 = vpow.pop %v1009
    %v1011 = vmul.f32 %v1008, 1.442695
    %v1012 = vpow.pop %v1011
    %v1013 = vsel %vm451, %v1010, 0.0
    %1014 = vadd.xlane.f32.xlu0 %v1013
    %v1015 = vpop.xlane.xlu0 %1014
    %v1016 = vsel %vm451, %v1012, 0.0
    %1017 = vadd.xlane.f32.xlu0 %v1016
    %v1018 = vpop.xlane.xlu0 %1017
    %v1019 = vrcp.pop %v1015
    %v1020 = vrcp.pop %v1018
    %v1021 = vmul.f32 %v1010, %v1019
    %v1022 = vmul.f32 %v1012, %v1020
    %v1023 = vpack.c.bf16 %v1021, %v1021
    %v1024 = vpack.c.bf16 %v1022, %v1022
    %1025 = vrot.lane.b32.xlu0 %v446, 48
    %v1026 = vpop.permute.xlu0 %1025
    %v1028 = vsel %vm451, %v1023, 0
    %v1031 = vsel %vm576, %v1026, 0
    %1033 = vmatprep.subr.bf16.mxu0 0
    %1034 = vmatpush1.bf16.msra.mxu0 0
    %1035 = vmatprep.subr.bf16.mxu0 0
    %1036 = vmatpush1.bf16.msra.mxu0 0
    %1037 = vmatprep.subr.bf16.mxu0 0
    %1038 = vmatpush1.bf16.msra.mxu0 0
    %1039 = vmatprep.subr.bf16.mxu0 0
    %1040 = vmatpush1.bf16.msra.mxu0 0
    %1041 = vmatprep.subr.bf16.mxu0 0
    %1042 = vmatpush1.bf16.msra.mxu0 0
    %1043 = vmatprep.subr.bf16.mxu0 0
    %1044 = vmatpush1.bf16.msra.mxu0 0
    %1045 = vmatprep.subr.bf16.mxu0 0
    %1046 = vmatpush1.bf16.msra.mxu0 0
    %1047 = vmatprep.subr.bf16.mxu0 0
    %1048 = vmatpush1.bf16.msra.mxu0 %v1031
    %1049 = vmatprep.subr.bf16.mxu0 0
    %1050 = vmatpush2.bf16.msra.mxu0 0
    %1051 = vmatprep.subr.bf16.mxu0 0
    %1052 = vmatpush2.bf16.msra.mxu0 0
    %1053 = vmatprep.subr.bf16.mxu0 0
    %1054 = vmatpush2.bf16.msra.mxu0 0
    %1055 = vmatprep.subr.bf16.mxu0 0
    %1056 = vmatpush2.bf16.msra.mxu0 0
    %1057 = vmatprep.subr.bf16.mxu0 0
    %1058 = vmatpush2.bf16.msra.mxu0 0
    %1059 = vmatprep.subr.bf16.mxu0 0
    %1060 = vmatpush2.bf16.msra.mxu0 0
    %1061 = vmatprep.subr.bf16.mxu0 0
    %1062 = vmatpush2.bf16.msra.mxu0 0
    %1063 = vmatprep.subr.bf16.mxu0 0
    %1064 = vmatpush2.bf16.msra.mxu0 0
    %1065 = vmatprep.mubr.bf16.mxu0 0
    %1066 = vmatmul.mubr.bf16.gmra.mxu0 %v1028
    %v1067 = vpop.f32.mrf.mxu0
    %v1068 = vadd.f32 0.0, %v1067
    %v1069 = vpop.f32.mrf.mxu0
    %v1070 = vpop.f32.mrf.mxu0
    %v1071 = vpop.f32.mrf.mxu0
    %1072 = vdwg.mxu0
    %1073 = vrot.lane.b32.xlu0 %v447, 48
    %v1074 = vpop.permute.xlu0 %1073
    %v1076 = vsel %vm451, %v1024, 0
    %v1079 = vsel %vm576, %v1074, 0
    %1081 = vmatprep.subr.bf16.mxu0 0
    %1082 = vmatpush1.bf16.msra.mxu0 0
    %1083 = vmatprep.subr.bf16.mxu0 0
    %1084 = vmatpush1.bf16.msra.mxu0 0
    %1085 = vmatprep.subr.bf16.mxu0 0
    %1086 = vmatpush1.bf16.msra.mxu0 0
    %1087 = vmatprep.subr.bf16.mxu0 0
    %1088 = vmatpush1.bf16.msra.mxu0 0
    %1089 = vmatprep.subr.bf16.mxu0 0
    %1090 = vmatpush1.bf16.msra.mxu0 0
    %1091 = vmatprep.subr.bf16.mxu0 0
    %1092 = vmatpush1.bf16.msra.mxu0 0
    %1093 = vmatprep.subr.bf16.mxu0 0
    %1094 = vmatpush1.bf16.msra.mxu0 0
    %1095 = vmatprep.subr.bf16.mxu0 0
    %1096 = vmatpush1.bf16.msra.mxu0 %v1079
    %1097 = vmatprep.subr.bf16.mxu0 0
    %1098 = vmatpush2.bf16.msra.mxu0 0
    %1099 = vmatprep.subr.bf16.mxu0 0
    %1100 = vmatpush2.bf16.msra.mxu0 0
    %1101 = vmatprep.subr.bf16.mxu0 0
    %1102 = vmatpush2.bf16.msra.mxu0 0
    %1103 = vmatprep.subr.bf16.mxu0 0
    %1104 = vmatpush2.bf16.msra.mxu0 0
    %1105 = vmatprep.subr.bf16.mxu0 0
    %1106 = vmatpush2.bf16.msra.mxu0 0
    %1107 = vmatprep.subr.bf16.mxu0 0
    %1108 = vmatpush2.bf16.msra.mxu0 0
    %1109 = vmatprep.subr.bf16.mxu0 0
    %1110 = vmatpush2.bf16.msra.mxu0 0
    %1111 = vmatprep.subr.bf16.mxu0 0
    %1112 = vmatpush2.bf16.msra.mxu0 0
    %1113 = vmatprep.mubr.bf16.mxu0 0
    %1114 = vmatmul.mubr.bf16.gmra.mxu0 %v1076
    %v1115 = vpop.f32.mrf.mxu0
    %v1116 = vadd.f32 0.0, %v1115
    %v1117 = vpop.f32.mrf.mxu0
    %v1118 = vpop.f32.mrf.mxu0
    %v1119 = vpop.f32.mrf.mxu0
    %1120 = vdwg.mxu0
    %1123 = vrot.lane.b32.xlu0 %v1068, 16
    %v1124 = vpop.permute.xlu0 %1123
    %1125 = vrot.lane.b32.xlu0 %v1116, 16
    %v1126 = vpop.permute.xlu0 %1125
    %vm1129 = vcmask 195712
    %1130 = vst.msk [vmem:[#allocation2] sm:$0xff] %vm1129, %v1124
    %1131 = vst.msk [vmem:[#allocation2 + $0x8] sm:$0xff] %vm1129, %v1126
    %1132 = vrot.lane.b32.xlu0 %v446, 104
    %v1133 = vpop.permute.xlu0 %1132
    %1134 = vrot.lane.b32.xlu0 %v446, 72
    %v1135 = vpop.permute.xlu0 %1134
    %v1137 = vsel %vm451, %v1133, 0
    %v1140 = vsel %vm451, %v1135, 0
    %1142 = vmatprep.subr.bf16.mxu0 0
    %1143 = vmatpush1.bf16.xpose.msra.mxu0 0
    %1144 = vmatprep.subr.bf16.mxu0 0
    %1145 = vmatpush1.bf16.xpose.msra.mxu0 0
    %1146 = vmatprep.subr.bf16.mxu0 0
    %1147 = vmatpush1.bf16.xpose.msra.mxu0 0
    %1148 = vmatprep.subr.bf16.mxu0 0
    %1149 = vmatpush1.bf16.xpose.msra.mxu0 0
    %1150 = vmatprep.subr.bf16.mxu0 0
    %1151 = vmatpush1.bf16.xpose.msra.mxu0 0
    %1152 = vmatprep.subr.bf16.mxu0 0
    %1153 = vmatpush1.bf16.xpose.msra.mxu0 0
    %1154 = vmatprep.subr.bf16.mxu0 0
    %1155 = vmatpush1.bf16.xpose.msra.mxu0 0
    %1156 = vmatprep.subr.bf16.mxu0 0
    %1157 = vmatpush1.bf16.xpose.msra.mxu0 %v1140
    %1158 = vmatprep.subr.bf16.mxu0 0
    %1159 = vmatpush2.bf16.xpose.msra.mxu0 0
    %1160 = vmatprep.subr.bf16.mxu0 0
    %1161 = vmatpush2.bf16.xpose.msra.mxu0 0
    %1162 = vmatprep.subr.bf16.mxu0 0
    %1163 = vmatpush2.bf16.xpose.msra.mxu0 0
    %1164 = vmatprep.subr.bf16.mxu0 0
    %1165 = vmatpush2.bf16.xpose.msra.mxu0 0
    %1166 = vmatprep.subr.bf16.mxu0 0
    %1167 = vmatpush2.bf16.xpose.msra.mxu0 0
    %1168 = vmatprep.subr.bf16.mxu0 0
    %1169 = vmatpush2.bf16.xpose.msra.mxu0 0
    %1170 = vmatprep.subr.bf16.mxu0 0
    %1171 = vmatpush2.bf16.xpose.msra.mxu0 0
    %1172 = vmatprep.subr.bf16.mxu0 0
    %1173 = vmatpush2.bf16.xpose.msra.mxu0 0
    %1174 = vmatprep.mubr.bf16.mxu0 0
    %1175 = vmatmul.mubr.bf16.gmra.mxu0 %v1137
    %v1176 = vpop.f32.mrf.mxu0
    %v1177 = vadd.f32 0.0, %v1176
    %v1178 = vpop.f32.mrf.mxu0
    %v1179 = vpop.f32.mrf.mxu0
    %v1180 = vpop.f32.mrf.mxu0
    %1181 = vdwg.mxu0
    %1182 = vrot.lane.b32.xlu0 %v447, 104
    %v1183 = vpop.permute.xlu0 %1182
    %1184 = vrot.lane.b32.xlu0 %v447, 72
    %v1185 = vpop.permute.xlu0 %1184
    %v1187 = vsel %vm451, %v1183, 0
    %v1190 = vsel %vm451, %v1185, 0
    %1192 = vmatprep.subr.bf16.mxu0 0
    %1193 = vmatpush1.bf16.xpose.msra.mxu0 0
    %1194 = vmatprep.subr.bf16.mxu0 0
    %1195 = vmatpush1.bf16.xpose.msra.mxu0 0
    %1196 = vmatprep.subr.bf16.mxu0 0
    %1197 = vmatpush1.bf16.xpose.msra.mxu0 0
    %1198 = vmatprep.subr.bf16.mxu0 0
    %1199 = vmatpush1.bf16.xpose.msra.mxu0 0
    %1200 = vmatprep.subr.bf16.mxu0 0
    %1201 = vmatpush1.bf16.xpose.msra.mxu0 0
    %1202 = vmatprep.subr.bf16.mxu0 0
    %1203 = vmatpush1.bf16.xpose.msra.mxu0 0
    %1204 = vmatprep.subr.bf16.mxu0 0
    %1205 = vmatpush1.bf16.xpose.msra.mxu0 0
    %1206 = vmatprep.subr.bf16.mxu0 0
    %1207 = vmatpush1.bf16.xpose.msra.mxu0 %v1190
    %1208 = vmatprep.subr.bf16.mxu0 0
    %1209 = vmatpush2.bf16.xpose.msra.mxu0 0
    %1210 = vmatprep.subr.bf16.mxu0 0
    %1211 = vmatpush2.bf16.xpose.msra.mxu0 0
    %1212 = vmatprep.subr.bf16.mxu0 0
    %1213 = vmatpush2.bf16.xpose.msra.mxu0 0
    %1214 = vmatprep.subr.bf16.mxu0 0
    %1215 = vmatpush2.bf16.xpose.msra.mxu0 0
    %1216 = vmatprep.subr.bf16.mxu0 0
    %1217 = vmatpush2.bf16.xpose.msra.mxu0 0
    %1218 = vmatprep.subr.bf16.mxu0 0
    %1219 = vmatpush2.bf16.xpose.msra.mxu0 0
    %1220 = vmatprep.subr.bf16.mxu0 0
    %1221 = vmatpush2.bf16.xpose.msra.mxu0 0
    %1222 = vmatprep.subr.bf16.mxu0 0
    %1223 = vmatpush2.bf16.xpose.msra.mxu0 0
    %1224 = vmatprep.mubr.bf16.mxu0 0
    %1225 = vmatmul.mubr.bf16.gmra.mxu0 %v1187
    %v1226 = vpop.f32.mrf.mxu0
    %v1227 = vadd.f32 0.0, %v1226
    %v1228 = vpop.f32.mrf.mxu0
    %v1229 = vpop.f32.mrf.mxu0
    %v1230 = vpop.f32.mrf.mxu0
    %1231 = vdwg.mxu0
    %v1232 = vsel %vm451, %v1177, -inf
    %1233 = vmax.xlane.f32.xlu0 %v1232
    %v1234 = vpop.xlane.xlu0 %1233
    %v1235 = vsel %vm451, %v1227, -inf
    %1236 = vmax.xlane.f32.xlu0 %v1235
    %v1237 = vpop.xlane.xlu0 %1236
    %v1238 = vsub.f32 %v1177, %v1234
    %v1239 = vsub.f32 %v1227, %v1237
    %v1240 = vmul.f32 %v1238, 1.442695
    %v1241 = vpow.pop %v1240
    %v1242 = vmul.f32 %v1239, 1.442695
    %v1243 = vpow.pop %v1242
    %v1244 = vsel %vm451, %v1241, 0.0
    %1245 = vadd.xlane.f32.xlu0 %v1244
    %v1246 = vpop.xlane.xlu0 %1245
    %v1247 = vsel %vm451, %v1243, 0.0
    %1248 = vadd.xlane.f32.xlu0 %v1247
    %v1249 = vpop.xlane.xlu0 %1248
    %v1250 = vrcp.pop %v1246
    %v1251 = vrcp.pop %v1249
    %v1252 = vmul.f32 %v1241, %v1250
    %v1253 = vmul.f32 %v1243, %v1251
    %v1254 = vpack.c.bf16 %v1252, %v1252
    %v1255 = vpack.c.bf16 %v1253, %v1253
    %1256 = vrot.lane.b32.xlu0 %v446, 40
    %v1257 = vpop.permute.xlu0 %1256
    %v1259 = vsel %vm451, %v1254, 0
    %v1262 = vsel %vm576, %v1257, 0
    %1264 = vmatprep.subr.bf16.mxu0 0
    %1265 = vmatpush1.bf16.msra.mxu0 0
    %1266 = vmatprep.subr.bf16.mxu0 0
    %1267 = vmatpush1.bf16.msra.mxu0 0
    %1268 = vmatprep.subr.bf16.mxu0 0
    %1269 = vmatpush1.bf16.msra.mxu0 0
    %1270 = vmatprep.subr.bf16.mxu0 0
    %1271 = vmatpush1.bf16.msra.mxu0 0
    %1272 = vmatprep.subr.bf16.mxu0 0
    %1273 = vmatpush1.bf16.msra.mxu0 0
    %1274 = vmatprep.subr.bf16.mxu0 0
    %1275 = vmatpush1.bf16.msra.mxu0 0
    %1276 = vmatprep.subr.bf16.mxu0 0
    %1277 = vmatpush1.bf16.msra.mxu0 0
    %1278 = vmatprep.subr.bf16.mxu0 0
    %1279 = vmatpush1.bf16.msra.mxu0 %v1262
    %1280 = vmatprep.subr.bf16.mxu0 0
    %1281 = vmatpush2.bf16.msra.mxu0 0
    %1282 = vmatprep.subr.bf16.mxu0 0
    %1283 = vmatpush2.bf16.msra.mxu0 0
    %1284 = vmatprep.subr.bf16.mxu0 0
    %1285 = vmatpush2.bf16.msra.mxu0 0
    %1286 = vmatprep.subr.bf16.mxu0 0
    %1287 = vmatpush2.bf16.msra.mxu0 0
    %1288 = vmatprep.subr.bf16.mxu0 0
    %1289 = vmatpush2.bf16.msra.mxu0 0
    %1290 = vmatprep.subr.bf16.mxu0 0
    %1291 = vmatpush2.bf16.msra.mxu0 0
    %1292 = vmatprep.subr.bf16.mxu0 0
    %1293 = vmatpush2.bf16.msra.mxu0 0
    %1294 = vmatprep.subr.bf16.mxu0 0
    %1295 = vmatpush2.bf16.msra.mxu0 0
    %1296 = vmatprep.mubr.bf16.mxu0 0
    %1297 = vmatmul.mubr.bf16.gmra.mxu0 %v1259
    %v1298 = vpop.f32.mrf.mxu0
    %v1299 = vadd.f32 0.0, %v1298
    %v1300 = vpop.f32.mrf.mxu0
    %v1301 = vpop.f32.mrf.mxu0
    %v1302 = vpop.f32.mrf.mxu0
    %1303 = vdwg.mxu0
    %1304 = vrot.lane.b32.xlu0 %v447, 40
    %v1305 = vpop.permute.xlu0 %1304
    %v1307 = vsel %vm451, %v1255, 0
    %v1310 = vsel %vm576, %v1305, 0
    %1312 = vmatprep.subr.bf16.mxu0 0
    %1313 = vmatpush1.bf16.msra.mxu0 0
    %1314 = vmatprep.subr.bf16.mxu0 0
    %1315 = vmatpush1.bf16.msra.mxu0 0
    %1316 = vmatprep.subr.bf16.mxu0 0
    %1317 = vmatpush1.bf16.msra.mxu0 0
    %1318 = vmatprep.subr.bf16.mxu0 0
    %1319 = vmatpush1.bf16.msra.mxu0 0
    %1320 = vmatprep.subr.bf16.mxu0 0
    %1321 = vmatpush1.bf16.msra.mxu0 0
    %1322 = vmatprep.subr.bf16.mxu0 0
    %1323 = vmatpush1.bf16.msra.mxu0 0
    %1324 = vmatprep.subr.bf16.mxu0 0
    %1325 = vmatpush1.bf16.msra.mxu0 0
    %1326 = vmatprep.subr.bf16.mxu0 0
    %1327 = vmatpush1.bf16.msra.mxu0 %v1310
    %1328 = vmatprep.subr.bf16.mxu0 0
    %1329 = vmatpush2.bf16.msra.mxu0 0
    %1330 = vmatprep.subr.bf16.mxu0 0
    %1331 = vmatpush2.bf16.msra.mxu0 0
    %1332 = vmatprep.subr.bf16.mxu0 0
    %1333 = vmatpush2.bf16.msra.mxu0 0
    %1334 = vmatprep.subr.bf16.mxu0 0
    %1335 = vmatpush2.bf16.msra.mxu0 0
    %1336 = vmatprep.subr.bf16.mxu0 0
    %1337 = vmatpush2.bf16.msra.mxu0 0
    %1338 = vmatprep.subr.bf16.mxu0 0
    %1339 = vmatpush2.bf16.msra.mxu0 0
    %1340 = vmatprep.subr.bf16.mxu0 0
    %1341 = vmatpush2.bf16.msra.mxu0 0
    %1342 = vmatprep.subr.bf16.mxu0 0
    %1343 = vmatpush2.bf16.msra.mxu0 0
    %1344 = vmatprep.mubr.bf16.mxu0 0
    %1345 = vmatmul.mubr.bf16.gmra.mxu0 %v1307
    %v1346 = vpop.f32.mrf.mxu0
    %v1347 = vadd.f32 0.0, %v1346
    %v1348 = vpop.f32.mrf.mxu0
    %v1349 = vpop.f32.mrf.mxu0
    %v1350 = vpop.f32.mrf.mxu0
    %1351 = vdwg.mxu0
    %1354 = vrot.lane.b32.xlu0 %v1299, 24
    %v1355 = vpop.permute.xlu0 %1354
    %1356 = vrot.lane.b32.xlu0 %v1347, 24
    %v1357 = vpop.permute.xlu0 %1356
    %vm1360 = vcmask 261312
    %1361 = vst.msk [vmem:[#allocation2] sm:$0xff] %vm1360, %v1355
    %1362 = vst.msk [vmem:[#allocation2 + $0x8] sm:$0xff] %vm1360, %v1357
    %v1363 = vld [vmem:[#allocation2] sm:$0xff]
    %v1364 = vld [vmem:[#allocation2 + $0x8] sm:$0xff]
    %v1365 = vpack.c.bf16 %v1364, %v1363
    %v1370 = vunpack.c.l.b16 %v303
    %v1371 = vunpack.c.l.b16 %v304
    %v1372 = vunpack.c.l.b16 %v305
    %v1373 = vunpack.c.l.b16 %v306
    %v1374 = vpack.c.b16 %v1371, %v1370
    %v1375 = vpack.c.b16 %v1373, %v1372
    %v1379 = vsel %vm345, %v1365, 0
    %1381 = vmatprep.subr.bf16.mxu0 0
    %1382 = vmatpush1.bf16.msra.mxu0 0
    %1383 = vmatprep.subr.bf16.mxu0 0
    %1384 = vmatpush1.bf16.msra.mxu0 0
    %1385 = vmatprep.subr.bf16.mxu0 0
    %1386 = vmatpush1.bf16.msra.mxu0 0
    %1387 = vmatprep.subr.bf16.mxu0 0
    %1388 = vmatpush1.bf16.msra.mxu0 0
    %1389 = vmatprep.subr.bf16.mxu0 0
    %1390 = vmatpush1.bf16.msra.mxu0 0
    %1391 = vmatprep.subr.bf16.mxu0 0
    %1392 = vmatpush1.bf16.msra.mxu0 0
    %1393 = vmatprep.subr.bf16.mxu0 0
    %1394 = vmatpush1.bf16.msra.mxu0 %v1375
    %1395 = vmatprep.subr.bf16.mxu0 0
    %1396 = vmatpush1.bf16.msra.mxu0 %v1374
    %1397 = vmatprep.subr.bf16.mxu0 0
    %1398 = vmatpush2.bf16.msra.mxu0 0
    %1399 = vmatprep.subr.bf16.mxu0 0
    %1400 = vmatpush2.bf16.msra.mxu0 0
    %1401 = vmatprep.subr.bf16.mxu0 0
    %1402 = vmatpush2.bf16.msra.mxu0 0
    %1403 = vmatprep.subr.bf16.mxu0 0
    %1404 = vmatpush2.bf16.msra.mxu0 0
    %1405 = vmatprep.subr.bf16.mxu0 0
    %1406 = vmatpush2.bf16.msra.mxu0 0
    %1407 = vmatprep.subr.bf16.mxu0 0
    %1408 = vmatpush2.bf16.msra.mxu0 0
    %1409 = vmatprep.subr.bf16.mxu0 0
    %1410 = vmatpush2.bf16.msra.mxu0 0
    %1411 = vmatprep.subr.bf16.mxu0 0
    %1412 = vmatpush2.bf16.msra.mxu0 0
    %1413 = vmatprep.mubr.bf16.mxu0 0
    %1414 = vmatmul.mubr.bf16.gmra.mxu0 %v1379
    %v1415 = vpop.f32.mrf.mxu0
    %v1416 = vadd.f32 0.0, %v1415
    %v1417 = vpop.f32.mrf.mxu0
    %v1418 = vpop.f32.mrf.mxu0
    %v1419 = vadd.f32 0.0, %v1418
    %v1420 = vpop.f32.mrf.mxu0
    %1421 = vdwg.mxu0
    %v1422 = vadd.f32 %v387, %v1416
    %v1423 = vadd.f32 %v388, %v1419
    %v1424 = vsel %vm345, %v1422, 0.0
    %1425 = vadd.xlane.f32.xlu0 %v1424
    %v1426 = vpop.xlane.xlu0 %1425
    %v1427 = vsel %vm345, %v1423, 0.0
    %1428 = vadd.xlane.f32.xlu0 %v1427
    %v1429 = vpop.xlane.xlu0 %1428
    %v1430 = vmul.f32 %v1426, %v352
    %v1431 = vmul.f32 %v1429, %v352
    %v1432 = vsub.f32 %v1422, %v1430
    %v1433 = vsub.f32 %v1423, %v1431
    %v1434 = vmul.f32 %v1432, %v1432
    %v1435 = vmul.f32 %v1433, %v1433
    %v1436 = vsel %vm345, %v1434, 0.0
    %1437 = vadd.xlane.f32.xlu0 %v1436
    %v1438 = vpop.xlane.xlu0 %1437
    %v1439 = vsel %vm345, %v1435, 0.0
    %1440 = vadd.xlane.f32.xlu0 %v1439
    %v1441 = vpop.xlane.xlu0 %1440
    %v1442 = vmul.f32 %v1438, %v352
    %v1443 = vmul.f32 %v1441, %v352
    %v1444 = vadd.f32 %v1442, 1e-05
    %v1445 = vadd.f32 %v1443, 1e-05
    %v1446 = vrsqrt.pop %v1444
    %v1447 = vrsqrt.pop %v1445
    %v1448 = vmul.f32 %v1432, %v1446
    %v1449 = vmul.f32 %v1433, %v1447
    %v1451 = vlaneseq
    %v1452 = vshrl.u32 %v1451, 7
    %v1453 = vsub.s32 0, %v1452
    %v1454 = vrot.slane %v307, %v1453
    %v1456 = vmul.f32 %v1448, %v1454
    %v1457 = vmul.f32 %v1449, %v1454
    %v1459 = vlaneseq
    %v1460 = vshrl.u32 %v1459, 7
    %v1461 = vsub.s32 0, %v1460
    %v1462 = vrot.slane %v308, %v1461
    %v1464 = vadd.f32 %v1456, %v1462
    %v1465 = vadd.f32 %v1457, %v1462
    %v1466 = vpack.c.bf16 %v1465, %v1464
    %v1471 = vunpack.c.l.b16 %v309
    %v1472 = vunpack.c.l.b16 %v310
    %v1473 = vunpack.c.l.b16 %v311
    %v1474 = vunpack.c.l.b16 %v312
    %v1475 = vpack.c.b16 %v1472, %v1471
    %v1476 = vpack.c.b16 %v1474, %v1473
    %v1480 = vsel %vm345, %v1466, 0
    %1482 = vmatprep.subr.bf16.mxu0 0
    %1483 = vmatpush1.bf16.msra.mxu0 0
    %1484 = vmatprep.subr.bf16.mxu0 0
    %1485 = vmatpush1.bf16.msra.mxu0 0
    %1486 = vmatprep.subr.bf16.mxu0 0
    %1487 = vmatpush1.bf16.msra.mxu0 0
    %1488 = vmatprep.subr.bf16.mxu0 0
    %1489 = vmatpush1.bf16.msra.mxu0 0
    %1490 = vmatprep.subr.bf16.mxu0 0
    %1491 = vmatpush1.bf16.msra.mxu0 0
    %1492 = vmatprep.subr.bf16.mxu0 0
    %1493 = vmatpush1.bf16.msra.mxu0 0
    %1494 = vmatprep.subr.bf16.mxu0 0
    %1495 = vmatpush1.bf16.msra.mxu0 %v1476
    %1496 = vmatprep.subr.bf16.mxu0 0
    %1497 = vmatpush1.bf16.msra.mxu0 %v1475
    %1498 = vmatprep.subr.bf16.mxu0 0
    %1499 = vmatpush2.bf16.msra.mxu0 0
    %1500 = vmatprep.subr.bf16.mxu0 0
    %1501 = vmatpush2.bf16.msra.mxu0 0
    %1502 = vmatprep.subr.bf16.mxu0 0
    %1503 = vmatpush2.bf16.msra.mxu0 0
    %1504 = vmatprep.subr.bf16.mxu0 0
    %1505 = vmatpush2.bf16.msra.mxu0 0
    %1506 = vmatprep.subr.bf16.mxu0 0
    %1507 = vmatpush2.bf16.msra.mxu0 0
    %1508 = vmatprep.subr.bf16.mxu0 0
    %1509 = vmatpush2.bf16.msra.mxu0 0
    %1510 = vmatprep.subr.bf16.mxu0 0
    %1511 = vmatpush2.bf16.msra.mxu0 0
    %1512 = vmatprep.subr.bf16.mxu0 0
    %1513 = vmatpush2.bf16.msra.mxu0 0
    %1514 = vmatprep.mubr.bf16.mxu0 0
    %1515 = vmatmul.mubr.bf16.gmra.mxu0 %v1480
    %v1516 = vpop.f32.mrf.mxu0
    %v1517 = vadd.f32 0.0, %v1516
    %v1518 = vpop.f32.mrf.mxu0
    %v1519 = vpop.f32.mrf.mxu0
    %v1520 = vadd.f32 0.0, %v1519
    %v1521 = vpop.f32.mrf.mxu0
    %1522 = vdwg.mxu0
    %v1527 = vunpack.c.l.b16 %v313
    %v1528 = vunpack.c.l.b16 %v314
    %v1529 = vunpack.c.l.b16 %v315
    %v1530 = vunpack.c.l.b16 %v316
    %v1531 = vpack.c.b16 %v1528, %v1527
    %v1532 = vpack.c.b16 %v1530, %v1529
    %v1536 = vsel %vm345, %v295, 0
    %v1539 = vsel %vm345, %v296, 0
    %1541 = vmatprep.subr.bf16.mxu0 0
    %1542 = vmatpush1.bf16.msra.mxu0 0
    %1543 = vmatprep.subr.bf16.mxu0 0
    %1544 = vmatpush1.bf16.msra.mxu0 0
    %1545 = vmatprep.subr.bf16.mxu0 0
    %1546 = vmatpush1.bf16.msra.mxu0 0
    %1547 = vmatprep.subr.bf16.mxu0 0
    %1548 = vmatpush1.bf16.msra.mxu0 0
    %1549 = vmatprep.subr.bf16.mxu0 0
    %1550 = vmatpush1.bf16.msra.mxu0 0
    %1551 = vmatprep.subr.bf16.mxu0 0
    %1552 = vmatpush1.bf16.msra.mxu0 0
    %1553 = vmatprep.subr.bf16.mxu0 0
    %1554 = vmatpush1.bf16.msra.mxu0 %v1532
    %1555 = vmatprep.subr.bf16.mxu0 0
    %1556 = vmatpush1.bf16.msra.mxu0 %v1531
    %1557 = vmatprep.subr.bf16.mxu0 0
    %1558 = vmatpush2.bf16.msra.mxu0 0
    %1559 = vmatprep.subr.bf16.mxu0 0
    %1560 = vmatpush2.bf16.msra.mxu0 0
    %1561 = vmatprep.subr.bf16.mxu0 0
    %1562 = vmatpush2.bf16.msra.mxu0 0
    %1563 = vmatprep.subr.bf16.mxu0 0
    %1564 = vmatpush2.bf16.msra.mxu0 0
    %1565 = vmatprep.subr.bf16.mxu0 0
    %1566 = vmatpush2.bf16.msra.mxu0 0
    %1567 = vmatprep.subr.bf16.mxu0 0
    %1568 = vmatpush2.bf16.msra.mxu0 0
    %1569 = vmatprep.subr.bf16.mxu0 0
    %1570 = vmatpush2.bf16.msra.mxu0 0
    %1571 = vmatprep.subr.bf16.mxu0 0
    %1572 = vmatpush2.bf16.msra.mxu0 0
    %1573 = vmatprep.mubr.bf16.mxu0 0
    %1574 = vmatmul.mubr.bf16.gmra.mxu0 %v1536
    %v1575 = vpop.f32.mrf.mxu0
    %v1576 = vadd.f32 0.0, %v1575
    %v1577 = vpop.f32.mrf.mxu0
    %v1578 = vpop.f32.mrf.mxu0
    %v1579 = vadd.f32 0.0, %v1578
    %v1580 = vpop.f32.mrf.mxu0
    %1581 = vmatprep.mubr.bf16.mxu0 0
    %1582 = vmatmul.mubr.bf16.gmra.mxu0 %v1539
    %v1583 = vpop.f32.mrf.mxu0
    %v1584 = vadd.f32 0.0, %v1583
    %v1585 = vpop.f32.mrf.mxu0
    %v1586 = vpop.f32.mrf.mxu0
    %v1587 = vpop.f32.mrf.mxu0
    %1588 = vdwg.mxu0
    %v1592 = vcombine.high %v1576, %v1576
    %v1594 = vunpack.c.l.s4 1983009808
    %v1595 = vunpack.c.0.s8 %v1594
    %v1596 = vlaneseq
    %v1597 = vshrl.u32 %v1596, 7
    %v1598 = vsub.s32 %v1595, %v1597
    %v1599 = vrot.slane %v1576, %v1598
    %v1601 = vunpack.c.l.s4 1983009808
    %v1602 = vunpack.c.0.s8 %v1601
    %v1603 = vlaneseq
    %v1604 = vshrl.u32 %v1603, 7
    %v1605 = vsub.s32 %v1602, %v1604
    %v1606 = vrot.slane %v1592, %v1605
    %v1607 = vcombine.high %v1599, %v1599
    %v1608 = vcombine.high %v1606, %v1606
    %v1609 = vcombine.high %v1579, %v1579
    %v1611 = vunpack.c.l.s4 1983009808
    %v1612 = vunpack.c.0.s8 %v1611
    %v1613 = vlaneseq
    %v1614 = vshrl.u32 %v1613, 7
    %v1615 = vsub.s32 %v1612, %v1614
    %v1616 = vrot.slane %v1579, %v1615
    %v1618 = vunpack.c.l.s4 1983009808
    %v1619 = vunpack.c.0.s8 %v1618
    %v1620 = vlaneseq
    %v1621 = vshrl.u32 %v1620, 7
    %v1622 = vsub.s32 %v1619, %v1621
    %v1623 = vrot.slane %v1609, %v1622
    %v1624 = vcombine.high %v1616, %v1616
    %v1625 = vcombine.high %v1623, %v1623
    %v1627 = vunpack.c.l.s4 1983009808
    %v1628 = vunpack.c.0.s8 %v1627
    %v1629 = vlaneseq
    %v1630 = vshrl.u32 %v1629, 7
    %v1631 = vsub.s32 %v1628, %v1630
    %v1632 = vrot.slane %v1584, %v1631
    %v1633 = vcombine.high %v1632, %v1632
    %v1634 = vpack.c.bf16 %v1517, %v1517
    %v1635 = vpack.c.bf16 %v1520, %v1520
    %v1636 = vcombine.low %v1599, %v1607
    %v1637 = vcombine.low %v1606, %v1608
    %v1639 = vunpack.c.l.s4 1983009808
    %v1640 = vunpack.c.0.s8 %v1639
    %v1641 = vlaneseq
    %v1642 = vshrl.u32 %v1641, 7
    %v1643 = vsub.s32 %v1640, %v1642
    %v1644 = vrot.slane %v1636, %v1643
    %v1646 = vunpack.c.l.s4 1983009808
    %v1647 = vunpack.c.0.s8 %v1646
    %v1648 = vlaneseq
    %v1649 = vshrl.u32 %v1648, 7
    %v1650 = vsub.s32 %v1647, %v1649
    %v1651 = vrot.slane %v1637, %v1650
    %v1652 = vcombine.low %v1644, %v1651
    %v1654 = vunpack.c.l.s4 1983009808
    %v1655 = vunpack.c.0.s8 %v1654
    %v1656 = vlaneseq
    %v1657 = vshrl.u32 %v1656, 7
    %v1658 = vsub.s32 %v1655, %v1657
    %v1659 = vrot.slane %v1616, %v1658
    %v1660 = vcombine.low %v1624, %v1623
    %v1661 = vcombine.low %v1625, %v1632
    %v1663 = vunpack.c.l.s4 1983009808
    %v1664 = vunpack.c.0.s8 %v1663
    %v1665 = vlaneseq
    %v1666 = vshrl.u32 %v1665, 7
    %v1667 = vsub.s32 %v1664, %v1666
    %v1668 = vrot.slane %v1660, %v1667
    %v1670 = vunpack.c.l.s4 1983009808
    %v1671 = vunpack.c.0.s8 %v1670
    %v1672 = vlaneseq
    %v1673 = vshrl.u32 %v1672, 7
    %v1674 = vsub.s32 %v1671, %v1673
    %v1675 = vrot.slane %v1661, %v1674
    %v1676 = vcombine.low %v1668, %v1675
    %v1678 = vunpack.c.l.s4 1983009808
    %v1679 = vunpack.c.0.s8 %v1678
    %v1680 = vlaneseq
    %v1681 = vshrl.u32 %v1680, 7
    %v1682 = vsub.s32 %v1679, %v1681
    %v1683 = vrot.slane %v1633, %v1682
    %v1688 = vpack.c.bf16 %v1659, %v1652
    %v1689 = vpack.c.bf16 %v1683, %v1676
    %v1691 = vsel %vm451, %v1634, 0
    %v1694 = vsel %vm451, %v1688, 0
    %1696 = vmatprep.subr.bf16.mxu0 0
    %1697 = vmatpush1.bf16.xpose.msra.mxu0 0
    %1698 = vmatprep.subr.bf16.mxu0 0
    %1699 = vmatpush1.bf16.xpose.msra.mxu0 0
    %1700 = vmatprep.subr.bf16.mxu0 0
    %1701 = vmatpush1.bf16.xpose.msra.mxu0 0
    %1702 = vmatprep.subr.bf16.mxu0 0
    %1703 = vmatpush1.bf16.xpose.msra.mxu0 0
    %1704 = vmatprep.subr.bf16.mxu0 0
    %1705 = vmatpush1.bf16.xpose.msra.mxu0 0
    %1706 = vmatprep.subr.bf16.mxu0 0
    %1707 = vmatpush1.bf16.xpose.msra.mxu0 0
    %1708 = vmatprep.subr.bf16.mxu0 0
    %1709 = vmatpush1.bf16.xpose.msra.mxu0 0
    %1710 = vmatprep.subr.bf16.mxu0 0
    %1711 = vmatpush1.bf16.xpose.msra.mxu0 %v1694
    %1712 = vmatprep.subr.bf16.mxu0 0
    %1713 = vmatpush2.bf16.xpose.msra.mxu0 0
    %1714 = vmatprep.subr.bf16.mxu0 0
    %1715 = vmatpush2.bf16.xpose.msra.mxu0 0
    %1716 = vmatprep.subr.bf16.mxu0 0
    %1717 = vmatpush2.bf16.xpose.msra.mxu0 0
    %1718 = vmatprep.subr.bf16.mxu0 0
    %1719 = vmatpush2.bf16.xpose.msra.mxu0 0
    %1720 = vmatprep.subr.bf16.mxu0 0
    %1721 = vmatpush2.bf16.xpose.msra.mxu0 0
    %1722 = vmatprep.subr.bf16.mxu0 0
    %1723 = vmatpush2.bf16.xpose.msra.mxu0 0
    %1724 = vmatprep.subr.bf16.mxu0 0
    %1725 = vmatpush2.bf16.xpose.msra.mxu0 0
    %1726 = vmatprep.subr.bf16.mxu0 0
    %1727 = vmatpush2.bf16.xpose.msra.mxu0 0
    %1728 = vmatprep.mubr.bf16.mxu0 0
    %1729 = vmatmul.mubr.bf16.gmra.mxu0 %v1691
    %v1730 = vpop.f32.mrf.mxu0
    %v1731 = vadd.f32 0.0, %v1730
    %v1732 = vpop.f32.mrf.mxu0
    %v1733 = vpop.f32.mrf.mxu0
    %v1734 = vpop.f32.mrf.mxu0
    %1735 = vdwg.mxu0
    %v1737 = vsel %vm451, %v1635, 0
    %v1740 = vsel %vm451, %v1689, 0
    %1742 = vmatprep.subr.bf16.mxu0 0
    %1743 = vmatpush1.bf16.xpose.msra.mxu0 0
    %1744 = vmatprep.subr.bf16.mxu0 0
    %1745 = vmatpush1.bf16.xpose.msra.mxu0 0
    %1746 = vmatprep.subr.bf16.mxu0 0
    %1747 = vmatpush1.bf16.xpose.msra.mxu0 0
    %1748 = vmatprep.subr.bf16.mxu0 0
    %1749 = vmatpush1.bf16.xpose.msra.mxu0 0
    %1750 = vmatprep.subr.bf16.mxu0 0
    %1751 = vmatpush1.bf16.xpose.msra.mxu0 0
    %1752 = vmatprep.subr.bf16.mxu0 0
    %1753 = vmatpush1.bf16.xpose.msra.mxu0 0
    %1754 = vmatprep.subr.bf16.mxu0 0
    %1755 = vmatpush1.bf16.xpose.msra.mxu0 0
    %1756 = vmatprep.subr.bf16.mxu0 0
    %1757 = vmatpush1.bf16.xpose.msra.mxu0 %v1740
    %1758 = vmatprep.subr.bf16.mxu0 0
    %1759 = vmatpush2.bf16.xpose.msra.mxu0 0
    %1760 = vmatprep.subr.bf16.mxu0 0
    %1761 = vmatpush2.bf16.xpose.msra.mxu0 0
    %1762 = vmatprep.subr.bf16.mxu0 0
    %1763 = vmatpush2.bf16.xpose.msra.mxu0 0
    %1764 = vmatprep.subr.bf16.mxu0 0
    %1765 = vmatpush2.bf16.xpose.msra.mxu0 0
    %1766 = vmatprep.subr.bf16.mxu0 0
    %1767 = vmatpush2.bf16.xpose.msra.mxu0 0
    %1768 = vmatprep.subr.bf16.mxu0 0
    %1769 = vmatpush2.bf16.xpose.msra.mxu0 0
    %1770 = vmatprep.subr.bf16.mxu0 0
    %1771 = vmatpush2.bf16.xpose.msra.mxu0 0
    %1772 = vmatprep.subr.bf16.mxu0 0
    %1773 = vmatpush2.bf16.xpose.msra.mxu0 0
    %1774 = vmatprep.mubr.bf16.mxu0 0
    %1775 = vmatmul.mubr.bf16.gmra.mxu0 %v1737
    %v1776 = vpop.f32.mrf.mxu0
    %v1777 = vadd.f32 0.0, %v1776
    %v1778 = vpop.f32.mrf.mxu0
    %v1779 = vpop.f32.mrf.mxu0
    %v1780 = vpop.f32.mrf.mxu0
    %1781 = vdwg.mxu0
    %vm1782 = vcmask 80896
    %v1783 = vsel %vm1782, %v1731, -inf
    %1784 = vmax.xlane.f32.xlu0 %v1783
    %v1785 = vpop.xlane.xlu0 %1784
    %v1786 = vsel %vm1782, %v1777, -inf
    %1787 = vmax.xlane.f32.xlu0 %v1786
    %v1788 = vpop.xlane.xlu0 %1787
    %v1789 = vsub.f32 %v1731, %v1785
    %v1790 = vsub.f32 %v1777, %v1788
    %v1791 = vmul.f32 %v1789, 1.442695
    %v1792 = vpow.pop %v1791
    %v1793 = vmul.f32 %v1790, 1.442695
    %v1794 = vpow.pop %v1793
    %v1795 = vsel %vm1782, %v1792, 0.0
    %1796 = vadd.xlane.f32.xlu0 %v1795
    %v1797 = vpop.xlane.xlu0 %1796
    %v1798 = vsel %vm1782, %v1794, 0.0
    %1799 = vadd.xlane.f32.xlu0 %v1798
    %v1800 = vpop.xlane.xlu0 %1799
    %v1801 = vrcp.pop %v1797
    %v1802 = vrcp.pop %v1800
    %v1803 = vmul.f32 %v1792, %v1801
    %v1804 = vmul.f32 %v1794, %v1802
    %v1805 = vpack.c.bf16 %v1803, %v1803
    %v1806 = vpack.c.bf16 %v1804, %v1804
    %1808 = vrot.lane.b32.xlu0 %v1688, 96
    %v1809 = vpop.permute.xlu0 %1808
    %v1811 = vsel %vm1782, %v1805, 0
    %vm1813 = vcmask 1044480
    %v1815 = vsel %vm1813, %v1809, 0
    %1817 = vmatprep.subr.bf16.mxu0 0
    %1818 = vmatpush1.bf16.msra.mxu0 0
    %1819 = vmatprep.subr.bf16.mxu0 0
    %1820 = vmatpush1.bf16.msra.mxu0 0
    %1821 = vmatprep.subr.bf16.mxu0 0
    %1822 = vmatpush1.bf16.msra.mxu0 0
    %1823 = vmatprep.subr.bf16.mxu0 0
    %1824 = vmatpush1.bf16.msra.mxu0 0
    %1825 = vmatprep.subr.bf16.mxu0 0
    %1826 = vmatpush1.bf16.msra.mxu0 0
    %1827 = vmatprep.subr.bf16.mxu0 0
    %1828 = vmatpush1.bf16.msra.mxu0 0
    %1829 = vmatprep.subr.bf16.mxu0 0
    %1830 = vmatpush1.bf16.msra.mxu0 0
    %1831 = vmatprep.subr.bf16.mxu0 0
    %1832 = vmatpush1.bf16.msra.mxu0 %v1815
    %1833 = vmatprep.subr.bf16.mxu0 0
    %1834 = vmatpush2.bf16.msra.mxu0 0
    %1835 = vmatprep.subr.bf16.mxu0 0
    %1836 = vmatpush2.bf16.msra.mxu0 0
    %1837 = vmatprep.subr.bf16.mxu0 0
    %1838 = vmatpush2.bf16.msra.mxu0 0
    %1839 = vmatprep.subr.bf16.mxu0 0
    %1840 = vmatpush2.bf16.msra.mxu0 0
    %1841 = vmatprep.subr.bf16.mxu0 0
    %1842 = vmatpush2.bf16.msra.mxu0 0
    %1843 = vmatprep.subr.bf16.mxu0 0
    %1844 = vmatpush2.bf16.msra.mxu0 0
    %1845 = vmatprep.subr.bf16.mxu0 0
    %1846 = vmatpush2.bf16.msra.mxu0 0
    %1847 = vmatprep.subr.bf16.mxu0 0
    %1848 = vmatpush2.bf16.msra.mxu0 0
    %1849 = vmatprep.mubr.bf16.mxu0 0
    %1850 = vmatmul.mubr.bf16.gmra.mxu0 %v1811
    %v1851 = vpop.f32.mrf.mxu0
    %v1852 = vadd.f32 0.0, %v1851
    %v1853 = vpop.f32.mrf.mxu0
    %v1854 = vpop.f32.mrf.mxu0
    %v1855 = vpop.f32.mrf.mxu0
    %1856 = vdwg.mxu0
    %1858 = vrot.lane.b32.xlu0 %v1689, 96
    %v1859 = vpop.permute.xlu0 %1858
    %v1861 = vsel %vm1782, %v1806, 0
    %v1864 = vsel %vm1813, %v1859, 0
    %1866 = vmatprep.subr.bf16.mxu0 0
    %1867 = vmatpush1.bf16.msra.mxu0 0
    %1868 = vmatprep.subr.bf16.mxu0 0
    %1869 = vmatpush1.bf16.msra.mxu0 0
    %1870 = vmatprep.subr.bf16.mxu0 0
    %1871 = vmatpush1.bf16.msra.mxu0 0
    %1872 = vmatprep.subr.bf16.mxu0 0
    %1873 = vmatpush1.bf16.msra.mxu0 0
    %1874 = vmatprep.subr.bf16.mxu0 0
    %1875 = vmatpush1.bf16.msra.mxu0 0
    %1876 = vmatprep.subr.bf16.mxu0 0
    %1877 = vmatpush1.bf16.msra.mxu0 0
    %1878 = vmatprep.subr.bf16.mxu0 0
    %1879 = vmatpush1.bf16.msra.mxu0 0
    %1880 = vmatprep.subr.bf16.mxu0 0
    %1881 = vmatpush1.bf16.msra.mxu0 %v1864
    %1882 = vmatprep.subr.bf16.mxu0 0
    %1883 = vmatpush2.bf16.msra.mxu0 0
    %1884 = vmatprep.subr.bf16.mxu0 0
    %1885 = vmatpush2.bf16.msra.mxu0 0
    %1886 = vmatprep.subr.bf16.mxu0 0
    %1887 = vmatpush2.bf16.msra.mxu0 0
    %1888 = vmatprep.subr.bf16.mxu0 0
    %1889 = vmatpush2.bf16.msra.mxu0 0
    %1890 = vmatprep.subr.bf16.mxu0 0
    %1891 = vmatpush2.bf16.msra.mxu0 0
    %1892 = vmatprep.subr.bf16.mxu0 0
    %1893 = vmatpush2.bf16.msra.mxu0 0
    %1894 = vmatprep.subr.bf16.mxu0 0
    %1895 = vmatpush2.bf16.msra.mxu0 0
    %1896 = vmatprep.subr.bf16.mxu0 0
    %1897 = vmatpush2.bf16.msra.mxu0 0
    %1898 = vmatprep.mubr.bf16.mxu0 0
    %1899 = vmatmul.mubr.bf16.gmra.mxu0 %v1861
    %v1900 = vpop.f32.mrf.mxu0
    %v1901 = vadd.f32 0.0, %v1900
    %v1902 = vpop.f32.mrf.mxu0
    %v1903 = vpop.f32.mrf.mxu0
    %v1904 = vpop.f32.mrf.mxu0
    %1905 = vdwg.mxu0
    %1906 = vst.msk [vmem:[#allocation2] sm:$0xff] %vm451, %v1852
    %1907 = vst.msk [vmem:[#allocation2 + $0x8] sm:$0xff] %vm451, %v1901
    %1909 = vrot.lane.b32.xlu0 %v1634, 120
    %v1910 = vpop.permute.xlu0 %1909
    %1911 = vrot.lane.b32.xlu0 %v1688, 120
    %v1912 = vpop.permute.xlu0 %1911
    %v1914 = vsel %vm451, %v1910, 0
    %v1917 = vsel %vm451, %v1912, 0
    %1919 = vmatprep.subr.bf16.mxu0 0
    %1920 = vmatpush1.bf16.xpose.msra.mxu0 0
    %1921 = vmatprep.subr.bf16.mxu0 0
    %1922 = vmatpush1.bf16.xpose.msra.mxu0 0
    %1923 = vmatprep.subr.bf16.mxu0 0
    %1924 = vmatpush1.bf16.xpose.msra.mxu0 0
    %1925 = vmatprep.subr.bf16.mxu0 0
    %1926 = vmatpush1.bf16.xpose.msra.mxu0 0
    %1927 = vmatprep.subr.bf16.mxu0 0
    %1928 = vmatpush1.bf16.xpose.msra.mxu0 0
    %1929 = vmatprep.subr.bf16.mxu0 0
    %1930 = vmatpush1.bf16.xpose.msra.mxu0 0
    %1931 = vmatprep.subr.bf16.mxu0 0
    %1932 = vmatpush1.bf16.xpose.msra.mxu0 0
    %1933 = vmatprep.subr.bf16.mxu0 0
    %1934 = vmatpush1.bf16.xpose.msra.mxu0 %v1917
    %1935 = vmatprep.subr.bf16.mxu0 0
    %1936 = vmatpush2.bf16.xpose.msra.mxu0 0
    %1937 = vmatprep.subr.bf16.mxu0 0
    %1938 = vmatpush2.bf16.xpose.msra.mxu0 0
    %1939 = vmatprep.subr.bf16.mxu0 0
    %1940 = vmatpush2.bf16.xpose.msra.mxu0 0
    %1941 = vmatprep.subr.bf16.mxu0 0
    %1942 = vmatpush2.bf16.xpose.msra.mxu0 0
    %1943 = vmatprep.subr.bf16.mxu0 0
    %1944 = vmatpush2.bf16.xpose.msra.mxu0 0
    %1945 = vmatprep.subr.bf16.mxu0 0
    %1946 = vmatpush2.bf16.xpose.msra.mxu0 0
    %1947 = vmatprep.subr.bf16.mxu0 0
    %1948 = vmatpush2.bf16.xpose.msra.mxu0 0
    %1949 = vmatprep.subr.bf16.mxu0 0
    %1950 = vmatpush2.bf16.xpose.msra.mxu0 0
    %1951 = vmatprep.mubr.bf16.mxu0 0
    %1952 = vmatmul.mubr.bf16.gmra.mxu0 %v1914
    %v1953 = vpop.f32.mrf.mxu0
    %v1954 = vadd.f32 0.0, %v1953
    %v1955 = vpop.f32.mrf.mxu0
    %v1956 = vpop.f32.mrf.mxu0
    %v1957 = vpop.f32.mrf.mxu0
    %1958 = vdwg.mxu0
    %1960 = vrot.lane.b32.xlu0 %v1635, 120
    %v1961 = vpop.permute.xlu0 %1960
    %1962 = vrot.lane.b32.xlu0 %v1689, 120
    %v1963 = vpop.permute.xlu0 %1962
    %v1965 = vsel %vm451, %v1961, 0
    %v1968 = vsel %vm451, %v1963, 0
    %1970 = vmatprep.subr.bf16.mxu0 0
    %1971 = vmatpush1.bf16.xpose.msra.mxu0 0
    %1972 = vmatprep.subr.bf16.mxu0 0
    %1973 = vmatpush1.bf16.xpose.msra.mxu0 0
    %1974 = vmatprep.subr.bf16.mxu0 0
    %1975 = vmatpush1.bf16.xpose.msra.mxu0 0
    %1976 = vmatprep.subr.bf16.mxu0 0
    %1977 = vmatpush1.bf16.xpose.msra.mxu0 0
    %1978 = vmatprep.subr.bf16.mxu0 0
    %1979 = vmatpush1.bf16.xpose.msra.mxu0 0
    %1980 = vmatprep.subr.bf16.mxu0 0
    %1981 = vmatpush1.bf16.xpose.msra.mxu0 0
    %1982 = vmatprep.subr.bf16.mxu0 0
    %1983 = vmatpush1.bf16.xpose.msra.mxu0 0
    %1984 = vmatprep.subr.bf16.mxu0 0
    %1985 = vmatpush1.bf16.xpose.msra.mxu0 %v1968
    %1986 = vmatprep.subr.bf16.mxu0 0
    %1987 = vmatpush2.bf16.xpose.msra.mxu0 0
    %1988 = vmatprep.subr.bf16.mxu0 0
    %1989 = vmatpush2.bf16.xpose.msra.mxu0 0
    %1990 = vmatprep.subr.bf16.mxu0 0
    %1991 = vmatpush2.bf16.xpose.msra.mxu0 0
    %1992 = vmatprep.subr.bf16.mxu0 0
    %1993 = vmatpush2.bf16.xpose.msra.mxu0 0
    %1994 = vmatprep.subr.bf16.mxu0 0
    %1995 = vmatpush2.bf16.xpose.msra.mxu0 0
    %1996 = vmatprep.subr.bf16.mxu0 0
    %1997 = vmatpush2.bf16.xpose.msra.mxu0 0
    %1998 = vmatprep.subr.bf16.mxu0 0
    %1999 = vmatpush2.bf16.xpose.msra.mxu0 0
    %2000 = vmatprep.subr.bf16.mxu0 0
    %2001 = vmatpush2.bf16.xpose.msra.mxu0 0
    %2002 = vmatprep.mubr.bf16.mxu0 0
    %2003 = vmatmul.mubr.bf16.gmra.mxu0 %v1965
    %v2004 = vpop.f32.mrf.mxu0
    %v2005 = vadd.f32 0.0, %v2004
    %v2006 = vpop.f32.mrf.mxu0
    %v2007 = vpop.f32.mrf.mxu0
    %v2008 = vpop.f32.mrf.mxu0
    %2009 = vdwg.mxu0
    %v2010 = vsel %vm1782, %v1954, -inf
    %2011 = vmax.xlane.f32.xlu0 %v2010
    %v2012 = vpop.xlane.xlu0 %2011
    %v2013 = vsel %vm1782, %v2005, -inf
    %2014 = vmax.xlane.f32.xlu0 %v2013
    %v2015 = vpop.xlane.xlu0 %2014
    %v2016 = vsub.f32 %v1954, %v2012
    %v2017 = vsub.f32 %v2005, %v2015
    %v2018 = vmul.f32 %v2016, 1.442695
    %v2019 = vpow.pop %v2018
    %v2020 = vmul.f32 %v2017, 1.442695
    %v2021 = vpow.pop %v2020
    %v2022 = vsel %vm1782, %v2019, 0.0
    %2023 = vadd.xlane.f32.xlu0 %v2022
    %v2024 = vpop.xlane.xlu0 %2023
    %v2025 = vsel %vm1782, %v2021, 0.0
    %2026 = vadd.xlane.f32.xlu0 %v2025
    %v2027 = vpop.xlane.xlu0 %2026
    %v2028 = vrcp.pop %v2024
    %v2029 = vrcp.pop %v2027
    %v2030 = vmul.f32 %v2019, %v2028
    %v2031 = vmul.f32 %v2021, %v2029
    %v2032 = vpack.c.bf16 %v2030, %v2030
    %v2033 = vpack.c.bf16 %v2031, %v2031
    %2034 = vrot.lane.b32.xlu0 %v1688, 88
    %v2035 = vpop.permute.xlu0 %2034
    %v2037 = vsel %vm1782, %v2032, 0
    %v2040 = vsel %vm1813, %v2035, 0
    %2042 = vmatprep.subr.bf16.mxu0 0
    %2043 = vmatpush1.bf16.msra.mxu0 0
    %2044 = vmatprep.subr.bf16.mxu0 0
    %2045 = vmatpush1.bf16.msra.mxu0 0
    %2046 = vmatprep.subr.bf16.mxu0 0
    %2047 = vmatpush1.bf16.msra.mxu0 0
    %2048 = vmatprep.subr.bf16.mxu0 0
    %2049 = vmatpush1.bf16.msra.mxu0 0
    %2050 = vmatprep.subr.bf16.mxu0 0
    %2051 = vmatpush1.bf16.msra.mxu0 0
    %2052 = vmatprep.subr.bf16.mxu0 0
    %2053 = vmatpush1.bf16.msra.mxu0 0
    %2054 = vmatprep.subr.bf16.mxu0 0
    %2055 = vmatpush1.bf16.msra.mxu0 0
    %2056 = vmatprep.subr.bf16.mxu0 0
    %2057 = vmatpush1.bf16.msra.mxu0 %v2040
    %2058 = vmatprep.subr.bf16.mxu0 0
    %2059 = vmatpush2.bf16.msra.mxu0 0
    %2060 = vmatprep.subr.bf16.mxu0 0
    %2061 = vmatpush2.bf16.msra.mxu0 0
    %2062 = vmatprep.subr.bf16.mxu0 0
    %2063 = vmatpush2.bf16.msra.mxu0 0
    %2064 = vmatprep.subr.bf16.mxu0 0
    %2065 = vmatpush2.bf16.msra.mxu0 0
    %2066 = vmatprep.subr.bf16.mxu0 0
    %2067 = vmatpush2.bf16.msra.mxu0 0
    %2068 = vmatprep.subr.bf16.mxu0 0
    %2069 = vmatpush2.bf16.msra.mxu0 0
    %2070 = vmatprep.subr.bf16.mxu0 0
    %2071 = vmatpush2.bf16.msra.mxu0 0
    %2072 = vmatprep.subr.bf16.mxu0 0
    %2073 = vmatpush2.bf16.msra.mxu0 0
    %2074 = vmatprep.mubr.bf16.mxu0 0
    %2075 = vmatmul.mubr.bf16.gmra.mxu0 %v2037
    %v2076 = vpop.f32.mrf.mxu0
    %v2077 = vadd.f32 0.0, %v2076
    %v2078 = vpop.f32.mrf.mxu0
    %v2079 = vpop.f32.mrf.mxu0
    %v2080 = vpop.f32.mrf.mxu0
    %2081 = vdwg.mxu0
    %2082 = vrot.lane.b32.xlu0 %v1689, 88
    %v2083 = vpop.permute.xlu0 %2082
    %v2085 = vsel %vm1782, %v2033, 0
    %v2088 = vsel %vm1813, %v2083, 0
    %2090 = vmatprep.subr.bf16.mxu0 0
    %2091 = vmatpush1.bf16.msra.mxu0 0
    %2092 = vmatprep.subr.bf16.mxu0 0
    %2093 = vmatpush1.bf16.msra.mxu0 0
    %2094 = vmatprep.subr.bf16.mxu0 0
    %2095 = vmatpush1.bf16.msra.mxu0 0
    %2096 = vmatprep.subr.bf16.mxu0 0
    %2097 = vmatpush1.bf16.msra.mxu0 0
    %2098 = vmatprep.subr.bf16.mxu0 0
    %2099 = vmatpush1.bf16.msra.mxu0 0
    %2100 = vmatprep.subr.bf16.mxu0 0
    %2101 = vmatpush1.bf16.msra.mxu0 0
    %2102 = vmatprep.subr.bf16.mxu0 0
    %2103 = vmatpush1.bf16.msra.mxu0 0
    %2104 = vmatprep.subr.bf16.mxu0 0
    %2105 = vmatpush1.bf16.msra.mxu0 %v2088
    %2106 = vmatprep.subr.bf16.mxu0 0
    %2107 = vmatpush2.bf16.msra.mxu0 0
    %2108 = vmatprep.subr.bf16.mxu0 0
    %2109 = vmatpush2.bf16.msra.mxu0 0
    %2110 = vmatprep.subr.bf16.mxu0 0
    %2111 = vmatpush2.bf16.msra.mxu0 0
    %2112 = vmatprep.subr.bf16.mxu0 0
    %2113 = vmatpush2.bf16.msra.mxu0 0
    %2114 = vmatprep.subr.bf16.mxu0 0
    %2115 = vmatpush2.bf16.msra.mxu0 0
    %2116 = vmatprep.subr.bf16.mxu0 0
    %2117 = vmatpush2.bf16.msra.mxu0 0
    %2118 = vmatprep.subr.bf16.mxu0 0
    %2119 = vmatpush2.bf16.msra.mxu0 0
    %2120 = vmatprep.subr.bf16.mxu0 0
    %2121 = vmatpush2.bf16.msra.mxu0 0
    %2122 = vmatprep.mubr.bf16.mxu0 0
    %2123 = vmatmul.mubr.bf16.gmra.mxu0 %v2085
    %v2124 = vpop.f32.mrf.mxu0
    %v2125 = vadd.f32 0.0, %v2124
    %v2126 = vpop.f32.mrf.mxu0
    %v2127 = vpop.f32.mrf.mxu0
    %v2128 = vpop.f32.mrf.mxu0
    %2129 = vdwg.mxu0
    %2132 = vrot.lane.b32.xlu0 %v2077, 8
    %v2133 = vpop.permute.xlu0 %2132
    %2134 = vrot.lane.b32.xlu0 %v2125, 8
    %v2135 = vpop.permute.xlu0 %2134
    %2138 = vst.msk [vmem:[#allocation2] sm:$0xff] %vm898, %v2133
    %2139 = vst.msk [vmem:[#allocation2 + $0x8] sm:$0xff] %vm898, %v2135
    %2140 = vrot.lane.b32.xlu0 %v1634, 112
    %v2141 = vpop.permute.xlu0 %2140
    %2142 = vrot.lane.b32.xlu0 %v1688, 112
    %v2143 = vpop.permute.xlu0 %2142
    %v2145 = vsel %vm451, %v2141, 0
    %v2148 = vsel %vm451, %v2143, 0
    %2150 = vmatprep.subr.bf16.mxu0 0
    %2151 = vmatpush1.bf16.xpose.msra.mxu0 0
    %2152 = vmatprep.subr.bf16.mxu0 0
    %2153 = vmatpush1.bf16.xpose.msra.mxu0 0
    %2154 = vmatprep.subr.bf16.mxu0 0
    %2155 = vmatpush1.bf16.xpose.msra.mxu0 0
    %2156 = vmatprep.subr.bf16.mxu0 0
    %2157 = vmatpush1.bf16.xpose.msra.mxu0 0
    %2158 = vmatprep.subr.bf16.mxu0 0
    %2159 = vmatpush1.bf16.xpose.msra.mxu0 0
    %2160 = vmatprep.subr.bf16.mxu0 0
    %2161 = vmatpush1.bf16.xpose.msra.mxu0 0
    %2162 = vmatprep.subr.bf16.mxu0 0
    %2163 = vmatpush1.bf16.xpose.msra.mxu0 0
    %2164 = vmatprep.subr.bf16.mxu0 0
    %2165 = vmatpush1.bf16.xpose.msra.mxu0 %v2148
    %2166 = vmatprep.subr.bf16.mxu0 0
    %2167 = vmatpush2.bf16.xpose.msra.mxu0 0
    %2168 = vmatprep.subr.bf16.mxu0 0
    %2169 = vmatpush2.bf16.xpose.msra.mxu0 0
    %2170 = vmatprep.subr.bf16.mxu0 0
    %2171 = vmatpush2.bf16.xpose.msra.mxu0 0
    %2172 = vmatprep.subr.bf16.mxu0 0
    %2173 = vmatpush2.bf16.xpose.msra.mxu0 0
    %2174 = vmatprep.subr.bf16.mxu0 0
    %2175 = vmatpush2.bf16.xpose.msra.mxu0 0
    %2176 = vmatprep.subr.bf16.mxu0 0
    %2177 = vmatpush2.bf16.xpose.msra.mxu0 0
    %2178 = vmatprep.subr.bf16.mxu0 0
    %2179 = vmatpush2.bf16.xpose.msra.mxu0 0
    %2180 = vmatprep.subr.bf16.mxu0 0
    %2181 = vmatpush2.bf16.xpose.msra.mxu0 0
    %2182 = vmatprep.mubr.bf16.mxu0 0
    %2183 = vmatmul.mubr.bf16.gmra.mxu0 %v2145
    %v2184 = vpop.f32.mrf.mxu0
    %v2185 = vadd.f32 0.0, %v2184
    %v2186 = vpop.f32.mrf.mxu0
    %v2187 = vpop.f32.mrf.mxu0
    %v2188 = vpop.f32.mrf.mxu0
    %2189 = vdwg.mxu0
    %2190 = vrot.lane.b32.xlu0 %v1635, 112
    %v2191 = vpop.permute.xlu0 %2190
    %2192 = vrot.lane.b32.xlu0 %v1689, 112
    %v2193 = vpop.permute.xlu0 %2192
    %v2195 = vsel %vm451, %v2191, 0
    %v2198 = vsel %vm451, %v2193, 0
    %2200 = vmatprep.subr.bf16.mxu0 0
    %2201 = vmatpush1.bf16.xpose.msra.mxu0 0
    %2202 = vmatprep.subr.bf16.mxu0 0
    %2203 = vmatpush1.bf16.xpose.msra.mxu0 0
    %2204 = vmatprep.subr.bf16.mxu0 0
    %2205 = vmatpush1.bf16.xpose.msra.mxu0 0
    %2206 = vmatprep.subr.bf16.mxu0 0
    %2207 = vmatpush1.bf16.xpose.msra.mxu0 0
    %2208 = vmatprep.subr.bf16.mxu0 0
    %2209 = vmatpush1.bf16.xpose.msra.mxu0 0
    %2210 = vmatprep.subr.bf16.mxu0 0
    %2211 = vmatpush1.bf16.xpose.msra.mxu0 0
    %2212 = vmatprep.subr.bf16.mxu0 0
    %2213 = vmatpush1.bf16.xpose.msra.mxu0 0
    %2214 = vmatprep.subr.bf16.mxu0 0
    %2215 = vmatpush1.bf16.xpose.msra.mxu0 %v2198
    %2216 = vmatprep.subr.bf16.mxu0 0
    %2217 = vmatpush2.bf16.xpose.msra.mxu0 0
    %2218 = vmatprep.subr.bf16.mxu0 0
    %2219 = vmatpush2.bf16.xpose.msra.mxu0 0
    %2220 = vmatprep.subr.bf16.mxu0 0
    %2221 = vmatpush2.bf16.xpose.msra.mxu0 0
    %2222 = vmatprep.subr.bf16.mxu0 0
    %2223 = vmatpush2.bf16.xpose.msra.mxu0 0
    %2224 = vmatprep.subr.bf16.mxu0 0
    %2225 = vmatpush2.bf16.xpose.msra.mxu0 0
    %2226 = vmatprep.subr.bf16.mxu0 0
    %2227 = vmatpush2.bf16.xpose.msra.mxu0 0
    %2228 = vmatprep.subr.bf16.mxu0 0
    %2229 = vmatpush2.bf16.xpose.msra.mxu0 0
    %2230 = vmatprep.subr.bf16.mxu0 0
    %2231 = vmatpush2.bf16.xpose.msra.mxu0 0
    %2232 = vmatprep.mubr.bf16.mxu0 0
    %2233 = vmatmul.mubr.bf16.gmra.mxu0 %v2195
    %v2234 = vpop.f32.mrf.mxu0
    %v2235 = vadd.f32 0.0, %v2234
    %v2236 = vpop.f32.mrf.mxu0
    %v2237 = vpop.f32.mrf.mxu0
    %v2238 = vpop.f32.mrf.mxu0
    %2239 = vdwg.mxu0
    %v2240 = vsel %vm1782, %v2185, -inf
    %2241 = vmax.xlane.f32.xlu0 %v2240
    %v2242 = vpop.xlane.xlu0 %2241
    %v2243 = vsel %vm1782, %v2235, -inf
    %2244 = vmax.xlane.f32.xlu0 %v2243
    %v2245 = vpop.xlane.xlu0 %2244
    %v2246 = vsub.f32 %v2185, %v2242
    %v2247 = vsub.f32 %v2235, %v2245
    %v2248 = vmul.f32 %v2246, 1.442695
    %v2249 = vpow.pop %v2248
    %v2250 = vmul.f32 %v2247, 1.442695
    %v2251 = vpow.pop %v2250
    %v2252 = vsel %vm1782, %v2249, 0.0
    %2253 = vadd.xlane.f32.xlu0 %v2252
    %v2254 = vpop.xlane.xlu0 %2253
    %v2255 = vsel %vm1782, %v2251, 0.0
    %2256 = vadd.xlane.f32.xlu0 %v2255
    %v2257 = vpop.xlane.xlu0 %2256
    %v2258 = vrcp.pop %v2254
    %v2259 = vrcp.pop %v2257
    %v2260 = vmul.f32 %v2249, %v2258
    %v2261 = vmul.f32 %v2251, %v2259
    %v2262 = vpack.c.bf16 %v2260, %v2260
    %v2263 = vpack.c.bf16 %v2261, %v2261
    %2264 = vrot.lane.b32.xlu0 %v1688, 80
    %v2265 = vpop.permute.xlu0 %2264
    %v2267 = vsel %vm1782, %v2262, 0
    %v2270 = vsel %vm1813, %v2265, 0
    %2272 = vmatprep.subr.bf16.mxu0 0
    %2273 = vmatpush1.bf16.msra.mxu0 0
    %2274 = vmatprep.subr.bf16.mxu0 0
    %2275 = vmatpush1.bf16.msra.mxu0 0
    %2276 = vmatprep.subr.bf16.mxu0 0
    %2277 = vmatpush1.bf16.msra.mxu0 0
    %2278 = vmatprep.subr.bf16.mxu0 0
    %2279 = vmatpush1.bf16.msra.mxu0 0
    %2280 = vmatprep.subr.bf16.mxu0 0
    %2281 = vmatpush1.bf16.msra.mxu0 0
    %2282 = vmatprep.subr.bf16.mxu0 0
    %2283 = vmatpush1.bf16.msra.mxu0 0
    %2284 = vmatprep.subr.bf16.mxu0 0
    %2285 = vmatpush1.bf16.msra.mxu0 0
    %2286 = vmatprep.subr.bf16.mxu0 0
    %2287 = vmatpush1.bf16.msra.mxu0 %v2270
    %2288 = vmatprep.subr.bf16.mxu0 0
    %2289 = vmatpush2.bf16.msra.mxu0 0
    %2290 = vmatprep.subr.bf16.mxu0 0
    %2291 = vmatpush2.bf16.msra.mxu0 0
    %2292 = vmatprep.subr.bf16.mxu0 0
    %2293 = vmatpush2.bf16.msra.mxu0 0
    %2294 = vmatprep.subr.bf16.mxu0 0
    %2295 = vmatpush2.bf16.msra.mxu0 0
    %2296 = vmatprep.subr.bf16.mxu0 0
    %2297 = vmatpush2.bf16.msra.mxu0 0
    %2298 = vmatprep.subr.bf16.mxu0 0
    %2299 = vmatpush2.bf16.msra.mxu0 0
    %2300 = vmatprep.subr.bf16.mxu0 0
    %2301 = vmatpush2.bf16.msra.mxu0 0
    %2302 = vmatprep.subr.bf16.mxu0 0
    %2303 = vmatpush2.bf16.msra.mxu0 0
    %2304 = vmatprep.mubr.bf16.mxu0 0
    %2305 = vmatmul.mubr.bf16.gmra.mxu0 %v2267
    %v2306 = vpop.f32.mrf.mxu0
    %v2307 = vadd.f32 0.0, %v2306
    %v2308 = vpop.f32.mrf.mxu0
    %v2309 = vpop.f32.mrf.mxu0
    %v2310 = vpop.f32.mrf.mxu0
    %2311 = vdwg.mxu0
    %2312 = vrot.lane.b32.xlu0 %v1689, 80
    %v2313 = vpop.permute.xlu0 %2312
    %v2315 = vsel %vm1782, %v2263, 0
    %v2318 = vsel %vm1813, %v2313, 0
    %2320 = vmatprep.subr.bf16.mxu0 0
    %2321 = vmatpush1.bf16.msra.mxu0 0
    %2322 = vmatprep.subr.bf16.mxu0 0
    %2323 = vmatpush1.bf16.msra.mxu0 0
    %2324 = vmatprep.subr.bf16.mxu0 0
    %2325 = vmatpush1.bf16.msra.mxu0 0
    %2326 = vmatprep.subr.bf16.mxu0 0
    %2327 = vmatpush1.bf16.msra.mxu0 0
    %2328 = vmatprep.subr.bf16.mxu0 0
    %2329 = vmatpush1.bf16.msra.mxu0 0
    %2330 = vmatprep.subr.bf16.mxu0 0
    %2331 = vmatpush1.bf16.msra.mxu0 0
    %2332 = vmatprep.subr.bf16.mxu0 0
    %2333 = vmatpush1.bf16.msra.mxu0 0
    %2334 = vmatprep.subr.bf16.mxu0 0
    %2335 = vmatpush1.bf16.msra.mxu0 %v2318
    %2336 = vmatprep.subr.bf16.mxu0 0
    %2337 = vmatpush2.bf16.msra.mxu0 0
    %2338 = vmatprep.subr.bf16.mxu0 0
    %2339 = vmatpush2.bf16.msra.mxu0 0
    %2340 = vmatprep.subr.bf16.mxu0 0
    %2341 = vmatpush2.bf16.msra.mxu0 0
    %2342 = vmatprep.subr.bf16.mxu0 0
    %2343 = vmatpush2.bf16.msra.mxu0 0
    %2344 = vmatprep.subr.bf16.mxu0 0
    %2345 = vmatpush2.bf16.msra.mxu0 0
    %2346 = vmatprep.subr.bf16.mxu0 0
    %2347 = vmatpush2.bf16.msra.mxu0 0
    %2348 = vmatprep.subr.bf16.mxu0 0
    %2349 = vmatpush2.bf16.msra.mxu0 0
    %2350 = vmatprep.subr.bf16.mxu0 0
    %2351 = vmatpush2.bf16.msra.mxu0 0
    %2352 = vmatprep.mubr.bf16.mxu0 0
    %2353 = vmatmul.mubr.bf16.gmra.mxu0 %v2315
    %v2354 = vpop.f32.mrf.mxu0
    %v2355 = vadd.f32 0.0, %v2354
    %v2356 = vpop.f32.mrf.mxu0
    %v2357 = vpop.f32.mrf.mxu0
    %v2358 = vpop.f32.mrf.mxu0
    %2359 = vdwg.mxu0
    %2362 = vrot.lane.b32.xlu0 %v2307, 16
    %v2363 = vpop.permute.xlu0 %2362
    %2364 = vrot.lane.b32.xlu0 %v2355, 16
    %v2365 = vpop.permute.xlu0 %2364
    %2368 = vst.msk [vmem:[#allocation2] sm:$0xff] %vm1129, %v2363
    %2369 = vst.msk [vmem:[#allocation2 + $0x8] sm:$0xff] %vm1129, %v2365
    %2370 = vrot.lane.b32.xlu0 %v1634, 104
    %v2371 = vpop.permute.xlu0 %2370
    %2372 = vrot.lane.b32.xlu0 %v1688, 104
    %v2373 = vpop.permute.xlu0 %2372
    %v2375 = vsel %vm451, %v2371, 0
    %v2378 = vsel %vm451, %v2373, 0
    %2380 = vmatprep.subr.bf16.mxu0 0
    %2381 = vmatpush1.bf16.xpose.msra.mxu0 0
    %2382 = vmatprep.subr.bf16.mxu0 0
    %2383 = vmatpush1.bf16.xpose.msra.mxu0 0
    %2384 = vmatprep.subr.bf16.mxu0 0
    %2385 = vmatpush1.bf16.xpose.msra.mxu0 0
    %2386 = vmatprep.subr.bf16.mxu0 0
    %2387 = vmatpush1.bf16.xpose.msra.mxu0 0
    %2388 = vmatprep.subr.bf16.mxu0 0
    %2389 = vmatpush1.bf16.xpose.msra.mxu0 0
    %2390 = vmatprep.subr.bf16.mxu0 0
    %2391 = vmatpush1.bf16.xpose.msra.mxu0 0
    %2392 = vmatprep.subr.bf16.mxu0 0
    %2393 = vmatpush1.bf16.xpose.msra.mxu0 0
    %2394 = vmatprep.subr.bf16.mxu0 0
    %2395 = vmatpush1.bf16.xpose.msra.mxu0 %v2378
    %2396 = vmatprep.subr.bf16.mxu0 0
    %2397 = vmatpush2.bf16.xpose.msra.mxu0 0
    %2398 = vmatprep.subr.bf16.mxu0 0
    %2399 = vmatpush2.bf16.xpose.msra.mxu0 0
    %2400 = vmatprep.subr.bf16.mxu0 0
    %2401 = vmatpush2.bf16.xpose.msra.mxu0 0
    %2402 = vmatprep.subr.bf16.mxu0 0
    %2403 = vmatpush2.bf16.xpose.msra.mxu0 0
    %2404 = vmatprep.subr.bf16.mxu0 0
    %2405 = vmatpush2.bf16.xpose.msra.mxu0 0
    %2406 = vmatprep.subr.bf16.mxu0 0
    %2407 = vmatpush2.bf16.xpose.msra.mxu0 0
    %2408 = vmatprep.subr.bf16.mxu0 0
    %2409 = vmatpush2.bf16.xpose.msra.mxu0 0
    %2410 = vmatprep.subr.bf16.mxu0 0
    %2411 = vmatpush2.bf16.xpose.msra.mxu0 0
    %2412 = vmatprep.mubr.bf16.mxu0 0
    %2413 = vmatmul.mubr.bf16.gmra.mxu0 %v2375
    %v2414 = vpop.f32.mrf.mxu0
    %v2415 = vadd.f32 0.0, %v2414
    %v2416 = vpop.f32.mrf.mxu0
    %v2417 = vpop.f32.mrf.mxu0
    %v2418 = vpop.f32.mrf.mxu0
    %2419 = vdwg.mxu0
    %2420 = vrot.lane.b32.xlu0 %v1635, 104
    %v2421 = vpop.permute.xlu0 %2420
    %2422 = vrot.lane.b32.xlu0 %v1689, 104
    %v2423 = vpop.permute.xlu0 %2422
    %v2425 = vsel %vm451, %v2421, 0
    %v2428 = vsel %vm451, %v2423, 0
    %2430 = vmatprep.subr.bf16.mxu0 0
    %2431 = vmatpush1.bf16.xpose.msra.mxu0 0
    %2432 = vmatprep.subr.bf16.mxu0 0
    %2433 = vmatpush1.bf16.xpose.msra.mxu0 0
    %2434 = vmatprep.subr.bf16.mxu0 0
    %2435 = vmatpush1.bf16.xpose.msra.mxu0 0
    %2436 = vmatprep.subr.bf16.mxu0 0
    %2437 = vmatpush1.bf16.xpose.msra.mxu0 0
    %2438 = vmatprep.subr.bf16.mxu0 0
    %2439 = vmatpush1.bf16.xpose.msra.mxu0 0
    %2440 = vmatprep.subr.bf16.mxu0 0
    %2441 = vmatpush1.bf16.xpose.msra.mxu0 0
    %2442 = vmatprep.subr.bf16.mxu0 0
    %2443 = vmatpush1.bf16.xpose.msra.mxu0 0
    %2444 = vmatprep.subr.bf16.mxu0 0
    %2445 = vmatpush1.bf16.xpose.msra.mxu0 %v2428
    %2446 = vmatprep.subr.bf16.mxu0 0
    %2447 = vmatpush2.bf16.xpose.msra.mxu0 0
    %2448 = vmatprep.subr.bf16.mxu0 0
    %2449 = vmatpush2.bf16.xpose.msra.mxu0 0
    %2450 = vmatprep.subr.bf16.mxu0 0
    %2451 = vmatpush2.bf16.xpose.msra.mxu0 0
    %2452 = vmatprep.subr.bf16.mxu0 0
    %2453 = vmatpush2.bf16.xpose.msra.mxu0 0
    %2454 = vmatprep.subr.bf16.mxu0 0
    %2455 = vmatpush2.bf16.xpose.msra.mxu0 0
    %2456 = vmatprep.subr.bf16.mxu0 0
    %2457 = vmatpush2.bf16.xpose.msra.mxu0 0
    %2458 = vmatprep.subr.bf16.mxu0 0
    %2459 = vmatpush2.bf16.xpose.msra.mxu0 0
    %2460 = vmatprep.subr.bf16.mxu0 0
    %2461 = vmatpush2.bf16.xpose.msra.mxu0 0
    %2462 = vmatprep.mubr.bf16.mxu0 0
    %2463 = vmatmul.mubr.bf16.gmra.mxu0 %v2425
    %v2464 = vpop.f32.mrf.mxu0
    %v2465 = vadd.f32 0.0, %v2464
    %v2466 = vpop.f32.mrf.mxu0
    %v2467 = vpop.f32.mrf.mxu0
    %v2468 = vpop.f32.mrf.mxu0
    %2469 = vdwg.mxu0
    %v2470 = vsel %vm1782, %v2415, -inf
    %2471 = vmax.xlane.f32.xlu0 %v2470
    %v2472 = vpop.xlane.xlu0 %2471
    %v2473 = vsel %vm1782, %v2465, -inf
    %2474 = vmax.xlane.f32.xlu0 %v2473
    %v2475 = vpop.xlane.xlu0 %2474
    %v2476 = vsub.f32 %v2415, %v2472
    %v2477 = vsub.f32 %v2465, %v2475
    %v2478 = vmul.f32 %v2476, 1.442695
    %v2479 = vpow.pop %v2478
    %v2480 = vmul.f32 %v2477, 1.442695
    %v2481 = vpow.pop %v2480
    %v2482 = vsel %vm1782, %v2479, 0.0
    %2483 = vadd.xlane.f32.xlu0 %v2482
    %v2484 = vpop.xlane.xlu0 %2483
    %v2485 = vsel %vm1782, %v2481, 0.0
    %2486 = vadd.xlane.f32.xlu0 %v2485
    %v2487 = vpop.xlane.xlu0 %2486
    %v2488 = vrcp.pop %v2484
    %v2489 = vrcp.pop %v2487
    %v2490 = vmul.f32 %v2479, %v2488
    %v2491 = vmul.f32 %v2481, %v2489
    %v2492 = vpack.c.bf16 %v2490, %v2490
    %v2493 = vpack.c.bf16 %v2491, %v2491
    %2494 = vrot.lane.b32.xlu0 %v1688, 72
    %v2495 = vpop.permute.xlu0 %2494
    %v2497 = vsel %vm1782, %v2492, 0
    %v2500 = vsel %vm1813, %v2495, 0
    %2502 = vmatprep.subr.bf16.mxu0 0
    %2503 = vmatpush1.bf16.msra.mxu0 0
    %2504 = vmatprep.subr.bf16.mxu0 0
    %2505 = vmatpush1.bf16.msra.mxu0 0
    %2506 = vmatprep.subr.bf16.mxu0 0
    %2507 = vmatpush1.bf16.msra.mxu0 0
    %2508 = vmatprep.subr.bf16.mxu0 0
    %2509 = vmatpush1.bf16.msra.mxu0 0
    %2510 = vmatprep.subr.bf16.mxu0 0
    %2511 = vmatpush1.bf16.msra.mxu0 0
    %2512 = vmatprep.subr.bf16.mxu0 0
    %2513 = vmatpush1.bf16.msra.mxu0 0
    %2514 = vmatprep.subr.bf16.mxu0 0
    %2515 = vmatpush1.bf16.msra.mxu0 0
    %2516 = vmatprep.subr.bf16.mxu0 0
    %2517 = vmatpush1.bf16.msra.mxu0 %v2500
    %2518 = vmatprep.subr.bf16.mxu0 0
    %2519 = vmatpush2.bf16.msra.mxu0 0
    %2520 = vmatprep.subr.bf16.mxu0 0
    %2521 = vmatpush2.bf16.msra.mxu0 0
    %2522 = vmatprep.subr.bf16.mxu0 0
    %2523 = vmatpush2.bf16.msra.mxu0 0
    %2524 = vmatprep.subr.bf16.mxu0 0
    %2525 = vmatpush2.bf16.msra.mxu0 0
    %2526 = vmatprep.subr.bf16.mxu0 0
    %2527 = vmatpush2.bf16.msra.mxu0 0
    %2528 = vmatprep.subr.bf16.mxu0 0
    %2529 = vmatpush2.bf16.msra.mxu0 0
    %2530 = vmatprep.subr.bf16.mxu0 0
    %2531 = vmatpush2.bf16.msra.mxu0 0
    %2532 = vmatprep.subr.bf16.mxu0 0
    %2533 = vmatpush2.bf16.msra.mxu0 0
    %2534 = vmatprep.mubr.bf16.mxu0 0
    %2535 = vmatmul.mubr.bf16.gmra.mxu0 %v2497
    %v2536 = vpop.f32.mrf.mxu0
    %v2537 = vadd.f32 0.0, %v2536
    %v2538 = vpop.f32.mrf.mxu0
    %v2539 = vpop.f32.mrf.mxu0
    %v2540 = vpop.f32.mrf.mxu0
    %2541 = vdwg.mxu0
    %2542 = vrot.lane.b32.xlu0 %v1689, 72
    %v2543 = vpop.permute.xlu0 %2542
    %v2545 = vsel %vm1782, %v2493, 0
    %v2548 = vsel %vm1813, %v2543, 0
    %2550 = vmatprep.subr.bf16.mxu0 0
    %2551 = vmatpush1.bf16.msra.mxu0 0
    %2552 = vmatprep.subr.bf16.mxu0 0
    %2553 = vmatpush1.bf16.msra.mxu0 0
    %2554 = vmatprep.subr.bf16.mxu0 0
    %2555 = vmatpush1.bf16.msra.mxu0 0
    %2556 = vmatprep.subr.bf16.mxu0 0
    %2557 = vmatpush1.bf16.msra.mxu0 0
    %2558 = vmatprep.subr.bf16.mxu0 0
    %2559 = vmatpush1.bf16.msra.mxu0 0
    %2560 = vmatprep.subr.bf16.mxu0 0
    %2561 = vmatpush1.bf16.msra.mxu0 0
    %2562 = vmatprep.subr.bf16.mxu0 0
    %2563 = vmatpush1.bf16.msra.mxu0 0
    %2564 = vmatprep.subr.bf16.mxu0 0
    %2565 = vmatpush1.bf16.msra.mxu0 %v2548
    %2566 = vmatprep.subr.bf16.mxu0 0
    %2567 = vmatpush2.bf16.msra.mxu0 0
    %2568 = vmatprep.subr.bf16.mxu0 0
    %2569 = vmatpush2.bf16.msra.mxu0 0
    %2570 = vmatprep.subr.bf16.mxu0 0
    %2571 = vmatpush2.bf16.msra.mxu0 0
    %2572 = vmatprep.subr.bf16.mxu0 0
    %2573 = vmatpush2.bf16.msra.mxu0 0
    %2574 = vmatprep.subr.bf16.mxu0 0
    %2575 = vmatpush2.bf16.msra.mxu0 0
    %2576 = vmatprep.subr.bf16.mxu0 0
    %2577 = vmatpush2.bf16.msra.mxu0 0
    %2578 = vmatprep.subr.bf16.mxu0 0
    %2579 = vmatpush2.bf16.msra.mxu0 0
    %2580 = vmatprep.subr.bf16.mxu0 0
    %2581 = vmatpush2.bf16.msra.mxu0 0
    %2582 = vmatprep.mubr.bf16.mxu0 0
    %2583 = vmatmul.mubr.bf16.gmra.mxu0 %v2545
    %v2584 = vpop.f32.mrf.mxu0
    %v2585 = vadd.f32 0.0, %v2584
    %v2586 = vpop.f32.mrf.mxu0
    %v2587 = vpop.f32.mrf.mxu0
    %v2588 = vpop.f32.mrf.mxu0
    %2589 = vdwg.mxu0
    %2592 = vrot.lane.b32.xlu0 %v2537, 24
    %v2593 = vpop.permute.xlu0 %2592
    %2594 = vrot.lane.b32.xlu0 %v2585, 24
    %v2595 = vpop.permute.xlu0 %2594
    %2598 = vst.msk [vmem:[#allocation2] sm:$0xff] %vm1360, %v2593
    %2599 = vst.msk [vmem:[#allocation2 + $0x8] sm:$0xff] %vm1360, %v2595
    %v2600 = vld [vmem:[#allocation2] sm:$0xff]
    %v2601 = vld [vmem:[#allocation2 + $0x8] sm:$0xff]
    %v2602 = vpack.c.bf16 %v2601, %v2600
    %v2607 = vunpack.c.l.b16 %v317
    %v2608 = vunpack.c.l.b16 %v318
    %v2609 = vunpack.c.l.b16 %v319
    %v2610 = vunpack.c.l.b16 %v320
    %v2611 = vpack.c.b16 %v2608, %v2607
    %v2612 = vpack.c.b16 %v2610, %v2609
    %v2616 = vsel %vm345, %v2602, 0
    %2618 = vmatprep.subr.bf16.mxu0 0
    %2619 = vmatpush1.bf16.msra.mxu0 0
    %2620 = vmatprep.subr.bf16.mxu0 0
    %2621 = vmatpush1.bf16.msra.mxu0 0
    %2622 = vmatprep.subr.bf16.mxu0 0
    %2623 = vmatpush1.bf16.msra.mxu0 0
    %2624 = vmatprep.subr.bf16.mxu0 0
    %2625 = vmatpush1.bf16.msra.mxu0 0
    %2626 = vmatprep.subr.bf16.mxu0 0
    %2627 = vmatpush1.bf16.msra.mxu0 0
    %2628 = vmatprep.subr.bf16.mxu0 0
    %2629 = vmatpush1.bf16.msra.mxu0 0
    %2630 = vmatprep.subr.bf16.mxu0 0
    %2631 = vmatpush1.bf16.msra.mxu0 %v2612
    %2632 = vmatprep.subr.bf16.mxu0 0
    %2633 = vmatpush1.bf16.msra.mxu0 %v2611
    %2634 = vmatprep.subr.bf16.mxu0 0
    %2635 = vmatpush2.bf16.msra.mxu0 0
    %2636 = vmatprep.subr.bf16.mxu0 0
    %2637 = vmatpush2.bf16.msra.mxu0 0
    %2638 = vmatprep.subr.bf16.mxu0 0
    %2639 = vmatpush2.bf16.msra.mxu0 0
    %2640 = vmatprep.subr.bf16.mxu0 0
    %2641 = vmatpush2.bf16.msra.mxu0 0
    %2642 = vmatprep.subr.bf16.mxu0 0
    %2643 = vmatpush2.bf16.msra.mxu0 0
    %2644 = vmatprep.subr.bf16.mxu0 0
    %2645 = vmatpush2.bf16.msra.mxu0 0
    %2646 = vmatprep.subr.bf16.mxu0 0
    %2647 = vmatpush2.bf16.msra.mxu0 0
    %2648 = vmatprep.subr.bf16.mxu0 0
    %2649 = vmatpush2.bf16.msra.mxu0 0
    %2650 = vmatprep.mubr.bf16.mxu0 0
    %2651 = vmatmul.mubr.bf16.gmra.mxu0 %v2616
    %v2652 = vpop.f32.mrf.mxu0
    %v2653 = vadd.f32 0.0, %v2652
    %v2654 = vpop.f32.mrf.mxu0
    %v2655 = vpop.f32.mrf.mxu0
    %v2656 = vadd.f32 0.0, %v2655
    %v2657 = vpop.f32.mrf.mxu0
    %2658 = vdwg.mxu0
    %v2659 = vadd.f32 %v1422, %v2653
    %v2660 = vadd.f32 %v1423, %v2656
    %v2661 = vsel %vm345, %v2659, 0.0
    %2662 = vadd.xlane.f32.xlu0 %v2661
    %v2663 = vpop.xlane.xlu0 %2662
    %v2664 = vsel %vm345, %v2660, 0.0
    %2665 = vadd.xlane.f32.xlu0 %v2664
    %v2666 = vpop.xlane.xlu0 %2665
    %v2667 = vmul.f32 %v2663, %v352
    %v2668 = vmul.f32 %v2666, %v352
    %v2669 = vsub.f32 %v2659, %v2667
    %v2670 = vsub.f32 %v2660, %v2668
    %v2671 = vmul.f32 %v2669, %v2669
    %v2672 = vmul.f32 %v2670, %v2670
    %v2673 = vsel %vm345, %v2671, 0.0
    %2674 = vadd.xlane.f32.xlu0 %v2673
    %v2675 = vpop.xlane.xlu0 %2674
    %v2676 = vsel %vm345, %v2672, 0.0
    %2677 = vadd.xlane.f32.xlu0 %v2676
    %v2678 = vpop.xlane.xlu0 %2677
    %v2679 = vmul.f32 %v2675, %v352
    %v2680 = vmul.f32 %v2678, %v352
    %v2681 = vadd.f32 %v2679, 1e-05
    %v2682 = vadd.f32 %v2680, 1e-05
    %v2683 = vrsqrt.pop %v2681
    %v2684 = vrsqrt.pop %v2682
    %v2685 = vmul.f32 %v2669, %v2683
    %v2686 = vmul.f32 %v2670, %v2684
    %v2688 = vlaneseq
    %v2689 = vshrl.u32 %v2688, 7
    %v2690 = vsub.s32 0, %v2689
    %v2691 = vrot.slane %v321, %v2690
    %v2693 = vmul.f32 %v2685, %v2691
    %v2694 = vmul.f32 %v2686, %v2691
    %v2696 = vlaneseq
    %v2697 = vshrl.u32 %v2696, 7
    %v2698 = vsub.s32 0, %v2697
    %v2699 = vrot.slane %v322, %v2698
    %v2701 = vadd.f32 %v2693, %v2699
    %v2702 = vadd.f32 %v2694, %v2699
    %v2703 = vpack.c.bf16 %v2702, %v2701
    %v2705 = vlaneseq
    %v2706 = vshrl.u32 %v2705, 7
    %v2707 = vsub.s32 0, %v2706
    %v2708 = vrot.slane %v327, %v2707
    %v2714 = vunpack.c.l.b16 %v323
    %v2715 = vunpack.c.l.b16 %v324
    %v2716 = vunpack.c.l.b16 %v325
    %v2717 = vunpack.c.l.b16 %v326
    %v2718 = vpack.c.b16 %v2715, %v2714
    %v2719 = vpack.c.b16 %v2717, %v2716
    %v2723 = vsel %vm345, %v2703, 0
    %2725 = vmatprep.subr.bf16.mxu0 0
    %2726 = vmatpush1.bf16.msra.mxu0 0
    %2727 = vmatprep.subr.bf16.mxu0 0
    %2728 = vmatpush1.bf16.msra.mxu0 0
    %2729 = vmatprep.subr.bf16.mxu0 0
    %2730 = vmatpush1.bf16.msra.mxu0 0
    %2731 = vmatprep.subr.bf16.mxu0 0
    %2732 = vmatpush1.bf16.msra.mxu0 0
    %2733 = vmatprep.subr.bf16.mxu0 0
    %2734 = vmatpush1.bf16.msra.mxu0 0
    %2735 = vmatprep.subr.bf16.mxu0 0
    %2736 = vmatpush1.bf16.msra.mxu0 0
    %2737 = vmatprep.subr.bf16.mxu0 0
    %2738 = vmatpush1.bf16.msra.mxu0 %v2719
    %2739 = vmatprep.subr.bf16.mxu0 0
    %2740 = vmatpush1.bf16.msra.mxu0 %v2718
    %2741 = vmatprep.subr.bf16.mxu0 0
    %2742 = vmatpush2.bf16.msra.mxu0 0
    %2743 = vmatprep.subr.bf16.mxu0 0
    %2744 = vmatpush2.bf16.msra.mxu0 0
    %2745 = vmatprep.subr.bf16.mxu0 0
    %2746 = vmatpush2.bf16.msra.mxu0 0
    %2747 = vmatprep.subr.bf16.mxu0 0
    %2748 = vmatpush2.bf16.msra.mxu0 0
    %2749 = vmatprep.subr.bf16.mxu0 0
    %2750 = vmatpush2.bf16.msra.mxu0 0
    %2751 = vmatprep.subr.bf16.mxu0 0
    %2752 = vmatpush2.bf16.msra.mxu0 0
    %2753 = vmatprep.subr.bf16.mxu0 0
    %2754 = vmatpush2.bf16.msra.mxu0 0
    %2755 = vmatprep.subr.bf16.mxu0 0
    %2756 = vmatpush2.bf16.msra.mxu0 0
    %2757 = vmatprep.mubr.bf16.mxu0 0
    %2758 = vmatmul.mubr.bf16.gmra.mxu0 %v2723
    %v2759 = vpop.f32.mrf.mxu0
    %v2760 = vadd.f32 %v2708, %v2759
    %v2761 = vpop.f32.mrf.mxu0
    %v2762 = vpop.f32.mrf.mxu0
    %v2763 = vadd.f32 %v2708, %v2762
    %v2764 = vpop.f32.mrf.mxu0
    %2765 = vdwg.mxu0
    %v2766 = vmax.f32 %v2760, 0.0
    %v2767 = vmax.f32 %v2763, 0.0
    %v2768 = vpack.c.bf16 %v2767, %v2766
    %v2770 = vlaneseq
    %v2771 = vshrl.u32 %v2770, 7
    %v2772 = vsub.s32 0, %v2771
    %v2773 = vrot.slane %v344, %v2772
    %v2791 = vunpack.c.l.b16 %v328
    %v2792 = vunpack.c.l.b16 %v329
    %v2793 = vunpack.c.l.b16 %v330
    %v2794 = vunpack.c.l.b16 %v331
    %v2795 = vunpack.c.l.b16 %v332
    %v2796 = vunpack.c.l.b16 %v333
    %v2797 = vunpack.c.l.b16 %v334
    %v2798 = vunpack.c.l.b16 %v335
    %v2799 = vunpack.c.l.b16 %v336
    %v2800 = vunpack.c.l.b16 %v337
    %v2801 = vunpack.c.l.b16 %v338
    %v2802 = vunpack.c.l.b16 %v339
    %v2803 = vunpack.c.l.b16 %v340
    %v2804 = vunpack.c.l.b16 %v341
    %v2805 = vunpack.c.l.b16 %v342
    %v2806 = vunpack.c.l.b16 %v343
    %v2807 = vpack.c.b16 %v2792, %v2791
    %v2808 = vpack.c.b16 %v2794, %v2793
    %v2809 = vpack.c.b16 %v2796, %v2795
    %v2810 = vpack.c.b16 %v2798, %v2797
    %v2811 = vpack.c.b16 %v2800, %v2799
    %v2812 = vpack.c.b16 %v2802, %v2801
    %v2813 = vpack.c.b16 %v2804, %v2803
    %v2814 = vpack.c.b16 %v2806, %v2805
    %2823 = vmatprep.subr.bf16.mxu0 0
    %2824 = vmatpush1.bf16.msra.mxu0 %v2814
    %2825 = vmatprep.subr.bf16.mxu0 0
    %2826 = vmatpush1.bf16.msra.mxu0 %v2813
    %2827 = vmatprep.subr.bf16.mxu0 0
    %2828 = vmatpush1.bf16.msra.mxu0 %v2812
    %2829 = vmatprep.subr.bf16.mxu0 0
    %2830 = vmatpush1.bf16.msra.mxu0 %v2811
    %2831 = vmatprep.subr.bf16.mxu0 0
    %2832 = vmatpush1.bf16.msra.mxu0 %v2810
    %2833 = vmatprep.subr.bf16.mxu0 0
    %2834 = vmatpush1.bf16.msra.mxu0 %v2809
    %2835 = vmatprep.subr.bf16.mxu0 0
    %2836 = vmatpush1.bf16.msra.mxu0 %v2808
    %2837 = vmatprep.subr.bf16.mxu0 0
    %2838 = vmatpush1.bf16.msra.mxu0 %v2807
    %2839 = vmatprep.subr.bf16.mxu0 0
    %2840 = vmatpush2.bf16.msra.mxu0 0
    %2841 = vmatprep.subr.bf16.mxu0 0
    %2842 = vmatpush2.bf16.msra.mxu0 0
    %2843 = vmatprep.subr.bf16.mxu0 0
    %2844 = vmatpush2.bf16.msra.mxu0 0
    %2845 = vmatprep.subr.bf16.mxu0 0
    %2846 = vmatpush2.bf16.msra.mxu0 0
    %2847 = vmatprep.subr.bf16.mxu0 0
    %2848 = vmatpush2.bf16.msra.mxu0 0
    %2849 = vmatprep.subr.bf16.mxu0 0
    %2850 = vmatpush2.bf16.msra.mxu0 0
    %2851 = vmatprep.subr.bf16.mxu0 0
    %2852 = vmatpush2.bf16.msra.mxu0 0
    %2853 = vmatprep.subr.bf16.mxu0 0
    %2854 = vmatpush2.bf16.msra.mxu0 0
    %2855 = vmatprep.mubr.bf16.mxu0 0
    %2856 = vmatmul.mubr.bf16.gmra.mxu0 %v2768
    %v2857 = vpop.f32.mrf.mxu0
    %v2858 = vadd.f32 %v2773, %v2857
    %v2859 = vpop.f32.mrf.mxu0
    %v2860 = vpop.f32.mrf.mxu0
    %v2861 = vadd.f32 %v2773, %v2860
    %v2862 = vpop.f32.mrf.mxu0
    %2863 = vdwg.mxu0
    %v2864 = vadd.f32 %v2659, %v2858
    %v2865 = vadd.f32 %v2660, %v2861
    %s2866 = scalar_lea.vmem [#allocation6], 1
    %v2867 = vld [vmem:[%s2866] sm:$0x1]
    %s2868 = scalar_lea.vmem [#allocation8], 1
    %v2869 = vld [vmem:[%s2868] sm:$0x1]
    %s2870 = scalar_lea.vmem %s4, 16
    %v2871 = vld [vmem:[%s2870] sm:$0xf]
    %v2872 = vld [vmem:[%s2870 + $0x4] sm:$0xf]
    %v2873 = vld [vmem:[%s2870 + $0x8] sm:$0xf]
    %v2874 = vld [vmem:[%s2870 + $0xc] sm:$0xf]
    %s2875 = scalar_lea.vmem %s5, 16
    %v2876 = vld [vmem:[%s2875] sm:$0xf]
    %v2877 = vld [vmem:[%s2875 + $0x4] sm:$0xf]
    %v2878 = vld [vmem:[%s2875 + $0x8] sm:$0xf]
    %v2879 = vld [vmem:[%s2875 + $0xc] sm:$0xf]
    %s2880 = scalar_lea.vmem [#allocation9], 1
    %v2881 = vld [vmem:[%s2880] sm:$0x1]
    %s2882 = scalar_lea.vmem [#allocation11], 1
    %v2883 = vld [vmem:[%s2882] sm:$0x1]
    %s2884 = scalar_lea.vmem %s8, 16
    %v2885 = vld [vmem:[%s2884] sm:$0xf]
    %v2886 = vld [vmem:[%s2884 + $0x4] sm:$0xf]
    %v2887 = vld [vmem:[%s2884 + $0x8] sm:$0xf]
    %v2888 = vld [vmem:[%s2884 + $0xc] sm:$0xf]
    %s2889 = scalar_lea.vmem %s9, 16
    %v2890 = vld [vmem:[%s2889] sm:$0xf]
    %v2891 = vld [vmem:[%s2889 + $0x4] sm:$0xf]
    %v2892 = vld [vmem:[%s2889 + $0x8] sm:$0xf]
    %v2893 = vld [vmem:[%s2889 + $0xc] sm:$0xf]
    %s2894 = scalar_lea.vmem %s10, 16
    %v2895 = vld [vmem:[%s2894] sm:$0xf]
    %v2896 = vld [vmem:[%s2894 + $0x4] sm:$0xf]
    %v2897 = vld [vmem:[%s2894 + $0x8] sm:$0xf]
    %v2898 = vld [vmem:[%s2894 + $0xc] sm:$0xf]
    %s2899 = scalar_lea.vmem [#allocation12], 1
    %v2900 = vld [vmem:[%s2899] sm:$0x1]
    %s2901 = scalar_lea.vmem [#allocation14], 1
    %v2902 = vld [vmem:[%s2901] sm:$0x1]
    %s2903 = scalar_lea.vmem %s13, 16
    %v2904 = vld [vmem:[%s2903] sm:$0xf]
    %v2905 = vld [vmem:[%s2903 + $0x4] sm:$0xf]
    %v2906 = vld [vmem:[%s2903 + $0x8] sm:$0xf]
    %v2907 = vld [vmem:[%s2903 + $0xc] sm:$0xf]
    %s2908 = scalar_lea.vmem [#allocation15], 1
    %v2909 = vld [vmem:[%s2908] sm:$0x1]
    %s2910 = scalar_lea.vmem %s15, 64
    %v2911 = vld [vmem:[%s2910] sm:$0xf]
    %v2912 = vld [vmem:[%s2910 + $0x4] sm:$0xf]
    %v2913 = vld [vmem:[%s2910 + $0x8] sm:$0xf]
    %v2914 = vld [vmem:[%s2910 + $0xc] sm:$0xf]
    %v2915 = vld [vmem:[%s2910 + $0x10] sm:$0xf]
    %v2916 = vld [vmem:[%s2910 + $0x14] sm:$0xf]
    %v2917 = vld [vmem:[%s2910 + $0x18] sm:$0xf]
    %v2918 = vld [vmem:[%s2910 + $0x1c] sm:$0xf]
    %v2919 = vld [vmem:[%s2910 + $0x20] sm:$0xf]
    %v2920 = vld [vmem:[%s2910 + $0x24] sm:$0xf]
    %v2921 = vld [vmem:[%s2910 + $0x28] sm:$0xf]
    %v2922 = vld [vmem:[%s2910 + $0x2c] sm:$0xf]
    %v2923 = vld [vmem:[%s2910 + $0x30] sm:$0xf]
    %v2924 = vld [vmem:[%s2910 + $0x34] sm:$0xf]
    %v2925 = vld [vmem:[%s2910 + $0x38] sm:$0xf]
    %v2926 = vld [vmem:[%s2910 + $0x3c] sm:$0xf]
    %s2927 = scalar_lea.vmem [#allocation17], 1
    %v2928 = vld [vmem:[%s2927] sm:$0x1]
    %v2929 = vsel %vm345, %v2864, 0.0
    %2930 = vadd.xlane.f32.xlu0 %v2929
    %v2931 = vpop.xlane.xlu0 %2930
    %v2932 = vsel %vm345, %v2865, 0.0
    %2933 = vadd.xlane.f32.xlu0 %v2932
    %v2934 = vpop.xlane.xlu0 %2933
    %v2935 = vmul.f32 %v2931, %v352
    %v2936 = vmul.f32 %v2934, %v352
    %v2937 = vsub.f32 %v2864, %v2935
    %v2938 = vsub.f32 %v2865, %v2936
    %v2939 = vmul.f32 %v2937, %v2937
    %v2940 = vmul.f32 %v2938, %v2938
    %v2941 = vsel %vm345, %v2939, 0.0
    %2942 = vadd.xlane.f32.xlu0 %v2941
    %v2943 = vpop.xlane.xlu0 %2942
    %v2944 = vsel %vm345, %v2940, 0.0
    %2945 = vadd.xlane.f32.xlu0 %v2944
    %v2946 = vpop.xlane.xlu0 %2945
    %v2947 = vmul.f32 %v2943, %v352
    %v2948 = vmul.f32 %v2946, %v352
    %v2949 = vadd.f32 %v2947, 1e-05
    %v2950 = vadd.f32 %v2948, 1e-05
    %v2951 = vrsqrt.pop %v2949
    %v2952 = vrsqrt.pop %v2950
    %v2953 = vmul.f32 %v2937, %v2951
    %v2954 = vmul.f32 %v2938, %v2952
    %v2956 = vlaneseq
    %v2957 = vshrl.u32 %v2956, 7
    %v2958 = vsub.s32 0, %v2957
    %v2959 = vrot.slane %v2867, %v2958
    %v2961 = vmul.f32 %v2953, %v2959
    %v2962 = vmul.f32 %v2954, %v2959
    %v2964 = vlaneseq
    %v2965 = vshrl.u32 %v2964, 7
    %v2966 = vsub.s32 0, %v2965
    %v2967 = vrot.slane %v2869, %v2966
    %v2969 = vadd.f32 %v2961, %v2967
    %v2970 = vadd.f32 %v2962, %v2967
    %v2971 = vpack.c.bf16 %v2970, %v2969
    %v2976 = vunpack.c.l.b16 %v2871
    %v2977 = vunpack.c.l.b16 %v2872
    %v2978 = vunpack.c.l.b16 %v2873
    %v2979 = vunpack.c.l.b16 %v2874
    %v2980 = vpack.c.b16 %v2977, %v2976
    %v2981 = vpack.c.b16 %v2979, %v2978
    %v2985 = vsel %vm345, %v2971, 0
    %2987 = vmatprep.subr.bf16.mxu0 0
    %2988 = vmatpush1.bf16.msra.mxu0 0
    %2989 = vmatprep.subr.bf16.mxu0 0
    %2990 = vmatpush1.bf16.msra.mxu0 0
    %2991 = vmatprep.subr.bf16.mxu0 0
    %2992 = vmatpush1.bf16.msra.mxu0 0
    %2993 = vmatprep.subr.bf16.mxu0 0
    %2994 = vmatpush1.bf16.msra.mxu0 0
    %2995 = vmatprep.subr.bf16.mxu0 0
    %2996 = vmatpush1.bf16.msra.mxu0 0
    %2997 = vmatprep.subr.bf16.mxu0 0
    %2998 = vmatpush1.bf16.msra.mxu0 0
    %2999 = vmatprep.subr.bf16.mxu0 0
    %3000 = vmatpush1.bf16.msra.mxu0 %v2981
    %3001 = vmatprep.subr.bf16.mxu0 0
    %3002 = vmatpush1.bf16.msra.mxu0 %v2980
    %3003 = vmatprep.subr.bf16.mxu0 0
    %3004 = vmatpush2.bf16.msra.mxu0 0
    %3005 = vmatprep.subr.bf16.mxu0 0
    %3006 = vmatpush2.bf16.msra.mxu0 0
    %3007 = vmatprep.subr.bf16.mxu0 0
    %3008 = vmatpush2.bf16.msra.mxu0 0
    %3009 = vmatprep.subr.bf16.mxu0 0
    %3010 = vmatpush2.bf16.msra.mxu0 0
    %3011 = vmatprep.subr.bf16.mxu0 0
    %3012 = vmatpush2.bf16.msra.mxu0 0
    %3013 = vmatprep.subr.bf16.mxu0 0
    %3014 = vmatpush2.bf16.msra.mxu0 0
    %3015 = vmatprep.subr.bf16.mxu0 0
    %3016 = vmatpush2.bf16.msra.mxu0 0
    %3017 = vmatprep.subr.bf16.mxu0 0
    %3018 = vmatpush2.bf16.msra.mxu0 0
    %3019 = vmatprep.mubr.bf16.mxu0 0
    %3020 = vmatmul.mubr.bf16.gmra.mxu0 %v2985
    %v3021 = vpop.f32.mrf.mxu0
    %v3022 = vadd.f32 0.0, %v3021
    %v3023 = vpop.f32.mrf.mxu0
    %v3024 = vpop.f32.mrf.mxu0
    %v3025 = vadd.f32 0.0, %v3024
    %v3026 = vpop.f32.mrf.mxu0
    %3027 = vdwg.mxu0
    %v3028 = vpack.c.bf16 %v3022, %v3022
    %v3029 = vpack.c.bf16 %v3025, %v3025
    %3031 = vrot.lane.b32.xlu0 %v3028, 96
    %v3032 = vpop.permute.xlu0 %3031
    %v3034 = vsel %vm451, %v3028, 0
    %v3037 = vsel %vm451, %v3032, 0
    %3039 = vmatprep.subr.bf16.mxu0 0
    %3040 = vmatpush1.bf16.xpose.msra.mxu0 0
    %3041 = vmatprep.subr.bf16.mxu0 0
    %3042 = vmatpush1.bf16.xpose.msra.mxu0 0
    %3043 = vmatprep.subr.bf16.mxu0 0
    %3044 = vmatpush1.bf16.xpose.msra.mxu0 0
    %3045 = vmatprep.subr.bf16.mxu0 0
    %3046 = vmatpush1.bf16.xpose.msra.mxu0 0
    %3047 = vmatprep.subr.bf16.mxu0 0
    %3048 = vmatpush1.bf16.xpose.msra.mxu0 0
    %3049 = vmatprep.subr.bf16.mxu0 0
    %3050 = vmatpush1.bf16.xpose.msra.mxu0 0
    %3051 = vmatprep.subr.bf16.mxu0 0
    %3052 = vmatpush1.bf16.xpose.msra.mxu0 0
    %3053 = vmatprep.subr.bf16.mxu0 0
    %3054 = vmatpush1.bf16.xpose.msra.mxu0 %v3037
    %3055 = vmatprep.subr.bf16.mxu0 0
    %3056 = vmatpush2.bf16.xpose.msra.mxu0 0
    %3057 = vmatprep.subr.bf16.mxu0 0
    %3058 = vmatpush2.bf16.xpose.msra.mxu0 0
    %3059 = vmatprep.subr.bf16.mxu0 0
    %3060 = vmatpush2.bf16.xpose.msra.mxu0 0
    %3061 = vmatprep.subr.bf16.mxu0 0
    %3062 = vmatpush2.bf16.xpose.msra.mxu0 0
    %3063 = vmatprep.subr.bf16.mxu0 0
    %3064 = vmatpush2.bf16.xpose.msra.mxu0 0
    %3065 = vmatprep.subr.bf16.mxu0 0
    %3066 = vmatpush2.bf16.xpose.msra.mxu0 0
    %3067 = vmatprep.subr.bf16.mxu0 0
    %3068 = vmatpush2.bf16.xpose.msra.mxu0 0
    %3069 = vmatprep.subr.bf16.mxu0 0
    %3070 = vmatpush2.bf16.xpose.msra.mxu0 0
    %3071 = vmatprep.mubr.bf16.mxu0 0
    %3072 = vmatmul.mubr.bf16.gmra.mxu0 %v3034
    %v3073 = vpop.f32.mrf.mxu0
    %v3074 = vadd.f32 0.0, %v3073
    %v3075 = vpop.f32.mrf.mxu0
    %v3076 = vpop.f32.mrf.mxu0
    %v3077 = vpop.f32.mrf.mxu0
    %3078 = vdwg.mxu0
    %3080 = vrot.lane.b32.xlu0 %v3029, 96
    %v3081 = vpop.permute.xlu0 %3080
    %v3083 = vsel %vm451, %v3029, 0
    %v3086 = vsel %vm451, %v3081, 0
    %3088 = vmatprep.subr.bf16.mxu0 0
    %3089 = vmatpush1.bf16.xpose.msra.mxu0 0
    %3090 = vmatprep.subr.bf16.mxu0 0
    %3091 = vmatpush1.bf16.xpose.msra.mxu0 0
    %3092 = vmatprep.subr.bf16.mxu0 0
    %3093 = vmatpush1.bf16.xpose.msra.mxu0 0
    %3094 = vmatprep.subr.bf16.mxu0 0
    %3095 = vmatpush1.bf16.xpose.msra.mxu0 0
    %3096 = vmatprep.subr.bf16.mxu0 0
    %3097 = vmatpush1.bf16.xpose.msra.mxu0 0
    %3098 = vmatprep.subr.bf16.mxu0 0
    %3099 = vmatpush1.bf16.xpose.msra.mxu0 0
    %3100 = vmatprep.subr.bf16.mxu0 0
    %3101 = vmatpush1.bf16.xpose.msra.mxu0 0
    %3102 = vmatprep.subr.bf16.mxu0 0
    %3103 = vmatpush1.bf16.xpose.msra.mxu0 %v3086
    %3104 = vmatprep.subr.bf16.mxu0 0
    %3105 = vmatpush2.bf16.xpose.msra.mxu0 0
    %3106 = vmatprep.subr.bf16.mxu0 0
    %3107 = vmatpush2.bf16.xpose.msra.mxu0 0
    %3108 = vmatprep.subr.bf16.mxu0 0
    %3109 = vmatpush2.bf16.xpose.msra.mxu0 0
    %3110 = vmatprep.subr.bf16.mxu0 0
    %3111 = vmatpush2.bf16.xpose.msra.mxu0 0
    %3112 = vmatprep.subr.bf16.mxu0 0
    %3113 = vmatpush2.bf16.xpose.msra.mxu0 0
    %3114 = vmatprep.subr.bf16.mxu0 0
    %3115 = vmatpush2.bf16.xpose.msra.mxu0 0
    %3116 = vmatprep.subr.bf16.mxu0 0
    %3117 = vmatpush2.bf16.xpose.msra.mxu0 0
    %3118 = vmatprep.subr.bf16.mxu0 0
    %3119 = vmatpush2.bf16.xpose.msra.mxu0 0
    %3120 = vmatprep.mubr.bf16.mxu0 0
    %3121 = vmatmul.mubr.bf16.gmra.mxu0 %v3083
    %v3122 = vpop.f32.mrf.mxu0
    %v3123 = vadd.f32 0.0, %v3122
    %v3124 = vpop.f32.mrf.mxu0
    %v3125 = vpop.f32.mrf.mxu0
    %v3126 = vpop.f32.mrf.mxu0
    %3127 = vdwg.mxu0
    %v3128 = vsel %vm451, %v3074, -inf
    %3129 = vmax.xlane.f32.xlu0 %v3128
    %v3130 = vpop.xlane.xlu0 %3129
    %v3131 = vsel %vm451, %v3123, -inf
    %3132 = vmax.xlane.f32.xlu0 %v3131
    %v3133 = vpop.xlane.xlu0 %3132
    %v3134 = vsub.f32 %v3074, %v3130
    %v3135 = vsub.f32 %v3123, %v3133
    %v3136 = vmul.f32 %v3134, 1.442695
    %v3137 = vpow.pop %v3136
    %v3138 = vmul.f32 %v3135, 1.442695
    %v3139 = vpow.pop %v3138
    %v3140 = vsel %vm451, %v3137, 0.0
    %3141 = vadd.xlane.f32.xlu0 %v3140
    %v3142 = vpop.xlane.xlu0 %3141
    %v3143 = vsel %vm451, %v3139, 0.0
    %3144 = vadd.xlane.f32.xlu0 %v3143
    %v3145 = vpop.xlane.xlu0 %3144
    %v3146 = vrcp.pop %v3142
    %v3147 = vrcp.pop %v3145
    %v3148 = vmul.f32 %v3137, %v3146
    %v3149 = vmul.f32 %v3139, %v3147
    %v3150 = vpack.c.bf16 %v3148, %v3148
    %v3151 = vpack.c.bf16 %v3149, %v3149
    %3152 = vrot.lane.b32.xlu0 %v3028, 64
    %v3153 = vpop.permute.xlu0 %3152
    %v3155 = vsel %vm451, %v3150, 0
    %v3158 = vsel %vm576, %v3153, 0
    %3160 = vmatprep.subr.bf16.mxu0 0
    %3161 = vmatpush1.bf16.msra.mxu0 0
    %3162 = vmatprep.subr.bf16.mxu0 0
    %3163 = vmatpush1.bf16.msra.mxu0 0
    %3164 = vmatprep.subr.bf16.mxu0 0
    %3165 = vmatpush1.bf16.msra.mxu0 0
    %3166 = vmatprep.subr.bf16.mxu0 0
    %3167 = vmatpush1.bf16.msra.mxu0 0
    %3168 = vmatprep.subr.bf16.mxu0 0
    %3169 = vmatpush1.bf16.msra.mxu0 0
    %3170 = vmatprep.subr.bf16.mxu0 0
    %3171 = vmatpush1.bf16.msra.mxu0 0
    %3172 = vmatprep.subr.bf16.mxu0 0
    %3173 = vmatpush1.bf16.msra.mxu0 0
    %3174 = vmatprep.subr.bf16.mxu0 0
    %3175 = vmatpush1.bf16.msra.mxu0 %v3158
    %3176 = vmatprep.subr.bf16.mxu0 0
    %3177 = vmatpush2.bf16.msra.mxu0 0
    %3178 = vmatprep.subr.bf16.mxu0 0
    %3179 = vmatpush2.bf16.msra.mxu0 0
    %3180 = vmatprep.subr.bf16.mxu0 0
    %3181 = vmatpush2.bf16.msra.mxu0 0
    %3182 = vmatprep.subr.bf16.mxu0 0
    %3183 = vmatpush2.bf16.msra.mxu0 0
    %3184 = vmatprep.subr.bf16.mxu0 0
    %3185 = vmatpush2.bf16.msra.mxu0 0
    %3186 = vmatprep.subr.bf16.mxu0 0
    %3187 = vmatpush2.bf16.msra.mxu0 0
    %3188 = vmatprep.subr.bf16.mxu0 0
    %3189 = vmatpush2.bf16.msra.mxu0 0
    %3190 = vmatprep.subr.bf16.mxu0 0
    %3191 = vmatpush2.bf16.msra.mxu0 0
    %3192 = vmatprep.mubr.bf16.mxu0 0
    %3193 = vmatmul.mubr.bf16.gmra.mxu0 %v3155
    %v3194 = vpop.f32.mrf.mxu0
    %v3195 = vadd.f32 0.0, %v3194
    %v3196 = vpop.f32.mrf.mxu0
    %v3197 = vpop.f32.mrf.mxu0
    %v3198 = vpop.f32.mrf.mxu0
    %3199 = vdwg.mxu0
    %3200 = vrot.lane.b32.xlu0 %v3029, 64
    %v3201 = vpop.permute.xlu0 %3200
    %v3203 = vsel %vm451, %v3151, 0
    %v3206 = vsel %vm576, %v3201, 0
    %3208 = vmatprep.subr.bf16.mxu0 0
    %3209 = vmatpush1.bf16.msra.mxu0 0
    %3210 = vmatprep.subr.bf16.mxu0 0
    %3211 = vmatpush1.bf16.msra.mxu0 0
    %3212 = vmatprep.subr.bf16.mxu0 0
    %3213 = vmatpush1.bf16.msra.mxu0 0
    %3214 = vmatprep.subr.bf16.mxu0 0
    %3215 = vmatpush1.bf16.msra.mxu0 0
    %3216 = vmatprep.subr.bf16.mxu0 0
    %3217 = vmatpush1.bf16.msra.mxu0 0
    %3218 = vmatprep.subr.bf16.mxu0 0
    %3219 = vmatpush1.bf16.msra.mxu0 0
    %3220 = vmatprep.subr.bf16.mxu0 0
    %3221 = vmatpush1.bf16.msra.mxu0 0
    %3222 = vmatprep.subr.bf16.mxu0 0
    %3223 = vmatpush1.bf16.msra.mxu0 %v3206
    %3224 = vmatprep.subr.bf16.mxu0 0
    %3225 = vmatpush2.bf16.msra.mxu0 0
    %3226 = vmatprep.subr.bf16.mxu0 0
    %3227 = vmatpush2.bf16.msra.mxu0 0
    %3228 = vmatprep.subr.bf16.mxu0 0
    %3229 = vmatpush2.bf16.msra.mxu0 0
    %3230 = vmatprep.subr.bf16.mxu0 0
    %3231 = vmatpush2.bf16.msra.mxu0 0
    %3232 = vmatprep.subr.bf16.mxu0 0
    %3233 = vmatpush2.bf16.msra.mxu0 0
    %3234 = vmatprep.subr.bf16.mxu0 0
    %3235 = vmatpush2.bf16.msra.mxu0 0
    %3236 = vmatprep.subr.bf16.mxu0 0
    %3237 = vmatpush2.bf16.msra.mxu0 0
    %3238 = vmatprep.subr.bf16.mxu0 0
    %3239 = vmatpush2.bf16.msra.mxu0 0
    %3240 = vmatprep.mubr.bf16.mxu0 0
    %3241 = vmatmul.mubr.bf16.gmra.mxu0 %v3203
    %v3242 = vpop.f32.mrf.mxu0
    %v3243 = vadd.f32 0.0, %v3242
    %v3244 = vpop.f32.mrf.mxu0
    %v3245 = vpop.f32.mrf.mxu0
    %v3246 = vpop.f32.mrf.mxu0
    %3247 = vdwg.mxu0
    %3248 = vst.msk [vmem:[#allocation2] sm:$0xff] %vm451, %v3195
    %3249 = vst.msk [vmem:[#allocation2 + $0x8] sm:$0xff] %vm451, %v3243
    %3250 = vrot.lane.b32.xlu0 %v3028, 120
    %v3251 = vpop.permute.xlu0 %3250
    %3252 = vrot.lane.b32.xlu0 %v3028, 88
    %v3253 = vpop.permute.xlu0 %3252
    %v3255 = vsel %vm451, %v3251, 0
    %v3258 = vsel %vm451, %v3253, 0
    %3260 = vmatprep.subr.bf16.mxu0 0
    %3261 = vmatpush1.bf16.xpose.msra.mxu0 0
    %3262 = vmatprep.subr.bf16.mxu0 0
    %3263 = vmatpush1.bf16.xpose.msra.mxu0 0
    %3264 = vmatprep.subr.bf16.mxu0 0
    %3265 = vmatpush1.bf16.xpose.msra.mxu0 0
    %3266 = vmatprep.subr.bf16.mxu0 0
    %3267 = vmatpush1.bf16.xpose.msra.mxu0 0
    %3268 = vmatprep.subr.bf16.mxu0 0
    %3269 = vmatpush1.bf16.xpose.msra.mxu0 0
    %3270 = vmatprep.subr.bf16.mxu0 0
    %3271 = vmatpush1.bf16.xpose.msra.mxu0 0
    %3272 = vmatprep.subr.bf16.mxu0 0
    %3273 = vmatpush1.bf16.xpose.msra.mxu0 0
    %3274 = vmatprep.subr.bf16.mxu0 0
    %3275 = vmatpush1.bf16.xpose.msra.mxu0 %v3258
    %3276 = vmatprep.subr.bf16.mxu0 0
    %3277 = vmatpush2.bf16.xpose.msra.mxu0 0
    %3278 = vmatprep.subr.bf16.mxu0 0
    %3279 = vmatpush2.bf16.xpose.msra.mxu0 0
    %3280 = vmatprep.subr.bf16.mxu0 0
    %3281 = vmatpush2.bf16.xpose.msra.mxu0 0
    %3282 = vmatprep.subr.bf16.mxu0 0
    %3283 = vmatpush2.bf16.xpose.msra.mxu0 0
    %3284 = vmatprep.subr.bf16.mxu0 0
    %3285 = vmatpush2.bf16.xpose.msra.mxu0 0
    %3286 = vmatprep.subr.bf16.mxu0 0
    %3287 = vmatpush2.bf16.xpose.msra.mxu0 0
    %3288 = vmatprep.subr.bf16.mxu0 0
    %3289 = vmatpush2.bf16.xpose.msra.mxu0 0
    %3290 = vmatprep.subr.bf16.mxu0 0
    %3291 = vmatpush2.bf16.xpose.msra.mxu0 0
    %3292 = vmatprep.mubr.bf16.mxu0 0
    %3293 = vmatmul.mubr.bf16.gmra.mxu0 %v3255
    %v3294 = vpop.f32.mrf.mxu0
    %v3295 = vadd.f32 0.0, %v3294
    %v3296 = vpop.f32.mrf.mxu0
    %v3297 = vpop.f32.mrf.mxu0
    %v3298 = vpop.f32.mrf.mxu0
    %3299 = vdwg.mxu0
    %3300 = vrot.lane.b32.xlu0 %v3029, 120
    %v3301 = vpop.permute.xlu0 %3300
    %3302 = vrot.lane.b32.xlu0 %v3029, 88
    %v3303 = vpop.permute.xlu0 %3302
    %v3305 = vsel %vm451, %v3301, 0
    %v3308 = vsel %vm451, %v3303, 0
    %3310 = vmatprep.subr.bf16.mxu0 0
    %3311 = vmatpush1.bf16.xpose.msra.mxu0 0
    %3312 = vmatprep.subr.bf16.mxu0 0
    %3313 = vmatpush1.bf16.xpose.msra.mxu0 0
    %3314 = vmatprep.subr.bf16.mxu0 0
    %3315 = vmatpush1.bf16.xpose.msra.mxu0 0
    %3316 = vmatprep.subr.bf16.mxu0 0
    %3317 = vmatpush1.bf16.xpose.msra.mxu0 0
    %3318 = vmatprep.subr.bf16.mxu0 0
    %3319 = vmatpush1.bf16.xpose.msra.mxu0 0
    %3320 = vmatprep.subr.bf16.mxu0 0
    %3321 = vmatpush1.bf16.xpose.msra.mxu0 0
    %3322 = vmatprep.subr.bf16.mxu0 0
    %3323 = vmatpush1.bf16.xpose.msra.mxu0 0
    %3324 = vmatprep.subr.bf16.mxu0 0
    %3325 = vmatpush1.bf16.xpose.msra.mxu0 %v3308
    %3326 = vmatprep.subr.bf16.mxu0 0
    %3327 = vmatpush2.bf16.xpose.msra.mxu0 0
    %3328 = vmatprep.subr.bf16.mxu0 0
    %3329 = vmatpush2.bf16.xpose.msra.mxu0 0
    %3330 = vmatprep.subr.bf16.mxu0 0
    %3331 = vmatpush2.bf16.xpose.msra.mxu0 0
    %3332 = vmatprep.subr.bf16.mxu0 0
    %3333 = vmatpush2.bf16.xpose.msra.mxu0 0
    %3334 = vmatprep.subr.bf16.mxu0 0
    %3335 = vmatpush2.bf16.xpose.msra.mxu0 0
    %3336 = vmatprep.subr.bf16.mxu0 0
    %3337 = vmatpush2.bf16.xpose.msra.mxu0 0
    %3338 = vmatprep.subr.bf16.mxu0 0
    %3339 = vmatpush2.bf16.xpose.msra.mxu0 0
    %3340 = vmatprep.subr.bf16.mxu0 0
    %3341 = vmatpush2.bf16.xpose.msra.mxu0 0
    %3342 = vmatprep.mubr.bf16.mxu0 0
    %3343 = vmatmul.mubr.bf16.gmra.mxu0 %v3305
    %v3344 = vpop.f32.mrf.mxu0
    %v3345 = vadd.f32 0.0, %v3344
    %v3346 = vpop.f32.mrf.mxu0
    %v3347 = vpop.f32.mrf.mxu0
    %v3348 = vpop.f32.mrf.mxu0
    %3349 = vdwg.mxu0
    %v3350 = vsel %vm451, %v3295, -inf
    %3351 = vmax.xlane.f32.xlu0 %v3350
    %v3352 = vpop.xlane.xlu0 %3351
    %v3353 = vsel %vm451, %v3345, -inf
    %3354 = vmax.xlane.f32.xlu0 %v3353
    %v3355 = vpop.xlane.xlu0 %3354
    %v3356 = vsub.f32 %v3295, %v3352
    %v3357 = vsub.f32 %v3345, %v3355
    %v3358 = vmul.f32 %v3356, 1.442695
    %v3359 = vpow.pop %v3358
    %v3360 = vmul.f32 %v3357, 1.442695
    %v3361 = vpow.pop %v3360
    %v3362 = vsel %vm451, %v3359, 0.0
    %3363 = vadd.xlane.f32.xlu0 %v3362
    %v3364 = vpop.xlane.xlu0 %3363
    %v3365 = vsel %vm451, %v3361, 0.0
    %3366 = vadd.xlane.f32.xlu0 %v3365
    %v3367 = vpop.xlane.xlu0 %3366
    %v3368 = vrcp.pop %v3364
    %v3369 = vrcp.pop %v3367
    %v3370 = vmul.f32 %v3359, %v3368
    %v3371 = vmul.f32 %v3361, %v3369
    %v3372 = vpack.c.bf16 %v3370, %v3370
    %v3373 = vpack.c.bf16 %v3371, %v3371
    %3374 = vrot.lane.b32.xlu0 %v3028, 56
    %v3375 = vpop.permute.xlu0 %3374
    %v3377 = vsel %vm451, %v3372, 0
    %v3380 = vsel %vm576, %v3375, 0
    %3382 = vmatprep.subr.bf16.mxu0 0
    %3383 = vmatpush1.bf16.msra.mxu0 0
    %3384 = vmatprep.subr.bf16.mxu0 0
    %3385 = vmatpush1.bf16.msra.mxu0 0
    %3386 = vmatprep.subr.bf16.mxu0 0
    %3387 = vmatpush1.bf16.msra.mxu0 0
    %3388 = vmatprep.subr.bf16.mxu0 0
    %3389 = vmatpush1.bf16.msra.mxu0 0
    %3390 = vmatprep.subr.bf16.mxu0 0
    %3391 = vmatpush1.bf16.msra.mxu0 0
    %3392 = vmatprep.subr.bf16.mxu0 0
    %3393 = vmatpush1.bf16.msra.mxu0 0
    %3394 = vmatprep.subr.bf16.mxu0 0
    %3395 = vmatpush1.bf16.msra.mxu0 0
    %3396 = vmatprep.subr.bf16.mxu0 0
    %3397 = vmatpush1.bf16.msra.mxu0 %v3380
    %3398 = vmatprep.subr.bf16.mxu0 0
    %3399 = vmatpush2.bf16.msra.mxu0 0
    %3400 = vmatprep.subr.bf16.mxu0 0
    %3401 = vmatpush2.bf16.msra.mxu0 0
    %3402 = vmatprep.subr.bf16.mxu0 0
    %3403 = vmatpush2.bf16.msra.mxu0 0
    %3404 = vmatprep.subr.bf16.mxu0 0
    %3405 = vmatpush2.bf16.msra.mxu0 0
    %3406 = vmatprep.subr.bf16.mxu0 0
    %3407 = vmatpush2.bf16.msra.mxu0 0
    %3408 = vmatprep.subr.bf16.mxu0 0
    %3409 = vmatpush2.bf16.msra.mxu0 0
    %3410 = vmatprep.subr.bf16.mxu0 0
    %3411 = vmatpush2.bf16.msra.mxu0 0
    %3412 = vmatprep.subr.bf16.mxu0 0
    %3413 = vmatpush2.bf16.msra.mxu0 0
    %3414 = vmatprep.mubr.bf16.mxu0 0
    %3415 = vmatmul.mubr.bf16.gmra.mxu0 %v3377
    %v3416 = vpop.f32.mrf.mxu0
    %v3417 = vadd.f32 0.0, %v3416
    %v3418 = vpop.f32.mrf.mxu0
    %v3419 = vpop.f32.mrf.mxu0
    %v3420 = vpop.f32.mrf.mxu0
    %3421 = vdwg.mxu0
    %3422 = vrot.lane.b32.xlu0 %v3029, 56
    %v3423 = vpop.permute.xlu0 %3422
    %v3425 = vsel %vm451, %v3373, 0
    %v3428 = vsel %vm576, %v3423, 0
    %3430 = vmatprep.subr.bf16.mxu0 0
    %3431 = vmatpush1.bf16.msra.mxu0 0
    %3432 = vmatprep.subr.bf16.mxu0 0
    %3433 = vmatpush1.bf16.msra.mxu0 0
    %3434 = vmatprep.subr.bf16.mxu0 0
    %3435 = vmatpush1.bf16.msra.mxu0 0
    %3436 = vmatprep.subr.bf16.mxu0 0
    %3437 = vmatpush1.bf16.msra.mxu0 0
    %3438 = vmatprep.subr.bf16.mxu0 0
    %3439 = vmatpush1.bf16.msra.mxu0 0
    %3440 = vmatprep.subr.bf16.mxu0 0
    %3441 = vmatpush1.bf16.msra.mxu0 0
    %3442 = vmatprep.subr.bf16.mxu0 0
    %3443 = vmatpush1.bf16.msra.mxu0 0
    %3444 = vmatprep.subr.bf16.mxu0 0
    %3445 = vmatpush1.bf16.msra.mxu0 %v3428
    %3446 = vmatprep.subr.bf16.mxu0 0
    %3447 = vmatpush2.bf16.msra.mxu0 0
    %3448 = vmatprep.subr.bf16.mxu0 0
    %3449 = vmatpush2.bf16.msra.mxu0 0
    %3450 = vmatprep.subr.bf16.mxu0 0
    %3451 = vmatpush2.bf16.msra.mxu0 0
    %3452 = vmatprep.subr.bf16.mxu0 0
    %3453 = vmatpush2.bf16.msra.mxu0 0
    %3454 = vmatprep.subr.bf16.mxu0 0
    %3455 = vmatpush2.bf16.msra.mxu0 0
    %3456 = vmatprep.subr.bf16.mxu0 0
    %3457 = vmatpush2.bf16.msra.mxu0 0
    %3458 = vmatprep.subr.bf16.mxu0 0
    %3459 = vmatpush2.bf16.msra.mxu0 0
    %3460 = vmatprep.subr.bf16.mxu0 0
    %3461 = vmatpush2.bf16.msra.mxu0 0
    %3462 = vmatprep.mubr.bf16.mxu0 0
    %3463 = vmatmul.mubr.bf16.gmra.mxu0 %v3425
    %v3464 = vpop.f32.mrf.mxu0
    %v3465 = vadd.f32 0.0, %v3464
    %v3466 = vpop.f32.mrf.mxu0
    %v3467 = vpop.f32.mrf.mxu0
    %v3468 = vpop.f32.mrf.mxu0
    %3469 = vdwg.mxu0
    %3472 = vrot.lane.b32.xlu0 %v3417, 8
    %v3473 = vpop.permute.xlu0 %3472
    %3474 = vrot.lane.b32.xlu0 %v3465, 8
    %v3475 = vpop.permute.xlu0 %3474
    %3478 = vst.msk [vmem:[#allocation2] sm:$0xff] %vm898, %v3473
    %3479 = vst.msk [vmem:[#allocation2 + $0x8] sm:$0xff] %vm898, %v3475
    %3480 = vrot.lane.b32.xlu0 %v3028, 112
    %v3481 = vpop.permute.xlu0 %3480
    %3482 = vrot.lane.b32.xlu0 %v3028, 80
    %v3483 = vpop.permute.xlu0 %3482
    %v3485 = vsel %vm451, %v3481, 0
    %v3488 = vsel %vm451, %v3483, 0
    %3490 = vmatprep.subr.bf16.mxu0 0
    %3491 = vmatpush1.bf16.xpose.msra.mxu0 0
    %3492 = vmatprep.subr.bf16.mxu0 0
    %3493 = vmatpush1.bf16.xpose.msra.mxu0 0
    %3494 = vmatprep.subr.bf16.mxu0 0
    %3495 = vmatpush1.bf16.xpose.msra.mxu0 0
    %3496 = vmatprep.subr.bf16.mxu0 0
    %3497 = vmatpush1.bf16.xpose.msra.mxu0 0
    %3498 = vmatprep.subr.bf16.mxu0 0
    %3499 = vmatpush1.bf16.xpose.msra.mxu0 0
    %3500 = vmatprep.subr.bf16.mxu0 0
    %3501 = vmatpush1.bf16.xpose.msra.mxu0 0
    %3502 = vmatprep.subr.bf16.mxu0 0
    %3503 = vmatpush1.bf16.xpose.msra.mxu0 0
    %3504 = vmatprep.subr.bf16.mxu0 0
    %3505 = vmatpush1.bf16.xpose.msra.mxu0 %v3488
    %3506 = vmatprep.subr.bf16.mxu0 0
    %3507 = vmatpush2.bf16.xpose.msra.mxu0 0
    %3508 = vmatprep.subr.bf16.mxu0 0
    %3509 = vmatpush2.bf16.xpose.msra.mxu0 0
    %3510 = vmatprep.subr.bf16.mxu0 0
    %3511 = vmatpush2.bf16.xpose.msra.mxu0 0
    %3512 = vmatprep.subr.bf16.mxu0 0
    %3513 = vmatpush2.bf16.xpose.msra.mxu0 0
    %3514 = vmatprep.subr.bf16.mxu0 0
    %3515 = vmatpush2.bf16.xpose.msra.mxu0 0
    %3516 = vmatprep.subr.bf16.mxu0 0
    %3517 = vmatpush2.bf16.xpose.msra.mxu0 0
    %3518 = vmatprep.subr.bf16.mxu0 0
    %3519 = vmatpush2.bf16.xpose.msra.mxu0 0
    %3520 = vmatprep.subr.bf16.mxu0 0
    %3521 = vmatpush2.bf16.xpose.msra.mxu0 0
    %3522 = vmatprep.mubr.bf16.mxu0 0
    %3523 = vmatmul.mubr.bf16.gmra.mxu0 %v3485
    %v3524 = vpop.f32.mrf.mxu0
    %v3525 = vadd.f32 0.0, %v3524
    %v3526 = vpop.f32.mrf.mxu0
    %v3527 = vpop.f32.mrf.mxu0
    %v3528 = vpop.f32.mrf.mxu0
    %3529 = vdwg.mxu0
    %3530 = vrot.lane.b32.xlu0 %v3029, 112
    %v3531 = vpop.permute.xlu0 %3530
    %3532 = vrot.lane.b32.xlu0 %v3029, 80
    %v3533 = vpop.permute.xlu0 %3532
    %v3535 = vsel %vm451, %v3531, 0
    %v3538 = vsel %vm451, %v3533, 0
    %3540 = vmatprep.subr.bf16.mxu0 0
    %3541 = vmatpush1.bf16.xpose.msra.mxu0 0
    %3542 = vmatprep.subr.bf16.mxu0 0
    %3543 = vmatpush1.bf16.xpose.msra.mxu0 0
    %3544 = vmatprep.subr.bf16.mxu0 0
    %3545 = vmatpush1.bf16.xpose.msra.mxu0 0
    %3546 = vmatprep.subr.bf16.mxu0 0
    %3547 = vmatpush1.bf16.xpose.msra.mxu0 0
    %3548 = vmatprep.subr.bf16.mxu0 0
    %3549 = vmatpush1.bf16.xpose.msra.mxu0 0
    %3550 = vmatprep.subr.bf16.mxu0 0
    %3551 = vmatpush1.bf16.xpose.msra.mxu0 0
    %3552 = vmatprep.subr.bf16.mxu0 0
    %3553 = vmatpush1.bf16.xpose.msra.mxu0 0
    %3554 = vmatprep.subr.bf16.mxu0 0
    %3555 = vmatpush1.bf16.xpose.msra.mxu0 %v3538
    %3556 = vmatprep.subr.bf16.mxu0 0
    %3557 = vmatpush2.bf16.xpose.msra.mxu0 0
    %3558 = vmatprep.subr.bf16.mxu0 0
    %3559 = vmatpush2.bf16.xpose.msra.mxu0 0
    %3560 = vmatprep.subr.bf16.mxu0 0
    %3561 = vmatpush2.bf16.xpose.msra.mxu0 0
    %3562 = vmatprep.subr.bf16.mxu0 0
    %3563 = vmatpush2.bf16.xpose.msra.mxu0 0
    %3564 = vmatprep.subr.bf16.mxu0 0
    %3565 = vmatpush2.bf16.xpose.msra.mxu0 0
    %3566 = vmatprep.subr.bf16.mxu0 0
    %3567 = vmatpush2.bf16.xpose.msra.mxu0 0
    %3568 = vmatprep.subr.bf16.mxu0 0
    %3569 = vmatpush2.bf16.xpose.msra.mxu0 0
    %3570 = vmatprep.subr.bf16.mxu0 0
    %3571 = vmatpush2.bf16.xpose.msra.mxu0 0
    %3572 = vmatprep.mubr.bf16.mxu0 0
    %3573 = vmatmul.mubr.bf16.gmra.mxu0 %v3535
    %v3574 = vpop.f32.mrf.mxu0
    %v3575 = vadd.f32 0.0, %v3574
    %v3576 = vpop.f32.mrf.mxu0
    %v3577 = vpop.f32.mrf.mxu0
    %v3578 = vpop.f32.mrf.mxu0
    %3579 = vdwg.mxu0
    %v3580 = vsel %vm451, %v3525, -inf
    %3581 = vmax.xlane.f32.xlu0 %v3580
    %v3582 = vpop.xlane.xlu0 %3581
    %v3583 = vsel %vm451, %v3575, -inf
    %3584 = vmax.xlane.f32.xlu0 %v3583
    %v3585 = vpop.xlane.xlu0 %3584
    %v3586 = vsub.f32 %v3525, %v3582
    %v3587 = vsub.f32 %v3575, %v3585
    %v3588 = vmul.f32 %v3586, 1.442695
    %v3589 = vpow.pop %v3588
    %v3590 = vmul.f32 %v3587, 1.442695
    %v3591 = vpow.pop %v3590
    %v3592 = vsel %vm451, %v3589, 0.0
    %3593 = vadd.xlane.f32.xlu0 %v3592
    %v3594 = vpop.xlane.xlu0 %3593
    %v3595 = vsel %vm451, %v3591, 0.0
    %3596 = vadd.xlane.f32.xlu0 %v3595
    %v3597 = vpop.xlane.xlu0 %3596
    %v3598 = vrcp.pop %v3594
    %v3599 = vrcp.pop %v3597
    %v3600 = vmul.f32 %v3589, %v3598
    %v3601 = vmul.f32 %v3591, %v3599
    %v3602 = vpack.c.bf16 %v3600, %v3600
    %v3603 = vpack.c.bf16 %v3601, %v3601
    %3604 = vrot.lane.b32.xlu0 %v3028, 48
    %v3605 = vpop.permute.xlu0 %3604
    %v3607 = vsel %vm451, %v3602, 0
    %v3610 = vsel %vm576, %v3605, 0
    %3612 = vmatprep.subr.bf16.mxu0 0
    %3613 = vmatpush1.bf16.msra.mxu0 0
    %3614 = vmatprep.subr.bf16.mxu0 0
    %3615 = vmatpush1.bf16.msra.mxu0 0
    %3616 = vmatprep.subr.bf16.mxu0 0
    %3617 = vmatpush1.bf16.msra.mxu0 0
    %3618 = vmatprep.subr.bf16.mxu0 0
    %3619 = vmatpush1.bf16.msra.mxu0 0
    %3620 = vmatprep.subr.bf16.mxu0 0
    %3621 = vmatpush1.bf16.msra.mxu0 0
    %3622 = vmatprep.subr.bf16.mxu0 0
    %3623 = vmatpush1.bf16.msra.mxu0 0
    %3624 = vmatprep.subr.bf16.mxu0 0
    %3625 = vmatpush1.bf16.msra.mxu0 0
    %3626 = vmatprep.subr.bf16.mxu0 0
    %3627 = vmatpush1.bf16.msra.mxu0 %v3610
    %3628 = vmatprep.subr.bf16.mxu0 0
    %3629 = vmatpush2.bf16.msra.mxu0 0
    %3630 = vmatprep.subr.bf16.mxu0 0
    %3631 = vmatpush2.bf16.msra.mxu0 0
    %3632 = vmatprep.subr.bf16.mxu0 0
    %3633 = vmatpush2.bf16.msra.mxu0 0
    %3634 = vmatprep.subr.bf16.mxu0 0
    %3635 = vmatpush2.bf16.msra.mxu0 0
    %3636 = vmatprep.subr.bf16.mxu0 0
    %3637 = vmatpush2.bf16.msra.mxu0 0
    %3638 = vmatprep.subr.bf16.mxu0 0
    %3639 = vmatpush2.bf16.msra.mxu0 0
    %3640 = vmatprep.subr.bf16.mxu0 0
    %3641 = vmatpush2.bf16.msra.mxu0 0
    %3642 = vmatprep.subr.bf16.mxu0 0
    %3643 = vmatpush2.bf16.msra.mxu0 0
    %3644 = vmatprep.mubr.bf16.mxu0 0
    %3645 = vmatmul.mubr.bf16.gmra.mxu0 %v3607
    %v3646 = vpop.f32.mrf.mxu0
    %v3647 = vadd.f32 0.0, %v3646
    %v3648 = vpop.f32.mrf.mxu0
    %v3649 = vpop.f32.mrf.mxu0
    %v3650 = vpop.f32.mrf.mxu0
    %3651 = vdwg.mxu0
    %3652 = vrot.lane.b32.xlu0 %v3029, 48
    %v3653 = vpop.permute.xlu0 %3652
    %v3655 = vsel %vm451, %v3603, 0
    %v3658 = vsel %vm576, %v3653, 0
    %3660 = vmatprep.subr.bf16.mxu0 0
    %3661 = vmatpush1.bf16.msra.mxu0 0
    %3662 = vmatprep.subr.bf16.mxu0 0
    %3663 = vmatpush1.bf16.msra.mxu0 0
    %3664 = vmatprep.subr.bf16.mxu0 0
    %3665 = vmatpush1.bf16.msra.mxu0 0
    %3666 = vmatprep.subr.bf16.mxu0 0
    %3667 = vmatpush1.bf16.msra.mxu0 0
    %3668 = vmatprep.subr.bf16.mxu0 0
    %3669 = vmatpush1.bf16.msra.mxu0 0
    %3670 = vmatprep.subr.bf16.mxu0 0
    %3671 = vmatpush1.bf16.msra.mxu0 0
    %3672 = vmatprep.subr.bf16.mxu0 0
    %3673 = vmatpush1.bf16.msra.mxu0 0
    %3674 = vmatprep.subr.bf16.mxu0 0
    %3675 = vmatpush1.bf16.msra.mxu0 %v3658
    %3676 = vmatprep.subr.bf16.mxu0 0
    %3677 = vmatpush2.bf16.msra.mxu0 0
    %3678 = vmatprep.subr.bf16.mxu0 0
    %3679 = vmatpush2.bf16.msra.mxu0 0
    %3680 = vmatprep.subr.bf16.mxu0 0
    %3681 = vmatpush2.bf16.msra.mxu0 0
    %3682 = vmatprep.subr.bf16.mxu0 0
    %3683 = vmatpush2.bf16.msra.mxu0 0
    %3684 = vmatprep.subr.bf16.mxu0 0
    %3685 = vmatpush2.bf16.msra.mxu0 0
    %3686 = vmatprep.subr.bf16.mxu0 0
    %3687 = vmatpush2.bf16.msra.mxu0 0
    %3688 = vmatprep.subr.bf16.mxu0 0
    %3689 = vmatpush2.bf16.msra.mxu0 0
    %3690 = vmatprep.subr.bf16.mxu0 0
    %3691 = vmatpush2.bf16.msra.mxu0 0
    %3692 = vmatprep.mubr.bf16.mxu0 0
    %3693 = vmatmul.mubr.bf16.gmra.mxu0 %v3655
    %v3694 = vpop.f32.mrf.mxu0
    %v3695 = vadd.f32 0.0, %v3694
    %v3696 = vpop.f32.mrf.mxu0
    %v3697 = vpop.f32.mrf.mxu0
    %v3698 = vpop.f32.mrf.mxu0
    %3699 = vdwg.mxu0
    %3702 = vrot.lane.b32.xlu0 %v3647, 16
    %v3703 = vpop.permute.xlu0 %3702
    %3704 = vrot.lane.b32.xlu0 %v3695, 16
    %v3705 = vpop.permute.xlu0 %3704
    %3708 = vst.msk [vmem:[#allocation2] sm:$0xff] %vm1129, %v3703
    %3709 = vst.msk [vmem:[#allocation2 + $0x8] sm:$0xff] %vm1129, %v3705
    %3710 = vrot.lane.b32.xlu0 %v3028, 104
    %v3711 = vpop.permute.xlu0 %3710
    %3712 = vrot.lane.b32.xlu0 %v3028, 72
    %v3713 = vpop.permute.xlu0 %3712
    %v3715 = vsel %vm451, %v3711, 0
    %v3718 = vsel %vm451, %v3713, 0
    %3720 = vmatprep.subr.bf16.mxu0 0
    %3721 = vmatpush1.bf16.xpose.msra.mxu0 0
    %3722 = vmatprep.subr.bf16.mxu0 0
    %3723 = vmatpush1.bf16.xpose.msra.mxu0 0
    %3724 = vmatprep.subr.bf16.mxu0 0
    %3725 = vmatpush1.bf16.xpose.msra.mxu0 0
    %3726 = vmatprep.subr.bf16.mxu0 0
    %3727 = vmatpush1.bf16.xpose.msra.mxu0 0
    %3728 = vmatprep.subr.bf16.mxu0 0
    %3729 = vmatpush1.bf16.xpose.msra.mxu0 0
    %3730 = vmatprep.subr.bf16.mxu0 0
    %3731 = vmatpush1.bf16.xpose.msra.mxu0 0
    %3732 = vmatprep.subr.bf16.mxu0 0
    %3733 = vmatpush1.bf16.xpose.msra.mxu0 0
    %3734 = vmatprep.subr.bf16.mxu0 0
    %3735 = vmatpush1.bf16.xpose.msra.mxu0 %v3718
    %3736 = vmatprep.subr.bf16.mxu0 0
    %3737 = vmatpush2.bf16.xpose.msra.mxu0 0
    %3738 = vmatprep.subr.bf16.mxu0 0
    %3739 = vmatpush2.bf16.xpose.msra.mxu0 0
    %3740 = vmatprep.subr.bf16.mxu0 0
    %3741 = vmatpush2.bf16.xpose.msra.mxu0 0
    %3742 = vmatprep.subr.bf16.mxu0 0
    %3743 = vmatpush2.bf16.xpose.msra.mxu0 0
    %3744 = vmatprep.subr.bf16.mxu0 0
    %3745 = vmatpush2.bf16.xpose.msra.mxu0 0
    %3746 = vmatprep.subr.bf16.mxu0 0
    %3747 = vmatpush2.bf16.xpose.msra.mxu0 0
    %3748 = vmatprep.subr.bf16.mxu0 0
    %3749 = vmatpush2.bf16.xpose.msra.mxu0 0
    %3750 = vmatprep.subr.bf16.mxu0 0
    %3751 = vmatpush2.bf16.xpose.msra.mxu0 0
    %3752 = vmatprep.mubr.bf16.mxu0 0
    %3753 = vmatmul.mubr.bf16.gmra.mxu0 %v3715
    %v3754 = vpop.f32.mrf.mxu0
    %v3755 = vadd.f32 0.0, %v3754
    %v3756 = vpop.f32.mrf.mxu0
    %v3757 = vpop.f32.mrf.mxu0
    %v3758 = vpop.f32.mrf.mxu0
    %3759 = vdwg.mxu0
    %3760 = vrot.lane.b32.xlu0 %v3029, 104
    %v3761 = vpop.permute.xlu0 %3760
    %3762 = vrot.lane.b32.xlu0 %v3029, 72
    %v3763 = vpop.permute.xlu0 %3762
    %v3765 = vsel %vm451, %v3761, 0
    %v3768 = vsel %vm451, %v3763, 0
    %3770 = vmatprep.subr.bf16.mxu0 0
    %3771 = vmatpush1.bf16.xpose.msra.mxu0 0
    %3772 = vmatprep.subr.bf16.mxu0 0
    %3773 = vmatpush1.bf16.xpose.msra.mxu0 0
    %3774 = vmatprep.subr.bf16.mxu0 0
    %3775 = vmatpush1.bf16.xpose.msra.mxu0 0
    %3776 = vmatprep.subr.bf16.mxu0 0
    %3777 = vmatpush1.bf16.xpose.msra.mxu0 0
    %3778 = vmatprep.subr.bf16.mxu0 0
    %3779 = vmatpush1.bf16.xpose.msra.mxu0 0
    %3780 = vmatprep.subr.bf16.mxu0 0
    %3781 = vmatpush1.bf16.xpose.msra.mxu0 0
    %3782 = vmatprep.subr.bf16.mxu0 0
    %3783 = vmatpush1.bf16.xpose.msra.mxu0 0
    %3784 = vmatprep.subr.bf16.mxu0 0
    %3785 = vmatpush1.bf16.xpose.msra.mxu0 %v3768
    %3786 = vmatprep.subr.bf16.mxu0 0
    %3787 = vmatpush2.bf16.xpose.msra.mxu0 0
    %3788 = vmatprep.subr.bf16.mxu0 0
    %3789 = vmatpush2.bf16.xpose.msra.mxu0 0
    %3790 = vmatprep.subr.bf16.mxu0 0
    %3791 = vmatpush2.bf16.xpose.msra.mxu0 0
    %3792 = vmatprep.subr.bf16.mxu0 0
    %3793 = vmatpush2.bf16.xpose.msra.mxu0 0
    %3794 = vmatprep.subr.bf16.mxu0 0
    %3795 = vmatpush2.bf16.xpose.msra.mxu0 0
    %3796 = vmatprep.subr.bf16.mxu0 0
    %3797 = vmatpush2.bf16.xpose.msra.mxu0 0
    %3798 = vmatprep.subr.bf16.mxu0 0
    %3799 = vmatpush2.bf16.xpose.msra.mxu0 0
    %3800 = vmatprep.subr.bf16.mxu0 0
    %3801 = vmatpush2.bf16.xpose.msra.mxu0 0
    %3802 = vmatprep.mubr.bf16.mxu0 0
    %3803 = vmatmul.mubr.bf16.gmra.mxu0 %v3765
    %v3804 = vpop.f32.mrf.mxu0
    %v3805 = vadd.f32 0.0, %v3804
    %v3806 = vpop.f32.mrf.mxu0
    %v3807 = vpop.f32.mrf.mxu0
    %v3808 = vpop.f32.mrf.mxu0
    %3809 = vdwg.mxu0
    %v3810 = vsel %vm451, %v3755, -inf
    %3811 = vmax.xlane.f32.xlu0 %v3810
    %v3812 = vpop.xlane.xlu0 %3811
    %v3813 = vsel %vm451, %v3805, -inf
    %3814 = vmax.xlane.f32.xlu0 %v3813
    %v3815 = vpop.xlane.xlu0 %3814
    %v3816 = vsub.f32 %v3755, %v3812
    %v3817 = vsub.f32 %v3805, %v3815
    %v3818 = vmul.f32 %v3816, 1.442695
    %v3819 = vpow.pop %v3818
    %v3820 = vmul.f32 %v3817, 1.442695
    %v3821 = vpow.pop %v3820
    %v3822 = vsel %vm451, %v3819, 0.0
    %3823 = vadd.xlane.f32.xlu0 %v3822
    %v3824 = vpop.xlane.xlu0 %3823
    %v3825 = vsel %vm451, %v3821, 0.0
    %3826 = vadd.xlane.f32.xlu0 %v3825
    %v3827 = vpop.xlane.xlu0 %3826
    %v3828 = vrcp.pop %v3824
    %v3829 = vrcp.pop %v3827
    %v3830 = vmul.f32 %v3819, %v3828
    %v3831 = vmul.f32 %v3821, %v3829
    %v3832 = vpack.c.bf16 %v3830, %v3830
    %v3833 = vpack.c.bf16 %v3831, %v3831
    %3834 = vrot.lane.b32.xlu0 %v3028, 40
    %v3835 = vpop.permute.xlu0 %3834
    %v3837 = vsel %vm451, %v3832, 0
    %v3840 = vsel %vm576, %v3835, 0
    %3842 = vmatprep.subr.bf16.mxu0 0
    %3843 = vmatpush1.bf16.msra.mxu0 0
    %3844 = vmatprep.subr.bf16.mxu0 0
    %3845 = vmatpush1.bf16.msra.mxu0 0
    %3846 = vmatprep.subr.bf16.mxu0 0
    %3847 = vmatpush1.bf16.msra.mxu0 0
    %3848 = vmatprep.subr.bf16.mxu0 0
    %3849 = vmatpush1.bf16.msra.mxu0 0
    %3850 = vmatprep.subr.bf16.mxu0 0
    %3851 = vmatpush1.bf16.msra.mxu0 0
    %3852 = vmatprep.subr.bf16.mxu0 0
    %3853 = vmatpush1.bf16.msra.mxu0 0
    %3854 = vmatprep.subr.bf16.mxu0 0
    %3855 = vmatpush1.bf16.msra.mxu0 0
    %3856 = vmatprep.subr.bf16.mxu0 0
    %3857 = vmatpush1.bf16.msra.mxu0 %v3840
    %3858 = vmatprep.subr.bf16.mxu0 0
    %3859 = vmatpush2.bf16.msra.mxu0 0
    %3860 = vmatprep.subr.bf16.mxu0 0
    %3861 = vmatpush2.bf16.msra.mxu0 0
    %3862 = vmatprep.subr.bf16.mxu0 0
    %3863 = vmatpush2.bf16.msra.mxu0 0
    %3864 = vmatprep.subr.bf16.mxu0 0
    %3865 = vmatpush2.bf16.msra.mxu0 0
    %3866 = vmatprep.subr.bf16.mxu0 0
    %3867 = vmatpush2.bf16.msra.mxu0 0
    %3868 = vmatprep.subr.bf16.mxu0 0
    %3869 = vmatpush2.bf16.msra.mxu0 0
    %3870 = vmatprep.subr.bf16.mxu0 0
    %3871 = vmatpush2.bf16.msra.mxu0 0
    %3872 = vmatprep.subr.bf16.mxu0 0
    %3873 = vmatpush2.bf16.msra.mxu0 0
    %3874 = vmatprep.mubr.bf16.mxu0 0
    %3875 = vmatmul.mubr.bf16.gmra.mxu0 %v3837
    %v3876 = vpop.f32.mrf.mxu0
    %v3877 = vadd.f32 0.0, %v3876
    %v3878 = vpop.f32.mrf.mxu0
    %v3879 = vpop.f32.mrf.mxu0
    %v3880 = vpop.f32.mrf.mxu0
    %3881 = vdwg.mxu0
    %3882 = vrot.lane.b32.xlu0 %v3029, 40
    %v3883 = vpop.permute.xlu0 %3882
    %v3885 = vsel %vm451, %v3833, 0
    %v3888 = vsel %vm576, %v3883, 0
    %3890 = vmatprep.subr.bf16.mxu0 0
    %3891 = vmatpush1.bf16.msra.mxu0 0
    %3892 = vmatprep.subr.bf16.mxu0 0
    %3893 = vmatpush1.bf16.msra.mxu0 0
    %3894 = vmatprep.subr.bf16.mxu0 0
    %3895 = vmatpush1.bf16.msra.mxu0 0
    %3896 = vmatprep.subr.bf16.mxu0 0
    %3897 = vmatpush1.bf16.msra.mxu0 0
    %3898 = vmatprep.subr.bf16.mxu0 0
    %3899 = vmatpush1.bf16.msra.mxu0 0
    %3900 = vmatprep.subr.bf16.mxu0 0
    %3901 = vmatpush1.bf16.msra.mxu0 0
    %3902 = vmatprep.subr.bf16.mxu0 0
    %3903 = vmatpush1.bf16.msra.mxu0 0
    %3904 = vmatprep.subr.bf16.mxu0 0
    %3905 = vmatpush1.bf16.msra.mxu0 %v3888
    %3906 = vmatprep.subr.bf16.mxu0 0
    %3907 = vmatpush2.bf16.msra.mxu0 0
    %3908 = vmatprep.subr.bf16.mxu0 0
    %3909 = vmatpush2.bf16.msra.mxu0 0
    %3910 = vmatprep.subr.bf16.mxu0 0
    %3911 = vmatpush2.bf16.msra.mxu0 0
    %3912 = vmatprep.subr.bf16.mxu0 0
    %3913 = vmatpush2.bf16.msra.mxu0 0
    %3914 = vmatprep.subr.bf16.mxu0 0
    %3915 = vmatpush2.bf16.msra.mxu0 0
    %3916 = vmatprep.subr.bf16.mxu0 0
    %3917 = vmatpush2.bf16.msra.mxu0 0
    %3918 = vmatprep.subr.bf16.mxu0 0
    %3919 = vmatpush2.bf16.msra.mxu0 0
    %3920 = vmatprep.subr.bf16.mxu0 0
    %3921 = vmatpush2.bf16.msra.mxu0 0
    %3922 = vmatprep.mubr.bf16.mxu0 0
    %3923 = vmatmul.mubr.bf16.gmra.mxu0 %v3885
    %v3924 = vpop.f32.mrf.mxu0
    %v3925 = vadd.f32 0.0, %v3924
    %v3926 = vpop.f32.mrf.mxu0
    %v3927 = vpop.f32.mrf.mxu0
    %v3928 = vpop.f32.mrf.mxu0
    %3929 = vdwg.mxu0
    %3932 = vrot.lane.b32.xlu0 %v3877, 24
    %v3933 = vpop.permute.xlu0 %3932
    %3934 = vrot.lane.b32.xlu0 %v3925, 24
    %v3935 = vpop.permute.xlu0 %3934
    %3938 = vst.msk [vmem:[#allocation2] sm:$0xff] %vm1360, %v3933
    %3939 = vst.msk [vmem:[#allocation2 + $0x8] sm:$0xff] %vm1360, %v3935
    %v3940 = vld [vmem:[#allocation2] sm:$0xff]
    %v3941 = vld [vmem:[#allocation2 + $0x8] sm:$0xff]
    %v3942 = vpack.c.bf16 %v3941, %v3940
    %v3947 = vunpack.c.l.b16 %v2876
    %v3948 = vunpack.c.l.b16 %v2877
    %v3949 = vunpack.c.l.b16 %v2878
    %v3950 = vunpack.c.l.b16 %v2879
    %v3951 = vpack.c.b16 %v3948, %v3947
    %v3952 = vpack.c.b16 %v3950, %v3949
    %v3956 = vsel %vm345, %v3942, 0
    %3958 = vmatprep.subr.bf16.mxu0 0
    %3959 = vmatpush1.bf16.msra.mxu0 0
    %3960 = vmatprep.subr.bf16.mxu0 0
    %3961 = vmatpush1.bf16.msra.mxu0 0
    %3962 = vmatprep.subr.bf16.mxu0 0
    %3963 = vmatpush1.bf16.msra.mxu0 0
    %3964 = vmatprep.subr.bf16.mxu0 0
    %3965 = vmatpush1.bf16.msra.mxu0 0
    %3966 = vmatprep.subr.bf16.mxu0 0
    %3967 = vmatpush1.bf16.msra.mxu0 0
    %3968 = vmatprep.subr.bf16.mxu0 0
    %3969 = vmatpush1.bf16.msra.mxu0 0
    %3970 = vmatprep.subr.bf16.mxu0 0
    %3971 = vmatpush1.bf16.msra.mxu0 %v3952
    %3972 = vmatprep.subr.bf16.mxu0 0
    %3973 = vmatpush1.bf16.msra.mxu0 %v3951
    %3974 = vmatprep.subr.bf16.mxu0 0
    %3975 = vmatpush2.bf16.msra.mxu0 0
    %3976 = vmatprep.subr.bf16.mxu0 0
    %3977 = vmatpush2.bf16.msra.mxu0 0
    %3978 = vmatprep.subr.bf16.mxu0 0
    %3979 = vmatpush2.bf16.msra.mxu0 0
    %3980 = vmatprep.subr.bf16.mxu0 0
    %3981 = vmatpush2.bf16.msra.mxu0 0
    %3982 = vmatprep.subr.bf16.mxu0 0
    %3983 = vmatpush2.bf16.msra.mxu0 0
    %3984 = vmatprep.subr.bf16.mxu0 0
    %3985 = vmatpush2.bf16.msra.mxu0 0
    %3986 = vmatprep.subr.bf16.mxu0 0
    %3987 = vmatpush2.bf16.msra.mxu0 0
    %3988 = vmatprep.subr.bf16.mxu0 0
    %3989 = vmatpush2.bf16.msra.mxu0 0
    %3990 = vmatprep.mubr.bf16.mxu0 0
    %3991 = vmatmul.mubr.bf16.gmra.mxu0 %v3956
    %v3992 = vpop.f32.mrf.mxu0
    %v3993 = vadd.f32 0.0, %v3992
    %v3994 = vpop.f32.mrf.mxu0
    %v3995 = vpop.f32.mrf.mxu0
    %v3996 = vadd.f32 0.0, %v3995
    %v3997 = vpop.f32.mrf.mxu0
    %3998 = vdwg.mxu0
    %v3999 = vadd.f32 %v2864, %v3993
    %v4000 = vadd.f32 %v2865, %v3996
    %v4001 = vsel %vm345, %v3999, 0.0
    %4002 = vadd.xlane.f32.xlu0 %v4001
    %v4003 = vpop.xlane.xlu0 %4002
    %v4004 = vsel %vm345, %v4000, 0.0
    %4005 = vadd.xlane.f32.xlu0 %v4004
    %v4006 = vpop.xlane.xlu0 %4005
    %v4007 = vmul.f32 %v4003, %v352
    %v4008 = vmul.f32 %v4006, %v352
    %v4009 = vsub.f32 %v3999, %v4007
    %v4010 = vsub.f32 %v4000, %v4008
    %v4011 = vmul.f32 %v4009, %v4009
    %v4012 = vmul.f32 %v4010, %v4010
    %v4013 = vsel %vm345, %v4011, 0.0
    %4014 = vadd.xlane.f32.xlu0 %v4013
    %v4015 = vpop.xlane.xlu0 %4014
    %v4016 = vsel %vm345, %v4012, 0.0
    %4017 = vadd.xlane.f32.xlu0 %v4016
    %v4018 = vpop.xlane.xlu0 %4017
    %v4019 = vmul.f32 %v4015, %v352
    %v4020 = vmul.f32 %v4018, %v352
    %v4021 = vadd.f32 %v4019, 1e-05
    %v4022 = vadd.f32 %v4020, 1e-05
    %v4023 = vrsqrt.pop %v4021
    %v4024 = vrsqrt.pop %v4022
    %v4025 = vmul.f32 %v4009, %v4023
    %v4026 = vmul.f32 %v4010, %v4024
    %v4028 = vlaneseq
    %v4029 = vshrl.u32 %v4028, 7
    %v4030 = vsub.s32 0, %v4029
    %v4031 = vrot.slane %v2881, %v4030
    %v4033 = vmul.f32 %v4025, %v4031
    %v4034 = vmul.f32 %v4026, %v4031
    %v4036 = vlaneseq
    %v4037 = vshrl.u32 %v4036, 7
    %v4038 = vsub.s32 0, %v4037
    %v4039 = vrot.slane %v2883, %v4038
    %v4041 = vadd.f32 %v4033, %v4039
    %v4042 = vadd.f32 %v4034, %v4039
    %v4043 = vpack.c.bf16 %v4042, %v4041
    %v4048 = vunpack.c.l.b16 %v2885
    %v4049 = vunpack.c.l.b16 %v2886
    %v4050 = vunpack.c.l.b16 %v2887
    %v4051 = vunpack.c.l.b16 %v2888
    %v4052 = vpack.c.b16 %v4049, %v4048
    %v4053 = vpack.c.b16 %v4051, %v4050
    %v4057 = vsel %vm345, %v4043, 0
    %4059 = vmatprep.subr.bf16.mxu0 0
    %4060 = vmatpush1.bf16.msra.mxu0 0
    %4061 = vmatprep.subr.bf16.mxu0 0
    %4062 = vmatpush1.bf16.msra.mxu0 0
    %4063 = vmatprep.subr.bf16.mxu0 0
    %4064 = vmatpush1.bf16.msra.mxu0 0
    %4065 = vmatprep.subr.bf16.mxu0 0
    %4066 = vmatpush1.bf16.msra.mxu0 0
    %4067 = vmatprep.subr.bf16.mxu0 0
    %4068 = vmatpush1.bf16.msra.mxu0 0
    %4069 = vmatprep.subr.bf16.mxu0 0
    %4070 = vmatpush1.bf16.msra.mxu0 0
    %4071 = vmatprep.subr.bf16.mxu0 0
    %4072 = vmatpush1.bf16.msra.mxu0 %v4053
    %4073 = vmatprep.subr.bf16.mxu0 0
    %4074 = vmatpush1.bf16.msra.mxu0 %v4052
    %4075 = vmatprep.subr.bf16.mxu0 0
    %4076 = vmatpush2.bf16.msra.mxu0 0
    %4077 = vmatprep.subr.bf16.mxu0 0
    %4078 = vmatpush2.bf16.msra.mxu0 0
    %4079 = vmatprep.subr.bf16.mxu0 0
    %4080 = vmatpush2.bf16.msra.mxu0 0
    %4081 = vmatprep.subr.bf16.mxu0 0
    %4082 = vmatpush2.bf16.msra.mxu0 0
    %4083 = vmatprep.subr.bf16.mxu0 0
    %4084 = vmatpush2.bf16.msra.mxu0 0
    %4085 = vmatprep.subr.bf16.mxu0 0
    %4086 = vmatpush2.bf16.msra.mxu0 0
    %4087 = vmatprep.subr.bf16.mxu0 0
    %4088 = vmatpush2.bf16.msra.mxu0 0
    %4089 = vmatprep.subr.bf16.mxu0 0
    %4090 = vmatpush2.bf16.msra.mxu0 0
    %4091 = vmatprep.mubr.bf16.mxu0 0
    %4092 = vmatmul.mubr.bf16.gmra.mxu0 %v4057
    %v4093 = vpop.f32.mrf.mxu0
    %v4094 = vadd.f32 0.0, %v4093
    %v4095 = vpop.f32.mrf.mxu0
    %v4096 = vpop.f32.mrf.mxu0
    %v4097 = vadd.f32 0.0, %v4096
    %v4098 = vpop.f32.mrf.mxu0
    %4099 = vdwg.mxu0
    %v4104 = vunpack.c.l.b16 %v2890
    %v4105 = vunpack.c.l.b16 %v2891
    %v4106 = vunpack.c.l.b16 %v2892
    %v4107 = vunpack.c.l.b16 %v2893
    %v4108 = vpack.c.b16 %v4105, %v4104
    %v4109 = vpack.c.b16 %v4107, %v4106
    %4112 = vmatprep.subr.bf16.mxu0 0
    %4113 = vmatpush1.bf16.msra.mxu0 0
    %4114 = vmatprep.subr.bf16.mxu0 0
    %4115 = vmatpush1.bf16.msra.mxu0 0
    %4116 = vmatprep.subr.bf16.mxu0 0
    %4117 = vmatpush1.bf16.msra.mxu0 0
    %4118 = vmatprep.subr.bf16.mxu0 0
    %4119 = vmatpush1.bf16.msra.mxu0 0
    %4120 = vmatprep.subr.bf16.mxu0 0
    %4121 = vmatpush1.bf16.msra.mxu0 0
    %4122 = vmatprep.subr.bf16.mxu0 0
    %4123 = vmatpush1.bf16.msra.mxu0 0
    %4124 = vmatprep.subr.bf16.mxu0 0
    %4125 = vmatpush1.bf16.msra.mxu0 %v4109
    %4126 = vmatprep.subr.bf16.mxu0 0
    %4127 = vmatpush1.bf16.msra.mxu0 %v4108
    %4128 = vmatprep.subr.bf16.mxu0 0
    %4129 = vmatpush2.bf16.msra.mxu0 0
    %4130 = vmatprep.subr.bf16.mxu0 0
    %4131 = vmatpush2.bf16.msra.mxu0 0
    %4132 = vmatprep.subr.bf16.mxu0 0
    %4133 = vmatpush2.bf16.msra.mxu0 0
    %4134 = vmatprep.subr.bf16.mxu0 0
    %4135 = vmatpush2.bf16.msra.mxu0 0
    %4136 = vmatprep.subr.bf16.mxu0 0
    %4137 = vmatpush2.bf16.msra.mxu0 0
    %4138 = vmatprep.subr.bf16.mxu0 0
    %4139 = vmatpush2.bf16.msra.mxu0 0
    %4140 = vmatprep.subr.bf16.mxu0 0
    %4141 = vmatpush2.bf16.msra.mxu0 0
    %4142 = vmatprep.subr.bf16.mxu0 0
    %4143 = vmatpush2.bf16.msra.mxu0 0
    %4144 = vmatprep.mubr.bf16.mxu0 0
    %4145 = vmatmul.mubr.bf16.gmra.mxu0 %v1536
    %v4146 = vpop.f32.mrf.mxu0
    %v4147 = vadd.f32 0.0, %v4146
    %v4148 = vpop.f32.mrf.mxu0
    %v4149 = vpop.f32.mrf.mxu0
    %v4150 = vadd.f32 0.0, %v4149
    %v4151 = vpop.f32.mrf.mxu0
    %4152 = vmatprep.mubr.bf16.mxu0 0
    %4153 = vmatmul.mubr.bf16.gmra.mxu0 %v1539
    %v4154 = vpop.f32.mrf.mxu0
    %v4155 = vadd.f32 0.0, %v4154
    %v4156 = vpop.f32.mrf.mxu0
    %v4157 = vpop.f32.mrf.mxu0
    %v4158 = vpop.f32.mrf.mxu0
    %4159 = vdwg.mxu0
    %v4163 = vcombine.high %v4147, %v4147
    %v4165 = vunpack.c.l.s4 1983009808
    %v4166 = vunpack.c.0.s8 %v4165
    %v4167 = vlaneseq
    %v4168 = vshrl.u32 %v4167, 7
    %v4169 = vsub.s32 %v4166, %v4168
    %v4170 = vrot.slane %v4147, %v4169
    %v4172 = vunpack.c.l.s4 1983009808
    %v4173 = vunpack.c.0.s8 %v4172
    %v4174 = vlaneseq
    %v4175 = vshrl.u32 %v4174, 7
    %v4176 = vsub.s32 %v4173, %v4175
    %v4177 = vrot.slane %v4163, %v4176
    %v4178 = vcombine.high %v4170, %v4170
    %v4179 = vcombine.high %v4177, %v4177
    %v4180 = vcombine.high %v4150, %v4150
    %v4182 = vunpack.c.l.s4 1983009808
    %v4183 = vunpack.c.0.s8 %v4182
    %v4184 = vlaneseq
    %v4185 = vshrl.u32 %v4184, 7
    %v4186 = vsub.s32 %v4183, %v4185
    %v4187 = vrot.slane %v4150, %v4186
    %v4189 = vunpack.c.l.s4 1983009808
    %v4190 = vunpack.c.0.s8 %v4189
    %v4191 = vlaneseq
    %v4192 = vshrl.u32 %v4191, 7
    %v4193 = vsub.s32 %v4190, %v4192
    %v4194 = vrot.slane %v4180, %v4193
    %v4195 = vcombine.high %v4187, %v4187
    %v4196 = vcombine.high %v4194, %v4194
    %v4198 = vunpack.c.l.s4 1983009808
    %v4199 = vunpack.c.0.s8 %v4198
    %v4200 = vlaneseq
    %v4201 = vshrl.u32 %v4200, 7
    %v4202 = vsub.s32 %v4199, %v4201
    %v4203 = vrot.slane %v4155, %v4202
    %v4204 = vcombine.high %v4203, %v4203
    %v4205 = vpack.c.bf16 %v4094, %v4094
    %v4206 = vpack.c.bf16 %v4097, %v4097
    %v4207 = vcombine.low %v4170, %v4178
    %v4208 = vcombine.low %v4177, %v4179
    %v4210 = vunpack.c.l.s4 1983009808
    %v4211 = vunpack.c.0.s8 %v4210
    %v4212 = vlaneseq
    %v4213 = vshrl.u32 %v4212, 7
    %v4214 = vsub.s32 %v4211, %v4213
    %v4215 = vrot.slane %v4207, %v4214
    %v4217 = vunpack.c.l.s4 1983009808
    %v4218 = vunpack.c.0.s8 %v4217
    %v4219 = vlaneseq
    %v4220 = vshrl.u32 %v4219, 7
    %v4221 = vsub.s32 %v4218, %v4220
    %v4222 = vrot.slane %v4208, %v4221
    %v4223 = vcombine.low %v4215, %v4222
    %v4225 = vunpack.c.l.s4 1983009808
    %v4226 = vunpack.c.0.s8 %v4225
    %v4227 = vlaneseq
    %v4228 = vshrl.u32 %v4227, 7
    %v4229 = vsub.s32 %v4226, %v4228
    %v4230 = vrot.slane %v4187, %v4229
    %v4231 = vcombine.low %v4195, %v4194
    %v4232 = vcombine.low %v4196, %v4203
    %v4234 = vunpack.c.l.s4 1983009808
    %v4235 = vunpack.c.0.s8 %v4234
    %v4236 = vlaneseq
    %v4237 = vshrl.u32 %v4236, 7
    %v4238 = vsub.s32 %v4235, %v4237
    %v4239 = vrot.slane %v4231, %v4238
    %v4241 = vunpack.c.l.s4 1983009808
    %v4242 = vunpack.c.0.s8 %v4241
    %v4243 = vlaneseq
    %v4244 = vshrl.u32 %v4243, 7
    %v4245 = vsub.s32 %v4242, %v4244
    %v4246 = vrot.slane %v4232, %v4245
    %v4247 = vcombine.low %v4239, %v4246
    %v4249 = vunpack.c.l.s4 1983009808
    %v4250 = vunpack.c.0.s8 %v4249
    %v4251 = vlaneseq
    %v4252 = vshrl.u32 %v4251, 7
    %v4253 = vsub.s32 %v4250, %v4252
    %v4254 = vrot.slane %v4204, %v4253
    %v4259 = vpack.c.bf16 %v4230, %v4223
    %v4260 = vpack.c.bf16 %v4254, %v4247
    %vm4261 = vcmask 130048
    %v4263 = vsel %vm4261, %v4205, 0
    %v4266 = vsel %vm4261, %v4259, 0
    %4268 = vmatprep.subr.bf16.mxu0 0
    %4269 = vmatpush1.bf16.xpose.msra.mxu0 0
    %4270 = vmatprep.subr.bf16.mxu0 0
    %4271 = vmatpush1.bf16.xpose.msra.mxu0 0
    %4272 = vmatprep.subr.bf16.mxu0 0
    %4273 = vmatpush1.bf16.xpose.msra.mxu0 0
    %4274 = vmatprep.subr.bf16.mxu0 0
    %4275 = vmatpush1.bf16.xpose.msra.mxu0 0
    %4276 = vmatprep.subr.bf16.mxu0 0
    %4277 = vmatpush1.bf16.xpose.msra.mxu0 0
    %4278 = vmatprep.subr.bf16.mxu0 0
    %4279 = vmatpush1.bf16.xpose.msra.mxu0 0
    %4280 = vmatprep.subr.bf16.mxu0 0
    %4281 = vmatpush1.bf16.xpose.msra.mxu0 0
    %4282 = vmatprep.subr.bf16.mxu0 0
    %4283 = vmatpush1.bf16.xpose.msra.mxu0 %v4266
    %4284 = vmatprep.subr.bf16.mxu0 0
    %4285 = vmatpush2.bf16.xpose.msra.mxu0 0
    %4286 = vmatprep.subr.bf16.mxu0 0
    %4287 = vmatpush2.bf16.xpose.msra.mxu0 0
    %4288 = vmatprep.subr.bf16.mxu0 0
    %4289 = vmatpush2.bf16.xpose.msra.mxu0 0
    %4290 = vmatprep.subr.bf16.mxu0 0
    %4291 = vmatpush2.bf16.xpose.msra.mxu0 0
    %4292 = vmatprep.subr.bf16.mxu0 0
    %4293 = vmatpush2.bf16.xpose.msra.mxu0 0
    %4294 = vmatprep.subr.bf16.mxu0 0
    %4295 = vmatpush2.bf16.xpose.msra.mxu0 0
    %4296 = vmatprep.subr.bf16.mxu0 0
    %4297 = vmatpush2.bf16.xpose.msra.mxu0 0
    %4298 = vmatprep.subr.bf16.mxu0 0
    %4299 = vmatpush2.bf16.xpose.msra.mxu0 0
    %4300 = vmatprep.mubr.bf16.mxu0 0
    %4301 = vmatmul.mubr.bf16.gmra.mxu0 %v4263
    %v4302 = vpop.f32.mrf.mxu0
    %v4303 = vadd.f32 0.0, %v4302
    %v4304 = vpop.f32.mrf.mxu0
    %v4305 = vpop.f32.mrf.mxu0
    %v4306 = vpop.f32.mrf.mxu0
    %4307 = vdwg.mxu0
    %v4309 = vsel %vm4261, %v4206, 0
    %v4312 = vsel %vm4261, %v4260, 0
    %4314 = vmatprep.subr.bf16.mxu0 0
    %4315 = vmatpush1.bf16.xpose.msra.mxu0 0
    %4316 = vmatprep.subr.bf16.mxu0 0
    %4317 = vmatpush1.bf16.xpose.msra.mxu0 0
    %4318 = vmatprep.subr.bf16.mxu0 0
    %4319 = vmatpush1.bf16.xpose.msra.mxu0 0
    %4320 = vmatprep.subr.bf16.mxu0 0
    %4321 = vmatpush1.bf16.xpose.msra.mxu0 0
    %4322 = vmatprep.subr.bf16.mxu0 0
    %4323 = vmatpush1.bf16.xpose.msra.mxu0 0
    %4324 = vmatprep.subr.bf16.mxu0 0
    %4325 = vmatpush1.bf16.xpose.msra.mxu0 0
    %4326 = vmatprep.subr.bf16.mxu0 0
    %4327 = vmatpush1.bf16.xpose.msra.mxu0 0
    %4328 = vmatprep.subr.bf16.mxu0 0
    %4329 = vmatpush1.bf16.xpose.msra.mxu0 %v4312
    %4330 = vmatprep.subr.bf16.mxu0 0
    %4331 = vmatpush2.bf16.xpose.msra.mxu0 0
    %4332 = vmatprep.subr.bf16.mxu0 0
    %4333 = vmatpush2.bf16.xpose.msra.mxu0 0
    %4334 = vmatprep.subr.bf16.mxu0 0
    %4335 = vmatpush2.bf16.xpose.msra.mxu0 0
    %4336 = vmatprep.subr.bf16.mxu0 0
    %4337 = vmatpush2.bf16.xpose.msra.mxu0 0
    %4338 = vmatprep.subr.bf16.mxu0 0
    %4339 = vmatpush2.bf16.xpose.msra.mxu0 0
    %4340 = vmatprep.subr.bf16.mxu0 0
    %4341 = vmatpush2.bf16.xpose.msra.mxu0 0
    %4342 = vmatprep.subr.bf16.mxu0 0
    %4343 = vmatpush2.bf16.xpose.msra.mxu0 0
    %4344 = vmatprep.subr.bf16.mxu0 0
    %4345 = vmatpush2.bf16.xpose.msra.mxu0 0
    %4346 = vmatprep.mubr.bf16.mxu0 0
    %4347 = vmatmul.mubr.bf16.gmra.mxu0 %v4309
    %v4348 = vpop.f32.mrf.mxu0
    %v4349 = vadd.f32 0.0, %v4348
    %v4350 = vpop.f32.mrf.mxu0
    %v4351 = vpop.f32.mrf.mxu0
    %v4352 = vpop.f32.mrf.mxu0
    %4353 = vdwg.mxu0
    %v4354 = vsel %vm1782, %v4303, -inf
    %4355 = vmax.xlane.f32.xlu0 %v4354
    %v4356 = vpop.xlane.xlu0 %4355
    %v4357 = vsel %vm1782, %v4349, -inf
    %4358 = vmax.xlane.f32.xlu0 %v4357
    %v4359 = vpop.xlane.xlu0 %4358
    %v4360 = vsub.f32 %v4303, %v4356
    %v4361 = vsub.f32 %v4349, %v4359
    %v4362 = vmul.f32 %v4360, 1.442695
    %v4363 = vpow.pop %v4362
    %v4364 = vmul.f32 %v4361, 1.442695
    %v4365 = vpow.pop %v4364
    %v4366 = vsel %vm1782, %v4363, 0.0
    %4367 = vadd.xlane.f32.xlu0 %v4366
    %v4368 = vpop.xlane.xlu0 %4367
    %v4369 = vsel %vm1782, %v4365, 0.0
    %4370 = vadd.xlane.f32.xlu0 %v4369
    %v4371 = vpop.xlane.xlu0 %4370
    %v4372 = vrcp.pop %v4368
    %v4373 = vrcp.pop %v4371
    %v4374 = vmul.f32 %v4363, %v4372
    %v4375 = vmul.f32 %v4365, %v4373
    %v4376 = vpack.c.bf16 %v4374, %v4374
    %v4377 = vpack.c.bf16 %v4375, %v4375
    %4379 = vrot.lane.b32.xlu0 %v4259, 96
    %v4380 = vpop.permute.xlu0 %4379
    %v4382 = vsel %vm1782, %v4376, 0
    %v4385 = vsel %vm1813, %v4380, 0
    %4387 = vmatprep.subr.bf16.mxu0 0
    %4388 = vmatpush1.bf16.msra.mxu0 0
    %4389 = vmatprep.subr.bf16.mxu0 0
    %4390 = vmatpush1.bf16.msra.mxu0 0
    %4391 = vmatprep.subr.bf16.mxu0 0
    %4392 = vmatpush1.bf16.msra.mxu0 0
    %4393 = vmatprep.subr.bf16.mxu0 0
    %4394 = vmatpush1.bf16.msra.mxu0 0
    %4395 = vmatprep.subr.bf16.mxu0 0
    %4396 = vmatpush1.bf16.msra.mxu0 0
    %4397 = vmatprep.subr.bf16.mxu0 0
    %4398 = vmatpush1.bf16.msra.mxu0 0
    %4399 = vmatprep.subr.bf16.mxu0 0
    %4400 = vmatpush1.bf16.msra.mxu0 0
    %4401 = vmatprep.subr.bf16.mxu0 0
    %4402 = vmatpush1.bf16.msra.mxu0 %v4385
    %4403 = vmatprep.subr.bf16.mxu0 0
    %4404 = vmatpush2.bf16.msra.mxu0 0
    %4405 = vmatprep.subr.bf16.mxu0 0
    %4406 = vmatpush2.bf16.msra.mxu0 0
    %4407 = vmatprep.subr.bf16.mxu0 0
    %4408 = vmatpush2.bf16.msra.mxu0 0
    %4409 = vmatprep.subr.bf16.mxu0 0
    %4410 = vmatpush2.bf16.msra.mxu0 0
    %4411 = vmatprep.subr.bf16.mxu0 0
    %4412 = vmatpush2.bf16.msra.mxu0 0
    %4413 = vmatprep.subr.bf16.mxu0 0
    %4414 = vmatpush2.bf16.msra.mxu0 0
    %4415 = vmatprep.subr.bf16.mxu0 0
    %4416 = vmatpush2.bf16.msra.mxu0 0
    %4417 = vmatprep.subr.bf16.mxu0 0
    %4418 = vmatpush2.bf16.msra.mxu0 0
    %4419 = vmatprep.mubr.bf16.mxu0 0
    %4420 = vmatmul.mubr.bf16.gmra.mxu0 %v4382
    %v4421 = vpop.f32.mrf.mxu0
    %v4422 = vadd.f32 0.0, %v4421
    %v4423 = vpop.f32.mrf.mxu0
    %v4424 = vpop.f32.mrf.mxu0
    %v4425 = vpop.f32.mrf.mxu0
    %4426 = vdwg.mxu0
    %4428 = vrot.lane.b32.xlu0 %v4260, 96
    %v4429 = vpop.permute.xlu0 %4428
    %v4431 = vsel %vm1782, %v4377, 0
    %v4434 = vsel %vm1813, %v4429, 0
    %4436 = vmatprep.subr.bf16.mxu0 0
    %4437 = vmatpush1.bf16.msra.mxu0 0
    %4438 = vmatprep.subr.bf16.mxu0 0
    %4439 = vmatpush1.bf16.msra.mxu0 0
    %4440 = vmatprep.subr.bf16.mxu0 0
    %4441 = vmatpush1.bf16.msra.mxu0 0
    %4442 = vmatprep.subr.bf16.mxu0 0
    %4443 = vmatpush1.bf16.msra.mxu0 0
    %4444 = vmatprep.subr.bf16.mxu0 0
    %4445 = vmatpush1.bf16.msra.mxu0 0
    %4446 = vmatprep.subr.bf16.mxu0 0
    %4447 = vmatpush1.bf16.msra.mxu0 0
    %4448 = vmatprep.subr.bf16.mxu0 0
    %4449 = vmatpush1.bf16.msra.mxu0 0
    %4450 = vmatprep.subr.bf16.mxu0 0
    %4451 = vmatpush1.bf16.msra.mxu0 %v4434
    %4452 = vmatprep.subr.bf16.mxu0 0
    %4453 = vmatpush2.bf16.msra.mxu0 0
    %4454 = vmatprep.subr.bf16.mxu0 0
    %4455 = vmatpush2.bf16.msra.mxu0 0
    %4456 = vmatprep.subr.bf16.mxu0 0
    %4457 = vmatpush2.bf16.msra.mxu0 0
    %4458 = vmatprep.subr.bf16.mxu0 0
    %4459 = vmatpush2.bf16.msra.mxu0 0
    %4460 = vmatprep.subr.bf16.mxu0 0
    %4461 = vmatpush2.bf16.msra.mxu0 0
    %4462 = vmatprep.subr.bf16.mxu0 0
    %4463 = vmatpush2.bf16.msra.mxu0 0
    %4464 = vmatprep.subr.bf16.mxu0 0
    %4465 = vmatpush2.bf16.msra.mxu0 0
    %4466 = vmatprep.subr.bf16.mxu0 0
    %4467 = vmatpush2.bf16.msra.mxu0 0
    %4468 = vmatprep.mubr.bf16.mxu0 0
    %4469 = vmatmul.mubr.bf16.gmra.mxu0 %v4431
    %v4470 = vpop.f32.mrf.mxu0
    %v4471 = vadd.f32 0.0, %v4470
    %v4472 = vpop.f32.mrf.mxu0
    %v4473 = vpop.f32.mrf.mxu0
    %v4474 = vpop.f32.mrf.mxu0
    %4475 = vdwg.mxu0
    %4476 = vst.msk [vmem:[#allocation2] sm:$0xff] %vm4261, %v4422
    %4477 = vst.msk [vmem:[#allocation2 + $0x8] sm:$0xff] %vm4261, %v4471
    %4479 = vrot.lane.b32.xlu0 %v4205, 112
    %v4480 = vpop.permute.xlu0 %4479
    %4481 = vrot.lane.b32.xlu0 %v4259, 112
    %v4482 = vpop.permute.xlu0 %4481
    %v4484 = vsel %vm4261, %v4480, 0
    %v4487 = vsel %vm4261, %v4482, 0
    %4489 = vmatprep.subr.bf16.mxu0 0
    %4490 = vmatpush1.bf16.xpose.msra.mxu0 0
    %4491 = vmatprep.subr.bf16.mxu0 0
    %4492 = vmatpush1.bf16.xpose.msra.mxu0 0
    %4493 = vmatprep.subr.bf16.mxu0 0
    %4494 = vmatpush1.bf16.xpose.msra.mxu0 0
    %4495 = vmatprep.subr.bf16.mxu0 0
    %4496 = vmatpush1.bf16.xpose.msra.mxu0 0
    %4497 = vmatprep.subr.bf16.mxu0 0
    %4498 = vmatpush1.bf16.xpose.msra.mxu0 0
    %4499 = vmatprep.subr.bf16.mxu0 0
    %4500 = vmatpush1.bf16.xpose.msra.mxu0 0
    %4501 = vmatprep.subr.bf16.mxu0 0
    %4502 = vmatpush1.bf16.xpose.msra.mxu0 0
    %4503 = vmatprep.subr.bf16.mxu0 0
    %4504 = vmatpush1.bf16.xpose.msra.mxu0 %v4487
    %4505 = vmatprep.subr.bf16.mxu0 0
    %4506 = vmatpush2.bf16.xpose.msra.mxu0 0
    %4507 = vmatprep.subr.bf16.mxu0 0
    %4508 = vmatpush2.bf16.xpose.msra.mxu0 0
    %4509 = vmatprep.subr.bf16.mxu0 0
    %4510 = vmatpush2.bf16.xpose.msra.mxu0 0
    %4511 = vmatprep.subr.bf16.mxu0 0
    %4512 = vmatpush2.bf16.xpose.msra.mxu0 0
    %4513 = vmatprep.subr.bf16.mxu0 0
    %4514 = vmatpush2.bf16.xpose.msra.mxu0 0
    %4515 = vmatprep.subr.bf16.mxu0 0
    %4516 = vmatpush2.bf16.xpose.msra.mxu0 0
    %4517 = vmatprep.subr.bf16.mxu0 0
    %4518 = vmatpush2.bf16.xpose.msra.mxu0 0
    %4519 = vmatprep.subr.bf16.mxu0 0
    %4520 = vmatpush2.bf16.xpose.msra.mxu0 0
    %4521 = vmatprep.mubr.bf16.mxu0 0
    %4522 = vmatmul.mubr.bf16.gmra.mxu0 %v4484
    %v4523 = vpop.f32.mrf.mxu0
    %v4524 = vadd.f32 0.0, %v4523
    %v4525 = vpop.f32.mrf.mxu0
    %v4526 = vpop.f32.mrf.mxu0
    %v4527 = vpop.f32.mrf.mxu0
    %4528 = vdwg.mxu0
    %4530 = vrot.lane.b32.xlu0 %v4206, 112
    %v4531 = vpop.permute.xlu0 %4530
    %4532 = vrot.lane.b32.xlu0 %v4260, 112
    %v4533 = vpop.permute.xlu0 %4532
    %v4535 = vsel %vm4261, %v4531, 0
    %v4538 = vsel %vm4261, %v4533, 0
    %4540 = vmatprep.subr.bf16.mxu0 0
    %4541 = vmatpush1.bf16.xpose.msra.mxu0 0
    %4542 = vmatprep.subr.bf16.mxu0 0
    %4543 = vmatpush1.bf16.xpose.msra.mxu0 0
    %4544 = vmatprep.subr.bf16.mxu0 0
    %4545 = vmatpush1.bf16.xpose.msra.mxu0 0
    %4546 = vmatprep.subr.bf16.mxu0 0
    %4547 = vmatpush1.bf16.xpose.msra.mxu0 0
    %4548 = vmatprep.subr.bf16.mxu0 0
    %4549 = vmatpush1.bf16.xpose.msra.mxu0 0
    %4550 = vmatprep.subr.bf16.mxu0 0
    %4551 = vmatpush1.bf16.xpose.msra.mxu0 0
    %4552 = vmatprep.subr.bf16.mxu0 0
    %4553 = vmatpush1.bf16.xpose.msra.mxu0 0
    %4554 = vmatprep.subr.bf16.mxu0 0
    %4555 = vmatpush1.bf16.xpose.msra.mxu0 %v4538
    %4556 = vmatprep.subr.bf16.mxu0 0
    %4557 = vmatpush2.bf16.xpose.msra.mxu0 0
    %4558 = vmatprep.subr.bf16.mxu0 0
    %4559 = vmatpush2.bf16.xpose.msra.mxu0 0
    %4560 = vmatprep.subr.bf16.mxu0 0
    %4561 = vmatpush2.bf16.xpose.msra.mxu0 0
    %4562 = vmatprep.subr.bf16.mxu0 0
    %4563 = vmatpush2.bf16.xpose.msra.mxu0 0
    %4564 = vmatprep.subr.bf16.mxu0 0
    %4565 = vmatpush2.bf16.xpose.msra.mxu0 0
    %4566 = vmatprep.subr.bf16.mxu0 0
    %4567 = vmatpush2.bf16.xpose.msra.mxu0 0
    %4568 = vmatprep.subr.bf16.mxu0 0
    %4569 = vmatpush2.bf16.xpose.msra.mxu0 0
    %4570 = vmatprep.subr.bf16.mxu0 0
    %4571 = vmatpush2.bf16.xpose.msra.mxu0 0
    %4572 = vmatprep.mubr.bf16.mxu0 0
    %4573 = vmatmul.mubr.bf16.gmra.mxu0 %v4535
    %v4574 = vpop.f32.mrf.mxu0
    %v4575 = vadd.f32 0.0, %v4574
    %v4576 = vpop.f32.mrf.mxu0
    %v4577 = vpop.f32.mrf.mxu0
    %v4578 = vpop.f32.mrf.mxu0
    %4579 = vdwg.mxu0
    %v4580 = vsel %vm1782, %v4524, -inf
    %4581 = vmax.xlane.f32.xlu0 %v4580
    %v4582 = vpop.xlane.xlu0 %4581
    %v4583 = vsel %vm1782, %v4575, -inf
    %4584 = vmax.xlane.f32.xlu0 %v4583
    %v4585 = vpop.xlane.xlu0 %4584
    %v4586 = vsub.f32 %v4524, %v4582
    %v4587 = vsub.f32 %v4575, %v4585
    %v4588 = vmul.f32 %v4586, 1.442695
    %v4589 = vpow.pop %v4588
    %v4590 = vmul.f32 %v4587, 1.442695
    %v4591 = vpow.pop %v4590
    %v4592 = vsel %vm1782, %v4589, 0.0
    %4593 = vadd.xlane.f32.xlu0 %v4592
    %v4594 = vpop.xlane.xlu0 %4593
    %v4595 = vsel %vm1782, %v4591, 0.0
    %4596 = vadd.xlane.f32.xlu0 %v4595
    %v4597 = vpop.xlane.xlu0 %4596
    %v4598 = vrcp.pop %v4594
    %v4599 = vrcp.pop %v4597
    %v4600 = vmul.f32 %v4589, %v4598
    %v4601 = vmul.f32 %v4591, %v4599
    %v4602 = vpack.c.bf16 %v4600, %v4600
    %v4603 = vpack.c.bf16 %v4601, %v4601
    %4604 = vrot.lane.b32.xlu0 %v4259, 80
    %v4605 = vpop.permute.xlu0 %4604
    %v4607 = vsel %vm1782, %v4602, 0
    %v4610 = vsel %vm1813, %v4605, 0
    %4612 = vmatprep.subr.bf16.mxu0 0
    %4613 = vmatpush1.bf16.msra.mxu0 0
    %4614 = vmatprep.subr.bf16.mxu0 0
    %4615 = vmatpush1.bf16.msra.mxu0 0
    %4616 = vmatprep.subr.bf16.mxu0 0
    %4617 = vmatpush1.bf16.msra.mxu0 0
    %4618 = vmatprep.subr.bf16.mxu0 0
    %4619 = vmatpush1.bf16.msra.mxu0 0
    %4620 = vmatprep.subr.bf16.mxu0 0
    %4621 = vmatpush1.bf16.msra.mxu0 0
    %4622 = vmatprep.subr.bf16.mxu0 0
    %4623 = vmatpush1.bf16.msra.mxu0 0
    %4624 = vmatprep.subr.bf16.mxu0 0
    %4625 = vmatpush1.bf16.msra.mxu0 0
    %4626 = vmatprep.subr.bf16.mxu0 0
    %4627 = vmatpush1.bf16.msra.mxu0 %v4610
    %4628 = vmatprep.subr.bf16.mxu0 0
    %4629 = vmatpush2.bf16.msra.mxu0 0
    %4630 = vmatprep.subr.bf16.mxu0 0
    %4631 = vmatpush2.bf16.msra.mxu0 0
    %4632 = vmatprep.subr.bf16.mxu0 0
    %4633 = vmatpush2.bf16.msra.mxu0 0
    %4634 = vmatprep.subr.bf16.mxu0 0
    %4635 = vmatpush2.bf16.msra.mxu0 0
    %4636 = vmatprep.subr.bf16.mxu0 0
    %4637 = vmatpush2.bf16.msra.mxu0 0
    %4638 = vmatprep.subr.bf16.mxu0 0
    %4639 = vmatpush2.bf16.msra.mxu0 0
    %4640 = vmatprep.subr.bf16.mxu0 0
    %4641 = vmatpush2.bf16.msra.mxu0 0
    %4642 = vmatprep.subr.bf16.mxu0 0
    %4643 = vmatpush2.bf16.msra.mxu0 0
    %4644 = vmatprep.mubr.bf16.mxu0 0
    %4645 = vmatmul.mubr.bf16.gmra.mxu0 %v4607
    %v4646 = vpop.f32.mrf.mxu0
    %v4647 = vadd.f32 0.0, %v4646
    %v4648 = vpop.f32.mrf.mxu0
    %v4649 = vpop.f32.mrf.mxu0
    %v4650 = vpop.f32.mrf.mxu0
    %4651 = vdwg.mxu0
    %4652 = vrot.lane.b32.xlu0 %v4260, 80
    %v4653 = vpop.permute.xlu0 %4652
    %v4655 = vsel %vm1782, %v4603, 0
    %v4658 = vsel %vm1813, %v4653, 0
    %4660 = vmatprep.subr.bf16.mxu0 0
    %4661 = vmatpush1.bf16.msra.mxu0 0
    %4662 = vmatprep.subr.bf16.mxu0 0
    %4663 = vmatpush1.bf16.msra.mxu0 0
    %4664 = vmatprep.subr.bf16.mxu0 0
    %4665 = vmatpush1.bf16.msra.mxu0 0
    %4666 = vmatprep.subr.bf16.mxu0 0
    %4667 = vmatpush1.bf16.msra.mxu0 0
    %4668 = vmatprep.subr.bf16.mxu0 0
    %4669 = vmatpush1.bf16.msra.mxu0 0
    %4670 = vmatprep.subr.bf16.mxu0 0
    %4671 = vmatpush1.bf16.msra.mxu0 0
    %4672 = vmatprep.subr.bf16.mxu0 0
    %4673 = vmatpush1.bf16.msra.mxu0 0
    %4674 = vmatprep.subr.bf16.mxu0 0
    %4675 = vmatpush1.bf16.msra.mxu0 %v4658
    %4676 = vmatprep.subr.bf16.mxu0 0
    %4677 = vmatpush2.bf16.msra.mxu0 0
    %4678 = vmatprep.subr.bf16.mxu0 0
    %4679 = vmatpush2.bf16.msra.mxu0 0
    %4680 = vmatprep.subr.bf16.mxu0 0
    %4681 = vmatpush2.bf16.msra.mxu0 0
    %4682 = vmatprep.subr.bf16.mxu0 0
    %4683 = vmatpush2.bf16.msra.mxu0 0
    %4684 = vmatprep.subr.bf16.mxu0 0
    %4685 = vmatpush2.bf16.msra.mxu0 0
    %4686 = vmatprep.subr.bf16.mxu0 0
    %4687 = vmatpush2.bf16.msra.mxu0 0
    %4688 = vmatprep.subr.bf16.mxu0 0
    %4689 = vmatpush2.bf16.msra.mxu0 0
    %4690 = vmatprep.subr.bf16.mxu0 0
    %4691 = vmatpush2.bf16.msra.mxu0 0
    %4692 = vmatprep.mubr.bf16.mxu0 0
    %4693 = vmatmul.mubr.bf16.gmra.mxu0 %v4655
    %v4694 = vpop.f32.mrf.mxu0
    %v4695 = vadd.f32 0.0, %v4694
    %v4696 = vpop.f32.mrf.mxu0
    %v4697 = vpop.f32.mrf.mxu0
    %v4698 = vpop.f32.mrf.mxu0
    %4699 = vdwg.mxu0
    %4702 = vrot.lane.b32.xlu0 %v4647, 16
    %v4703 = vpop.permute.xlu0 %4702
    %4704 = vrot.lane.b32.xlu0 %v4695, 16
    %v4705 = vpop.permute.xlu0 %4704
    %vm4708 = vcmask 261248
    %4709 = vst.msk [vmem:[#allocation2] sm:$0xff] %vm4708, %v4703
    %4710 = vst.msk [vmem:[#allocation2 + $0x8] sm:$0xff] %vm4708, %v4705
    %v4711 = vld [vmem:[#allocation2] sm:$0xff]
    %v4712 = vld [vmem:[#allocation2 + $0x8] sm:$0xff]
    %v4713 = vpack.c.bf16 %v4712, %v4711
    %v4718 = vunpack.c.l.b16 %v2895
    %v4719 = vunpack.c.l.b16 %v2896
    %v4720 = vunpack.c.l.b16 %v2897
    %v4721 = vunpack.c.l.b16 %v2898
    %v4722 = vpack.c.b16 %v4719, %v4718
    %v4723 = vpack.c.b16 %v4721, %v4720
    %v4727 = vsel %vm345, %v4713, 0
    %4729 = vmatprep.subr.bf16.mxu0 0
    %4730 = vmatpush1.bf16.msra.mxu0 0
    %4731 = vmatprep.subr.bf16.mxu0 0
    %4732 = vmatpush1.bf16.msra.mxu0 0
    %4733 = vmatprep.subr.bf16.mxu0 0
    %4734 = vmatpush1.bf16.msra.mxu0 0
    %4735 = vmatprep.subr.bf16.mxu0 0
    %4736 = vmatpush1.bf16.msra.mxu0 0
    %4737 = vmatprep.subr.bf16.mxu0 0
    %4738 = vmatpush1.bf16.msra.mxu0 0
    %4739 = vmatprep.subr.bf16.mxu0 0
    %4740 = vmatpush1.bf16.msra.mxu0 0
    %4741 = vmatprep.subr.bf16.mxu0 0
    %4742 = vmatpush1.bf16.msra.mxu0 %v4723
    %4743 = vmatprep.subr.bf16.mxu0 0
    %4744 = vmatpush1.bf16.msra.mxu0 %v4722
    %4745 = vmatprep.subr.bf16.mxu0 0
    %4746 = vmatpush2.bf16.msra.mxu0 0
    %4747 = vmatprep.subr.bf16.mxu0 0
    %4748 = vmatpush2.bf16.msra.mxu0 0
    %4749 = vmatprep.subr.bf16.mxu0 0
    %4750 = vmatpush2.bf16.msra.mxu0 0
    %4751 = vmatprep.subr.bf16.mxu0 0
    %4752 = vmatpush2.bf16.msra.mxu0 0
    %4753 = vmatprep.subr.bf16.mxu0 0
    %4754 = vmatpush2.bf16.msra.mxu0 0
    %4755 = vmatprep.subr.bf16.mxu0 0
    %4756 = vmatpush2.bf16.msra.mxu0 0
    %4757 = vmatprep.subr.bf16.mxu0 0
    %4758 = vmatpush2.bf16.msra.mxu0 0
    %4759 = vmatprep.subr.bf16.mxu0 0
    %4760 = vmatpush2.bf16.msra.mxu0 0
    %4761 = vmatprep.mubr.bf16.mxu0 0
    %4762 = vmatmul.mubr.bf16.gmra.mxu0 %v4727
    %v4763 = vpop.f32.mrf.mxu0
    %v4764 = vadd.f32 0.0, %v4763
    %v4765 = vpop.f32.mrf.mxu0
    %v4766 = vpop.f32.mrf.mxu0
    %v4767 = vadd.f32 0.0, %v4766
    %v4768 = vpop.f32.mrf.mxu0
    %4769 = vdwg.mxu0
    %v4770 = vadd.f32 %v3999, %v4764
    %v4771 = vadd.f32 %v4000, %v4767
    %v4772 = vsel %vm345, %v4770, 0.0
    %4773 = vadd.xlane.f32.xlu0 %v4772
    %v4774 = vpop.xlane.xlu0 %4773
    %v4775 = vsel %vm345, %v4771, 0.0
    %4776 = vadd.xlane.f32.xlu0 %v4775
    %v4777 = vpop.xlane.xlu0 %4776
    %v4778 = vmul.f32 %v4774, %v352
    %v4779 = vmul.f32 %v4777, %v352
    %v4780 = vsub.f32 %v4770, %v4778
    %v4781 = vsub.f32 %v4771, %v4779
    %v4782 = vmul.f32 %v4780, %v4780
    %v4783 = vmul.f32 %v4781, %v4781
    %v4784 = vsel %vm345, %v4782, 0.0
    %4785 = vadd.xlane.f32.xlu0 %v4784
    %v4786 = vpop.xlane.xlu0 %4785
    %v4787 = vsel %vm345, %v4783, 0.0
    %4788 = vadd.xlane.f32.xlu0 %v4787
    %v4789 = vpop.xlane.xlu0 %4788
    %v4790 = vmul.f32 %v4786, %v352
    %v4791 = vmul.f32 %v4789, %v352
    %v4792 = vadd.f32 %v4790, 1e-05
    %v4793 = vadd.f32 %v4791, 1e-05
    %v4794 = vrsqrt.pop %v4792
    %v4795 = vrsqrt.pop %v4793
    %v4796 = vmul.f32 %v4780, %v4794
    %v4797 = vmul.f32 %v4781, %v4795
    %v4799 = vlaneseq
    %v4800 = vshrl.u32 %v4799, 7
    %v4801 = vsub.s32 0, %v4800
    %v4802 = vrot.slane %v2900, %v4801
    %v4804 = vmul.f32 %v4796, %v4802
    %v4805 = vmul.f32 %v4797, %v4802
    %v4807 = vlaneseq
    %v4808 = vshrl.u32 %v4807, 7
    %v4809 = vsub.s32 0, %v4808
    %v4810 = vrot.slane %v2902, %v4809
    %v4812 = vadd.f32 %v4804, %v4810
    %v4813 = vadd.f32 %v4805, %v4810
    %v4814 = vpack.c.bf16 %v4813, %v4812
    %v4816 = vlaneseq
    %v4817 = vshrl.u32 %v4816, 7
    %v4818 = vsub.s32 0, %v4817
    %v4819 = vrot.slane %v2909, %v4818
    %v4825 = vunpack.c.l.b16 %v2904
    %v4826 = vunpack.c.l.b16 %v2905
    %v4827 = vunpack.c.l.b16 %v2906
    %v4828 = vunpack.c.l.b16 %v2907
    %v4829 = vpack.c.b16 %v4826, %v4825
    %v4830 = vpack.c.b16 %v4828, %v4827
    %v4834 = vsel %vm345, %v4814, 0
    %4836 = vmatprep.subr.bf16.mxu0 0
    %4837 = vmatpush1.bf16.msra.mxu0 0
    %4838 = vmatprep.subr.bf16.mxu0 0
    %4839 = vmatpush1.bf16.msra.mxu0 0
    %4840 = vmatprep.subr.bf16.mxu0 0
    %4841 = vmatpush1.bf16.msra.mxu0 0
    %4842 = vmatprep.subr.bf16.mxu0 0
    %4843 = vmatpush1.bf16.msra.mxu0 0
    %4844 = vmatprep.subr.bf16.mxu0 0
    %4845 = vmatpush1.bf16.msra.mxu0 0
    %4846 = vmatprep.subr.bf16.mxu0 0
    %4847 = vmatpush1.bf16.msra.mxu0 0
    %4848 = vmatprep.subr.bf16.mxu0 0
    %4849 = vmatpush1.bf16.msra.mxu0 %v4830
    %4850 = vmatprep.subr.bf16.mxu0 0
    %4851 = vmatpush1.bf16.msra.mxu0 %v4829
    %4852 = vmatprep.subr.bf16.mxu0 0
    %4853 = vmatpush2.bf16.msra.mxu0 0
    %4854 = vmatprep.subr.bf16.mxu0 0
    %4855 = vmatpush2.bf16.msra.mxu0 0
    %4856 = vmatprep.subr.bf16.mxu0 0
    %4857 = vmatpush2.bf16.msra.mxu0 0
    %4858 = vmatprep.subr.bf16.mxu0 0
    %4859 = vmatpush2.bf16.msra.mxu0 0
    %4860 = vmatprep.subr.bf16.mxu0 0
    %4861 = vmatpush2.bf16.msra.mxu0 0
    %4862 = vmatprep.subr.bf16.mxu0 0
    %4863 = vmatpush2.bf16.msra.mxu0 0
    %4864 = vmatprep.subr.bf16.mxu0 0
    %4865 = vmatpush2.bf16.msra.mxu0 0
    %4866 = vmatprep.subr.bf16.mxu0 0
    %4867 = vmatpush2.bf16.msra.mxu0 0
    %4868 = vmatprep.mubr.bf16.mxu0 0
    %4869 = vmatmul.mubr.bf16.gmra.mxu0 %v4834
    %v4870 = vpop.f32.mrf.mxu0
    %v4871 = vadd.f32 %v4819, %v4870
    %v4872 = vpop.f32.mrf.mxu0
    %v4873 = vpop.f32.mrf.mxu0
    %v4874 = vadd.f32 %v4819, %v4873
    %v4875 = vpop.f32.mrf.mxu0
    %4876 = vdwg.mxu0
    %v4877 = vmax.f32 %v4871, 0.0
    %v4878 = vmax.f32 %v4874, 0.0
    %v4879 = vpack.c.bf16 %v4878, %v4877
    %v4881 = vlaneseq
    %v4882 = vshrl.u32 %v4881, 7
    %v4883 = vsub.s32 0, %v4882
    %v4884 = vrot.slane %v2928, %v4883
    %v4902 = vunpack.c.l.b16 %v2911
    %v4903 = vunpack.c.l.b16 %v2912
    %v4904 = vunpack.c.l.b16 %v2913
    %v4905 = vunpack.c.l.b16 %v2914
    %v4906 = vunpack.c.l.b16 %v2915
    %v4907 = vunpack.c.l.b16 %v2916
    %v4908 = vunpack.c.l.b16 %v2917
    %v4909 = vunpack.c.l.b16 %v2918
    %v4910 = vunpack.c.l.b16 %v2919
    %v4911 = vunpack.c.l.b16 %v2920
    %v4912 = vunpack.c.l.b16 %v2921
    %v4913 = vunpack.c.l.b16 %v2922
    %v4914 = vunpack.c.l.b16 %v2923
    %v4915 = vunpack.c.l.b16 %v2924
    %v4916 = vunpack.c.l.b16 %v2925
    %v4917 = vunpack.c.l.b16 %v2926
    %v4918 = vpack.c.b16 %v4903, %v4902
    %v4919 = vpack.c.b16 %v4905, %v4904
    %v4920 = vpack.c.b16 %v4907, %v4906
    %v4921 = vpack.c.b16 %v4909, %v4908
    %v4922 = vpack.c.b16 %v4911, %v4910
    %v4923 = vpack.c.b16 %v4913, %v4912
    %v4924 = vpack.c.b16 %v4915, %v4914
    %v4925 = vpack.c.b16 %v4917, %v4916
    %4934 = vmatprep.subr.bf16.mxu0 0
    %4935 = vmatpush1.bf16.msra.mxu0 %v4925
    %4936 = vmatprep.subr.bf16.mxu0 0
    %4937 = vmatpush1.bf16.msra.mxu0 %v4924
    %4938 = vmatprep.subr.bf16.mxu0 0
    %4939 = vmatpush1.bf16.msra.mxu0 %v4923
    %4940 = vmatprep.subr.bf16.mxu0 0
    %4941 = vmatpush1.bf16.msra.mxu0 %v4922
    %4942 = vmatprep.subr.bf16.mxu0 0
    %4943 = vmatpush1.bf16.msra.mxu0 %v4921
    %4944 = vmatprep.subr.bf16.mxu0 0
    %4945 = vmatpush1.bf16.msra.mxu0 %v4920
    %4946 = vmatprep.subr.bf16.mxu0 0
    %4947 = vmatpush1.bf16.msra.mxu0 %v4919
    %4948 = vmatprep.subr.bf16.mxu0 0
    %4949 = vmatpush1.bf16.msra.mxu0 %v4918
    %4950 = vmatprep.subr.bf16.mxu0 0
    %4951 = vmatpush2.bf16.msra.mxu0 0
    %4952 = vmatprep.subr.bf16.mxu0 0
    %4953 = vmatpush2.bf16.msra.mxu0 0
    %4954 = vmatprep.subr.bf16.mxu0 0
    %4955 = vmatpush2.bf16.msra.mxu0 0
    %4956 = vmatprep.subr.bf16.mxu0 0
    %4957 = vmatpush2.bf16.msra.mxu0 0
    %4958 = vmatprep.subr.bf16.mxu0 0
    %4959 = vmatpush2.bf16.msra.mxu0 0
    %4960 = vmatprep.subr.bf16.mxu0 0
    %4961 = vmatpush2.bf16.msra.mxu0 0
    %4962 = vmatprep.subr.bf16.mxu0 0
    %4963 = vmatpush2.bf16.msra.mxu0 0
    %4964 = vmatprep.subr.bf16.mxu0 0
    %4965 = vmatpush2.bf16.msra.mxu0 0
    %4966 = vmatprep.mubr.bf16.mxu0 0
    %4967 = vmatmul.mubr.bf16.gmra.mxu0 %v4879
    %v4968 = vpop.f32.mrf.mxu0
    %v4969 = vadd.f32 %v4884, %v4968
    %v4970 = vpop.f32.mrf.mxu0
    %v4971 = vpop.f32.mrf.mxu0
    %v4972 = vadd.f32 %v4884, %v4971
    %v4973 = vpop.f32.mrf.mxu0
    %4974 = vdwg.mxu0
    %v4975 = vadd.f32 %v4770, %v4969
    %v4976 = vadd.f32 %v4771, %v4972
    %v4977 = vld [vmem:[%s17] sm:$0x1]
    %v4978 = vld [vmem:[%s18] sm:$0x1]
    %v4979 = vsel %vm345, %v4975, 0.0
    %4980 = vadd.xlane.f32.xlu0 %v4979
    %v4981 = vpop.xlane.xlu0 %4980
    %v4982 = vsel %vm345, %v4976, 0.0
    %4983 = vadd.xlane.f32.xlu0 %v4982
    %v4984 = vpop.xlane.xlu0 %4983
    %v4985 = vmul.f32 %v4981, %v352
    %v4986 = vmul.f32 %v4984, %v352
    %v4987 = vsub.f32 %v4975, %v4985
    %v4988 = vsub.f32 %v4976, %v4986
    %v4989 = vmul.f32 %v4987, %v4987
    %v4990 = vmul.f32 %v4988, %v4988
    %v4991 = vsel %vm345, %v4989, 0.0
    %4992 = vadd.xlane.f32.xlu0 %v4991
    %v4993 = vpop.xlane.xlu0 %4992
    %v4994 = vsel %vm345, %v4990, 0.0
    %4995 = vadd.xlane.f32.xlu0 %v4994
    %v4996 = vpop.xlane.xlu0 %4995
    %v4997 = vmul.f32 %v4993, %v352
    %v4998 = vmul.f32 %v4996, %v352
    %v4999 = vadd.f32 %v4997, 1e-05
    %v5000 = vadd.f32 %v4998, 1e-05
    %v5001 = vrsqrt.pop %v4999
    %v5002 = vrsqrt.pop %v5000
    %v5003 = vmul.f32 %v4987, %v5001
    %v5004 = vmul.f32 %v4988, %v5002
    %v5006 = vlaneseq
    %v5007 = vshrl.u32 %v5006, 7
    %v5008 = vsub.s32 0, %v5007
    %v5009 = vrot.slane %v4977, %v5008
    %v5011 = vmul.f32 %v5003, %v5009
    %v5012 = vmul.f32 %v5004, %v5009
    %v5014 = vlaneseq
    %v5015 = vshrl.u32 %v5014, 7
    %v5016 = vsub.s32 0, %v5015
    %v5017 = vrot.slane %v4978, %v5016
    %v5019 = vadd.f32 %v5011, %v5017
    %v5020 = vadd.f32 %v5012, %v5017
    %v5021 = vpack.c.bf16 %v5020, %v5019
    %v5022 = vld [vmem:[%s19] sm:$0xf]
    %v5023 = vld [vmem:[%s19 + $0x4] sm:$0xf]
    %v5024 = vld [vmem:[%s19 + $0x8] sm:$0xf]
    %v5025 = vld [vmem:[%s19 + $0xc] sm:$0xf]
    %v5026 = vld [vmem:[%s20] sm:$0x1]
    %v5028 = vlaneseq
    %v5029 = vshrl.u32 %v5028, 7
    %v5030 = vsub.s32 0, %v5029
    %v5031 = vrot.slane %v5026, %v5030
    %v5037 = vunpack.c.l.b16 %v5022
    %v5038 = vunpack.c.l.b16 %v5023
    %v5039 = vunpack.c.l.b16 %v5024
    %v5040 = vunpack.c.l.b16 %v5025
    %v5041 = vpack.c.b16 %v5038, %v5037
    %v5042 = vpack.c.b16 %v5040, %v5039
    %v5046 = vsel %vm345, %v5021, 0
    %5048 = vmatprep.subr.bf16.mxu0 0
    %5049 = vmatpush1.bf16.msra.mxu0 0
    %5050 = vmatprep.subr.bf16.mxu0 0
    %5051 = vmatpush1.bf16.msra.mxu0 0
    %5052 = vmatprep.subr.bf16.mxu0 0
    %5053 = vmatpush1.bf16.msra.mxu0 0
    %5054 = vmatprep.subr.bf16.mxu0 0
    %5055 = vmatpush1.bf16.msra.mxu0 0
    %5056 = vmatprep.subr.bf16.mxu0 0
    %5057 = vmatpush1.bf16.msra.mxu0 0
    %5058 = vmatprep.subr.bf16.mxu0 0
    %5059 = vmatpush1.bf16.msra.mxu0 0
    %5060 = vmatprep.subr.bf16.mxu0 0
    %5061 = vmatpush1.bf16.msra.mxu0 %v5042
    %5062 = vmatprep.subr.bf16.mxu0 0
    %5063 = vmatpush1.bf16.msra.mxu0 %v5041
    %5064 = vmatprep.subr.bf16.mxu0 0
    %5065 = vmatpush2.bf16.msra.mxu0 0
    %5066 = vmatprep.subr.bf16.mxu0 0
    %5067 = vmatpush2.bf16.msra.mxu0 0
    %5068 = vmatprep.subr.bf16.mxu0 0
    %5069 = vmatpush2.bf16.msra.mxu0 0
    %5070 = vmatprep.subr.bf16.mxu0 0
    %5071 = vmatpush2.bf16.msra.mxu0 0
    %5072 = vmatprep.subr.bf16.mxu0 0
    %5073 = vmatpush2.bf16.msra.mxu0 0
    %5074 = vmatprep.subr.bf16.mxu0 0
    %5075 = vmatpush2.bf16.msra.mxu0 0
    %5076 = vmatprep.subr.bf16.mxu0 0
    %5077 = vmatpush2.bf16.msra.mxu0 0
    %5078 = vmatprep.subr.bf16.mxu0 0
    %5079 = vmatpush2.bf16.msra.mxu0 0
    %5080 = vmatprep.mubr.bf16.mxu0 0
    %5081 = vmatmul.mubr.bf16.gmra.mxu0 %v5046
    %v5082 = vpop.f32.mrf.mxu0
    %v5083 = vadd.f32 %v5031, %v5082
    %v5084 = vpop.f32.mrf.mxu0
    %v5085 = vpop.f32.mrf.mxu0
    %v5086 = vadd.f32 %v5031, %v5085
    %v5087 = vpop.f32.mrf.mxu0
    %5088 = vdwg.mxu0
    %5089 = vst.msk [vmem:[#allocation18] sm:$0xff] %vm345, %v5083
    %5090 = vst.msk [vmem:[#allocation18 + $0x8] sm:$0xff] %vm345, %v5086
    // Predicated region
    $region122: #{tpu_custom_call.1} parent=1 // pred_check
      _
    $region123: #{tpu_custom_call.1} parent=1 // pred_check_branch
      %5092 = sbr.rel (0) target = $region125
    $region124: #{tpu_custom_call.1} parent=1 // pred_region
      %s5094 = ssub.s32 256, 256
      %5095 = vsyncadd [#allocation5], %s5094
      %s5096 = sshll.u32 [#allocation18], 4
      %s5097 = int_to_ptr.vmem [resolvable:$true] %s5096
      %5102 = dma.vmem_to_hbm [thread:$0]  %s5097, 256, %s21, [#allocation5], 128, 128, 8
    $region125: #{tpu_custom_call.1} parent=1 // pred_fallthru
      _
    // Predicated region
    $region126: #{tpu_custom_call.1} parent=1 // pred_check
      _
    $region127: #{tpu_custom_call.1} parent=1 // pred_check_branch
      %5104 = sbr.rel (0) target = $region129
    $region128: #{tpu_custom_call.1} parent=1 // pred_region
      %5105 = dma.done [#allocation5], 256
    $region129: #{tpu_custom_call.1} parent=1 // pred_fallthru
      _
    %5106 = vsyncpa [#allocation4], 1
    %5107 = vsyncpa [#allocation7], 1
    %5108 = vsyncpa [#allocation10], 1
    %5109 = vsyncpa [#allocation13], 1
    %5110 = vsyncpa [#allocation16], 1
    %5111 = vsyncpa [#allocation5], 1

</llo_original>
